<compile_context>
chip_gen: v7x
topology: tpu7x:2x2x1
jax: 0.10.0
libtpu: 0.0.40
codegen_flags: <defaults>
</compile_context>

<pallas_src>
import jax
import jax.numpy as jnp
from jax import lax
from jax.experimental import pallas as pl
from jax.experimental.pallas import tpu as pltpu

VOCAB_SIZE = 6
LSTM_HIDDEN = 32
LSTM_LAYER = 4
IN_PAD = 8          # layer-0 feature dim padded 6 -> 8 (one sublane tile)


def _round_up(x, m):
    return ((x + m - 1) // m) * m


def _vmem_capacity_bytes():
    """Physical VMEM of the local TPU generation (fallback 64 MiB fits all)."""
    try:
        cap = getattr(pltpu.get_tpu_info(), "vmem_capacity_bytes", None)
        if cap:
            return int(cap)
    except Exception:
        pass
    return 64 << 20


def _lstm_sum_classifier_kernel(x_ref, wih0_ref, wih_ref, whh_ref, b_ref,
                                wc_ref, bc_ref, out_ref, seq_ref, xw_ref):
    """x: (T, Bt, IN_PAD) time-major inputs (features 6..7 are zero pads).
    wih0: (IN_PAD, 4H) layer-0 input weights; wih: (L-1, H, 4H) layers 1..3;
    whh: (L, H, 4H); b: (L, 1, 4H) fused b_ih+b_hh.  Gate columns are ordered
    (i, f, o, g).  wc: (1, H), bc: (1, 1).  out: (Bt, 1).
    Scratch: seq (T, Bt, H) inter-layer buffer, xw (T, Bt, 4H) hoisted x@Wih."""
    H = LSTM_HIDDEN
    G = 4 * H
    T, Bt = x_ref.shape[0], x_ref.shape[1]

    # Unroll tied to Bt so live gates/h/c vregs stay inside the 64-vreg file.
    unroll = 8 if Bt <= 32 else 4
    proj_unroll = max(1, min(unroll, T))
    rec_unroll = max(1, min(unroll, max(1, T - 1)))

    def cell(gates, c_prev):
        # sigmoid(x) == 0.5*tanh(0.5*x)+0.5: one EUP tanh over the (i,f,o)
        # slab instead of exp+divide, plus one tanh for the g gate.
        sig = 0.5 * jnp.tanh(0.5 * gates[:, 0:3 * H]) + 0.5
        g_g = jnp.tanh(gates[:, 3 * H:4 * H])
        c_new = sig[:, H:2 * H] * c_prev + sig[:, 0:H] * g_g
        h_new = sig[:, 2 * H:3 * H] * jnp.tanh(c_new)
        return h_new, c_new

    acc_out = None
    for l in range(LSTM_LAYER):                     # static layer loop
        last = (l == LSTM_LAYER - 1)
        if l == 0:
            wih = wih0_ref[...]                     # (IN_PAD, 4H)
            src = x_ref
        else:
            wih = wih_ref[l - 1]                    # (H, 4H)
            src = seq_ref
        whh = whh_ref[l]                            # (H, 4H)
        b_bc = jnp.broadcast_to(b_ref[l], (Bt, G))  # bias hoisted out of loops

        # ---- Phase 1: input projection, no recurrent dependence ------------
        def proj_step(t, carry, src=src, wih=wih, b_bc=b_bc):
            xw_ref[t] = (jnp.dot(src[t], wih,
                                 preferred_element_type=jnp.float32) + b_bc)
            return carry
        lax.fori_loop(0, T, proj_step, 0, unroll=proj_unroll)

        # ---- Phase 2: recurrence; only h_{t-1} @ Whh stays per step --------
        # t == 0 peeled: h0 == 0, so gates = xw[0] (no MXU dot at all).
        h0, c0 = cell(xw_ref[0], jnp.zeros((Bt, H), jnp.float32))

        if last:
            # Time-sum accumulated in the loop carry; no seq writes/re-reads.
            def time_step(t, carry, whh=whh):
                h_prev, c_prev, acc = carry
                gates = xw_ref[t] + jnp.dot(h_prev, whh,
                                            preferred_element_type=jnp.float32)
                h_new, c_new = cell(gates, c_prev)
                return (h_new, c_new, acc + h_new)
            _, _, acc_out = lax.fori_loop(1, T, time_step, (h0, c0, h0),
                                          unroll=rec_unroll)
        else:
            seq_ref[0] = h0
            def time_step(t, carry, whh=whh):
                h_prev, c_prev = carry
                gates = xw_ref[t] + jnp.dot(h_prev, whh,
                                            preferred_element_type=jnp.float32)
                h_new, c_new = cell(gates, c_prev)
                seq_ref[t] = h_new              # input of the next layer
                return (h_new, c_new)
            lax.fori_loop(1, T, time_step, (h0, c0), unroll=rec_unroll)

    # Linear(32 -> 1) on the time-summed hidden state as a VPU/XLU lane reduce
    # instead of an MXU (Bt,32)x(32,1) dot in the epilogue.
    out_ref[...] = (jnp.sum(acc_out * wc_ref[...], axis=-1, keepdims=True)
                    + bc_ref[...])


def init_raw_params(key):
    """PyTorch-format parameters: per-layer w_ih (4H,in), w_hh (4H,H),
    b_ih/b_hh (4H,) in torch gate order (i, f, g, o), plus classifier."""
    H, L = LSTM_HIDDEN, LSTM_LAYER
    k = 1.0 / (H ** 0.5)
    keys = jax.random.split(key, 4 * L + 2)
    layers = []
    for l in range(L):
        in_dim = VOCAB_SIZE if l == 0 else H
        k0, k1, k2, k3 = keys[4 * l:4 * l + 4]
        layers.append(dict(
            w_ih=jax.random.uniform(k0, (4 * H, in_dim), jnp.float32, -k, k),
            w_hh=jax.random.uniform(k1, (4 * H, H), jnp.float32, -k, k),
            b_ih=jax.random.uniform(k2, (4 * H,), jnp.float32, -k, k),
            b_hh=jax.random.uniform(k3, (4 * H,), jnp.float32, -k, k)))
    w_cls = jax.random.uniform(keys[-2], (1, H), jnp.float32, -k, k)
    b_cls = jax.random.uniform(keys[-1], (1,), jnp.float32, -k, k)
    return layers, w_cls, b_cls


def pack_params(layers, w_cls, b_cls):
    """Torch-format params -> kernel layout:
      - layer-0 input columns zero-padded 6 -> IN_PAD (identical math), kept as
        a separate small (IN_PAD, 4H) table,
      - gate rows permuted (i, f, g, o) -> (i, f, o, g) so the sigmoid is one
        contiguous 3H slice,
      - transposed to right-multiply form, b_ih + b_hh fused."""
    H = LSTM_HIDDEN

    def reorder(w):  # operates on the leading 4H axis
        return jnp.concatenate([w[0:2 * H], w[3 * H:4 * H], w[2 * H:3 * H]],
                               axis=0)

    w_ih0 = layers[0]["w_ih"]
    in_dim = w_ih0.shape[1]
    wih0 = jnp.zeros((4 * H, IN_PAD), jnp.float32).at[:, :in_dim].set(w_ih0)
    wih0 = reorder(wih0).T                                    # (IN_PAD, 4H)

    wih_list, whh_list, b_list = [], [], []
    for li, lyr in enumerate(layers):
        if li > 0:
            wih_list.append(reorder(lyr["w_ih"]).T)           # (H, 4H)
        whh_list.append(reorder(lyr["w_hh"]).T)               # (H, 4H)
        b_list.append(reorder(lyr["b_ih"] + lyr["b_hh"])[None, :])
    return {
        "wih0": wih0,                   # (IN_PAD, 4H)
        "wih":  jnp.stack(wih_list),    # (L-1, H, 4H)
        "whh":  jnp.stack(whh_list),    # (L, H, 4H)
        "b":    jnp.stack(b_list),      # (L, 1, 4H)
        "wc":   w_cls,                  # (1, H)
        "bc":   b_cls[None, :],         # (1, 1)
    }


def cpg_predictor_forward(x, params, *, b_tile=None):
    """x: (B, T, VOCAB_SIZE) float32 -> logits (B,).  Matches
    CpGPredictor.forward for a batch of equal-length sequences."""
    B, T, V = x.shape
    H, L, G, F0 = LSTM_HIDDEN, LSTM_LAYER, 4 * LSTM_HIDDEN, IN_PAD

    # --- per-generation VMEM / tile budgeting --------------------------------
    phys = _vmem_capacity_bytes()              # 64 MiB v7x, 128 MiB v5e/v6e
    budget = int(phys * 0.75)
    # resident weight bytes (x2 for BlockSpec double buffering)
    w_bytes = 2 * 4 * (F0 * G + (L - 1) * H * G + L * H * G + L * G + H + 1)
    # per batch row: 2x input block (double-buffered) + seq scratch + xw scratch
    per_b = 4 * T * (2 * F0 + H + G)

    if b_tile is None:
        max_bt = (budget - w_bytes - (2 << 20)) // max(per_b, 1)
        max_bt = max(8, (max_bt // 8) * 8)
        b_pad8 = _round_up(B, 8)
        # Produce >= 2 batch tiles whenever B permits so both v7x TCs get work.
        want = _round_up(-(-b_pad8 // 2), 8) if b_pad8 >= 16 else b_pad8
        b_tile = max(8, min(want, 128, max_bt))
    else:
        b_tile = max(8, _round_up(b_tile, 8))
    b_pad = _round_up(max(B, b_tile), b_tile)
    n_tiles = b_pad // b_tile

    req = per_b * b_tile + w_bytes + 2 * 4 * b_tile
    vmem_limit = int(min(phys * 0.9, max(32 << 20, req + (8 << 20))))

    # Feature-pad 6 -> 8 only (zero weight rows keep the math identical),
    # batch-pad to the tile boundary, then go time-major (T, B, F0).
    x_pad = jnp.zeros((b_pad, T, F0), jnp.float32)
    x_pad = x_pad.at[:B, :, :V].set(x.astype(jnp.float32))
    x_tm = jnp.transpose(x_pad, (1, 0, 2))          # (T, b_pad, F0)

    out = pl.pallas_call(
        _lstm_sum_classifier_kernel,
        out_shape=jax.ShapeDtypeStruct((b_pad, 1), jnp.float32),
        grid=(n_tiles,),
        in_specs=[
            pl.BlockSpec((T, b_tile, F0), lambda i: (0, i, 0)),
            pl.BlockSpec((F0, G), lambda i: (0, 0)),
            pl.BlockSpec((L - 1, H, G), lambda i: (0, 0, 0)),
            pl.BlockSpec((L, H, G), lambda i: (0, 0, 0)),
            pl.BlockSpec((L, 1, G), lambda i: (0, 0, 0)),
            pl.BlockSpec((1, H), lambda i: (0, 0)),
            pl.BlockSpec((1, 1), lambda i: (0, 0)),
        ],
        out_specs=pl.BlockSpec((b_tile, 1), lambda i: (i, 0)),
        scratch_shapes=[
            pltpu.VMEM((T, b_tile, H), jnp.float32),   # inter-layer sequence buffer
            pltpu.VMEM((T, b_tile, G), jnp.float32),   # hoisted x@Wih + bias buffer
        ],
        compiler_params=pltpu.CompilerParams(
            dimension_semantics=("parallel",),         # batch tiles -> both TCs on v7x
            vmem_limit_bytes=vmem_limit,
        ),
    )(x_tm, params["wih0"], params["wih"], params["whh"],
      params["b"], params["wc"], params["bc"])

    return out[:B, 0]                                  # .squeeze(-1), drop padding


def reference_forward(x, layers, w_cls, b_cls):
    """Pure-JAX reference in the original PyTorch gate order (i, f, g, o)."""
    H = LSTM_HIDDEN
    B, T, _ = x.shape
    seq = x.astype(jnp.float32)
    for lyr in layers:
        w_ih, w_hh = lyr["w_ih"], lyr["w_hh"]
        b = lyr["b_ih"] + lyr["b_hh"]
        h = jnp.zeros((B, H), jnp.float32)
        c = jnp.zeros((B, H), jnp.float32)
        outs = []
        for t in range(T):
            g = seq[:, t] @ w_ih.T + h @ w_hh.T + b
            i_g = jax.nn.sigmoid(g[:, 0:H])
            f_g = jax.nn.sigmoid(g[:, H:2 * H])
            g_g = jnp.tanh(g[:, 2 * H:3 * H])
            o_g = jax.nn.sigmoid(g[:, 3 * H:4 * H])
            c = f_g * c + i_g * g_g
            h = o_g * jnp.tanh(c)
            outs.append(h)
        seq = jnp.stack(outs, axis=1)
    enc_sum = jnp.sum(seq, axis=1)
    return (enc_sum @ w_cls.T + b_cls)[:, 0]


if __name__ == "__main__":
    key = jax.random.PRNGKey(0)
    pkey, xkey = jax.random.split(key)
    layers, w_cls, b_cls = init_raw_params(pkey)
    params = pack_params(layers, w_cls, b_cls)

    B, T = 2, 8
    ids = jax.random.randint(xkey, (B, T), 0, VOCAB_SIZE)
    x = jax.nn.one_hot(ids, VOCAB_SIZE, dtype=jnp.float32)   # (B, T, 6)

    logits = cpg_predictor_forward(x, params)
    jax.block_until_ready(logits)
    assert logits.shape == (B,) and logits.dtype == jnp.float32

    # Reference check guards gate permutation, padding, bias fusion, xW hoist,
    # peeled t==0 step, carry-summed last layer, and the tanh-sigmoid identity.
    ref = reference_forward(x, layers, w_cls, b_cls)
    assert jnp.allclose(logits, ref, rtol=1e-3, atol=1e-3), (logits, ref)

    print("KERNEL_OK")
</pallas_src>

<mosaic_0001>
module attributes {stable_mosaic.version = 11 : i64} {
  func.func @_lstm_sum_classifier_kernel(%arg0: i32, %arg1: memref<8x8x8xf32, #tpu.memory_space<vmem>>, %arg2: memref<8x128xf32, #tpu.memory_space<vmem>>, %arg3: memref<3x32x128xf32, #tpu.memory_space<vmem>>, %arg4: memref<4x32x128xf32, #tpu.memory_space<vmem>>, %arg5: memref<4x1x128xf32, #tpu.memory_space<vmem>>, %arg6: memref<1x32xf32, #tpu.memory_space<vmem>>, %arg7: memref<1x1xf32, #tpu.memory_space<vmem>>, %arg8: memref<8x1xf32, #tpu.memory_space<vmem>>, %arg9: memref<8x8x32xf32, #tpu.memory_space<vmem>>, %arg10: memref<8x8x128xf32, #tpu.memory_space<vmem>>) attributes {dimension_semantics = [#tpu.dimension_semantics<parallel>], iteration_bounds = array<i64: 1>, scalar_prefetch = 0 : i64, scratch_operands = 2 : i64, tpu.core_type = #tpu.core_type<tc>, window_params = [{transform_indices = @transform_0, window_bounds = array<i64: 8, 8, 8>}, {pipeline_mode = #tpu.pipeline_mode<synchronous>, transform_indices = @transform_1, window_bounds = array<i64: 8, 128>}, {pipeline_mode = #tpu.pipeline_mode<synchronous>, transform_indices = @transform_2, window_bounds = array<i64: 3, 32, 128>}, {pipeline_mode = #tpu.pipeline_mode<synchronous>, transform_indices = @transform_3, window_bounds = array<i64: 4, 32, 128>}, {pipeline_mode = #tpu.pipeline_mode<synchronous>, transform_indices = @transform_4, window_bounds = array<i64: 4, 1, 128>}, {pipeline_mode = #tpu.pipeline_mode<synchronous>, transform_indices = @transform_5, window_bounds = array<i64: 1, 32>}, {pipeline_mode = #tpu.pipeline_mode<synchronous>, transform_indices = @transform_6, window_bounds = array<i64: 1, 1>}, {transform_indices = @transform_7, window_bounds = array<i64: 8, 1>}]} {
    %c0 = arith.constant 0 : index
    %c0_0 = arith.constant 0 : index
    %0 = vector.load %arg2[%c0, %c0_0] : memref<8x128xf32, #tpu.memory_space<vmem>>, vector<8x128xf32>
    %c0_1 = arith.constant 0 : index
    %c0_2 = arith.constant 0 : index
    %c0_3 = arith.constant 0 : index
    %1 = vector.load %arg4[%c0_1, %c0_2, %c0_3] : memref<4x32x128xf32, #tpu.memory_space<vmem>>, vector<1x32x128xf32>
    %2 = vector.shape_cast %1 : vector<1x32x128xf32> to vector<32x128xf32>
    %c0_4 = arith.constant 0 : index
    %c0_5 = arith.constant 0 : index
    %c0_6 = arith.constant 0 : index
    %3 = vector.load %arg5[%c0_4, %c0_5, %c0_6] : memref<4x1x128xf32, #tpu.memory_space<vmem>>, vector<1x1x128xf32>
    %4 = vector.shape_cast %3 : vector<1x1x128xf32> to vector<1x128xf32>
    %5 = vector.shape_cast %4 : vector<1x128xf32> to vector<1x128xf32>
    %6 = vector.broadcast %5 : vector<1x128xf32> to vector<8x128xf32>
    %c0_i32 = arith.constant 0 : i32
    %7 = arith.index_cast %c0_i32 : i32 to index
    %c0_7 = arith.constant 0 : index
    %c0_8 = arith.constant 0 : index
    %8 = vector.load %arg1[%7, %c0_7, %c0_8] : memref<8x8x8xf32, #tpu.memory_space<vmem>>, vector<1x8x8xf32>
    %9 = vector.shape_cast %8 : vector<1x8x8xf32> to vector<8x8xf32>
    %cst = arith.constant dense<0.000000e+00> : vector<8x128xf32>
    %10 = tpu.matmul %9, %0, %cst {dimension_numbers = #tpu.dot_dimension_numbers<[1], [0], [0], [1], [0, 0, 1, 1], [], []>} : vector<8x8xf32>, vector<8x128xf32>, vector<8x128xf32> -> vector<8x128xf32>
    %11 = arith.addf %10, %6 : vector<8x128xf32>
    %12 = arith.index_cast %c0_i32 : i32 to index
    %c0_9 = arith.constant 0 : index
    %c0_10 = arith.constant 0 : index
    %13 = vector.load %arg10[%12, %c0_9, %c0_10] : memref<8x8x128xf32, #tpu.memory_space<vmem>>, vector<1x8x128xf32>
    %14 = vector.shape_cast %13 : vector<1x8x128xf32> to vector<8x128xf32>
    %15 = vector.shape_cast %11 : vector<8x128xf32> to vector<1x8x128xf32>
    tpu.vector_store %arg10[%12, %c0_9, %c0_10], %15 {strides = array<i32>} : memref<8x8x128xf32, #tpu.memory_space<vmem>>, vector<1x8x128xf32>,
    %c1_i32 = arith.constant 1 : i32
    %16 = arith.index_cast %c1_i32 : i32 to index
    %c0_11 = arith.constant 0 : index
    %c0_12 = arith.constant 0 : index
    %17 = vector.load %arg1[%16, %c0_11, %c0_12] : memref<8x8x8xf32, #tpu.memory_space<vmem>>, vector<1x8x8xf32>
    %18 = vector.shape_cast %17 : vector<1x8x8xf32> to vector<8x8xf32>
    %cst_13 = arith.constant dense<0.000000e+00> : vector<8x128xf32>
    %19 = tpu.matmul %18, %0, %cst_13 {dimension_numbers = #tpu.dot_dimension_numbers<[1], [0], [0], [1], [0, 0, 1, 1], [], []>} : vector<8x8xf32>, vector<8x128xf32>, vector<8x128xf32> -> vector<8x128xf32>
    %20 = arith.addf %19, %6 : vector<8x128xf32>
    %21 = arith.index_cast %c1_i32 : i32 to index
    %c0_14 = arith.constant 0 : index
    %c0_15 = arith.constant 0 : index
    %22 = vector.load %arg10[%21, %c0_14, %c0_15] : memref<8x8x128xf32, #tpu.memory_space<vmem>>, vector<1x8x128xf32>
    %23 = vector.shape_cast %22 : vector<1x8x128xf32> to vector<8x128xf32>
    %24 = vector.shape_cast %20 : vector<8x128xf32> to vector<1x8x128xf32>
    tpu.vector_store %arg10[%21, %c0_14, %c0_15], %24 {strides = array<i32>} : memref<8x8x128xf32, #tpu.memory_space<vmem>>, vector<1x8x128xf32>,
    %c2_i32 = arith.constant 2 : i32
    %25 = arith.index_cast %c2_i32 : i32 to index
    %c0_16 = arith.constant 0 : index
    %c0_17 = arith.constant 0 : index
    %26 = vector.load %arg1[%25, %c0_16, %c0_17] : memref<8x8x8xf32, #tpu.memory_space<vmem>>, vector<1x8x8xf32>
    %27 = vector.shape_cast %26 : vector<1x8x8xf32> to vector<8x8xf32>
    %cst_18 = arith.constant dense<0.000000e+00> : vector<8x128xf32>
    %28 = tpu.matmul %27, %0, %cst_18 {dimension_numbers = #tpu.dot_dimension_numbers<[1], [0], [0], [1], [0, 0, 1, 1], [], []>} : vector<8x8xf32>, vector<8x128xf32>, vector<8x128xf32> -> vector<8x128xf32>
    %29 = arith.addf %28, %6 : vector<8x128xf32>
    %30 = arith.index_cast %c2_i32 : i32 to index
    %c0_19 = arith.constant 0 : index
    %c0_20 = arith.constant 0 : index
    %31 = vector.load %arg10[%30, %c0_19, %c0_20] : memref<8x8x128xf32, #tpu.memory_space<vmem>>, vector<1x8x128xf32>
    %32 = vector.shape_cast %31 : vector<1x8x128xf32> to vector<8x128xf32>
    %33 = vector.shape_cast %29 : vector<8x128xf32> to vector<1x8x128xf32>
    tpu.vector_store %arg10[%30, %c0_19, %c0_20], %33 {strides = array<i32>} : memref<8x8x128xf32, #tpu.memory_space<vmem>>, vector<1x8x128xf32>,
    %c3_i32 = arith.constant 3 : i32
    %34 = arith.index_cast %c3_i32 : i32 to index
    %c0_21 = arith.constant 0 : index
    %c0_22 = arith.constant 0 : index
    %35 = vector.load %arg1[%34, %c0_21, %c0_22] : memref<8x8x8xf32, #tpu.memory_space<vmem>>, vector<1x8x8xf32>
    %36 = vector.shape_cast %35 : vector<1x8x8xf32> to vector<8x8xf32>
    %cst_23 = arith.constant dense<0.000000e+00> : vector<8x128xf32>
    %37 = tpu.matmul %36, %0, %cst_23 {dimension_numbers = #tpu.dot_dimension_numbers<[1], [0], [0], [1], [0, 0, 1, 1], [], []>} : vector<8x8xf32>, vector<8x128xf32>, vector<8x128xf32> -> vector<8x128xf32>
    %38 = arith.addf %37, %6 : vector<8x128xf32>
    %39 = arith.index_cast %c3_i32 : i32 to index
    %c0_24 = arith.constant 0 : index
    %c0_25 = arith.constant 0 : index
    %40 = vector.load %arg10[%39, %c0_24, %c0_25] : memref<8x8x128xf32, #tpu.memory_space<vmem>>, vector<1x8x128xf32>
    %41 = vector.shape_cast %40 : vector<1x8x128xf32> to vector<8x128xf32>
    %42 = vector.shape_cast %38 : vector<8x128xf32> to vector<1x8x128xf32>
    tpu.vector_store %arg10[%39, %c0_24, %c0_25], %42 {strides = array<i32>} : memref<8x8x128xf32, #tpu.memory_space<vmem>>, vector<1x8x128xf32>,
    %c4_i32 = arith.constant 4 : i32
    %43 = arith.index_cast %c4_i32 : i32 to index
    %c0_26 = arith.constant 0 : index
    %c0_27 = arith.constant 0 : index
    %44 = vector.load %arg1[%43, %c0_26, %c0_27] : memref<8x8x8xf32, #tpu.memory_space<vmem>>, vector<1x8x8xf32>
    %45 = vector.shape_cast %44 : vector<1x8x8xf32> to vector<8x8xf32>
    %cst_28 = arith.constant dense<0.000000e+00> : vector<8x128xf32>
    %46 = tpu.matmul %45, %0, %cst_28 {dimension_numbers = #tpu.dot_dimension_numbers<[1], [0], [0], [1], [0, 0, 1, 1], [], []>} : vector<8x8xf32>, vector<8x128xf32>, vector<8x128xf32> -> vector<8x128xf32>
    %47 = arith.addf %46, %6 : vector<8x128xf32>
    %48 = arith.index_cast %c4_i32 : i32 to index
    %c0_29 = arith.constant 0 : index
    %c0_30 = arith.constant 0 : index
    %49 = vector.load %arg10[%48, %c0_29, %c0_30] : memref<8x8x128xf32, #tpu.memory_space<vmem>>, vector<1x8x128xf32>
    %50 = vector.shape_cast %49 : vector<1x8x128xf32> to vector<8x128xf32>
    %51 = vector.shape_cast %47 : vector<8x128xf32> to vector<1x8x128xf32>
    tpu.vector_store %arg10[%48, %c0_29, %c0_30], %51 {strides = array<i32>} : memref<8x8x128xf32, #tpu.memory_space<vmem>>, vector<1x8x128xf32>,
    %c5_i32 = arith.constant 5 : i32
    %52 = arith.index_cast %c5_i32 : i32 to index
    %c0_31 = arith.constant 0 : index
    %c0_32 = arith.constant 0 : index
    %53 = vector.load %arg1[%52, %c0_31, %c0_32] : memref<8x8x8xf32, #tpu.memory_space<vmem>>, vector<1x8x8xf32>
    %54 = vector.shape_cast %53 : vector<1x8x8xf32> to vector<8x8xf32>
    %cst_33 = arith.constant dense<0.000000e+00> : vector<8x128xf32>
    %55 = tpu.matmul %54, %0, %cst_33 {dimension_numbers = #tpu.dot_dimension_numbers<[1], [0], [0], [1], [0, 0, 1, 1], [], []>} : vector<8x8xf32>, vector<8x128xf32>, vector<8x128xf32> -> vector<8x128xf32>
    %56 = arith.addf %55, %6 : vector<8x128xf32>
    %57 = arith.index_cast %c5_i32 : i32 to index
    %c0_34 = arith.constant 0 : index
    %c0_35 = arith.constant 0 : index
    %58 = vector.load %arg10[%57, %c0_34, %c0_35] : memref<8x8x128xf32, #tpu.memory_space<vmem>>, vector<1x8x128xf32>
    %59 = vector.shape_cast %58 : vector<1x8x128xf32> to vector<8x128xf32>
    %60 = vector.shape_cast %56 : vector<8x128xf32> to vector<1x8x128xf32>
    tpu.vector_store %arg10[%57, %c0_34, %c0_35], %60 {strides = array<i32>} : memref<8x8x128xf32, #tpu.memory_space<vmem>>, vector<1x8x128xf32>,
    %c6_i32 = arith.constant 6 : i32
    %61 = arith.index_cast %c6_i32 : i32 to index
    %c0_36 = arith.constant 0 : index
    %c0_37 = arith.constant 0 : index
    %62 = vector.load %arg1[%61, %c0_36, %c0_37] : memref<8x8x8xf32, #tpu.memory_space<vmem>>, vector<1x8x8xf32>
    %63 = vector.shape_cast %62 : vector<1x8x8xf32> to vector<8x8xf32>
    %cst_38 = arith.constant dense<0.000000e+00> : vector<8x128xf32>
    %64 = tpu.matmul %63, %0, %cst_38 {dimension_numbers = #tpu.dot_dimension_numbers<[1], [0], [0], [1], [0, 0, 1, 1], [], []>} : vector<8x8xf32>, vector<8x128xf32>, vector<8x128xf32> -> vector<8x128xf32>
    %65 = arith.addf %64, %6 : vector<8x128xf32>
    %66 = arith.index_cast %c6_i32 : i32 to index
    %c0_39 = arith.constant 0 : index
    %c0_40 = arith.constant 0 : index
    %67 = vector.load %arg10[%66, %c0_39, %c0_40] : memref<8x8x128xf32, #tpu.memory_space<vmem>>, vector<1x8x128xf32>
    %68 = vector.shape_cast %67 : vector<1x8x128xf32> to vector<8x128xf32>
    %69 = vector.shape_cast %65 : vector<8x128xf32> to vector<1x8x128xf32>
    tpu.vector_store %arg10[%66, %c0_39, %c0_40], %69 {strides = array<i32>} : memref<8x8x128xf32, #tpu.memory_space<vmem>>, vector<1x8x128xf32>,
    %c7_i32 = arith.constant 7 : i32
    %70 = arith.index_cast %c7_i32 : i32 to index
    %c0_41 = arith.constant 0 : index
    %c0_42 = arith.constant 0 : index
    %71 = vector.load %arg1[%70, %c0_41, %c0_42] : memref<8x8x8xf32, #tpu.memory_space<vmem>>, vector<1x8x8xf32>
    %72 = vector.shape_cast %71 : vector<1x8x8xf32> to vector<8x8xf32>
    %cst_43 = arith.constant dense<0.000000e+00> : vector<8x128xf32>
    %73 = tpu.matmul %72, %0, %cst_43 {dimension_numbers = #tpu.dot_dimension_numbers<[1], [0], [0], [1], [0, 0, 1, 1], [], []>} : vector<8x8xf32>, vector<8x128xf32>, vector<8x128xf32> -> vector<8x128xf32>
    %74 = arith.addf %73, %6 : vector<8x128xf32>
    %75 = arith.index_cast %c7_i32 : i32 to index
    %c0_44 = arith.constant 0 : index
    %c0_45 = arith.constant 0 : index
    %76 = vector.load %arg10[%75, %c0_44, %c0_45] : memref<8x8x128xf32, #tpu.memory_space<vmem>>, vector<1x8x128xf32>
    %77 = vector.shape_cast %76 : vector<1x8x128xf32> to vector<8x128xf32>
    %78 = vector.shape_cast %74 : vector<8x128xf32> to vector<1x8x128xf32>
    tpu.vector_store %arg10[%75, %c0_44, %c0_45], %78 {strides = array<i32>} : memref<8x8x128xf32, #tpu.memory_space<vmem>>, vector<1x8x128xf32>,
    %c8_i32 = arith.constant 8 : i32
    %c0_46 = arith.constant 0 : index
    %c0_47 = arith.constant 0 : index
    %c0_48 = arith.constant 0 : index
    %79 = vector.load %arg10[%c0_46, %c0_47, %c0_48] : memref<8x8x128xf32, #tpu.memory_space<vmem>>, vector<1x8x128xf32>
    %80 = vector.shape_cast %79 : vector<1x8x128xf32> to vector<8x128xf32>
    %cst_49 = arith.constant 0.000000e+00 : f32
    %81 = vector.broadcast %cst_49 : f32 to vector<8x32xf32>
    %82 = vector.extract_strided_slice %80 {offsets = [0, 0], sizes = [8, 96], strides = [1, 1]} : vector<8x128xf32> to vector<8x96xf32>
    %cst_50 = arith.constant 5.000000e-01 : f32
    %83 = vector.broadcast %cst_50 : f32 to vector<8x96xf32>
    %84 = arith.mulf %83, %82 : vector<8x96xf32>
    %85 = math.tanh %84 : vector<8x96xf32>
    %cst_51 = arith.constant 5.000000e-01 : f32
    %86 = vector.broadcast %cst_51 : f32 to vector<8x96xf32>
    %87 = arith.mulf %86, %85 : vector<8x96xf32>
    %cst_52 = arith.constant 5.000000e-01 : f32
    %88 = vector.broadcast %cst_52 : f32 to vector<8x96xf32>
    %89 = arith.addf %87, %88 : vector<8x96xf32>
    %90 = vector.extract_strided_slice %80 {offsets = [0, 96], sizes = [8, 32], strides = [1, 1]} : vector<8x128xf32> to vector<8x32xf32>
    %91 = math.tanh %90 : vector<8x32xf32>
    %92 = vector.extract_strided_slice %89 {offsets = [0, 32], sizes = [8, 32], strides = [1, 1]} : vector<8x96xf32> to vector<8x32xf32>
    %93 = arith.mulf %92, %81 : vector<8x32xf32>
    %94 = vector.extract_strided_slice %89 {offsets = [0, 0], sizes = [8, 32], strides = [1, 1]} : vector<8x96xf32> to vector<8x32xf32>
    %95 = arith.mulf %94, %91 : vector<8x32xf32>
    %96 = arith.addf %93, %95 : vector<8x32xf32>
    %97 = vector.extract_strided_slice %89 {offsets = [0, 64], sizes = [8, 32], strides = [1, 1]} : vector<8x96xf32> to vector<8x32xf32>
    %98 = math.tanh %96 : vector<8x32xf32>
    %99 = arith.mulf %97, %98 : vector<8x32xf32>
    %c0_53 = arith.constant 0 : index
    %c0_54 = arith.constant 0 : index
    %c0_55 = arith.constant 0 : index
    %100 = vector.load %arg9[%c0_53, %c0_54, %c0_55] : memref<8x8x32xf32, #tpu.memory_space<vmem>>, vector<1x8x32xf32>
    %101 = vector.shape_cast %100 : vector<1x8x32xf32> to vector<8x32xf32>
    %102 = vector.shape_cast %99 : vector<8x32xf32> to vector<1x8x32xf32>
    tpu.vector_store %arg9[%c0_53, %c0_54, %c0_55], %102 {strides = array<i32>} : memref<8x8x32xf32, #tpu.memory_space<vmem>>, vector<1x8x32xf32>,
    %c1_i32_56 = arith.constant 1 : i32
    %103 = arith.index_cast %c1_i32_56 : i32 to index
    %c0_57 = arith.constant 0 : index
    %c0_58 = arith.constant 0 : index
    %104 = vector.load %arg10[%103, %c0_57, %c0_58] : memref<8x8x128xf32, #tpu.memory_space<vmem>>, vector<1x8x128xf32>
    %105 = vector.shape_cast %104 : vector<1x8x128xf32> to vector<8x128xf32>
    %cst_59 = arith.constant dense<0.000000e+00> : vector<8x128xf32>
    %106 = tpu.matmul %99, %2, %cst_59 {dimension_numbers = #tpu.dot_dimension_numbers<[1], [0], [0], [1], [0, 0, 1, 1], [], []>} : vector<8x32xf32>, vector<32x128xf32>, vector<8x128xf32> -> vector<8x128xf32>
    %107 = arith.addf %105, %106 : vector<8x128xf32>
    %108 = vector.extract_strided_slice %107 {offsets = [0, 0], sizes = [8, 96], strides = [1, 1]} : vector<8x128xf32> to vector<8x96xf32>
    %cst_60 = arith.constant 5.000000e-01 : f32
    %109 = vector.broadcast %cst_60 : f32 to vector<8x96xf32>
    %110 = arith.mulf %109, %108 : vector<8x96xf32>
    %111 = math.tanh %110 : vector<8x96xf32>
    %cst_61 = arith.constant 5.000000e-01 : f32
    %112 = vector.broadcast %cst_61 : f32 to vector<8x96xf32>
    %113 = arith.mulf %112, %111 : vector<8x96xf32>
    %cst_62 = arith.constant 5.000000e-01 : f32
    %114 = vector.broadcast %cst_62 : f32 to vector<8x96xf32>
    %115 = arith.addf %113, %114 : vector<8x96xf32>
    %116 = vector.extract_strided_slice %107 {offsets = [0, 96], sizes = [8, 32], strides = [1, 1]} : vector<8x128xf32> to vector<8x32xf32>
    %117 = math.tanh %116 : vector<8x32xf32>
    %118 = vector.extract_strided_slice %115 {offsets = [0, 32], sizes = [8, 32], strides = [1, 1]} : vector<8x96xf32> to vector<8x32xf32>
    %119 = arith.mulf %118, %96 : vector<8x32xf32>
    %120 = vector.extract_strided_slice %115 {offsets = [0, 0], sizes = [8, 32], strides = [1, 1]} : vector<8x96xf32> to vector<8x32xf32>
    %121 = arith.mulf %120, %117 : vector<8x32xf32>
    %122 = arith.addf %119, %121 : vector<8x32xf32>
    %123 = vector.extract_strided_slice %115 {offsets = [0, 64], sizes = [8, 32], strides = [1, 1]} : vector<8x96xf32> to vector<8x32xf32>
    %124 = math.tanh %122 : vector<8x32xf32>
    %125 = arith.mulf %123, %124 : vector<8x32xf32>
    %126 = arith.index_cast %c1_i32_56 : i32 to index
    %c0_63 = arith.constant 0 : index
    %c0_64 = arith.constant 0 : index
    %127 = vector.load %arg9[%126, %c0_63, %c0_64] : memref<8x8x32xf32, #tpu.memory_space<vmem>>, vector<1x8x32xf32>
    %128 = vector.shape_cast %127 : vector<1x8x32xf32> to vector<8x32xf32>
    %129 = vector.shape_cast %125 : vector<8x32xf32> to vector<1x8x32xf32>
    tpu.vector_store %arg9[%126, %c0_63, %c0_64], %129 {strides = array<i32>} : memref<8x8x32xf32, #tpu.memory_space<vmem>>, vector<1x8x32xf32>,
    %c2_i32_65 = arith.constant 2 : i32
    %130 = arith.index_cast %c2_i32_65 : i32 to index
    %c0_66 = arith.constant 0 : index
    %c0_67 = arith.constant 0 : index
    %131 = vector.load %arg10[%130, %c0_66, %c0_67] : memref<8x8x128xf32, #tpu.memory_space<vmem>>, vector<1x8x128xf32>
    %132 = vector.shape_cast %131 : vector<1x8x128xf32> to vector<8x128xf32>
    %cst_68 = arith.constant dense<0.000000e+00> : vector<8x128xf32>
    %133 = tpu.matmul %125, %2, %cst_68 {dimension_numbers = #tpu.dot_dimension_numbers<[1], [0], [0], [1], [0, 0, 1, 1], [], []>} : vector<8x32xf32>, vector<32x128xf32>, vector<8x128xf32> -> vector<8x128xf32>
    %134 = arith.addf %132, %133 : vector<8x128xf32>
    %135 = vector.extract_strided_slice %134 {offsets = [0, 0], sizes = [8, 96], strides = [1, 1]} : vector<8x128xf32> to vector<8x96xf32>
    %cst_69 = arith.constant 5.000000e-01 : f32
    %136 = vector.broadcast %cst_69 : f32 to vector<8x96xf32>
    %137 = arith.mulf %136, %135 : vector<8x96xf32>
    %138 = math.tanh %137 : vector<8x96xf32>
    %cst_70 = arith.constant 5.000000e-01 : f32
    %139 = vector.broadcast %cst_70 : f32 to vector<8x96xf32>
    %140 = arith.mulf %139, %138 : vector<8x96xf32>
    %cst_71 = arith.constant 5.000000e-01 : f32
    %141 = vector.broadcast %cst_71 : f32 to vector<8x96xf32>
    %142 = arith.addf %140, %141 : vector<8x96xf32>
    %143 = vector.extract_strided_slice %134 {offsets = [0, 96], sizes = [8, 32], strides = [1, 1]} : vector<8x128xf32> to vector<8x32xf32>
    %144 = math.tanh %143 : vector<8x32xf32>
    %145 = vector.extract_strided_slice %142 {offsets = [0, 32], sizes = [8, 32], strides = [1, 1]} : vector<8x96xf32> to vector<8x32xf32>
    %146 = arith.mulf %145, %122 : vector<8x32xf32>
    %147 = vector.extract_strided_slice %142 {offsets = [0, 0], sizes = [8, 32], strides = [1, 1]} : vector<8x96xf32> to vector<8x32xf32>
    %148 = arith.mulf %147, %144 : vector<8x32xf32>
    %149 = arith.addf %146, %148 : vector<8x32xf32>
    %150 = vector.extract_strided_slice %142 {offsets = [0, 64], sizes = [8, 32], strides = [1, 1]} : vector<8x96xf32> to vector<8x32xf32>
    %151 = math.tanh %149 : vector<8x32xf32>
    %152 = arith.mulf %150, %151 : vector<8x32xf32>
    %153 = arith.index_cast %c2_i32_65 : i32 to index
    %c0_72 = arith.constant 0 : index
    %c0_73 = arith.constant 0 : index
    %154 = vector.load %arg9[%153, %c0_72, %c0_73] : memref<8x8x32xf32, #tpu.memory_space<vmem>>, vector<1x8x32xf32>
    %155 = vector.shape_cast %154 : vector<1x8x32xf32> to vector<8x32xf32>
    %156 = vector.shape_cast %152 : vector<8x32xf32> to vector<1x8x32xf32>
    tpu.vector_store %arg9[%153, %c0_72, %c0_73], %156 {strides = array<i32>} : memref<8x8x32xf32, #tpu.memory_space<vmem>>, vector<1x8x32xf32>,
    %c3_i32_74 = arith.constant 3 : i32
    %157 = arith.index_cast %c3_i32_74 : i32 to index
    %c0_75 = arith.constant 0 : index
    %c0_76 = arith.constant 0 : index
    %158 = vector.load %arg10[%157, %c0_75, %c0_76] : memref<8x8x128xf32, #tpu.memory_space<vmem>>, vector<1x8x128xf32>
    %159 = vector.shape_cast %158 : vector<1x8x128xf32> to vector<8x128xf32>
    %cst_77 = arith.constant dense<0.000000e+00> : vector<8x128xf32>
    %160 = tpu.matmul %152, %2, %cst_77 {dimension_numbers = #tpu.dot_dimension_numbers<[1], [0], [0], [1], [0, 0, 1, 1], [], []>} : vector<8x32xf32>, vector<32x128xf32>, vector<8x128xf32> -> vector<8x128xf32>
    %161 = arith.addf %159, %160 : vector<8x128xf32>
    %162 = vector.extract_strided_slice %161 {offsets = [0, 0], sizes = [8, 96], strides = [1, 1]} : vector<8x128xf32> to vector<8x96xf32>
    %cst_78 = arith.constant 5.000000e-01 : f32
    %163 = vector.broadcast %cst_78 : f32 to vector<8x96xf32>
    %164 = arith.mulf %163, %162 : vector<8x96xf32>
    %165 = math.tanh %164 : vector<8x96xf32>
    %cst_79 = arith.constant 5.000000e-01 : f32
    %166 = vector.broadcast %cst_79 : f32 to vector<8x96xf32>
    %167 = arith.mulf %166, %165 : vector<8x96xf32>
    %cst_80 = arith.constant 5.000000e-01 : f32
    %168 = vector.broadcast %cst_80 : f32 to vector<8x96xf32>
    %169 = arith.addf %167, %168 : vector<8x96xf32>
    %170 = vector.extract_strided_slice %161 {offsets = [0, 96], sizes = [8, 32], strides = [1, 1]} : vector<8x128xf32> to vector<8x32xf32>
    %171 = math.tanh %170 : vector<8x32xf32>
    %172 = vector.extract_strided_slice %169 {offsets = [0, 32], sizes = [8, 32], strides = [1, 1]} : vector<8x96xf32> to vector<8x32xf32>
    %173 = arith.mulf %172, %149 : vector<8x32xf32>
    %174 = vector.extract_strided_slice %169 {offsets = [0, 0], sizes = [8, 32], strides = [1, 1]} : vector<8x96xf32> to vector<8x32xf32>
    %175 = arith.mulf %174, %171 : vector<8x32xf32>
    %176 = arith.addf %173, %175 : vector<8x32xf32>
    %177 = vector.extract_strided_slice %169 {offsets = [0, 64], sizes = [8, 32], strides = [1, 1]} : vector<8x96xf32> to vector<8x32xf32>
    %178 = math.tanh %176 : vector<8x32xf32>
    %179 = arith.mulf %177, %178 : vector<8x32xf32>
    %180 = arith.index_cast %c3_i32_74 : i32 to index
    %c0_81 = arith.constant 0 : index
    %c0_82 = arith.constant 0 : index
    %181 = vector.load %arg9[%180, %c0_81, %c0_82] : memref<8x8x32xf32, #tpu.memory_space<vmem>>, vector<1x8x32xf32>
    %182 = vector.shape_cast %181 : vector<1x8x32xf32> to vector<8x32xf32>
    %183 = vector.shape_cast %179 : vector<8x32xf32> to vector<1x8x32xf32>
    tpu.vector_store %arg9[%180, %c0_81, %c0_82], %183 {strides = array<i32>} : memref<8x8x32xf32, #tpu.memory_space<vmem>>, vector<1x8x32xf32>,
    %c4_i32_83 = arith.constant 4 : i32
    %184 = arith.index_cast %c4_i32_83 : i32 to index
    %c0_84 = arith.constant 0 : index
    %c0_85 = arith.constant 0 : index
    %185 = vector.load %arg10[%184, %c0_84, %c0_85] : memref<8x8x128xf32, #tpu.memory_space<vmem>>, vector<1x8x128xf32>
    %186 = vector.shape_cast %185 : vector<1x8x128xf32> to vector<8x128xf32>
    %cst_86 = arith.constant dense<0.000000e+00> : vector<8x128xf32>
    %187 = tpu.matmul %179, %2, %cst_86 {dimension_numbers = #tpu.dot_dimension_numbers<[1], [0], [0], [1], [0, 0, 1, 1], [], []>} : vector<8x32xf32>, vector<32x128xf32>, vector<8x128xf32> -> vector<8x128xf32>
    %188 = arith.addf %186, %187 : vector<8x128xf32>
    %189 = vector.extract_strided_slice %188 {offsets = [0, 0], sizes = [8, 96], strides = [1, 1]} : vector<8x128xf32> to vector<8x96xf32>
    %cst_87 = arith.constant 5.000000e-01 : f32
    %190 = vector.broadcast %cst_87 : f32 to vector<8x96xf32>
    %191 = arith.mulf %190, %189 : vector<8x96xf32>
    %192 = math.tanh %191 : vector<8x96xf32>
    %cst_88 = arith.constant 5.000000e-01 : f32
    %193 = vector.broadcast %cst_88 : f32 to vector<8x96xf32>
    %194 = arith.mulf %193, %192 : vector<8x96xf32>
    %cst_89 = arith.constant 5.000000e-01 : f32
    %195 = vector.broadcast %cst_89 : f32 to vector<8x96xf32>
    %196 = arith.addf %194, %195 : vector<8x96xf32>
    %197 = vector.extract_strided_slice %188 {offsets = [0, 96], sizes = [8, 32], strides = [1, 1]} : vector<8x128xf32> to vector<8x32xf32>
    %198 = math.tanh %197 : vector<8x32xf32>
    %199 = vector.extract_strided_slice %196 {offsets = [0, 32], sizes = [8, 32], strides = [1, 1]} : vector<8x96xf32> to vector<8x32xf32>
    %200 = arith.mulf %199, %176 : vector<8x32xf32>
    %201 = vector.extract_strided_slice %196 {offsets = [0, 0], sizes = [8, 32], strides = [1, 1]} : vector<8x96xf32> to vector<8x32xf32>
    %202 = arith.mulf %201, %198 : vector<8x32xf32>
    %203 = arith.addf %200, %202 : vector<8x32xf32>
    %204 = vector.extract_strided_slice %196 {offsets = [0, 64], sizes = [8, 32], strides = [1, 1]} : vector<8x96xf32> to vector<8x32xf32>
    %205 = math.tanh %203 : vector<8x32xf32>
    %206 = arith.mulf %204, %205 : vector<8x32xf32>
    %207 = arith.index_cast %c4_i32_83 : i32 to index
    %c0_90 = arith.constant 0 : index
    %c0_91 = arith.constant 0 : index
    %208 = vector.load %arg9[%207, %c0_90, %c0_91] : memref<8x8x32xf32, #tpu.memory_space<vmem>>, vector<1x8x32xf32>
    %209 = vector.shape_cast %208 : vector<1x8x32xf32> to vector<8x32xf32>
    %210 = vector.shape_cast %206 : vector<8x32xf32> to vector<1x8x32xf32>
    tpu.vector_store %arg9[%207, %c0_90, %c0_91], %210 {strides = array<i32>} : memref<8x8x32xf32, #tpu.memory_space<vmem>>, vector<1x8x32xf32>,
    %c5_i32_92 = arith.constant 5 : i32
    %211 = arith.index_cast %c5_i32_92 : i32 to index
    %c0_93 = arith.constant 0 : index
    %c0_94 = arith.constant 0 : index
    %212 = vector.load %arg10[%211, %c0_93, %c0_94] : memref<8x8x128xf32, #tpu.memory_space<vmem>>, vector<1x8x128xf32>
    %213 = vector.shape_cast %212 : vector<1x8x128xf32> to vector<8x128xf32>
    %cst_95 = arith.constant dense<0.000000e+00> : vector<8x128xf32>
    %214 = tpu.matmul %206, %2, %cst_95 {dimension_numbers = #tpu.dot_dimension_numbers<[1], [0], [0], [1], [0, 0, 1, 1], [], []>} : vector<8x32xf32>, vector<32x128xf32>, vector<8x128xf32> -> vector<8x128xf32>
    %215 = arith.addf %213, %214 : vector<8x128xf32>
    %216 = vector.extract_strided_slice %215 {offsets = [0, 0], sizes = [8, 96], strides = [1, 1]} : vector<8x128xf32> to vector<8x96xf32>
    %cst_96 = arith.constant 5.000000e-01 : f32
    %217 = vector.broadcast %cst_96 : f32 to vector<8x96xf32>
    %218 = arith.mulf %217, %216 : vector<8x96xf32>
    %219 = math.tanh %218 : vector<8x96xf32>
    %cst_97 = arith.constant 5.000000e-01 : f32
    %220 = vector.broadcast %cst_97 : f32 to vector<8x96xf32>
    %221 = arith.mulf %220, %219 : vector<8x96xf32>
    %cst_98 = arith.constant 5.000000e-01 : f32
    %222 = vector.broadcast %cst_98 : f32 to vector<8x96xf32>
    %223 = arith.addf %221, %222 : vector<8x96xf32>
    %224 = vector.extract_strided_slice %215 {offsets = [0, 96], sizes = [8, 32], strides = [1, 1]} : vector<8x128xf32> to vector<8x32xf32>
    %225 = math.tanh %224 : vector<8x32xf32>
    %226 = vector.extract_strided_slice %223 {offsets = [0, 32], sizes = [8, 32], strides = [1, 1]} : vector<8x96xf32> to vector<8x32xf32>
    %227 = arith.mulf %226, %203 : vector<8x32xf32>
    %228 = vector.extract_strided_slice %223 {offsets = [0, 0], sizes = [8, 32], strides = [1, 1]} : vector<8x96xf32> to vector<8x32xf32>
    %229 = arith.mulf %228, %225 : vector<8x32xf32>
    %230 = arith.addf %227, %229 : vector<8x32xf32>
    %231 = vector.extract_strided_slice %223 {offsets = [0, 64], sizes = [8, 32], strides = [1, 1]} : vector<8x96xf32> to vector<8x32xf32>
    %232 = math.tanh %230 : vector<8x32xf32>
    %233 = arith.mulf %231, %232 : vector<8x32xf32>
    %234 = arith.index_cast %c5_i32_92 : i32 to index
    %c0_99 = arith.constant 0 : index
    %c0_100 = arith.constant 0 : index
    %235 = vector.load %arg9[%234, %c0_99, %c0_100] : memref<8x8x32xf32, #tpu.memory_space<vmem>>, vector<1x8x32xf32>
    %236 = vector.shape_cast %235 : vector<1x8x32xf32> to vector<8x32xf32>
    %237 = vector.shape_cast %233 : vector<8x32xf32> to vector<1x8x32xf32>
    tpu.vector_store %arg9[%234, %c0_99, %c0_100], %237 {strides = array<i32>} : memref<8x8x32xf32, #tpu.memory_space<vmem>>, vector<1x8x32xf32>,
    %c6_i32_101 = arith.constant 6 : i32
    %238 = arith.index_cast %c6_i32_101 : i32 to index
    %c0_102 = arith.constant 0 : index
    %c0_103 = arith.constant 0 : index
    %239 = vector.load %arg10[%238, %c0_102, %c0_103] : memref<8x8x128xf32, #tpu.memory_space<vmem>>, vector<1x8x128xf32>
    %240 = vector.shape_cast %239 : vector<1x8x128xf32> to vector<8x128xf32>
    %cst_104 = arith.constant dense<0.000000e+00> : vector<8x128xf32>
    %241 = tpu.matmul %233, %2, %cst_104 {dimension_numbers = #tpu.dot_dimension_numbers<[1], [0], [0], [1], [0, 0, 1, 1], [], []>} : vector<8x32xf32>, vector<32x128xf32>, vector<8x128xf32> -> vector<8x128xf32>
    %242 = arith.addf %240, %241 : vector<8x128xf32>
    %243 = vector.extract_strided_slice %242 {offsets = [0, 0], sizes = [8, 96], strides = [1, 1]} : vector<8x128xf32> to vector<8x96xf32>
    %cst_105 = arith.constant 5.000000e-01 : f32
    %244 = vector.broadcast %cst_105 : f32 to vector<8x96xf32>
    %245 = arith.mulf %244, %243 : vector<8x96xf32>
    %246 = math.tanh %245 : vector<8x96xf32>
    %cst_106 = arith.constant 5.000000e-01 : f32
    %247 = vector.broadcast %cst_106 : f32 to vector<8x96xf32>
    %248 = arith.mulf %247, %246 : vector<8x96xf32>
    %cst_107 = arith.constant 5.000000e-01 : f32
    %249 = vector.broadcast %cst_107 : f32 to vector<8x96xf32>
    %250 = arith.addf %248, %249 : vector<8x96xf32>
    %251 = vector.extract_strided_slice %242 {offsets = [0, 96], sizes = [8, 32], strides = [1, 1]} : vector<8x128xf32> to vector<8x32xf32>
    %252 = math.tanh %251 : vector<8x32xf32>
    %253 = vector.extract_strided_slice %250 {offsets = [0, 32], sizes = [8, 32], strides = [1, 1]} : vector<8x96xf32> to vector<8x32xf32>
    %254 = arith.mulf %253, %230 : vector<8x32xf32>
    %255 = vector.extract_strided_slice %250 {offsets = [0, 0], sizes = [8, 32], strides = [1, 1]} : vector<8x96xf32> to vector<8x32xf32>
    %256 = arith.mulf %255, %252 : vector<8x32xf32>
    %257 = arith.addf %254, %256 : vector<8x32xf32>
    %258 = vector.extract_strided_slice %250 {offsets = [0, 64], sizes = [8, 32], strides = [1, 1]} : vector<8x96xf32> to vector<8x32xf32>
    %259 = math.tanh %257 : vector<8x32xf32>
    %260 = arith.mulf %258, %259 : vector<8x32xf32>
    %261 = arith.index_cast %c6_i32_101 : i32 to index
    %c0_108 = arith.constant 0 : index
    %c0_109 = arith.constant 0 : index
    %262 = vector.load %arg9[%261, %c0_108, %c0_109] : memref<8x8x32xf32, #tpu.memory_space<vmem>>, vector<1x8x32xf32>
    %263 = vector.shape_cast %262 : vector<1x8x32xf32> to vector<8x32xf32>
    %264 = vector.shape_cast %260 : vector<8x32xf32> to vector<1x8x32xf32>
    tpu.vector_store %arg9[%261, %c0_108, %c0_109], %264 {strides = array<i32>} : memref<8x8x32xf32, #tpu.memory_space<vmem>>, vector<1x8x32xf32>,
    %c7_i32_110 = arith.constant 7 : i32
    %265 = arith.index_cast %c7_i32_110 : i32 to index
    %c0_111 = arith.constant 0 : index
    %c0_112 = arith.constant 0 : index
    %266 = vector.load %arg10[%265, %c0_111, %c0_112] : memref<8x8x128xf32, #tpu.memory_space<vmem>>, vector<1x8x128xf32>
    %267 = vector.shape_cast %266 : vector<1x8x128xf32> to vector<8x128xf32>
    %cst_113 = arith.constant dense<0.000000e+00> : vector<8x128xf32>
    %268 = tpu.matmul %260, %2, %cst_113 {dimension_numbers = #tpu.dot_dimension_numbers<[1], [0], [0], [1], [0, 0, 1, 1], [], []>} : vector<8x32xf32>, vector<32x128xf32>, vector<8x128xf32> -> vector<8x128xf32>
    %269 = arith.addf %267, %268 : vector<8x128xf32>
    %270 = vector.extract_strided_slice %269 {offsets = [0, 0], sizes = [8, 96], strides = [1, 1]} : vector<8x128xf32> to vector<8x96xf32>
    %cst_114 = arith.constant 5.000000e-01 : f32
    %271 = vector.broadcast %cst_114 : f32 to vector<8x96xf32>
    %272 = arith.mulf %271, %270 : vector<8x96xf32>
    %273 = math.tanh %272 : vector<8x96xf32>
    %cst_115 = arith.constant 5.000000e-01 : f32
    %274 = vector.broadcast %cst_115 : f32 to vector<8x96xf32>
    %275 = arith.mulf %274, %273 : vector<8x96xf32>
    %cst_116 = arith.constant 5.000000e-01 : f32
    %276 = vector.broadcast %cst_116 : f32 to vector<8x96xf32>
    %277 = arith.addf %275, %276 : vector<8x96xf32>
    %278 = vector.extract_strided_slice %269 {offsets = [0, 96], sizes = [8, 32], strides = [1, 1]} : vector<8x128xf32> to vector<8x32xf32>
    %279 = math.tanh %278 : vector<8x32xf32>
    %280 = vector.extract_strided_slice %277 {offsets = [0, 32], sizes = [8, 32], strides = [1, 1]} : vector<8x96xf32> to vector<8x32xf32>
    %281 = arith.mulf %280, %257 : vector<8x32xf32>
    %282 = vector.extract_strided_slice %277 {offsets = [0, 0], sizes = [8, 32], strides = [1, 1]} : vector<8x96xf32> to vector<8x32xf32>
    %283 = arith.mulf %282, %279 : vector<8x32xf32>
    %284 = arith.addf %281, %283 : vector<8x32xf32>
    %285 = vector.extract_strided_slice %277 {offsets = [0, 64], sizes = [8, 32], strides = [1, 1]} : vector<8x96xf32> to vector<8x32xf32>
    %286 = math.tanh %284 : vector<8x32xf32>
    %287 = arith.mulf %285, %286 : vector<8x32xf32>
    %288 = arith.index_cast %c7_i32_110 : i32 to index
    %c0_117 = arith.constant 0 : index
    %c0_118 = arith.constant 0 : index
    %289 = vector.load %arg9[%288, %c0_117, %c0_118] : memref<8x8x32xf32, #tpu.memory_space<vmem>>, vector<1x8x32xf32>
    %290 = vector.shape_cast %289 : vector<1x8x32xf32> to vector<8x32xf32>
    %291 = vector.shape_cast %287 : vector<8x32xf32> to vector<1x8x32xf32>
    tpu.vector_store %arg9[%288, %c0_117, %c0_118], %291 {strides = array<i32>} : memref<8x8x32xf32, #tpu.memory_space<vmem>>, vector<1x8x32xf32>,
    %c7_i32_119 = arith.constant 7 : i32
    %c0_120 = arith.constant 0 : index
    %c0_121 = arith.constant 0 : index
    %c0_122 = arith.constant 0 : index
    %292 = vector.load %arg3[%c0_120, %c0_121, %c0_122] : memref<3x32x128xf32, #tpu.memory_space<vmem>>, vector<1x32x128xf32>
    %293 = vector.shape_cast %292 : vector<1x32x128xf32> to vector<32x128xf32>
    %c1 = arith.constant 1 : index
    %c0_123 = arith.constant 0 : index
    %c0_124 = arith.constant 0 : index
    %294 = vector.load %arg4[%c1, %c0_123, %c0_124] : memref<4x32x128xf32, #tpu.memory_space<vmem>>, vector<1x32x128xf32>
    %295 = vector.shape_cast %294 : vector<1x32x128xf32> to vector<32x128xf32>
    %c1_125 = arith.constant 1 : index
    %c0_126 = arith.constant 0 : index
    %c0_127 = arith.constant 0 : index
    %296 = vector.load %arg5[%c1_125, %c0_126, %c0_127] : memref<4x1x128xf32, #tpu.memory_space<vmem>>, vector<1x1x128xf32>
    %297 = vector.shape_cast %296 : vector<1x1x128xf32> to vector<1x128xf32>
    %298 = vector.shape_cast %297 : vector<1x128xf32> to vector<1x128xf32>
    %299 = vector.broadcast %298 : vector<1x128xf32> to vector<8x128xf32>
    %c0_i32_128 = arith.constant 0 : i32
    %300 = arith.index_cast %c0_i32_128 : i32 to index
    %c0_129 = arith.constant 0 : index
    %c0_130 = arith.constant 0 : index
    %301 = vector.load %arg9[%300, %c0_129, %c0_130] : memref<8x8x32xf32, #tpu.memory_space<vmem>>, vector<1x8x32xf32>
    %302 = vector.shape_cast %301 : vector<1x8x32xf32> to vector<8x32xf32>
    %cst_131 = arith.constant dense<0.000000e+00> : vector<8x128xf32>
    %303 = tpu.matmul %302, %293, %cst_131 {dimension_numbers = #tpu.dot_dimension_numbers<[1], [0], [0], [1], [0, 0, 1, 1], [], []>} : vector<8x32xf32>, vector<32x128xf32>, vector<8x128xf32> -> vector<8x128xf32>
    %304 = arith.addf %303, %299 : vector<8x128xf32>
    %305 = arith.index_cast %c0_i32_128 : i32 to index
    %c0_132 = arith.constant 0 : index
    %c0_133 = arith.constant 0 : index
    %306 = vector.load %arg10[%305, %c0_132, %c0_133] : memref<8x8x128xf32, #tpu.memory_space<vmem>>, vector<1x8x128xf32>
    %307 = vector.shape_cast %306 : vector<1x8x128xf32> to vector<8x128xf32>
    %308 = vector.shape_cast %304 : vector<8x128xf32> to vector<1x8x128xf32>
    tpu.vector_store %arg10[%305, %c0_132, %c0_133], %308 {strides = array<i32>} : memref<8x8x128xf32, #tpu.memory_space<vmem>>, vector<1x8x128xf32>,
    %c1_i32_134 = arith.constant 1 : i32
    %309 = arith.index_cast %c1_i32_134 : i32 to index
    %c0_135 = arith.constant 0 : index
    %c0_136 = arith.constant 0 : index
    %310 = vector.load %arg9[%309, %c0_135, %c0_136] : memref<8x8x32xf32, #tpu.memory_space<vmem>>, vector<1x8x32xf32>
    %311 = vector.shape_cast %310 : vector<1x8x32xf32> to vector<8x32xf32>
    %cst_137 = arith.constant dense<0.000000e+00> : vector<8x128xf32>
    %312 = tpu.matmul %311, %293, %cst_137 {dimension_numbers = #tpu.dot_dimension_numbers<[1], [0], [0], [1], [0, 0, 1, 1], [], []>} : vector<8x32xf32>, vector<32x128xf32>, vector<8x128xf32> -> vector<8x128xf32>
    %313 = arith.addf %312, %299 : vector<8x128xf32>
    %314 = arith.index_cast %c1_i32_134 : i32 to index
    %c0_138 = arith.constant 0 : index
    %c0_139 = arith.constant 0 : index
    %315 = vector.load %arg10[%314, %c0_138, %c0_139] : memref<8x8x128xf32, #tpu.memory_space<vmem>>, vector<1x8x128xf32>
    %316 = vector.shape_cast %315 : vector<1x8x128xf32> to vector<8x128xf32>
    %317 = vector.shape_cast %313 : vector<8x128xf32> to vector<1x8x128xf32>
    tpu.vector_store %arg10[%314, %c0_138, %c0_139], %317 {strides = array<i32>} : memref<8x8x128xf32, #tpu.memory_space<vmem>>, vector<1x8x128xf32>,
    %c2_i32_140 = arith.constant 2 : i32
    %318 = arith.index_cast %c2_i32_140 : i32 to index
    %c0_141 = arith.constant 0 : index
    %c0_142 = arith.constant 0 : index
    %319 = vector.load %arg9[%318, %c0_141, %c0_142] : memref<8x8x32xf32, #tpu.memory_space<vmem>>, vector<1x8x32xf32>
    %320 = vector.shape_cast %319 : vector<1x8x32xf32> to vector<8x32xf32>
    %cst_143 = arith.constant dense<0.000000e+00> : vector<8x128xf32>
    %321 = tpu.matmul %320, %293, %cst_143 {dimension_numbers = #tpu.dot_dimension_numbers<[1], [0], [0], [1], [0, 0, 1, 1], [], []>} : vector<8x32xf32>, vector<32x128xf32>, vector<8x128xf32> -> vector<8x128xf32>
    %322 = arith.addf %321, %299 : vector<8x128xf32>
    %323 = arith.index_cast %c2_i32_140 : i32 to index
    %c0_144 = arith.constant 0 : index
    %c0_145 = arith.constant 0 : index
    %324 = vector.load %arg10[%323, %c0_144, %c0_145] : memref<8x8x128xf32, #tpu.memory_space<vmem>>, vector<1x8x128xf32>
    %325 = vector.shape_cast %324 : vector<1x8x128xf32> to vector<8x128xf32>
    %326 = vector.shape_cast %322 : vector<8x128xf32> to vector<1x8x128xf32>
    tpu.vector_store %arg10[%323, %c0_144, %c0_145], %326 {strides = array<i32>} : memref<8x8x128xf32, #tpu.memory_space<vmem>>, vector<1x8x128xf32>,
    %c3_i32_146 = arith.constant 3 : i32
    %327 = arith.index_cast %c3_i32_146 : i32 to index
    %c0_147 = arith.constant 0 : index
    %c0_148 = arith.constant 0 : index
    %328 = vector.load %arg9[%327, %c0_147, %c0_148] : memref<8x8x32xf32, #tpu.memory_space<vmem>>, vector<1x8x32xf32>
    %329 = vector.shape_cast %328 : vector<1x8x32xf32> to vector<8x32xf32>
    %cst_149 = arith.constant dense<0.000000e+00> : vector<8x128xf32>
    %330 = tpu.matmul %329, %293, %cst_149 {dimension_numbers = #tpu.dot_dimension_numbers<[1], [0], [0], [1], [0, 0, 1, 1], [], []>} : vector<8x32xf32>, vector<32x128xf32>, vector<8x128xf32> -> vector<8x128xf32>
    %331 = arith.addf %330, %299 : vector<8x128xf32>
    %332 = arith.index_cast %c3_i32_146 : i32 to index
    %c0_150 = arith.constant 0 : index
    %c0_151 = arith.constant 0 : index
    %333 = vector.load %arg10[%332, %c0_150, %c0_151] : memref<8x8x128xf32, #tpu.memory_space<vmem>>, vector<1x8x128xf32>
    %334 = vector.shape_cast %333 : vector<1x8x128xf32> to vector<8x128xf32>
    %335 = vector.shape_cast %331 : vector<8x128xf32> to vector<1x8x128xf32>
    tpu.vector_store %arg10[%332, %c0_150, %c0_151], %335 {strides = array<i32>} : memref<8x8x128xf32, #tpu.memory_space<vmem>>, vector<1x8x128xf32>,
    %c4_i32_152 = arith.constant 4 : i32
    %336 = arith.index_cast %c4_i32_152 : i32 to index
    %c0_153 = arith.constant 0 : index
    %c0_154 = arith.constant 0 : index
    %337 = vector.load %arg9[%336, %c0_153, %c0_154] : memref<8x8x32xf32, #tpu.memory_space<vmem>>, vector<1x8x32xf32>
    %338 = vector.shape_cast %337 : vector<1x8x32xf32> to vector<8x32xf32>
    %cst_155 = arith.constant dense<0.000000e+00> : vector<8x128xf32>
    %339 = tpu.matmul %338, %293, %cst_155 {dimension_numbers = #tpu.dot_dimension_numbers<[1], [0], [0], [1], [0, 0, 1, 1], [], []>} : vector<8x32xf32>, vector<32x128xf32>, vector<8x128xf32> -> vector<8x128xf32>
    %340 = arith.addf %339, %299 : vector<8x128xf32>
    %341 = arith.index_cast %c4_i32_152 : i32 to index
    %c0_156 = arith.constant 0 : index
    %c0_157 = arith.constant 0 : index
    %342 = vector.load %arg10[%341, %c0_156, %c0_157] : memref<8x8x128xf32, #tpu.memory_space<vmem>>, vector<1x8x128xf32>
    %343 = vector.shape_cast %342 : vector<1x8x128xf32> to vector<8x128xf32>
    %344 = vector.shape_cast %340 : vector<8x128xf32> to vector<1x8x128xf32>
    tpu.vector_store %arg10[%341, %c0_156, %c0_157], %344 {strides = array<i32>} : memref<8x8x128xf32, #tpu.memory_space<vmem>>, vector<1x8x128xf32>,
    %c5_i32_158 = arith.constant 5 : i32
    %345 = arith.index_cast %c5_i32_158 : i32 to index
    %c0_159 = arith.constant 0 : index
    %c0_160 = arith.constant 0 : index
    %346 = vector.load %arg9[%345, %c0_159, %c0_160] : memref<8x8x32xf32, #tpu.memory_space<vmem>>, vector<1x8x32xf32>
    %347 = vector.shape_cast %346 : vector<1x8x32xf32> to vector<8x32xf32>
    %cst_161 = arith.constant dense<0.000000e+00> : vector<8x128xf32>
    %348 = tpu.matmul %347, %293, %cst_161 {dimension_numbers = #tpu.dot_dimension_numbers<[1], [0], [0], [1], [0, 0, 1, 1], [], []>} : vector<8x32xf32>, vector<32x128xf32>, vector<8x128xf32> -> vector<8x128xf32>
    %349 = arith.addf %348, %299 : vector<8x128xf32>
    %350 = arith.index_cast %c5_i32_158 : i32 to index
    %c0_162 = arith.constant 0 : index
    %c0_163 = arith.constant 0 : index
    %351 = vector.load %arg10[%350, %c0_162, %c0_163] : memref<8x8x128xf32, #tpu.memory_space<vmem>>, vector<1x8x128xf32>
    %352 = vector.shape_cast %351 : vector<1x8x128xf32> to vector<8x128xf32>
    %353 = vector.shape_cast %349 : vector<8x128xf32> to vector<1x8x128xf32>
    tpu.vector_store %arg10[%350, %c0_162, %c0_163], %353 {strides = array<i32>} : memref<8x8x128xf32, #tpu.memory_space<vmem>>, vector<1x8x128xf32>,
    %c6_i32_164 = arith.constant 6 : i32
    %354 = arith.index_cast %c6_i32_164 : i32 to index
    %c0_165 = arith.constant 0 : index
    %c0_166 = arith.constant 0 : index
    %355 = vector.load %arg9[%354, %c0_165, %c0_166] : memref<8x8x32xf32, #tpu.memory_space<vmem>>, vector<1x8x32xf32>
    %356 = vector.shape_cast %355 : vector<1x8x32xf32> to vector<8x32xf32>
    %cst_167 = arith.constant dense<0.000000e+00> : vector<8x128xf32>
    %357 = tpu.matmul %356, %293, %cst_167 {dimension_numbers = #tpu.dot_dimension_numbers<[1], [0], [0], [1], [0, 0, 1, 1], [], []>} : vector<8x32xf32>, vector<32x128xf32>, vector<8x128xf32> -> vector<8x128xf32>
    %358 = arith.addf %357, %299 : vector<8x128xf32>
    %359 = arith.index_cast %c6_i32_164 : i32 to index
    %c0_168 = arith.constant 0 : index
    %c0_169 = arith.constant 0 : index
    %360 = vector.load %arg10[%359, %c0_168, %c0_169] : memref<8x8x128xf32, #tpu.memory_space<vmem>>, vector<1x8x128xf32>
    %361 = vector.shape_cast %360 : vector<1x8x128xf32> to vector<8x128xf32>
    %362 = vector.shape_cast %358 : vector<8x128xf32> to vector<1x8x128xf32>
    tpu.vector_store %arg10[%359, %c0_168, %c0_169], %362 {strides = array<i32>} : memref<8x8x128xf32, #tpu.memory_space<vmem>>, vector<1x8x128xf32>,
    %c7_i32_170 = arith.constant 7 : i32
    %363 = arith.index_cast %c7_i32_170 : i32 to index
    %c0_171 = arith.constant 0 : index
    %c0_172 = arith.constant 0 : index
    %364 = vector.load %arg9[%363, %c0_171, %c0_172] : memref<8x8x32xf32, #tpu.memory_space<vmem>>, vector<1x8x32xf32>
    %365 = vector.shape_cast %364 : vector<1x8x32xf32> to vector<8x32xf32>
    %cst_173 = arith.constant dense<0.000000e+00> : vector<8x128xf32>
    %366 = tpu.matmul %365, %293, %cst_173 {dimension_numbers = #tpu.dot_dimension_numbers<[1], [0], [0], [1], [0, 0, 1, 1], [], []>} : vector<8x32xf32>, vector<32x128xf32>, vector<8x128xf32> -> vector<8x128xf32>
    %367 = arith.addf %366, %299 : vector<8x128xf32>
    %368 = arith.index_cast %c7_i32_170 : i32 to index
    %c0_174 = arith.constant 0 : index
    %c0_175 = arith.constant 0 : index
    %369 = vector.load %arg10[%368, %c0_174, %c0_175] : memref<8x8x128xf32, #tpu.memory_space<vmem>>, vector<1x8x128xf32>
    %370 = vector.shape_cast %369 : vector<1x8x128xf32> to vector<8x128xf32>
    %371 = vector.shape_cast %367 : vector<8x128xf32> to vector<1x8x128xf32>
    tpu.vector_store %arg10[%368, %c0_174, %c0_175], %371 {strides = array<i32>} : memref<8x8x128xf32, #tpu.memory_space<vmem>>, vector<1x8x128xf32>,
    %c8_i32_176 = arith.constant 8 : i32
    %c0_177 = arith.constant 0 : index
    %c0_178 = arith.constant 0 : index
    %c0_179 = arith.constant 0 : index
    %372 = vector.load %arg10[%c0_177, %c0_178, %c0_179] : memref<8x8x128xf32, #tpu.memory_space<vmem>>, vector<1x8x128xf32>
    %373 = vector.shape_cast %372 : vector<1x8x128xf32> to vector<8x128xf32>
    %cst_180 = arith.constant 0.000000e+00 : f32
    %374 = vector.broadcast %cst_180 : f32 to vector<8x32xf32>
    %375 = vector.extract_strided_slice %373 {offsets = [0, 0], sizes = [8, 96], strides = [1, 1]} : vector<8x128xf32> to vector<8x96xf32>
    %cst_181 = arith.constant 5.000000e-01 : f32
    %376 = vector.broadcast %cst_181 : f32 to vector<8x96xf32>
    %377 = arith.mulf %376, %375 : vector<8x96xf32>
    %378 = math.tanh %377 : vector<8x96xf32>
    %cst_182 = arith.constant 5.000000e-01 : f32
    %379 = vector.broadcast %cst_182 : f32 to vector<8x96xf32>
    %380 = arith.mulf %379, %378 : vector<8x96xf32>
    %cst_183 = arith.constant 5.000000e-01 : f32
    %381 = vector.broadcast %cst_183 : f32 to vector<8x96xf32>
    %382 = arith.addf %380, %381 : vector<8x96xf32>
    %383 = vector.extract_strided_slice %373 {offsets = [0, 96], sizes = [8, 32], strides = [1, 1]} : vector<8x128xf32> to vector<8x32xf32>
    %384 = math.tanh %383 : vector<8x32xf32>
    %385 = vector.extract_strided_slice %382 {offsets = [0, 32], sizes = [8, 32], strides = [1, 1]} : vector<8x96xf32> to vector<8x32xf32>
    %386 = arith.mulf %385, %374 : vector<8x32xf32>
    %387 = vector.extract_strided_slice %382 {offsets = [0, 0], sizes = [8, 32], strides = [1, 1]} : vector<8x96xf32> to vector<8x32xf32>
    %388 = arith.mulf %387, %384 : vector<8x32xf32>
    %389 = arith.addf %386, %388 : vector<8x32xf32>
    %390 = vector.extract_strided_slice %382 {offsets = [0, 64], sizes = [8, 32], strides = [1, 1]} : vector<8x96xf32> to vector<8x32xf32>
    %391 = math.tanh %389 : vector<8x32xf32>
    %392 = arith.mulf %390, %391 : vector<8x32xf32>
    %c0_184 = arith.constant 0 : index
    %c0_185 = arith.constant 0 : index
    %c0_186 = arith.constant 0 : index
    %393 = vector.load %arg9[%c0_184, %c0_185, %c0_186] : memref<8x8x32xf32, #tpu.memory_space<vmem>>, vector<1x8x32xf32>
    %394 = vector.shape_cast %393 : vector<1x8x32xf32> to vector<8x32xf32>
    %395 = vector.shape_cast %392 : vector<8x32xf32> to vector<1x8x32xf32>
    tpu.vector_store %arg9[%c0_184, %c0_185, %c0_186], %395 {strides = array<i32>} : memref<8x8x32xf32, #tpu.memory_space<vmem>>, vector<1x8x32xf32>,
    %c1_i32_187 = arith.constant 1 : i32
    %396 = arith.index_cast %c1_i32_187 : i32 to index
    %c0_188 = arith.constant 0 : index
    %c0_189 = arith.constant 0 : index
    %397 = vector.load %arg10[%396, %c0_188, %c0_189] : memref<8x8x128xf32, #tpu.memory_space<vmem>>, vector<1x8x128xf32>
    %398 = vector.shape_cast %397 : vector<1x8x128xf32> to vector<8x128xf32>
    %cst_190 = arith.constant dense<0.000000e+00> : vector<8x128xf32>
    %399 = tpu.matmul %392, %295, %cst_190 {dimension_numbers = #tpu.dot_dimension_numbers<[1], [0], [0], [1], [0, 0, 1, 1], [], []>} : vector<8x32xf32>, vector<32x128xf32>, vector<8x128xf32> -> vector<8x128xf32>
    %400 = arith.addf %398, %399 : vector<8x128xf32>
    %401 = vector.extract_strided_slice %400 {offsets = [0, 0], sizes = [8, 96], strides = [1, 1]} : vector<8x128xf32> to vector<8x96xf32>
    %cst_191 = arith.constant 5.000000e-01 : f32
    %402 = vector.broadcast %cst_191 : f32 to vector<8x96xf32>
    %403 = arith.mulf %402, %401 : vector<8x96xf32>
    %404 = math.tanh %403 : vector<8x96xf32>
    %cst_192 = arith.constant 5.000000e-01 : f32
    %405 = vector.broadcast %cst_192 : f32 to vector<8x96xf32>
    %406 = arith.mulf %405, %404 : vector<8x96xf32>
    %cst_193 = arith.constant 5.000000e-01 : f32
    %407 = vector.broadcast %cst_193 : f32 to vector<8x96xf32>
    %408 = arith.addf %406, %407 : vector<8x96xf32>
    %409 = vector.extract_strided_slice %400 {offsets = [0, 96], sizes = [8, 32], strides = [1, 1]} : vector<8x128xf32> to vector<8x32xf32>
    %410 = math.tanh %409 : vector<8x32xf32>
    %411 = vector.extract_strided_slice %408 {offsets = [0, 32], sizes = [8, 32], strides = [1, 1]} : vector<8x96xf32> to vector<8x32xf32>
    %412 = arith.mulf %411, %389 : vector<8x32xf32>
    %413 = vector.extract_strided_slice %408 {offsets = [0, 0], sizes = [8, 32], strides = [1, 1]} : vector<8x96xf32> to vector<8x32xf32>
    %414 = arith.mulf %413, %410 : vector<8x32xf32>
    %415 = arith.addf %412, %414 : vector<8x32xf32>
    %416 = vector.extract_strided_slice %408 {offsets = [0, 64], sizes = [8, 32], strides = [1, 1]} : vector<8x96xf32> to vector<8x32xf32>
    %417 = math.tanh %415 : vector<8x32xf32>
    %418 = arith.mulf %416, %417 : vector<8x32xf32>
    %419 = arith.index_cast %c1_i32_187 : i32 to index
    %c0_194 = arith.constant 0 : index
    %c0_195 = arith.constant 0 : index
    %420 = vector.load %arg9[%419, %c0_194, %c0_195] : memref<8x8x32xf32, #tpu.memory_space<vmem>>, vector<1x8x32xf32>
    %421 = vector.shape_cast %420 : vector<1x8x32xf32> to vector<8x32xf32>
    %422 = vector.shape_cast %418 : vector<8x32xf32> to vector<1x8x32xf32>
    tpu.vector_store %arg9[%419, %c0_194, %c0_195], %422 {strides = array<i32>} : memref<8x8x32xf32, #tpu.memory_space<vmem>>, vector<1x8x32xf32>,
    %c2_i32_196 = arith.constant 2 : i32
    %423 = arith.index_cast %c2_i32_196 : i32 to index
    %c0_197 = arith.constant 0 : index
    %c0_198 = arith.constant 0 : index
    %424 = vector.load %arg10[%423, %c0_197, %c0_198] : memref<8x8x128xf32, #tpu.memory_space<vmem>>, vector<1x8x128xf32>
    %425 = vector.shape_cast %424 : vector<1x8x128xf32> to vector<8x128xf32>
    %cst_199 = arith.constant dense<0.000000e+00> : vector<8x128xf32>
    %426 = tpu.matmul %418, %295, %cst_199 {dimension_numbers = #tpu.dot_dimension_numbers<[1], [0], [0], [1], [0, 0, 1, 1], [], []>} : vector<8x32xf32>, vector<32x128xf32>, vector<8x128xf32> -> vector<8x128xf32>
    %427 = arith.addf %425, %426 : vector<8x128xf32>
    %428 = vector.extract_strided_slice %427 {offsets = [0, 0], sizes = [8, 96], strides = [1, 1]} : vector<8x128xf32> to vector<8x96xf32>
    %cst_200 = arith.constant 5.000000e-01 : f32
    %429 = vector.broadcast %cst_200 : f32 to vector<8x96xf32>
    %430 = arith.mulf %429, %428 : vector<8x96xf32>
    %431 = math.tanh %430 : vector<8x96xf32>
    %cst_201 = arith.constant 5.000000e-01 : f32
    %432 = vector.broadcast %cst_201 : f32 to vector<8x96xf32>
    %433 = arith.mulf %432, %431 : vector<8x96xf32>
    %cst_202 = arith.constant 5.000000e-01 : f32
    %434 = vector.broadcast %cst_202 : f32 to vector<8x96xf32>
    %435 = arith.addf %433, %434 : vector<8x96xf32>
    %436 = vector.extract_strided_slice %427 {offsets = [0, 96], sizes = [8, 32], strides = [1, 1]} : vector<8x128xf32> to vector<8x32xf32>
    %437 = math.tanh %436 : vector<8x32xf32>
    %438 = vector.extract_strided_slice %435 {offsets = [0, 32], sizes = [8, 32], strides = [1, 1]} : vector<8x96xf32> to vector<8x32xf32>
    %439 = arith.mulf %438, %415 : vector<8x32xf32>
    %440 = vector.extract_strided_slice %435 {offsets = [0, 0], sizes = [8, 32], strides = [1, 1]} : vector<8x96xf32> to vector<8x32xf32>
    %441 = arith.mulf %440, %437 : vector<8x32xf32>
    %442 = arith.addf %439, %441 : vector<8x32xf32>
    %443 = vector.extract_strided_slice %435 {offsets = [0, 64], sizes = [8, 32], strides = [1, 1]} : vector<8x96xf32> to vector<8x32xf32>
    %444 = math.tanh %442 : vector<8x32xf32>
    %445 = arith.mulf %443, %444 : vector<8x32xf32>
    %446 = arith.index_cast %c2_i32_196 : i32 to index
    %c0_203 = arith.constant 0 : index
    %c0_204 = arith.constant 0 : index
    %447 = vector.load %arg9[%446, %c0_203, %c0_204] : memref<8x8x32xf32, #tpu.memory_space<vmem>>, vector<1x8x32xf32>
    %448 = vector.shape_cast %447 : vector<1x8x32xf32> to vector<8x32xf32>
    %449 = vector.shape_cast %445 : vector<8x32xf32> to vector<1x8x32xf32>
    tpu.vector_store %arg9[%446, %c0_203, %c0_204], %449 {strides = array<i32>} : memref<8x8x32xf32, #tpu.memory_space<vmem>>, vector<1x8x32xf32>,
    %c3_i32_205 = arith.constant 3 : i32
    %450 = arith.index_cast %c3_i32_205 : i32 to index
    %c0_206 = arith.constant 0 : index
    %c0_207 = arith.constant 0 : index
    %451 = vector.load %arg10[%450, %c0_206, %c0_207] : memref<8x8x128xf32, #tpu.memory_space<vmem>>, vector<1x8x128xf32>
    %452 = vector.shape_cast %451 : vector<1x8x128xf32> to vector<8x128xf32>
    %cst_208 = arith.constant dense<0.000000e+00> : vector<8x128xf32>
    %453 = tpu.matmul %445, %295, %cst_208 {dimension_numbers = #tpu.dot_dimension_numbers<[1], [0], [0], [1], [0, 0, 1, 1], [], []>} : vector<8x32xf32>, vector<32x128xf32>, vector<8x128xf32> -> vector<8x128xf32>
    %454 = arith.addf %452, %453 : vector<8x128xf32>
    %455 = vector.extract_strided_slice %454 {offsets = [0, 0], sizes = [8, 96], strides = [1, 1]} : vector<8x128xf32> to vector<8x96xf32>
    %cst_209 = arith.constant 5.000000e-01 : f32
    %456 = vector.broadcast %cst_209 : f32 to vector<8x96xf32>
    %457 = arith.mulf %456, %455 : vector<8x96xf32>
    %458 = math.tanh %457 : vector<8x96xf32>
    %cst_210 = arith.constant 5.000000e-01 : f32
    %459 = vector.broadcast %cst_210 : f32 to vector<8x96xf32>
    %460 = arith.mulf %459, %458 : vector<8x96xf32>
    %cst_211 = arith.constant 5.000000e-01 : f32
    %461 = vector.broadcast %cst_211 : f32 to vector<8x96xf32>
    %462 = arith.addf %460, %461 : vector<8x96xf32>
    %463 = vector.extract_strided_slice %454 {offsets = [0, 96], sizes = [8, 32], strides = [1, 1]} : vector<8x128xf32> to vector<8x32xf32>
    %464 = math.tanh %463 : vector<8x32xf32>
    %465 = vector.extract_strided_slice %462 {offsets = [0, 32], sizes = [8, 32], strides = [1, 1]} : vector<8x96xf32> to vector<8x32xf32>
    %466 = arith.mulf %465, %442 : vector<8x32xf32>
    %467 = vector.extract_strided_slice %462 {offsets = [0, 0], sizes = [8, 32], strides = [1, 1]} : vector<8x96xf32> to vector<8x32xf32>
    %468 = arith.mulf %467, %464 : vector<8x32xf32>
    %469 = arith.addf %466, %468 : vector<8x32xf32>
    %470 = vector.extract_strided_slice %462 {offsets = [0, 64], sizes = [8, 32], strides = [1, 1]} : vector<8x96xf32> to vector<8x32xf32>
    %471 = math.tanh %469 : vector<8x32xf32>
    %472 = arith.mulf %470, %471 : vector<8x32xf32>
    %473 = arith.index_cast %c3_i32_205 : i32 to index
    %c0_212 = arith.constant 0 : index
    %c0_213 = arith.constant 0 : index
    %474 = vector.load %arg9[%473, %c0_212, %c0_213] : memref<8x8x32xf32, #tpu.memory_space<vmem>>, vector<1x8x32xf32>
    %475 = vector.shape_cast %474 : vector<1x8x32xf32> to vector<8x32xf32>
    %476 = vector.shape_cast %472 : vector<8x32xf32> to vector<1x8x32xf32>
    tpu.vector_store %arg9[%473, %c0_212, %c0_213], %476 {strides = array<i32>} : memref<8x8x32xf32, #tpu.memory_space<vmem>>, vector<1x8x32xf32>,
    %c4_i32_214 = arith.constant 4 : i32
    %477 = arith.index_cast %c4_i32_214 : i32 to index
    %c0_215 = arith.constant 0 : index
    %c0_216 = arith.constant 0 : index
    %478 = vector.load %arg10[%477, %c0_215, %c0_216] : memref<8x8x128xf32, #tpu.memory_space<vmem>>, vector<1x8x128xf32>
    %479 = vector.shape_cast %478 : vector<1x8x128xf32> to vector<8x128xf32>
    %cst_217 = arith.constant dense<0.000000e+00> : vector<8x128xf32>
    %480 = tpu.matmul %472, %295, %cst_217 {dimension_numbers = #tpu.dot_dimension_numbers<[1], [0], [0], [1], [0, 0, 1, 1], [], []>} : vector<8x32xf32>, vector<32x128xf32>, vector<8x128xf32> -> vector<8x128xf32>
    %481 = arith.addf %479, %480 : vector<8x128xf32>
    %482 = vector.extract_strided_slice %481 {offsets = [0, 0], sizes = [8, 96], strides = [1, 1]} : vector<8x128xf32> to vector<8x96xf32>
    %cst_218 = arith.constant 5.000000e-01 : f32
    %483 = vector.broadcast %cst_218 : f32 to vector<8x96xf32>
    %484 = arith.mulf %483, %482 : vector<8x96xf32>
    %485 = math.tanh %484 : vector<8x96xf32>
    %cst_219 = arith.constant 5.000000e-01 : f32
    %486 = vector.broadcast %cst_219 : f32 to vector<8x96xf32>
    %487 = arith.mulf %486, %485 : vector<8x96xf32>
    %cst_220 = arith.constant 5.000000e-01 : f32
    %488 = vector.broadcast %cst_220 : f32 to vector<8x96xf32>
    %489 = arith.addf %487, %488 : vector<8x96xf32>
    %490 = vector.extract_strided_slice %481 {offsets = [0, 96], sizes = [8, 32], strides = [1, 1]} : vector<8x128xf32> to vector<8x32xf32>
    %491 = math.tanh %490 : vector<8x32xf32>
    %492 = vector.extract_strided_slice %489 {offsets = [0, 32], sizes = [8, 32], strides = [1, 1]} : vector<8x96xf32> to vector<8x32xf32>
    %493 = arith.mulf %492, %469 : vector<8x32xf32>
    %494 = vector.extract_strided_slice %489 {offsets = [0, 0], sizes = [8, 32], strides = [1, 1]} : vector<8x96xf32> to vector<8x32xf32>
    %495 = arith.mulf %494, %491 : vector<8x32xf32>
    %496 = arith.addf %493, %495 : vector<8x32xf32>
    %497 = vector.extract_strided_slice %489 {offsets = [0, 64], sizes = [8, 32], strides = [1, 1]} : vector<8x96xf32> to vector<8x32xf32>
    %498 = math.tanh %496 : vector<8x32xf32>
    %499 = arith.mulf %497, %498 : vector<8x32xf32>
    %500 = arith.index_cast %c4_i32_214 : i32 to index
    %c0_221 = arith.constant 0 : index
    %c0_222 = arith.constant 0 : index
    %501 = vector.load %arg9[%500, %c0_221, %c0_222] : memref<8x8x32xf32, #tpu.memory_space<vmem>>, vector<1x8x32xf32>
    %502 = vector.shape_cast %501 : vector<1x8x32xf32> to vector<8x32xf32>
    %503 = vector.shape_cast %499 : vector<8x32xf32> to vector<1x8x32xf32>
    tpu.vector_store %arg9[%500, %c0_221, %c0_222], %503 {strides = array<i32>} : memref<8x8x32xf32, #tpu.memory_space<vmem>>, vector<1x8x32xf32>,
    %c5_i32_223 = arith.constant 5 : i32
    %504 = arith.index_cast %c5_i32_223 : i32 to index
    %c0_224 = arith.constant 0 : index
    %c0_225 = arith.constant 0 : index
    %505 = vector.load %arg10[%504, %c0_224, %c0_225] : memref<8x8x128xf32, #tpu.memory_space<vmem>>, vector<1x8x128xf32>
    %506 = vector.shape_cast %505 : vector<1x8x128xf32> to vector<8x128xf32>
    %cst_226 = arith.constant dense<0.000000e+00> : vector<8x128xf32>
    %507 = tpu.matmul %499, %295, %cst_226 {dimension_numbers = #tpu.dot_dimension_numbers<[1], [0], [0], [1], [0, 0, 1, 1], [], []>} : vector<8x32xf32>, vector<32x128xf32>, vector<8x128xf32> -> vector<8x128xf32>
    %508 = arith.addf %506, %507 : vector<8x128xf32>
    %509 = vector.extract_strided_slice %508 {offsets = [0, 0], sizes = [8, 96], strides = [1, 1]} : vector<8x128xf32> to vector<8x96xf32>
    %cst_227 = arith.constant 5.000000e-01 : f32
    %510 = vector.broadcast %cst_227 : f32 to vector<8x96xf32>
    %511 = arith.mulf %510, %509 : vector<8x96xf32>
    %512 = math.tanh %511 : vector<8x96xf32>
    %cst_228 = arith.constant 5.000000e-01 : f32
    %513 = vector.broadcast %cst_228 : f32 to vector<8x96xf32>
    %514 = arith.mulf %513, %512 : vector<8x96xf32>
    %cst_229 = arith.constant 5.000000e-01 : f32
    %515 = vector.broadcast %cst_229 : f32 to vector<8x96xf32>
    %516 = arith.addf %514, %515 : vector<8x96xf32>
    %517 = vector.extract_strided_slice %508 {offsets = [0, 96], sizes = [8, 32], strides = [1, 1]} : vector<8x128xf32> to vector<8x32xf32>
    %518 = math.tanh %517 : vector<8x32xf32>
    %519 = vector.extract_strided_slice %516 {offsets = [0, 32], sizes = [8, 32], strides = [1, 1]} : vector<8x96xf32> to vector<8x32xf32>
    %520 = arith.mulf %519, %496 : vector<8x32xf32>
    %521 = vector.extract_strided_slice %516 {offsets = [0, 0], sizes = [8, 32], strides = [1, 1]} : vector<8x96xf32> to vector<8x32xf32>
    %522 = arith.mulf %521, %518 : vector<8x32xf32>
    %523 = arith.addf %520, %522 : vector<8x32xf32>
    %524 = vector.extract_strided_slice %516 {offsets = [0, 64], sizes = [8, 32], strides = [1, 1]} : vector<8x96xf32> to vector<8x32xf32>
    %525 = math.tanh %523 : vector<8x32xf32>
    %526 = arith.mulf %524, %525 : vector<8x32xf32>
    %527 = arith.index_cast %c5_i32_223 : i32 to index
    %c0_230 = arith.constant 0 : index
    %c0_231 = arith.constant 0 : index
    %528 = vector.load %arg9[%527, %c0_230, %c0_231] : memref<8x8x32xf32, #tpu.memory_space<vmem>>, vector<1x8x32xf32>
    %529 = vector.shape_cast %528 : vector<1x8x32xf32> to vector<8x32xf32>
    %530 = vector.shape_cast %526 : vector<8x32xf32> to vector<1x8x32xf32>
    tpu.vector_store %arg9[%527, %c0_230, %c0_231], %530 {strides = array<i32>} : memref<8x8x32xf32, #tpu.memory_space<vmem>>, vector<1x8x32xf32>,
    %c6_i32_232 = arith.constant 6 : i32
    %531 = arith.index_cast %c6_i32_232 : i32 to index
    %c0_233 = arith.constant 0 : index
    %c0_234 = arith.constant 0 : index
    %532 = vector.load %arg10[%531, %c0_233, %c0_234] : memref<8x8x128xf32, #tpu.memory_space<vmem>>, vector<1x8x128xf32>
    %533 = vector.shape_cast %532 : vector<1x8x128xf32> to vector<8x128xf32>
    %cst_235 = arith.constant dense<0.000000e+00> : vector<8x128xf32>
    %534 = tpu.matmul %526, %295, %cst_235 {dimension_numbers = #tpu.dot_dimension_numbers<[1], [0], [0], [1], [0, 0, 1, 1], [], []>} : vector<8x32xf32>, vector<32x128xf32>, vector<8x128xf32> -> vector<8x128xf32>
    %535 = arith.addf %533, %534 : vector<8x128xf32>
    %536 = vector.extract_strided_slice %535 {offsets = [0, 0], sizes = [8, 96], strides = [1, 1]} : vector<8x128xf32> to vector<8x96xf32>
    %cst_236 = arith.constant 5.000000e-01 : f32
    %537 = vector.broadcast %cst_236 : f32 to vector<8x96xf32>
    %538 = arith.mulf %537, %536 : vector<8x96xf32>
    %539 = math.tanh %538 : vector<8x96xf32>
    %cst_237 = arith.constant 5.000000e-01 : f32
    %540 = vector.broadcast %cst_237 : f32 to vector<8x96xf32>
    %541 = arith.mulf %540, %539 : vector<8x96xf32>
    %cst_238 = arith.constant 5.000000e-01 : f32
    %542 = vector.broadcast %cst_238 : f32 to vector<8x96xf32>
    %543 = arith.addf %541, %542 : vector<8x96xf32>
    %544 = vector.extract_strided_slice %535 {offsets = [0, 96], sizes = [8, 32], strides = [1, 1]} : vector<8x128xf32> to vector<8x32xf32>
    %545 = math.tanh %544 : vector<8x32xf32>
    %546 = vector.extract_strided_slice %543 {offsets = [0, 32], sizes = [8, 32], strides = [1, 1]} : vector<8x96xf32> to vector<8x32xf32>
    %547 = arith.mulf %546, %523 : vector<8x32xf32>
    %548 = vector.extract_strided_slice %543 {offsets = [0, 0], sizes = [8, 32], strides = [1, 1]} : vector<8x96xf32> to vector<8x32xf32>
    %549 = arith.mulf %548, %545 : vector<8x32xf32>
    %550 = arith.addf %547, %549 : vector<8x32xf32>
    %551 = vector.extract_strided_slice %543 {offsets = [0, 64], sizes = [8, 32], strides = [1, 1]} : vector<8x96xf32> to vector<8x32xf32>
    %552 = math.tanh %550 : vector<8x32xf32>
    %553 = arith.mulf %551, %552 : vector<8x32xf32>
    %554 = arith.index_cast %c6_i32_232 : i32 to index
    %c0_239 = arith.constant 0 : index
    %c0_240 = arith.constant 0 : index
    %555 = vector.load %arg9[%554, %c0_239, %c0_240] : memref<8x8x32xf32, #tpu.memory_space<vmem>>, vector<1x8x32xf32>
    %556 = vector.shape_cast %555 : vector<1x8x32xf32> to vector<8x32xf32>
    %557 = vector.shape_cast %553 : vector<8x32xf32> to vector<1x8x32xf32>
    tpu.vector_store %arg9[%554, %c0_239, %c0_240], %557 {strides = array<i32>} : memref<8x8x32xf32, #tpu.memory_space<vmem>>, vector<1x8x32xf32>,
    %c7_i32_241 = arith.constant 7 : i32
    %558 = arith.index_cast %c7_i32_241 : i32 to index
    %c0_242 = arith.constant 0 : index
    %c0_243 = arith.constant 0 : index
    %559 = vector.load %arg10[%558, %c0_242, %c0_243] : memref<8x8x128xf32, #tpu.memory_space<vmem>>, vector<1x8x128xf32>
    %560 = vector.shape_cast %559 : vector<1x8x128xf32> to vector<8x128xf32>
    %cst_244 = arith.constant dense<0.000000e+00> : vector<8x128xf32>
    %561 = tpu.matmul %553, %295, %cst_244 {dimension_numbers = #tpu.dot_dimension_numbers<[1], [0], [0], [1], [0, 0, 1, 1], [], []>} : vector<8x32xf32>, vector<32x128xf32>, vector<8x128xf32> -> vector<8x128xf32>
    %562 = arith.addf %560, %561 : vector<8x128xf32>
    %563 = vector.extract_strided_slice %562 {offsets = [0, 0], sizes = [8, 96], strides = [1, 1]} : vector<8x128xf32> to vector<8x96xf32>
    %cst_245 = arith.constant 5.000000e-01 : f32
    %564 = vector.broadcast %cst_245 : f32 to vector<8x96xf32>
    %565 = arith.mulf %564, %563 : vector<8x96xf32>
    %566 = math.tanh %565 : vector<8x96xf32>
    %cst_246 = arith.constant 5.000000e-01 : f32
    %567 = vector.broadcast %cst_246 : f32 to vector<8x96xf32>
    %568 = arith.mulf %567, %566 : vector<8x96xf32>
    %cst_247 = arith.constant 5.000000e-01 : f32
    %569 = vector.broadcast %cst_247 : f32 to vector<8x96xf32>
    %570 = arith.addf %568, %569 : vector<8x96xf32>
    %571 = vector.extract_strided_slice %562 {offsets = [0, 96], sizes = [8, 32], strides = [1, 1]} : vector<8x128xf32> to vector<8x32xf32>
    %572 = math.tanh %571 : vector<8x32xf32>
    %573 = vector.extract_strided_slice %570 {offsets = [0, 32], sizes = [8, 32], strides = [1, 1]} : vector<8x96xf32> to vector<8x32xf32>
    %574 = arith.mulf %573, %550 : vector<8x32xf32>
    %575 = vector.extract_strided_slice %570 {offsets = [0, 0], sizes = [8, 32], strides = [1, 1]} : vector<8x96xf32> to vector<8x32xf32>
    %576 = arith.mulf %575, %572 : vector<8x32xf32>
    %577 = arith.addf %574, %576 : vector<8x32xf32>
    %578 = vector.extract_strided_slice %570 {offsets = [0, 64], sizes = [8, 32], strides = [1, 1]} : vector<8x96xf32> to vector<8x32xf32>
    %579 = math.tanh %577 : vector<8x32xf32>
    %580 = arith.mulf %578, %579 : vector<8x32xf32>
    %581 = arith.index_cast %c7_i32_241 : i32 to index
    %c0_248 = arith.constant 0 : index
    %c0_249 = arith.constant 0 : index
    %582 = vector.load %arg9[%581, %c0_248, %c0_249] : memref<8x8x32xf32, #tpu.memory_space<vmem>>, vector<1x8x32xf32>
    %583 = vector.shape_cast %582 : vector<1x8x32xf32> to vector<8x32xf32>
    %584 = vector.shape_cast %580 : vector<8x32xf32> to vector<1x8x32xf32>
    tpu.vector_store %arg9[%581, %c0_248, %c0_249], %584 {strides = array<i32>} : memref<8x8x32xf32, #tpu.memory_space<vmem>>, vector<1x8x32xf32>,
    %c7_i32_250 = arith.constant 7 : i32
    %c1_251 = arith.constant 1 : index
    %c0_252 = arith.constant 0 : index
    %c0_253 = arith.constant 0 : index
    %585 = vector.load %arg3[%c1_251, %c0_252, %c0_253] : memref<3x32x128xf32, #tpu.memory_space<vmem>>, vector<1x32x128xf32>
    %586 = vector.shape_cast %585 : vector<1x32x128xf32> to vector<32x128xf32>
    %c2 = arith.constant 2 : index
    %c0_254 = arith.constant 0 : index
    %c0_255 = arith.constant 0 : index
    %587 = vector.load %arg4[%c2, %c0_254, %c0_255] : memref<4x32x128xf32, #tpu.memory_space<vmem>>, vector<1x32x128xf32>
    %588 = vector.shape_cast %587 : vector<1x32x128xf32> to vector<32x128xf32>
    %c2_256 = arith.constant 2 : index
    %c0_257 = arith.constant 0 : index
    %c0_258 = arith.constant 0 : index
    %589 = vector.load %arg5[%c2_256, %c0_257, %c0_258] : memref<4x1x128xf32, #tpu.memory_space<vmem>>, vector<1x1x128xf32>
    %590 = vector.shape_cast %589 : vector<1x1x128xf32> to vector<1x128xf32>
    %591 = vector.shape_cast %590 : vector<1x128xf32> to vector<1x128xf32>
    %592 = vector.broadcast %591 : vector<1x128xf32> to vector<8x128xf32>
    %c0_i32_259 = arith.constant 0 : i32
    %593 = arith.index_cast %c0_i32_259 : i32 to index
    %c0_260 = arith.constant 0 : index
    %c0_261 = arith.constant 0 : index
    %594 = vector.load %arg9[%593, %c0_260, %c0_261] : memref<8x8x32xf32, #tpu.memory_space<vmem>>, vector<1x8x32xf32>
    %595 = vector.shape_cast %594 : vector<1x8x32xf32> to vector<8x32xf32>
    %cst_262 = arith.constant dense<0.000000e+00> : vector<8x128xf32>
    %596 = tpu.matmul %595, %586, %cst_262 {dimension_numbers = #tpu.dot_dimension_numbers<[1], [0], [0], [1], [0, 0, 1, 1], [], []>} : vector<8x32xf32>, vector<32x128xf32>, vector<8x128xf32> -> vector<8x128xf32>
    %597 = arith.addf %596, %592 : vector<8x128xf32>
    %598 = arith.index_cast %c0_i32_259 : i32 to index
    %c0_263 = arith.constant 0 : index
    %c0_264 = arith.constant 0 : index
    %599 = vector.load %arg10[%598, %c0_263, %c0_264] : memref<8x8x128xf32, #tpu.memory_space<vmem>>, vector<1x8x128xf32>
    %600 = vector.shape_cast %599 : vector<1x8x128xf32> to vector<8x128xf32>
    %601 = vector.shape_cast %597 : vector<8x128xf32> to vector<1x8x128xf32>
    tpu.vector_store %arg10[%598, %c0_263, %c0_264], %601 {strides = array<i32>} : memref<8x8x128xf32, #tpu.memory_space<vmem>>, vector<1x8x128xf32>,
    %c1_i32_265 = arith.constant 1 : i32
    %602 = arith.index_cast %c1_i32_265 : i32 to index
    %c0_266 = arith.constant 0 : index
    %c0_267 = arith.constant 0 : index
    %603 = vector.load %arg9[%602, %c0_266, %c0_267] : memref<8x8x32xf32, #tpu.memory_space<vmem>>, vector<1x8x32xf32>
    %604 = vector.shape_cast %603 : vector<1x8x32xf32> to vector<8x32xf32>
    %cst_268 = arith.constant dense<0.000000e+00> : vector<8x128xf32>
    %605 = tpu.matmul %604, %586, %cst_268 {dimension_numbers = #tpu.dot_dimension_numbers<[1], [0], [0], [1], [0, 0, 1, 1], [], []>} : vector<8x32xf32>, vector<32x128xf32>, vector<8x128xf32> -> vector<8x128xf32>
    %606 = arith.addf %605, %592 : vector<8x128xf32>
    %607 = arith.index_cast %c1_i32_265 : i32 to index
    %c0_269 = arith.constant 0 : index
    %c0_270 = arith.constant 0 : index
    %608 = vector.load %arg10[%607, %c0_269, %c0_270] : memref<8x8x128xf32, #tpu.memory_space<vmem>>, vector<1x8x128xf32>
    %609 = vector.shape_cast %608 : vector<1x8x128xf32> to vector<8x128xf32>
    %610 = vector.shape_cast %606 : vector<8x128xf32> to vector<1x8x128xf32>
    tpu.vector_store %arg10[%607, %c0_269, %c0_270], %610 {strides = array<i32>} : memref<8x8x128xf32, #tpu.memory_space<vmem>>, vector<1x8x128xf32>,
    %c2_i32_271 = arith.constant 2 : i32
    %611 = arith.index_cast %c2_i32_271 : i32 to index
    %c0_272 = arith.constant 0 : index
    %c0_273 = arith.constant 0 : index
    %612 = vector.load %arg9[%611, %c0_272, %c0_273] : memref<8x8x32xf32, #tpu.memory_space<vmem>>, vector<1x8x32xf32>
    %613 = vector.shape_cast %612 : vector<1x8x32xf32> to vector<8x32xf32>
    %cst_274 = arith.constant dense<0.000000e+00> : vector<8x128xf32>
    %614 = tpu.matmul %613, %586, %cst_274 {dimension_numbers = #tpu.dot_dimension_numbers<[1], [0], [0], [1], [0, 0, 1, 1], [], []>} : vector<8x32xf32>, vector<32x128xf32>, vector<8x128xf32> -> vector<8x128xf32>
    %615 = arith.addf %614, %592 : vector<8x128xf32>
    %616 = arith.index_cast %c2_i32_271 : i32 to index
    %c0_275 = arith.constant 0 : index
    %c0_276 = arith.constant 0 : index
    %617 = vector.load %arg10[%616, %c0_275, %c0_276] : memref<8x8x128xf32, #tpu.memory_space<vmem>>, vector<1x8x128xf32>
    %618 = vector.shape_cast %617 : vector<1x8x128xf32> to vector<8x128xf32>
    %619 = vector.shape_cast %615 : vector<8x128xf32> to vector<1x8x128xf32>
    tpu.vector_store %arg10[%616, %c0_275, %c0_276], %619 {strides = array<i32>} : memref<8x8x128xf32, #tpu.memory_space<vmem>>, vector<1x8x128xf32>,
    %c3_i32_277 = arith.constant 3 : i32
    %620 = arith.index_cast %c3_i32_277 : i32 to index
    %c0_278 = arith.constant 0 : index
    %c0_279 = arith.constant 0 : index
    %621 = vector.load %arg9[%620, %c0_278, %c0_279] : memref<8x8x32xf32, #tpu.memory_space<vmem>>, vector<1x8x32xf32>
    %622 = vector.shape_cast %621 : vector<1x8x32xf32> to vector<8x32xf32>
    %cst_280 = arith.constant dense<0.000000e+00> : vector<8x128xf32>
    %623 = tpu.matmul %622, %586, %cst_280 {dimension_numbers = #tpu.dot_dimension_numbers<[1], [0], [0], [1], [0, 0, 1, 1], [], []>} : vector<8x32xf32>, vector<32x128xf32>, vector<8x128xf32> -> vector<8x128xf32>
    %624 = arith.addf %623, %592 : vector<8x128xf32>
    %625 = arith.index_cast %c3_i32_277 : i32 to index
    %c0_281 = arith.constant 0 : index
    %c0_282 = arith.constant 0 : index
    %626 = vector.load %arg10[%625, %c0_281, %c0_282] : memref<8x8x128xf32, #tpu.memory_space<vmem>>, vector<1x8x128xf32>
    %627 = vector.shape_cast %626 : vector<1x8x128xf32> to vector<8x128xf32>
    %628 = vector.shape_cast %624 : vector<8x128xf32> to vector<1x8x128xf32>
    tpu.vector_store %arg10[%625, %c0_281, %c0_282], %628 {strides = array<i32>} : memref<8x8x128xf32, #tpu.memory_space<vmem>>, vector<1x8x128xf32>,
    %c4_i32_283 = arith.constant 4 : i32
    %629 = arith.index_cast %c4_i32_283 : i32 to index
    %c0_284 = arith.constant 0 : index
    %c0_285 = arith.constant 0 : index
    %630 = vector.load %arg9[%629, %c0_284, %c0_285] : memref<8x8x32xf32, #tpu.memory_space<vmem>>, vector<1x8x32xf32>
    %631 = vector.shape_cast %630 : vector<1x8x32xf32> to vector<8x32xf32>
    %cst_286 = arith.constant dense<0.000000e+00> : vector<8x128xf32>
    %632 = tpu.matmul %631, %586, %cst_286 {dimension_numbers = #tpu.dot_dimension_numbers<[1], [0], [0], [1], [0, 0, 1, 1], [], []>} : vector<8x32xf32>, vector<32x128xf32>, vector<8x128xf32> -> vector<8x128xf32>
    %633 = arith.addf %632, %592 : vector<8x128xf32>
    %634 = arith.index_cast %c4_i32_283 : i32 to index
    %c0_287 = arith.constant 0 : index
    %c0_288 = arith.constant 0 : index
    %635 = vector.load %arg10[%634, %c0_287, %c0_288] : memref<8x8x128xf32, #tpu.memory_space<vmem>>, vector<1x8x128xf32>
    %636 = vector.shape_cast %635 : vector<1x8x128xf32> to vector<8x128xf32>
    %637 = vector.shape_cast %633 : vector<8x128xf32> to vector<1x8x128xf32>
    tpu.vector_store %arg10[%634, %c0_287, %c0_288], %637 {strides = array<i32>} : memref<8x8x128xf32, #tpu.memory_space<vmem>>, vector<1x8x128xf32>,
    %c5_i32_289 = arith.constant 5 : i32
    %638 = arith.index_cast %c5_i32_289 : i32 to index
    %c0_290 = arith.constant 0 : index
    %c0_291 = arith.constant 0 : index
    %639 = vector.load %arg9[%638, %c0_290, %c0_291] : memref<8x8x32xf32, #tpu.memory_space<vmem>>, vector<1x8x32xf32>
    %640 = vector.shape_cast %639 : vector<1x8x32xf32> to vector<8x32xf32>
    %cst_292 = arith.constant dense<0.000000e+00> : vector<8x128xf32>
    %641 = tpu.matmul %640, %586, %cst_292 {dimension_numbers = #tpu.dot_dimension_numbers<[1], [0], [0], [1], [0, 0, 1, 1], [], []>} : vector<8x32xf32>, vector<32x128xf32>, vector<8x128xf32> -> vector<8x128xf32>
    %642 = arith.addf %641, %592 : vector<8x128xf32>
    %643 = arith.index_cast %c5_i32_289 : i32 to index
    %c0_293 = arith.constant 0 : index
    %c0_294 = arith.constant 0 : index
    %644 = vector.load %arg10[%643, %c0_293, %c0_294] : memref<8x8x128xf32, #tpu.memory_space<vmem>>, vector<1x8x128xf32>
    %645 = vector.shape_cast %644 : vector<1x8x128xf32> to vector<8x128xf32>
    %646 = vector.shape_cast %642 : vector<8x128xf32> to vector<1x8x128xf32>
    tpu.vector_store %arg10[%643, %c0_293, %c0_294], %646 {strides = array<i32>} : memref<8x8x128xf32, #tpu.memory_space<vmem>>, vector<1x8x128xf32>,
    %c6_i32_295 = arith.constant 6 : i32
    %647 = arith.index_cast %c6_i32_295 : i32 to index
    %c0_296 = arith.constant 0 : index
    %c0_297 = arith.constant 0 : index
    %648 = vector.load %arg9[%647, %c0_296, %c0_297] : memref<8x8x32xf32, #tpu.memory_space<vmem>>, vector<1x8x32xf32>
    %649 = vector.shape_cast %648 : vector<1x8x32xf32> to vector<8x32xf32>
    %cst_298 = arith.constant dense<0.000000e+00> : vector<8x128xf32>
    %650 = tpu.matmul %649, %586, %cst_298 {dimension_numbers = #tpu.dot_dimension_numbers<[1], [0], [0], [1], [0, 0, 1, 1], [], []>} : vector<8x32xf32>, vector<32x128xf32>, vector<8x128xf32> -> vector<8x128xf32>
    %651 = arith.addf %650, %592 : vector<8x128xf32>
    %652 = arith.index_cast %c6_i32_295 : i32 to index
    %c0_299 = arith.constant 0 : index
    %c0_300 = arith.constant 0 : index
    %653 = vector.load %arg10[%652, %c0_299, %c0_300] : memref<8x8x128xf32, #tpu.memory_space<vmem>>, vector<1x8x128xf32>
    %654 = vector.shape_cast %653 : vector<1x8x128xf32> to vector<8x128xf32>
    %655 = vector.shape_cast %651 : vector<8x128xf32> to vector<1x8x128xf32>
    tpu.vector_store %arg10[%652, %c0_299, %c0_300], %655 {strides = array<i32>} : memref<8x8x128xf32, #tpu.memory_space<vmem>>, vector<1x8x128xf32>,
    %c7_i32_301 = arith.constant 7 : i32
    %656 = arith.index_cast %c7_i32_301 : i32 to index
    %c0_302 = arith.constant 0 : index
    %c0_303 = arith.constant 0 : index
    %657 = vector.load %arg9[%656, %c0_302, %c0_303] : memref<8x8x32xf32, #tpu.memory_space<vmem>>, vector<1x8x32xf32>
    %658 = vector.shape_cast %657 : vector<1x8x32xf32> to vector<8x32xf32>
    %cst_304 = arith.constant dense<0.000000e+00> : vector<8x128xf32>
    %659 = tpu.matmul %658, %586, %cst_304 {dimension_numbers = #tpu.dot_dimension_numbers<[1], [0], [0], [1], [0, 0, 1, 1], [], []>} : vector<8x32xf32>, vector<32x128xf32>, vector<8x128xf32> -> vector<8x128xf32>
    %660 = arith.addf %659, %592 : vector<8x128xf32>
    %661 = arith.index_cast %c7_i32_301 : i32 to index
    %c0_305 = arith.constant 0 : index
    %c0_306 = arith.constant 0 : index
    %662 = vector.load %arg10[%661, %c0_305, %c0_306] : memref<8x8x128xf32, #tpu.memory_space<vmem>>, vector<1x8x128xf32>
    %663 = vector.shape_cast %662 : vector<1x8x128xf32> to vector<8x128xf32>
    %664 = vector.shape_cast %660 : vector<8x128xf32> to vector<1x8x128xf32>
    tpu.vector_store %arg10[%661, %c0_305, %c0_306], %664 {strides = array<i32>} : memref<8x8x128xf32, #tpu.memory_space<vmem>>, vector<1x8x128xf32>,
    %c8_i32_307 = arith.constant 8 : i32
    %c0_308 = arith.constant 0 : index
    %c0_309 = arith.constant 0 : index
    %c0_310 = arith.constant 0 : index
    %665 = vector.load %arg10[%c0_308, %c0_309, %c0_310] : memref<8x8x128xf32, #tpu.memory_space<vmem>>, vector<1x8x128xf32>
    %666 = vector.shape_cast %665 : vector<1x8x128xf32> to vector<8x128xf32>
    %cst_311 = arith.constant 0.000000e+00 : f32
    %667 = vector.broadcast %cst_311 : f32 to vector<8x32xf32>
    %668 = vector.extract_strided_slice %666 {offsets = [0, 0], sizes = [8, 96], strides = [1, 1]} : vector<8x128xf32> to vector<8x96xf32>
    %cst_312 = arith.constant 5.000000e-01 : f32
    %669 = vector.broadcast %cst_312 : f32 to vector<8x96xf32>
    %670 = arith.mulf %669, %668 : vector<8x96xf32>
    %671 = math.tanh %670 : vector<8x96xf32>
    %cst_313 = arith.constant 5.000000e-01 : f32
    %672 = vector.broadcast %cst_313 : f32 to vector<8x96xf32>
    %673 = arith.mulf %672, %671 : vector<8x96xf32>
    %cst_314 = arith.constant 5.000000e-01 : f32
    %674 = vector.broadcast %cst_314 : f32 to vector<8x96xf32>
    %675 = arith.addf %673, %674 : vector<8x96xf32>
    %676 = vector.extract_strided_slice %666 {offsets = [0, 96], sizes = [8, 32], strides = [1, 1]} : vector<8x128xf32> to vector<8x32xf32>
    %677 = math.tanh %676 : vector<8x32xf32>
    %678 = vector.extract_strided_slice %675 {offsets = [0, 32], sizes = [8, 32], strides = [1, 1]} : vector<8x96xf32> to vector<8x32xf32>
    %679 = arith.mulf %678, %667 : vector<8x32xf32>
    %680 = vector.extract_strided_slice %675 {offsets = [0, 0], sizes = [8, 32], strides = [1, 1]} : vector<8x96xf32> to vector<8x32xf32>
    %681 = arith.mulf %680, %677 : vector<8x32xf32>
    %682 = arith.addf %679, %681 : vector<8x32xf32>
    %683 = vector.extract_strided_slice %675 {offsets = [0, 64], sizes = [8, 32], strides = [1, 1]} : vector<8x96xf32> to vector<8x32xf32>
    %684 = math.tanh %682 : vector<8x32xf32>
    %685 = arith.mulf %683, %684 : vector<8x32xf32>
    %c0_315 = arith.constant 0 : index
    %c0_316 = arith.constant 0 : index
    %c0_317 = arith.constant 0 : index
    %686 = vector.load %arg9[%c0_315, %c0_316, %c0_317] : memref<8x8x32xf32, #tpu.memory_space<vmem>>, vector<1x8x32xf32>
    %687 = vector.shape_cast %686 : vector<1x8x32xf32> to vector<8x32xf32>
    %688 = vector.shape_cast %685 : vector<8x32xf32> to vector<1x8x32xf32>
    tpu.vector_store %arg9[%c0_315, %c0_316, %c0_317], %688 {strides = array<i32>} : memref<8x8x32xf32, #tpu.memory_space<vmem>>, vector<1x8x32xf32>,
    %c1_i32_318 = arith.constant 1 : i32
    %689 = arith.index_cast %c1_i32_318 : i32 to index
    %c0_319 = arith.constant 0 : index
    %c0_320 = arith.constant 0 : index
    %690 = vector.load %arg10[%689, %c0_319, %c0_320] : memref<8x8x128xf32, #tpu.memory_space<vmem>>, vector<1x8x128xf32>
    %691 = vector.shape_cast %690 : vector<1x8x128xf32> to vector<8x128xf32>
    %cst_321 = arith.constant dense<0.000000e+00> : vector<8x128xf32>
    %692 = tpu.matmul %685, %588, %cst_321 {dimension_numbers = #tpu.dot_dimension_numbers<[1], [0], [0], [1], [0, 0, 1, 1], [], []>} : vector<8x32xf32>, vector<32x128xf32>, vector<8x128xf32> -> vector<8x128xf32>
    %693 = arith.addf %691, %692 : vector<8x128xf32>
    %694 = vector.extract_strided_slice %693 {offsets = [0, 0], sizes = [8, 96], strides = [1, 1]} : vector<8x128xf32> to vector<8x96xf32>
    %cst_322 = arith.constant 5.000000e-01 : f32
    %695 = vector.broadcast %cst_322 : f32 to vector<8x96xf32>
    %696 = arith.mulf %695, %694 : vector<8x96xf32>
    %697 = math.tanh %696 : vector<8x96xf32>
    %cst_323 = arith.constant 5.000000e-01 : f32
    %698 = vector.broadcast %cst_323 : f32 to vector<8x96xf32>
    %699 = arith.mulf %698, %697 : vector<8x96xf32>
    %cst_324 = arith.constant 5.000000e-01 : f32
    %700 = vector.broadcast %cst_324 : f32 to vector<8x96xf32>
    %701 = arith.addf %699, %700 : vector<8x96xf32>
    %702 = vector.extract_strided_slice %693 {offsets = [0, 96], sizes = [8, 32], strides = [1, 1]} : vector<8x128xf32> to vector<8x32xf32>
    %703 = math.tanh %702 : vector<8x32xf32>
    %704 = vector.extract_strided_slice %701 {offsets = [0, 32], sizes = [8, 32], strides = [1, 1]} : vector<8x96xf32> to vector<8x32xf32>
    %705 = arith.mulf %704, %682 : vector<8x32xf32>
    %706 = vector.extract_strided_slice %701 {offsets = [0, 0], sizes = [8, 32], strides = [1, 1]} : vector<8x96xf32> to vector<8x32xf32>
    %707 = arith.mulf %706, %703 : vector<8x32xf32>
    %708 = arith.addf %705, %707 : vector<8x32xf32>
    %709 = vector.extract_strided_slice %701 {offsets = [0, 64], sizes = [8, 32], strides = [1, 1]} : vector<8x96xf32> to vector<8x32xf32>
    %710 = math.tanh %708 : vector<8x32xf32>
    %711 = arith.mulf %709, %710 : vector<8x32xf32>
    %712 = arith.index_cast %c1_i32_318 : i32 to index
    %c0_325 = arith.constant 0 : index
    %c0_326 = arith.constant 0 : index
    %713 = vector.load %arg9[%712, %c0_325, %c0_326] : memref<8x8x32xf32, #tpu.memory_space<vmem>>, vector<1x8x32xf32>
    %714 = vector.shape_cast %713 : vector<1x8x32xf32> to vector<8x32xf32>
    %715 = vector.shape_cast %711 : vector<8x32xf32> to vector<1x8x32xf32>
    tpu.vector_store %arg9[%712, %c0_325, %c0_326], %715 {strides = array<i32>} : memref<8x8x32xf32, #tpu.memory_space<vmem>>, vector<1x8x32xf32>,
    %c2_i32_327 = arith.constant 2 : i32
    %716 = arith.index_cast %c2_i32_327 : i32 to index
    %c0_328 = arith.constant 0 : index
    %c0_329 = arith.constant 0 : index
    %717 = vector.load %arg10[%716, %c0_328, %c0_329] : memref<8x8x128xf32, #tpu.memory_space<vmem>>, vector<1x8x128xf32>
    %718 = vector.shape_cast %717 : vector<1x8x128xf32> to vector<8x128xf32>
    %cst_330 = arith.constant dense<0.000000e+00> : vector<8x128xf32>
    %719 = tpu.matmul %711, %588, %cst_330 {dimension_numbers = #tpu.dot_dimension_numbers<[1], [0], [0], [1], [0, 0, 1, 1], [], []>} : vector<8x32xf32>, vector<32x128xf32>, vector<8x128xf32> -> vector<8x128xf32>
    %720 = arith.addf %718, %719 : vector<8x128xf32>
    %721 = vector.extract_strided_slice %720 {offsets = [0, 0], sizes = [8, 96], strides = [1, 1]} : vector<8x128xf32> to vector<8x96xf32>
    %cst_331 = arith.constant 5.000000e-01 : f32
    %722 = vector.broadcast %cst_331 : f32 to vector<8x96xf32>
    %723 = arith.mulf %722, %721 : vector<8x96xf32>
    %724 = math.tanh %723 : vector<8x96xf32>
    %cst_332 = arith.constant 5.000000e-01 : f32
    %725 = vector.broadcast %cst_332 : f32 to vector<8x96xf32>
    %726 = arith.mulf %725, %724 : vector<8x96xf32>
    %cst_333 = arith.constant 5.000000e-01 : f32
    %727 = vector.broadcast %cst_333 : f32 to vector<8x96xf32>
    %728 = arith.addf %726, %727 : vector<8x96xf32>
    %729 = vector.extract_strided_slice %720 {offsets = [0, 96], sizes = [8, 32], strides = [1, 1]} : vector<8x128xf32> to vector<8x32xf32>
    %730 = math.tanh %729 : vector<8x32xf32>
    %731 = vector.extract_strided_slice %728 {offsets = [0, 32], sizes = [8, 32], strides = [1, 1]} : vector<8x96xf32> to vector<8x32xf32>
    %732 = arith.mulf %731, %708 : vector<8x32xf32>
    %733 = vector.extract_strided_slice %728 {offsets = [0, 0], sizes = [8, 32], strides = [1, 1]} : vector<8x96xf32> to vector<8x32xf32>
    %734 = arith.mulf %733, %730 : vector<8x32xf32>
    %735 = arith.addf %732, %734 : vector<8x32xf32>
    %736 = vector.extract_strided_slice %728 {offsets = [0, 64], sizes = [8, 32], strides = [1, 1]} : vector<8x96xf32> to vector<8x32xf32>
    %737 = math.tanh %735 : vector<8x32xf32>
    %738 = arith.mulf %736, %737 : vector<8x32xf32>
    %739 = arith.index_cast %c2_i32_327 : i32 to index
    %c0_334 = arith.constant 0 : index
    %c0_335 = arith.constant 0 : index
    %740 = vector.load %arg9[%739, %c0_334, %c0_335] : memref<8x8x32xf32, #tpu.memory_space<vmem>>, vector<1x8x32xf32>
    %741 = vector.shape_cast %740 : vector<1x8x32xf32> to vector<8x32xf32>
    %742 = vector.shape_cast %738 : vector<8x32xf32> to vector<1x8x32xf32>
    tpu.vector_store %arg9[%739, %c0_334, %c0_335], %742 {strides = array<i32>} : memref<8x8x32xf32, #tpu.memory_space<vmem>>, vector<1x8x32xf32>,
    %c3_i32_336 = arith.constant 3 : i32
    %743 = arith.index_cast %c3_i32_336 : i32 to index
    %c0_337 = arith.constant 0 : index
    %c0_338 = arith.constant 0 : index
    %744 = vector.load %arg10[%743, %c0_337, %c0_338] : memref<8x8x128xf32, #tpu.memory_space<vmem>>, vector<1x8x128xf32>
    %745 = vector.shape_cast %744 : vector<1x8x128xf32> to vector<8x128xf32>
    %cst_339 = arith.constant dense<0.000000e+00> : vector<8x128xf32>
    %746 = tpu.matmul %738, %588, %cst_339 {dimension_numbers = #tpu.dot_dimension_numbers<[1], [0], [0], [1], [0, 0, 1, 1], [], []>} : vector<8x32xf32>, vector<32x128xf32>, vector<8x128xf32> -> vector<8x128xf32>
    %747 = arith.addf %745, %746 : vector<8x128xf32>
    %748 = vector.extract_strided_slice %747 {offsets = [0, 0], sizes = [8, 96], strides = [1, 1]} : vector<8x128xf32> to vector<8x96xf32>
    %cst_340 = arith.constant 5.000000e-01 : f32
    %749 = vector.broadcast %cst_340 : f32 to vector<8x96xf32>
    %750 = arith.mulf %749, %748 : vector<8x96xf32>
    %751 = math.tanh %750 : vector<8x96xf32>
    %cst_341 = arith.constant 5.000000e-01 : f32
    %752 = vector.broadcast %cst_341 : f32 to vector<8x96xf32>
    %753 = arith.mulf %752, %751 : vector<8x96xf32>
    %cst_342 = arith.constant 5.000000e-01 : f32
    %754 = vector.broadcast %cst_342 : f32 to vector<8x96xf32>
    %755 = arith.addf %753, %754 : vector<8x96xf32>
    %756 = vector.extract_strided_slice %747 {offsets = [0, 96], sizes = [8, 32], strides = [1, 1]} : vector<8x128xf32> to vector<8x32xf32>
    %757 = math.tanh %756 : vector<8x32xf32>
    %758 = vector.extract_strided_slice %755 {offsets = [0, 32], sizes = [8, 32], strides = [1, 1]} : vector<8x96xf32> to vector<8x32xf32>
    %759 = arith.mulf %758, %735 : vector<8x32xf32>
    %760 = vector.extract_strided_slice %755 {offsets = [0, 0], sizes = [8, 32], strides = [1, 1]} : vector<8x96xf32> to vector<8x32xf32>
    %761 = arith.mulf %760, %757 : vector<8x32xf32>
    %762 = arith.addf %759, %761 : vector<8x32xf32>
    %763 = vector.extract_strided_slice %755 {offsets = [0, 64], sizes = [8, 32], strides = [1, 1]} : vector<8x96xf32> to vector<8x32xf32>
    %764 = math.tanh %762 : vector<8x32xf32>
    %765 = arith.mulf %763, %764 : vector<8x32xf32>
    %766 = arith.index_cast %c3_i32_336 : i32 to index
    %c0_343 = arith.constant 0 : index
    %c0_344 = arith.constant 0 : index
    %767 = vector.load %arg9[%766, %c0_343, %c0_344] : memref<8x8x32xf32, #tpu.memory_space<vmem>>, vector<1x8x32xf32>
    %768 = vector.shape_cast %767 : vector<1x8x32xf32> to vector<8x32xf32>
    %769 = vector.shape_cast %765 : vector<8x32xf32> to vector<1x8x32xf32>
    tpu.vector_store %arg9[%766, %c0_343, %c0_344], %769 {strides = array<i32>} : memref<8x8x32xf32, #tpu.memory_space<vmem>>, vector<1x8x32xf32>,
    %c4_i32_345 = arith.constant 4 : i32
    %770 = arith.index_cast %c4_i32_345 : i32 to index
    %c0_346 = arith.constant 0 : index
    %c0_347 = arith.constant 0 : index
    %771 = vector.load %arg10[%770, %c0_346, %c0_347] : memref<8x8x128xf32, #tpu.memory_space<vmem>>, vector<1x8x128xf32>
    %772 = vector.shape_cast %771 : vector<1x8x128xf32> to vector<8x128xf32>
    %cst_348 = arith.constant dense<0.000000e+00> : vector<8x128xf32>
    %773 = tpu.matmul %765, %588, %cst_348 {dimension_numbers = #tpu.dot_dimension_numbers<[1], [0], [0], [1], [0, 0, 1, 1], [], []>} : vector<8x32xf32>, vector<32x128xf32>, vector<8x128xf32> -> vector<8x128xf32>
    %774 = arith.addf %772, %773 : vector<8x128xf32>
    %775 = vector.extract_strided_slice %774 {offsets = [0, 0], sizes = [8, 96], strides = [1, 1]} : vector<8x128xf32> to vector<8x96xf32>
    %cst_349 = arith.constant 5.000000e-01 : f32
    %776 = vector.broadcast %cst_349 : f32 to vector<8x96xf32>
    %777 = arith.mulf %776, %775 : vector<8x96xf32>
    %778 = math.tanh %777 : vector<8x96xf32>
    %cst_350 = arith.constant 5.000000e-01 : f32
    %779 = vector.broadcast %cst_350 : f32 to vector<8x96xf32>
    %780 = arith.mulf %779, %778 : vector<8x96xf32>
    %cst_351 = arith.constant 5.000000e-01 : f32
    %781 = vector.broadcast %cst_351 : f32 to vector<8x96xf32>
    %782 = arith.addf %780, %781 : vector<8x96xf32>
    %783 = vector.extract_strided_slice %774 {offsets = [0, 96], sizes = [8, 32], strides = [1, 1]} : vector<8x128xf32> to vector<8x32xf32>
    %784 = math.tanh %783 : vector<8x32xf32>
    %785 = vector.extract_strided_slice %782 {offsets = [0, 32], sizes = [8, 32], strides = [1, 1]} : vector<8x96xf32> to vector<8x32xf32>
    %786 = arith.mulf %785, %762 : vector<8x32xf32>
    %787 = vector.extract_strided_slice %782 {offsets = [0, 0], sizes = [8, 32], strides = [1, 1]} : vector<8x96xf32> to vector<8x32xf32>
    %788 = arith.mulf %787, %784 : vector<8x32xf32>
    %789 = arith.addf %786, %788 : vector<8x32xf32>
    %790 = vector.extract_strided_slice %782 {offsets = [0, 64], sizes = [8, 32], strides = [1, 1]} : vector<8x96xf32> to vector<8x32xf32>
    %791 = math.tanh %789 : vector<8x32xf32>
    %792 = arith.mulf %790, %791 : vector<8x32xf32>
    %793 = arith.index_cast %c4_i32_345 : i32 to index
    %c0_352 = arith.constant 0 : index
    %c0_353 = arith.constant 0 : index
    %794 = vector.load %arg9[%793, %c0_352, %c0_353] : memref<8x8x32xf32, #tpu.memory_space<vmem>>, vector<1x8x32xf32>
    %795 = vector.shape_cast %794 : vector<1x8x32xf32> to vector<8x32xf32>
    %796 = vector.shape_cast %792 : vector<8x32xf32> to vector<1x8x32xf32>
    tpu.vector_store %arg9[%793, %c0_352, %c0_353], %796 {strides = array<i32>} : memref<8x8x32xf32, #tpu.memory_space<vmem>>, vector<1x8x32xf32>,
    %c5_i32_354 = arith.constant 5 : i32
    %797 = arith.index_cast %c5_i32_354 : i32 to index
    %c0_355 = arith.constant 0 : index
    %c0_356 = arith.constant 0 : index
    %798 = vector.load %arg10[%797, %c0_355, %c0_356] : memref<8x8x128xf32, #tpu.memory_space<vmem>>, vector<1x8x128xf32>
    %799 = vector.shape_cast %798 : vector<1x8x128xf32> to vector<8x128xf32>
    %cst_357 = arith.constant dense<0.000000e+00> : vector<8x128xf32>
    %800 = tpu.matmul %792, %588, %cst_357 {dimension_numbers = #tpu.dot_dimension_numbers<[1], [0], [0], [1], [0, 0, 1, 1], [], []>} : vector<8x32xf32>, vector<32x128xf32>, vector<8x128xf32> -> vector<8x128xf32>
    %801 = arith.addf %799, %800 : vector<8x128xf32>
    %802 = vector.extract_strided_slice %801 {offsets = [0, 0], sizes = [8, 96], strides = [1, 1]} : vector<8x128xf32> to vector<8x96xf32>
    %cst_358 = arith.constant 5.000000e-01 : f32
    %803 = vector.broadcast %cst_358 : f32 to vector<8x96xf32>
    %804 = arith.mulf %803, %802 : vector<8x96xf32>
    %805 = math.tanh %804 : vector<8x96xf32>
    %cst_359 = arith.constant 5.000000e-01 : f32
    %806 = vector.broadcast %cst_359 : f32 to vector<8x96xf32>
    %807 = arith.mulf %806, %805 : vector<8x96xf32>
    %cst_360 = arith.constant 5.000000e-01 : f32
    %808 = vector.broadcast %cst_360 : f32 to vector<8x96xf32>
    %809 = arith.addf %807, %808 : vector<8x96xf32>
    %810 = vector.extract_strided_slice %801 {offsets = [0, 96], sizes = [8, 32], strides = [1, 1]} : vector<8x128xf32> to vector<8x32xf32>
    %811 = math.tanh %810 : vector<8x32xf32>
    %812 = vector.extract_strided_slice %809 {offsets = [0, 32], sizes = [8, 32], strides = [1, 1]} : vector<8x96xf32> to vector<8x32xf32>
    %813 = arith.mulf %812, %789 : vector<8x32xf32>
    %814 = vector.extract_strided_slice %809 {offsets = [0, 0], sizes = [8, 32], strides = [1, 1]} : vector<8x96xf32> to vector<8x32xf32>
    %815 = arith.mulf %814, %811 : vector<8x32xf32>
    %816 = arith.addf %813, %815 : vector<8x32xf32>
    %817 = vector.extract_strided_slice %809 {offsets = [0, 64], sizes = [8, 32], strides = [1, 1]} : vector<8x96xf32> to vector<8x32xf32>
    %818 = math.tanh %816 : vector<8x32xf32>
    %819 = arith.mulf %817, %818 : vector<8x32xf32>
    %820 = arith.index_cast %c5_i32_354 : i32 to index
    %c0_361 = arith.constant 0 : index
    %c0_362 = arith.constant 0 : index
    %821 = vector.load %arg9[%820, %c0_361, %c0_362] : memref<8x8x32xf32, #tpu.memory_space<vmem>>, vector<1x8x32xf32>
    %822 = vector.shape_cast %821 : vector<1x8x32xf32> to vector<8x32xf32>
    %823 = vector.shape_cast %819 : vector<8x32xf32> to vector<1x8x32xf32>
    tpu.vector_store %arg9[%820, %c0_361, %c0_362], %823 {strides = array<i32>} : memref<8x8x32xf32, #tpu.memory_space<vmem>>, vector<1x8x32xf32>,
    %c6_i32_363 = arith.constant 6 : i32
    %824 = arith.index_cast %c6_i32_363 : i32 to index
    %c0_364 = arith.constant 0 : index
    %c0_365 = arith.constant 0 : index
    %825 = vector.load %arg10[%824, %c0_364, %c0_365] : memref<8x8x128xf32, #tpu.memory_space<vmem>>, vector<1x8x128xf32>
    %826 = vector.shape_cast %825 : vector<1x8x128xf32> to vector<8x128xf32>
    %cst_366 = arith.constant dense<0.000000e+00> : vector<8x128xf32>
    %827 = tpu.matmul %819, %588, %cst_366 {dimension_numbers = #tpu.dot_dimension_numbers<[1], [0], [0], [1], [0, 0, 1, 1], [], []>} : vector<8x32xf32>, vector<32x128xf32>, vector<8x128xf32> -> vector<8x128xf32>
    %828 = arith.addf %826, %827 : vector<8x128xf32>
    %829 = vector.extract_strided_slice %828 {offsets = [0, 0], sizes = [8, 96], strides = [1, 1]} : vector<8x128xf32> to vector<8x96xf32>
    %cst_367 = arith.constant 5.000000e-01 : f32
    %830 = vector.broadcast %cst_367 : f32 to vector<8x96xf32>
    %831 = arith.mulf %830, %829 : vector<8x96xf32>
    %832 = math.tanh %831 : vector<8x96xf32>
    %cst_368 = arith.constant 5.000000e-01 : f32
    %833 = vector.broadcast %cst_368 : f32 to vector<8x96xf32>
    %834 = arith.mulf %833, %832 : vector<8x96xf32>
    %cst_369 = arith.constant 5.000000e-01 : f32
    %835 = vector.broadcast %cst_369 : f32 to vector<8x96xf32>
    %836 = arith.addf %834, %835 : vector<8x96xf32>
    %837 = vector.extract_strided_slice %828 {offsets = [0, 96], sizes = [8, 32], strides = [1, 1]} : vector<8x128xf32> to vector<8x32xf32>
    %838 = math.tanh %837 : vector<8x32xf32>
    %839 = vector.extract_strided_slice %836 {offsets = [0, 32], sizes = [8, 32], strides = [1, 1]} : vector<8x96xf32> to vector<8x32xf32>
    %840 = arith.mulf %839, %816 : vector<8x32xf32>
    %841 = vector.extract_strided_slice %836 {offsets = [0, 0], sizes = [8, 32], strides = [1, 1]} : vector<8x96xf32> to vector<8x32xf32>
    %842 = arith.mulf %841, %838 : vector<8x32xf32>
    %843 = arith.addf %840, %842 : vector<8x32xf32>
    %844 = vector.extract_strided_slice %836 {offsets = [0, 64], sizes = [8, 32], strides = [1, 1]} : vector<8x96xf32> to vector<8x32xf32>
    %845 = math.tanh %843 : vector<8x32xf32>
    %846 = arith.mulf %844, %845 : vector<8x32xf32>
    %847 = arith.index_cast %c6_i32_363 : i32 to index
    %c0_370 = arith.constant 0 : index
    %c0_371 = arith.constant 0 : index
    %848 = vector.load %arg9[%847, %c0_370, %c0_371] : memref<8x8x32xf32, #tpu.memory_space<vmem>>, vector<1x8x32xf32>
    %849 = vector.shape_cast %848 : vector<1x8x32xf32> to vector<8x32xf32>
    %850 = vector.shape_cast %846 : vector<8x32xf32> to vector<1x8x32xf32>
    tpu.vector_store %arg9[%847, %c0_370, %c0_371], %850 {strides = array<i32>} : memref<8x8x32xf32, #tpu.memory_space<vmem>>, vector<1x8x32xf32>,
    %c7_i32_372 = arith.constant 7 : i32
    %851 = arith.index_cast %c7_i32_372 : i32 to index
    %c0_373 = arith.constant 0 : index
    %c0_374 = arith.constant 0 : index
    %852 = vector.load %arg10[%851, %c0_373, %c0_374] : memref<8x8x128xf32, #tpu.memory_space<vmem>>, vector<1x8x128xf32>
    %853 = vector.shape_cast %852 : vector<1x8x128xf32> to vector<8x128xf32>
    %cst_375 = arith.constant dense<0.000000e+00> : vector<8x128xf32>
    %854 = tpu.matmul %846, %588, %cst_375 {dimension_numbers = #tpu.dot_dimension_numbers<[1], [0], [0], [1], [0, 0, 1, 1], [], []>} : vector<8x32xf32>, vector<32x128xf32>, vector<8x128xf32> -> vector<8x128xf32>
    %855 = arith.addf %853, %854 : vector<8x128xf32>
    %856 = vector.extract_strided_slice %855 {offsets = [0, 0], sizes = [8, 96], strides = [1, 1]} : vector<8x128xf32> to vector<8x96xf32>
    %cst_376 = arith.constant 5.000000e-01 : f32
    %857 = vector.broadcast %cst_376 : f32 to vector<8x96xf32>
    %858 = arith.mulf %857, %856 : vector<8x96xf32>
    %859 = math.tanh %858 : vector<8x96xf32>
    %cst_377 = arith.constant 5.000000e-01 : f32
    %860 = vector.broadcast %cst_377 : f32 to vector<8x96xf32>
    %861 = arith.mulf %860, %859 : vector<8x96xf32>
    %cst_378 = arith.constant 5.000000e-01 : f32
    %862 = vector.broadcast %cst_378 : f32 to vector<8x96xf32>
    %863 = arith.addf %861, %862 : vector<8x96xf32>
    %864 = vector.extract_strided_slice %855 {offsets = [0, 96], sizes = [8, 32], strides = [1, 1]} : vector<8x128xf32> to vector<8x32xf32>
    %865 = math.tanh %864 : vector<8x32xf32>
    %866 = vector.extract_strided_slice %863 {offsets = [0, 32], sizes = [8, 32], strides = [1, 1]} : vector<8x96xf32> to vector<8x32xf32>
    %867 = arith.mulf %866, %843 : vector<8x32xf32>
    %868 = vector.extract_strided_slice %863 {offsets = [0, 0], sizes = [8, 32], strides = [1, 1]} : vector<8x96xf32> to vector<8x32xf32>
    %869 = arith.mulf %868, %865 : vector<8x32xf32>
    %870 = arith.addf %867, %869 : vector<8x32xf32>
    %871 = vector.extract_strided_slice %863 {offsets = [0, 64], sizes = [8, 32], strides = [1, 1]} : vector<8x96xf32> to vector<8x32xf32>
    %872 = math.tanh %870 : vector<8x32xf32>
    %873 = arith.mulf %871, %872 : vector<8x32xf32>
    %874 = arith.index_cast %c7_i32_372 : i32 to index
    %c0_379 = arith.constant 0 : index
    %c0_380 = arith.constant 0 : index
    %875 = vector.load %arg9[%874, %c0_379, %c0_380] : memref<8x8x32xf32, #tpu.memory_space<vmem>>, vector<1x8x32xf32>
    %876 = vector.shape_cast %875 : vector<1x8x32xf32> to vector<8x32xf32>
    %877 = vector.shape_cast %873 : vector<8x32xf32> to vector<1x8x32xf32>
    tpu.vector_store %arg9[%874, %c0_379, %c0_380], %877 {strides = array<i32>} : memref<8x8x32xf32, #tpu.memory_space<vmem>>, vector<1x8x32xf32>,
    %c7_i32_381 = arith.constant 7 : i32
    %c2_382 = arith.constant 2 : index
    %c0_383 = arith.constant 0 : index
    %c0_384 = arith.constant 0 : index
    %878 = vector.load %arg3[%c2_382, %c0_383, %c0_384] : memref<3x32x128xf32, #tpu.memory_space<vmem>>, vector<1x32x128xf32>
    %879 = vector.shape_cast %878 : vector<1x32x128xf32> to vector<32x128xf32>
    %c3 = arith.constant 3 : index
    %c0_385 = arith.constant 0 : index
    %c0_386 = arith.constant 0 : index
    %880 = vector.load %arg4[%c3, %c0_385, %c0_386] : memref<4x32x128xf32, #tpu.memory_space<vmem>>, vector<1x32x128xf32>
    %881 = vector.shape_cast %880 : vector<1x32x128xf32> to vector<32x128xf32>
    %c3_387 = arith.constant 3 : index
    %c0_388 = arith.constant 0 : index
    %c0_389 = arith.constant 0 : index
    %882 = vector.load %arg5[%c3_387, %c0_388, %c0_389] : memref<4x1x128xf32, #tpu.memory_space<vmem>>, vector<1x1x128xf32>
    %883 = vector.shape_cast %882 : vector<1x1x128xf32> to vector<1x128xf32>
    %884 = vector.shape_cast %883 : vector<1x128xf32> to vector<1x128xf32>
    %885 = vector.broadcast %884 : vector<1x128xf32> to vector<8x128xf32>
    %c0_i32_390 = arith.constant 0 : i32
    %886 = arith.index_cast %c0_i32_390 : i32 to index
    %c0_391 = arith.constant 0 : index
    %c0_392 = arith.constant 0 : index
    %887 = vector.load %arg9[%886, %c0_391, %c0_392] : memref<8x8x32xf32, #tpu.memory_space<vmem>>, vector<1x8x32xf32>
    %888 = vector.shape_cast %887 : vector<1x8x32xf32> to vector<8x32xf32>
    %cst_393 = arith.constant dense<0.000000e+00> : vector<8x128xf32>
    %889 = tpu.matmul %888, %879, %cst_393 {dimension_numbers = #tpu.dot_dimension_numbers<[1], [0], [0], [1], [0, 0, 1, 1], [], []>} : vector<8x32xf32>, vector<32x128xf32>, vector<8x128xf32> -> vector<8x128xf32>
    %890 = arith.addf %889, %885 : vector<8x128xf32>
    %891 = arith.index_cast %c0_i32_390 : i32 to index
    %c0_394 = arith.constant 0 : index
    %c0_395 = arith.constant 0 : index
    %892 = vector.load %arg10[%891, %c0_394, %c0_395] : memref<8x8x128xf32, #tpu.memory_space<vmem>>, vector<1x8x128xf32>
    %893 = vector.shape_cast %892 : vector<1x8x128xf32> to vector<8x128xf32>
    %894 = vector.shape_cast %890 : vector<8x128xf32> to vector<1x8x128xf32>
    tpu.vector_store %arg10[%891, %c0_394, %c0_395], %894 {strides = array<i32>} : memref<8x8x128xf32, #tpu.memory_space<vmem>>, vector<1x8x128xf32>,
    %c1_i32_396 = arith.constant 1 : i32
    %895 = arith.index_cast %c1_i32_396 : i32 to index
    %c0_397 = arith.constant 0 : index
    %c0_398 = arith.constant 0 : index
    %896 = vector.load %arg9[%895, %c0_397, %c0_398] : memref<8x8x32xf32, #tpu.memory_space<vmem>>, vector<1x8x32xf32>
    %897 = vector.shape_cast %896 : vector<1x8x32xf32> to vector<8x32xf32>
    %cst_399 = arith.constant dense<0.000000e+00> : vector<8x128xf32>
    %898 = tpu.matmul %897, %879, %cst_399 {dimension_numbers = #tpu.dot_dimension_numbers<[1], [0], [0], [1], [0, 0, 1, 1], [], []>} : vector<8x32xf32>, vector<32x128xf32>, vector<8x128xf32> -> vector<8x128xf32>
    %899 = arith.addf %898, %885 : vector<8x128xf32>
    %900 = arith.index_cast %c1_i32_396 : i32 to index
    %c0_400 = arith.constant 0 : index
    %c0_401 = arith.constant 0 : index
    %901 = vector.load %arg10[%900, %c0_400, %c0_401] : memref<8x8x128xf32, #tpu.memory_space<vmem>>, vector<1x8x128xf32>
    %902 = vector.shape_cast %901 : vector<1x8x128xf32> to vector<8x128xf32>
    %903 = vector.shape_cast %899 : vector<8x128xf32> to vector<1x8x128xf32>
    tpu.vector_store %arg10[%900, %c0_400, %c0_401], %903 {strides = array<i32>} : memref<8x8x128xf32, #tpu.memory_space<vmem>>, vector<1x8x128xf32>,
    %c2_i32_402 = arith.constant 2 : i32
    %904 = arith.index_cast %c2_i32_402 : i32 to index
    %c0_403 = arith.constant 0 : index
    %c0_404 = arith.constant 0 : index
    %905 = vector.load %arg9[%904, %c0_403, %c0_404] : memref<8x8x32xf32, #tpu.memory_space<vmem>>, vector<1x8x32xf32>
    %906 = vector.shape_cast %905 : vector<1x8x32xf32> to vector<8x32xf32>
    %cst_405 = arith.constant dense<0.000000e+00> : vector<8x128xf32>
    %907 = tpu.matmul %906, %879, %cst_405 {dimension_numbers = #tpu.dot_dimension_numbers<[1], [0], [0], [1], [0, 0, 1, 1], [], []>} : vector<8x32xf32>, vector<32x128xf32>, vector<8x128xf32> -> vector<8x128xf32>
    %908 = arith.addf %907, %885 : vector<8x128xf32>
    %909 = arith.index_cast %c2_i32_402 : i32 to index
    %c0_406 = arith.constant 0 : index
    %c0_407 = arith.constant 0 : index
    %910 = vector.load %arg10[%909, %c0_406, %c0_407] : memref<8x8x128xf32, #tpu.memory_space<vmem>>, vector<1x8x128xf32>
    %911 = vector.shape_cast %910 : vector<1x8x128xf32> to vector<8x128xf32>
    %912 = vector.shape_cast %908 : vector<8x128xf32> to vector<1x8x128xf32>
    tpu.vector_store %arg10[%909, %c0_406, %c0_407], %912 {strides = array<i32>} : memref<8x8x128xf32, #tpu.memory_space<vmem>>, vector<1x8x128xf32>,
    %c3_i32_408 = arith.constant 3 : i32
    %913 = arith.index_cast %c3_i32_408 : i32 to index
    %c0_409 = arith.constant 0 : index
    %c0_410 = arith.constant 0 : index
    %914 = vector.load %arg9[%913, %c0_409, %c0_410] : memref<8x8x32xf32, #tpu.memory_space<vmem>>, vector<1x8x32xf32>
    %915 = vector.shape_cast %914 : vector<1x8x32xf32> to vector<8x32xf32>
    %cst_411 = arith.constant dense<0.000000e+00> : vector<8x128xf32>
    %916 = tpu.matmul %915, %879, %cst_411 {dimension_numbers = #tpu.dot_dimension_numbers<[1], [0], [0], [1], [0, 0, 1, 1], [], []>} : vector<8x32xf32>, vector<32x128xf32>, vector<8x128xf32> -> vector<8x128xf32>
    %917 = arith.addf %916, %885 : vector<8x128xf32>
    %918 = arith.index_cast %c3_i32_408 : i32 to index
    %c0_412 = arith.constant 0 : index
    %c0_413 = arith.constant 0 : index
    %919 = vector.load %arg10[%918, %c0_412, %c0_413] : memref<8x8x128xf32, #tpu.memory_space<vmem>>, vector<1x8x128xf32>
    %920 = vector.shape_cast %919 : vector<1x8x128xf32> to vector<8x128xf32>
    %921 = vector.shape_cast %917 : vector<8x128xf32> to vector<1x8x128xf32>
    tpu.vector_store %arg10[%918, %c0_412, %c0_413], %921 {strides = array<i32>} : memref<8x8x128xf32, #tpu.memory_space<vmem>>, vector<1x8x128xf32>,
    %c4_i32_414 = arith.constant 4 : i32
    %922 = arith.index_cast %c4_i32_414 : i32 to index
    %c0_415 = arith.constant 0 : index
    %c0_416 = arith.constant 0 : index
    %923 = vector.load %arg9[%922, %c0_415, %c0_416] : memref<8x8x32xf32, #tpu.memory_space<vmem>>, vector<1x8x32xf32>
    %924 = vector.shape_cast %923 : vector<1x8x32xf32> to vector<8x32xf32>
    %cst_417 = arith.constant dense<0.000000e+00> : vector<8x128xf32>
    %925 = tpu.matmul %924, %879, %cst_417 {dimension_numbers = #tpu.dot_dimension_numbers<[1], [0], [0], [1], [0, 0, 1, 1], [], []>} : vector<8x32xf32>, vector<32x128xf32>, vector<8x128xf32> -> vector<8x128xf32>
    %926 = arith.addf %925, %885 : vector<8x128xf32>
    %927 = arith.index_cast %c4_i32_414 : i32 to index
    %c0_418 = arith.constant 0 : index
    %c0_419 = arith.constant 0 : index
    %928 = vector.load %arg10[%927, %c0_418, %c0_419] : memref<8x8x128xf32, #tpu.memory_space<vmem>>, vector<1x8x128xf32>
    %929 = vector.shape_cast %928 : vector<1x8x128xf32> to vector<8x128xf32>
    %930 = vector.shape_cast %926 : vector<8x128xf32> to vector<1x8x128xf32>
    tpu.vector_store %arg10[%927, %c0_418, %c0_419], %930 {strides = array<i32>} : memref<8x8x128xf32, #tpu.memory_space<vmem>>, vector<1x8x128xf32>,
    %c5_i32_420 = arith.constant 5 : i32
    %931 = arith.index_cast %c5_i32_420 : i32 to index
    %c0_421 = arith.constant 0 : index
    %c0_422 = arith.constant 0 : index
    %932 = vector.load %arg9[%931, %c0_421, %c0_422] : memref<8x8x32xf32, #tpu.memory_space<vmem>>, vector<1x8x32xf32>
    %933 = vector.shape_cast %932 : vector<1x8x32xf32> to vector<8x32xf32>
    %cst_423 = arith.constant dense<0.000000e+00> : vector<8x128xf32>
    %934 = tpu.matmul %933, %879, %cst_423 {dimension_numbers = #tpu.dot_dimension_numbers<[1], [0], [0], [1], [0, 0, 1, 1], [], []>} : vector<8x32xf32>, vector<32x128xf32>, vector<8x128xf32> -> vector<8x128xf32>
    %935 = arith.addf %934, %885 : vector<8x128xf32>
    %936 = arith.index_cast %c5_i32_420 : i32 to index
    %c0_424 = arith.constant 0 : index
    %c0_425 = arith.constant 0 : index
    %937 = vector.load %arg10[%936, %c0_424, %c0_425] : memref<8x8x128xf32, #tpu.memory_space<vmem>>, vector<1x8x128xf32>
    %938 = vector.shape_cast %937 : vector<1x8x128xf32> to vector<8x128xf32>
    %939 = vector.shape_cast %935 : vector<8x128xf32> to vector<1x8x128xf32>
    tpu.vector_store %arg10[%936, %c0_424, %c0_425], %939 {strides = array<i32>} : memref<8x8x128xf32, #tpu.memory_space<vmem>>, vector<1x8x128xf32>,
    %c6_i32_426 = arith.constant 6 : i32
    %940 = arith.index_cast %c6_i32_426 : i32 to index
    %c0_427 = arith.constant 0 : index
    %c0_428 = arith.constant 0 : index
    %941 = vector.load %arg9[%940, %c0_427, %c0_428] : memref<8x8x32xf32, #tpu.memory_space<vmem>>, vector<1x8x32xf32>
    %942 = vector.shape_cast %941 : vector<1x8x32xf32> to vector<8x32xf32>
    %cst_429 = arith.constant dense<0.000000e+00> : vector<8x128xf32>
    %943 = tpu.matmul %942, %879, %cst_429 {dimension_numbers = #tpu.dot_dimension_numbers<[1], [0], [0], [1], [0, 0, 1, 1], [], []>} : vector<8x32xf32>, vector<32x128xf32>, vector<8x128xf32> -> vector<8x128xf32>
    %944 = arith.addf %943, %885 : vector<8x128xf32>
    %945 = arith.index_cast %c6_i32_426 : i32 to index
    %c0_430 = arith.constant 0 : index
    %c0_431 = arith.constant 0 : index
    %946 = vector.load %arg10[%945, %c0_430, %c0_431] : memref<8x8x128xf32, #tpu.memory_space<vmem>>, vector<1x8x128xf32>
    %947 = vector.shape_cast %946 : vector<1x8x128xf32> to vector<8x128xf32>
    %948 = vector.shape_cast %944 : vector<8x128xf32> to vector<1x8x128xf32>
    tpu.vector_store %arg10[%945, %c0_430, %c0_431], %948 {strides = array<i32>} : memref<8x8x128xf32, #tpu.memory_space<vmem>>, vector<1x8x128xf32>,
    %c7_i32_432 = arith.constant 7 : i32
    %949 = arith.index_cast %c7_i32_432 : i32 to index
    %c0_433 = arith.constant 0 : index
    %c0_434 = arith.constant 0 : index
    %950 = vector.load %arg9[%949, %c0_433, %c0_434] : memref<8x8x32xf32, #tpu.memory_space<vmem>>, vector<1x8x32xf32>
    %951 = vector.shape_cast %950 : vector<1x8x32xf32> to vector<8x32xf32>
    %cst_435 = arith.constant dense<0.000000e+00> : vector<8x128xf32>
    %952 = tpu.matmul %951, %879, %cst_435 {dimension_numbers = #tpu.dot_dimension_numbers<[1], [0], [0], [1], [0, 0, 1, 1], [], []>} : vector<8x32xf32>, vector<32x128xf32>, vector<8x128xf32> -> vector<8x128xf32>
    %953 = arith.addf %952, %885 : vector<8x128xf32>
    %954 = arith.index_cast %c7_i32_432 : i32 to index
    %c0_436 = arith.constant 0 : index
    %c0_437 = arith.constant 0 : index
    %955 = vector.load %arg10[%954, %c0_436, %c0_437] : memref<8x8x128xf32, #tpu.memory_space<vmem>>, vector<1x8x128xf32>
    %956 = vector.shape_cast %955 : vector<1x8x128xf32> to vector<8x128xf32>
    %957 = vector.shape_cast %953 : vector<8x128xf32> to vector<1x8x128xf32>
    tpu.vector_store %arg10[%954, %c0_436, %c0_437], %957 {strides = array<i32>} : memref<8x8x128xf32, #tpu.memory_space<vmem>>, vector<1x8x128xf32>,
    %c8_i32_438 = arith.constant 8 : i32
    %c0_439 = arith.constant 0 : index
    %c0_440 = arith.constant 0 : index
    %c0_441 = arith.constant 0 : index
    %958 = vector.load %arg10[%c0_439, %c0_440, %c0_441] : memref<8x8x128xf32, #tpu.memory_space<vmem>>, vector<1x8x128xf32>
    %959 = vector.shape_cast %958 : vector<1x8x128xf32> to vector<8x128xf32>
    %cst_442 = arith.constant 0.000000e+00 : f32
    %960 = vector.broadcast %cst_442 : f32 to vector<8x32xf32>
    %961 = vector.extract_strided_slice %959 {offsets = [0, 0], sizes = [8, 96], strides = [1, 1]} : vector<8x128xf32> to vector<8x96xf32>
    %cst_443 = arith.constant 5.000000e-01 : f32
    %962 = vector.broadcast %cst_443 : f32 to vector<8x96xf32>
    %963 = arith.mulf %962, %961 : vector<8x96xf32>
    %964 = math.tanh %963 : vector<8x96xf32>
    %cst_444 = arith.constant 5.000000e-01 : f32
    %965 = vector.broadcast %cst_444 : f32 to vector<8x96xf32>
    %966 = arith.mulf %965, %964 : vector<8x96xf32>
    %cst_445 = arith.constant 5.000000e-01 : f32
    %967 = vector.broadcast %cst_445 : f32 to vector<8x96xf32>
    %968 = arith.addf %966, %967 : vector<8x96xf32>
    %969 = vector.extract_strided_slice %959 {offsets = [0, 96], sizes = [8, 32], strides = [1, 1]} : vector<8x128xf32> to vector<8x32xf32>
    %970 = math.tanh %969 : vector<8x32xf32>
    %971 = vector.extract_strided_slice %968 {offsets = [0, 32], sizes = [8, 32], strides = [1, 1]} : vector<8x96xf32> to vector<8x32xf32>
    %972 = arith.mulf %971, %960 : vector<8x32xf32>
    %973 = vector.extract_strided_slice %968 {offsets = [0, 0], sizes = [8, 32], strides = [1, 1]} : vector<8x96xf32> to vector<8x32xf32>
    %974 = arith.mulf %973, %970 : vector<8x32xf32>
    %975 = arith.addf %972, %974 : vector<8x32xf32>
    %976 = vector.extract_strided_slice %968 {offsets = [0, 64], sizes = [8, 32], strides = [1, 1]} : vector<8x96xf32> to vector<8x32xf32>
    %977 = math.tanh %975 : vector<8x32xf32>
    %978 = arith.mulf %976, %977 : vector<8x32xf32>
    %c1_i32_446 = arith.constant 1 : i32
    %979 = arith.index_cast %c1_i32_446 : i32 to index
    %c0_447 = arith.constant 0 : index
    %c0_448 = arith.constant 0 : index
    %980 = vector.load %arg10[%979, %c0_447, %c0_448] : memref<8x8x128xf32, #tpu.memory_space<vmem>>, vector<1x8x128xf32>
    %981 = vector.shape_cast %980 : vector<1x8x128xf32> to vector<8x128xf32>
    %cst_449 = arith.constant dense<0.000000e+00> : vector<8x128xf32>
    %982 = tpu.matmul %978, %881, %cst_449 {dimension_numbers = #tpu.dot_dimension_numbers<[1], [0], [0], [1], [0, 0, 1, 1], [], []>} : vector<8x32xf32>, vector<32x128xf32>, vector<8x128xf32> -> vector<8x128xf32>
    %983 = arith.addf %981, %982 : vector<8x128xf32>
    %984 = vector.extract_strided_slice %983 {offsets = [0, 0], sizes = [8, 96], strides = [1, 1]} : vector<8x128xf32> to vector<8x96xf32>
    %cst_450 = arith.constant 5.000000e-01 : f32
    %985 = vector.broadcast %cst_450 : f32 to vector<8x96xf32>
    %986 = arith.mulf %985, %984 : vector<8x96xf32>
    %987 = math.tanh %986 : vector<8x96xf32>
    %cst_451 = arith.constant 5.000000e-01 : f32
    %988 = vector.broadcast %cst_451 : f32 to vector<8x96xf32>
    %989 = arith.mulf %988, %987 : vector<8x96xf32>
    %cst_452 = arith.constant 5.000000e-01 : f32
    %990 = vector.broadcast %cst_452 : f32 to vector<8x96xf32>
    %991 = arith.addf %989, %990 : vector<8x96xf32>
    %992 = vector.extract_strided_slice %983 {offsets = [0, 96], sizes = [8, 32], strides = [1, 1]} : vector<8x128xf32> to vector<8x32xf32>
    %993 = math.tanh %992 : vector<8x32xf32>
    %994 = vector.extract_strided_slice %991 {offsets = [0, 32], sizes = [8, 32], strides = [1, 1]} : vector<8x96xf32> to vector<8x32xf32>
    %995 = arith.mulf %994, %975 : vector<8x32xf32>
    %996 = vector.extract_strided_slice %991 {offsets = [0, 0], sizes = [8, 32], strides = [1, 1]} : vector<8x96xf32> to vector<8x32xf32>
    %997 = arith.mulf %996, %993 : vector<8x32xf32>
    %998 = arith.addf %995, %997 : vector<8x32xf32>
    %999 = vector.extract_strided_slice %991 {offsets = [0, 64], sizes = [8, 32], strides = [1, 1]} : vector<8x96xf32> to vector<8x32xf32>
    %1000 = math.tanh %998 : vector<8x32xf32>
    %1001 = arith.mulf %999, %1000 : vector<8x32xf32>
    %1002 = arith.addf %978, %1001 : vector<8x32xf32>
    %c2_i32_453 = arith.constant 2 : i32
    %1003 = arith.index_cast %c2_i32_453 : i32 to index
    %c0_454 = arith.constant 0 : index
    %c0_455 = arith.constant 0 : index
    %1004 = vector.load %arg10[%1003, %c0_454, %c0_455] : memref<8x8x128xf32, #tpu.memory_space<vmem>>, vector<1x8x128xf32>
    %1005 = vector.shape_cast %1004 : vector<1x8x128xf32> to vector<8x128xf32>
    %cst_456 = arith.constant dense<0.000000e+00> : vector<8x128xf32>
    %1006 = tpu.matmul %1001, %881, %cst_456 {dimension_numbers = #tpu.dot_dimension_numbers<[1], [0], [0], [1], [0, 0, 1, 1], [], []>} : vector<8x32xf32>, vector<32x128xf32>, vector<8x128xf32> -> vector<8x128xf32>
    %1007 = arith.addf %1005, %1006 : vector<8x128xf32>
    %1008 = vector.extract_strided_slice %1007 {offsets = [0, 0], sizes = [8, 96], strides = [1, 1]} : vector<8x128xf32> to vector<8x96xf32>
    %cst_457 = arith.constant 5.000000e-01 : f32
    %1009 = vector.broadcast %cst_457 : f32 to vector<8x96xf32>
    %1010 = arith.mulf %1009, %1008 : vector<8x96xf32>
    %1011 = math.tanh %1010 : vector<8x96xf32>
    %cst_458 = arith.constant 5.000000e-01 : f32
    %1012 = vector.broadcast %cst_458 : f32 to vector<8x96xf32>
    %1013 = arith.mulf %1012, %1011 : vector<8x96xf32>
    %cst_459 = arith.constant 5.000000e-01 : f32
    %1014 = vector.broadcast %cst_459 : f32 to vector<8x96xf32>
    %1015 = arith.addf %1013, %1014 : vector<8x96xf32>
    %1016 = vector.extract_strided_slice %1007 {offsets = [0, 96], sizes = [8, 32], strides = [1, 1]} : vector<8x128xf32> to vector<8x32xf32>
    %1017 = math.tanh %1016 : vector<8x32xf32>
    %1018 = vector.extract_strided_slice %1015 {offsets = [0, 32], sizes = [8, 32], strides = [1, 1]} : vector<8x96xf32> to vector<8x32xf32>
    %1019 = arith.mulf %1018, %998 : vector<8x32xf32>
    %1020 = vector.extract_strided_slice %1015 {offsets = [0, 0], sizes = [8, 32], strides = [1, 1]} : vector<8x96xf32> to vector<8x32xf32>
    %1021 = arith.mulf %1020, %1017 : vector<8x32xf32>
    %1022 = arith.addf %1019, %1021 : vector<8x32xf32>
    %1023 = vector.extract_strided_slice %1015 {offsets = [0, 64], sizes = [8, 32], strides = [1, 1]} : vector<8x96xf32> to vector<8x32xf32>
    %1024 = math.tanh %1022 : vector<8x32xf32>
    %1025 = arith.mulf %1023, %1024 : vector<8x32xf32>
    %1026 = arith.addf %1002, %1025 : vector<8x32xf32>
    %c3_i32_460 = arith.constant 3 : i32
    %1027 = arith.index_cast %c3_i32_460 : i32 to index
    %c0_461 = arith.constant 0 : index
    %c0_462 = arith.constant 0 : index
    %1028 = vector.load %arg10[%1027, %c0_461, %c0_462] : memref<8x8x128xf32, #tpu.memory_space<vmem>>, vector<1x8x128xf32>
    %1029 = vector.shape_cast %1028 : vector<1x8x128xf32> to vector<8x128xf32>
    %cst_463 = arith.constant dense<0.000000e+00> : vector<8x128xf32>
    %1030 = tpu.matmul %1025, %881, %cst_463 {dimension_numbers = #tpu.dot_dimension_numbers<[1], [0], [0], [1], [0, 0, 1, 1], [], []>} : vector<8x32xf32>, vector<32x128xf32>, vector<8x128xf32> -> vector<8x128xf32>
    %1031 = arith.addf %1029, %1030 : vector<8x128xf32>
    %1032 = vector.extract_strided_slice %1031 {offsets = [0, 0], sizes = [8, 96], strides = [1, 1]} : vector<8x128xf32> to vector<8x96xf32>
    %cst_464 = arith.constant 5.000000e-01 : f32
    %1033 = vector.broadcast %cst_464 : f32 to vector<8x96xf32>
    %1034 = arith.mulf %1033, %1032 : vector<8x96xf32>
    %1035 = math.tanh %1034 : vector<8x96xf32>
    %cst_465 = arith.constant 5.000000e-01 : f32
    %1036 = vector.broadcast %cst_465 : f32 to vector<8x96xf32>
    %1037 = arith.mulf %1036, %1035 : vector<8x96xf32>
    %cst_466 = arith.constant 5.000000e-01 : f32
    %1038 = vector.broadcast %cst_466 : f32 to vector<8x96xf32>
    %1039 = arith.addf %1037, %1038 : vector<8x96xf32>
    %1040 = vector.extract_strided_slice %1031 {offsets = [0, 96], sizes = [8, 32], strides = [1, 1]} : vector<8x128xf32> to vector<8x32xf32>
    %1041 = math.tanh %1040 : vector<8x32xf32>
    %1042 = vector.extract_strided_slice %1039 {offsets = [0, 32], sizes = [8, 32], strides = [1, 1]} : vector<8x96xf32> to vector<8x32xf32>
    %1043 = arith.mulf %1042, %1022 : vector<8x32xf32>
    %1044 = vector.extract_strided_slice %1039 {offsets = [0, 0], sizes = [8, 32], strides = [1, 1]} : vector<8x96xf32> to vector<8x32xf32>
    %1045 = arith.mulf %1044, %1041 : vector<8x32xf32>
    %1046 = arith.addf %1043, %1045 : vector<8x32xf32>
    %1047 = vector.extract_strided_slice %1039 {offsets = [0, 64], sizes = [8, 32], strides = [1, 1]} : vector<8x96xf32> to vector<8x32xf32>
    %1048 = math.tanh %1046 : vector<8x32xf32>
    %1049 = arith.mulf %1047, %1048 : vector<8x32xf32>
    %1050 = arith.addf %1026, %1049 : vector<8x32xf32>
    %c4_i32_467 = arith.constant 4 : i32
    %1051 = arith.index_cast %c4_i32_467 : i32 to index
    %c0_468 = arith.constant 0 : index
    %c0_469 = arith.constant 0 : index
    %1052 = vector.load %arg10[%1051, %c0_468, %c0_469] : memref<8x8x128xf32, #tpu.memory_space<vmem>>, vector<1x8x128xf32>
    %1053 = vector.shape_cast %1052 : vector<1x8x128xf32> to vector<8x128xf32>
    %cst_470 = arith.constant dense<0.000000e+00> : vector<8x128xf32>
    %1054 = tpu.matmul %1049, %881, %cst_470 {dimension_numbers = #tpu.dot_dimension_numbers<[1], [0], [0], [1], [0, 0, 1, 1], [], []>} : vector<8x32xf32>, vector<32x128xf32>, vector<8x128xf32> -> vector<8x128xf32>
    %1055 = arith.addf %1053, %1054 : vector<8x128xf32>
    %1056 = vector.extract_strided_slice %1055 {offsets = [0, 0], sizes = [8, 96], strides = [1, 1]} : vector<8x128xf32> to vector<8x96xf32>
    %cst_471 = arith.constant 5.000000e-01 : f32
    %1057 = vector.broadcast %cst_471 : f32 to vector<8x96xf32>
    %1058 = arith.mulf %1057, %1056 : vector<8x96xf32>
    %1059 = math.tanh %1058 : vector<8x96xf32>
    %cst_472 = arith.constant 5.000000e-01 : f32
    %1060 = vector.broadcast %cst_472 : f32 to vector<8x96xf32>
    %1061 = arith.mulf %1060, %1059 : vector<8x96xf32>
    %cst_473 = arith.constant 5.000000e-01 : f32
    %1062 = vector.broadcast %cst_473 : f32 to vector<8x96xf32>
    %1063 = arith.addf %1061, %1062 : vector<8x96xf32>
    %1064 = vector.extract_strided_slice %1055 {offsets = [0, 96], sizes = [8, 32], strides = [1, 1]} : vector<8x128xf32> to vector<8x32xf32>
    %1065 = math.tanh %1064 : vector<8x32xf32>
    %1066 = vector.extract_strided_slice %1063 {offsets = [0, 32], sizes = [8, 32], strides = [1, 1]} : vector<8x96xf32> to vector<8x32xf32>
    %1067 = arith.mulf %1066, %1046 : vector<8x32xf32>
    %1068 = vector.extract_strided_slice %1063 {offsets = [0, 0], sizes = [8, 32], strides = [1, 1]} : vector<8x96xf32> to vector<8x32xf32>
    %1069 = arith.mulf %1068, %1065 : vector<8x32xf32>
    %1070 = arith.addf %1067, %1069 : vector<8x32xf32>
    %1071 = vector.extract_strided_slice %1063 {offsets = [0, 64], sizes = [8, 32], strides = [1, 1]} : vector<8x96xf32> to vector<8x32xf32>
    %1072 = math.tanh %1070 : vector<8x32xf32>
    %1073 = arith.mulf %1071, %1072 : vector<8x32xf32>
    %1074 = arith.addf %1050, %1073 : vector<8x32xf32>
    %c5_i32_474 = arith.constant 5 : i32
    %1075 = arith.index_cast %c5_i32_474 : i32 to index
    %c0_475 = arith.constant 0 : index
    %c0_476 = arith.constant 0 : index
    %1076 = vector.load %arg10[%1075, %c0_475, %c0_476] : memref<8x8x128xf32, #tpu.memory_space<vmem>>, vector<1x8x128xf32>
    %1077 = vector.shape_cast %1076 : vector<1x8x128xf32> to vector<8x128xf32>
    %cst_477 = arith.constant dense<0.000000e+00> : vector<8x128xf32>
    %1078 = tpu.matmul %1073, %881, %cst_477 {dimension_numbers = #tpu.dot_dimension_numbers<[1], [0], [0], [1], [0, 0, 1, 1], [], []>} : vector<8x32xf32>, vector<32x128xf32>, vector<8x128xf32> -> vector<8x128xf32>
    %1079 = arith.addf %1077, %1078 : vector<8x128xf32>
    %1080 = vector.extract_strided_slice %1079 {offsets = [0, 0], sizes = [8, 96], strides = [1, 1]} : vector<8x128xf32> to vector<8x96xf32>
    %cst_478 = arith.constant 5.000000e-01 : f32
    %1081 = vector.broadcast %cst_478 : f32 to vector<8x96xf32>
    %1082 = arith.mulf %1081, %1080 : vector<8x96xf32>
    %1083 = math.tanh %1082 : vector<8x96xf32>
    %cst_479 = arith.constant 5.000000e-01 : f32
    %1084 = vector.broadcast %cst_479 : f32 to vector<8x96xf32>
    %1085 = arith.mulf %1084, %1083 : vector<8x96xf32>
    %cst_480 = arith.constant 5.000000e-01 : f32
    %1086 = vector.broadcast %cst_480 : f32 to vector<8x96xf32>
    %1087 = arith.addf %1085, %1086 : vector<8x96xf32>
    %1088 = vector.extract_strided_slice %1079 {offsets = [0, 96], sizes = [8, 32], strides = [1, 1]} : vector<8x128xf32> to vector<8x32xf32>
    %1089 = math.tanh %1088 : vector<8x32xf32>
    %1090 = vector.extract_strided_slice %1087 {offsets = [0, 32], sizes = [8, 32], strides = [1, 1]} : vector<8x96xf32> to vector<8x32xf32>
    %1091 = arith.mulf %1090, %1070 : vector<8x32xf32>
    %1092 = vector.extract_strided_slice %1087 {offsets = [0, 0], sizes = [8, 32], strides = [1, 1]} : vector<8x96xf32> to vector<8x32xf32>
    %1093 = arith.mulf %1092, %1089 : vector<8x32xf32>
    %1094 = arith.addf %1091, %1093 : vector<8x32xf32>
    %1095 = vector.extract_strided_slice %1087 {offsets = [0, 64], sizes = [8, 32], strides = [1, 1]} : vector<8x96xf32> to vector<8x32xf32>
    %1096 = math.tanh %1094 : vector<8x32xf32>
    %1097 = arith.mulf %1095, %1096 : vector<8x32xf32>
    %1098 = arith.addf %1074, %1097 : vector<8x32xf32>
    %c6_i32_481 = arith.constant 6 : i32
    %1099 = arith.index_cast %c6_i32_481 : i32 to index
    %c0_482 = arith.constant 0 : index
    %c0_483 = arith.constant 0 : index
    %1100 = vector.load %arg10[%1099, %c0_482, %c0_483] : memref<8x8x128xf32, #tpu.memory_space<vmem>>, vector<1x8x128xf32>
    %1101 = vector.shape_cast %1100 : vector<1x8x128xf32> to vector<8x128xf32>
    %cst_484 = arith.constant dense<0.000000e+00> : vector<8x128xf32>
    %1102 = tpu.matmul %1097, %881, %cst_484 {dimension_numbers = #tpu.dot_dimension_numbers<[1], [0], [0], [1], [0, 0, 1, 1], [], []>} : vector<8x32xf32>, vector<32x128xf32>, vector<8x128xf32> -> vector<8x128xf32>
    %1103 = arith.addf %1101, %1102 : vector<8x128xf32>
    %1104 = vector.extract_strided_slice %1103 {offsets = [0, 0], sizes = [8, 96], strides = [1, 1]} : vector<8x128xf32> to vector<8x96xf32>
    %cst_485 = arith.constant 5.000000e-01 : f32
    %1105 = vector.broadcast %cst_485 : f32 to vector<8x96xf32>
    %1106 = arith.mulf %1105, %1104 : vector<8x96xf32>
    %1107 = math.tanh %1106 : vector<8x96xf32>
    %cst_486 = arith.constant 5.000000e-01 : f32
    %1108 = vector.broadcast %cst_486 : f32 to vector<8x96xf32>
    %1109 = arith.mulf %1108, %1107 : vector<8x96xf32>
    %cst_487 = arith.constant 5.000000e-01 : f32
    %1110 = vector.broadcast %cst_487 : f32 to vector<8x96xf32>
    %1111 = arith.addf %1109, %1110 : vector<8x96xf32>
    %1112 = vector.extract_strided_slice %1103 {offsets = [0, 96], sizes = [8, 32], strides = [1, 1]} : vector<8x128xf32> to vector<8x32xf32>
    %1113 = math.tanh %1112 : vector<8x32xf32>
    %1114 = vector.extract_strided_slice %1111 {offsets = [0, 32], sizes = [8, 32], strides = [1, 1]} : vector<8x96xf32> to vector<8x32xf32>
    %1115 = arith.mulf %1114, %1094 : vector<8x32xf32>
    %1116 = vector.extract_strided_slice %1111 {offsets = [0, 0], sizes = [8, 32], strides = [1, 1]} : vector<8x96xf32> to vector<8x32xf32>
    %1117 = arith.mulf %1116, %1113 : vector<8x32xf32>
    %1118 = arith.addf %1115, %1117 : vector<8x32xf32>
    %1119 = vector.extract_strided_slice %1111 {offsets = [0, 64], sizes = [8, 32], strides = [1, 1]} : vector<8x96xf32> to vector<8x32xf32>
    %1120 = math.tanh %1118 : vector<8x32xf32>
    %1121 = arith.mulf %1119, %1120 : vector<8x32xf32>
    %1122 = arith.addf %1098, %1121 : vector<8x32xf32>
    %c7_i32_488 = arith.constant 7 : i32
    %1123 = arith.index_cast %c7_i32_488 : i32 to index
    %c0_489 = arith.constant 0 : index
    %c0_490 = arith.constant 0 : index
    %1124 = vector.load %arg10[%1123, %c0_489, %c0_490] : memref<8x8x128xf32, #tpu.memory_space<vmem>>, vector<1x8x128xf32>
    %1125 = vector.shape_cast %1124 : vector<1x8x128xf32> to vector<8x128xf32>
    %cst_491 = arith.constant dense<0.000000e+00> : vector<8x128xf32>
    %1126 = tpu.matmul %1121, %881, %cst_491 {dimension_numbers = #tpu.dot_dimension_numbers<[1], [0], [0], [1], [0, 0, 1, 1], [], []>} : vector<8x32xf32>, vector<32x128xf32>, vector<8x128xf32> -> vector<8x128xf32>
    %1127 = arith.addf %1125, %1126 : vector<8x128xf32>
    %1128 = vector.extract_strided_slice %1127 {offsets = [0, 0], sizes = [8, 96], strides = [1, 1]} : vector<8x128xf32> to vector<8x96xf32>
    %cst_492 = arith.constant 5.000000e-01 : f32
    %1129 = vector.broadcast %cst_492 : f32 to vector<8x96xf32>
    %1130 = arith.mulf %1129, %1128 : vector<8x96xf32>
    %1131 = math.tanh %1130 : vector<8x96xf32>
    %cst_493 = arith.constant 5.000000e-01 : f32
    %1132 = vector.broadcast %cst_493 : f32 to vector<8x96xf32>
    %1133 = arith.mulf %1132, %1131 : vector<8x96xf32>
    %cst_494 = arith.constant 5.000000e-01 : f32
    %1134 = vector.broadcast %cst_494 : f32 to vector<8x96xf32>
    %1135 = arith.addf %1133, %1134 : vector<8x96xf32>
    %1136 = vector.extract_strided_slice %1127 {offsets = [0, 96], sizes = [8, 32], strides = [1, 1]} : vector<8x128xf32> to vector<8x32xf32>
    %1137 = math.tanh %1136 : vector<8x32xf32>
    %1138 = vector.extract_strided_slice %1135 {offsets = [0, 32], sizes = [8, 32], strides = [1, 1]} : vector<8x96xf32> to vector<8x32xf32>
    %1139 = arith.mulf %1138, %1118 : vector<8x32xf32>
    %1140 = vector.extract_strided_slice %1135 {offsets = [0, 0], sizes = [8, 32], strides = [1, 1]} : vector<8x96xf32> to vector<8x32xf32>
    %1141 = arith.mulf %1140, %1137 : vector<8x32xf32>
    %1142 = arith.addf %1139, %1141 : vector<8x32xf32>
    %1143 = vector.extract_strided_slice %1135 {offsets = [0, 64], sizes = [8, 32], strides = [1, 1]} : vector<8x96xf32> to vector<8x32xf32>
    %1144 = math.tanh %1142 : vector<8x32xf32>
    %1145 = arith.mulf %1143, %1144 : vector<8x32xf32>
    %1146 = arith.addf %1122, %1145 : vector<8x32xf32>
    %c7_i32_495 = arith.constant 7 : i32
    %c0_496 = arith.constant 0 : index
    %c0_497 = arith.constant 0 : index
    %1147 = vector.load %arg6[%c0_496, %c0_497] : memref<1x32xf32, #tpu.memory_space<vmem>>, vector<1x32xf32>
    %1148 = vector.broadcast %1147 : vector<1x32xf32> to vector<8x32xf32>
    %1149 = arith.mulf %1146, %1148 : vector<8x32xf32>
    %cst_498 = arith.constant dense<0.000000e+00> : vector<8xf32>
    %1150 = vector.multi_reduction <add>, %1149, %cst_498 [1] : vector<8x32xf32> to vector<8xf32>
    %1151 = vector.shape_cast %1150 : vector<8xf32> to vector<8x1xf32>
    %c0_499 = arith.constant 0 : index
    %c0_500 = arith.constant 0 : index
    %1152 = vector.load %arg7[%c0_499, %c0_500] : memref<1x1xf32, #tpu.memory_space<vmem>>, vector<1x1xf32>
    %1153 = vector.broadcast %1152 : vector<1x1xf32> to vector<8x1xf32>
    %1154 = arith.addf %1151, %1153 : vector<8x1xf32>
    %c0_501 = arith.constant 0 : index
    %c0_502 = arith.constant 0 : index
    %1155 = vector.load %arg8[%c0_501, %c0_502] : memref<8x1xf32, #tpu.memory_space<vmem>>, vector<8x1xf32>
    tpu.vector_store %arg8[%c0_501, %c0_502], %1154 {strides = array<i32>} : memref<8x1xf32, #tpu.memory_space<vmem>>, vector<8x1xf32>,
    return
  }
  func.func @transform_0(%arg0: i32) -> (i32, i32, i32) {
    %c0_i32 = arith.constant 0 : i32
    %c0_i32_0 = arith.constant 0 : i32
    %c0_i32_1 = arith.constant 0 : i32
    return %c0_i32, %arg0, %c0_i32_0 : i32, i32, i32
  }
  func.func @transform_1(%arg0: i32) -> (i32, i32) {
    %c0_i32 = arith.constant 0 : i32
    %c0_i32_0 = arith.constant 0 : i32
    %c0_i32_1 = arith.constant 0 : i32
    return %c0_i32, %c0_i32_0 : i32, i32
  }
  func.func @transform_2(%arg0: i32) -> (i32, i32, i32) {
    %c0_i32 = arith.constant 0 : i32
    %c0_i32_0 = arith.constant 0 : i32
    %c0_i32_1 = arith.constant 0 : i32
    %c0_i32_2 = arith.constant 0 : i32
    return %c0_i32, %c0_i32_0, %c0_i32_1 : i32, i32, i32
  }
  func.func @transform_3(%arg0: i32) -> (i32, i32, i32) {
    %c0_i32 = arith.constant 0 : i32
    %c0_i32_0 = arith.constant 0 : i32
    %c0_i32_1 = arith.constant 0 : i32
    %c0_i32_2 = arith.constant 0 : i32
    return %c0_i32, %c0_i32_0, %c0_i32_1 : i32, i32, i32
  }
  func.func @transform_4(%arg0: i32) -> (i32, i32, i32) {
    %c0_i32 = arith.constant 0 : i32
    %c0_i32_0 = arith.constant 0 : i32
    %c0_i32_1 = arith.constant 0 : i32
    %c0_i32_2 = arith.constant 0 : i32
    return %c0_i32, %c0_i32_0, %c0_i32_1 : i32, i32, i32
  }
  func.func @transform_5(%arg0: i32) -> (i32, i32) {
    %c0_i32 = arith.constant 0 : i32
    %c0_i32_0 = arith.constant 0 : i32
    %c0_i32_1 = arith.constant 0 : i32
    return %c0_i32, %c0_i32_0 : i32, i32
  }
  func.func @transform_6(%arg0: i32) -> (i32, i32) {
    %c0_i32 = arith.constant 0 : i32
    %c0_i32_0 = arith.constant 0 : i32
    %c0_i32_1 = arith.constant 0 : i32
    return %c0_i32, %c0_i32_0 : i32, i32
  }
  func.func @transform_7(%arg0: i32) -> (i32, i32) {
    %c0_i32 = arith.constant 0 : i32
    %c0_i32_0 = arith.constant 0 : i32
    return %arg0, %c0_i32 : i32, i32
  }
}

</mosaic_0001>

<llo_original>
// kernel: tpu_custom_call.1
$region0: #{tpu_custom_call.1}
  #allocation0 [shape = 'u32[]', space=smem, size = 0x4, offset = 0x4, fixed_abs, tag = 'smem constant byte address 0x4 - core index']
  #allocation1 [shape = 'u32[144,128]{1,0:T(1,128)}', space=vmem, size = 0x12000, scoped, tag = 'internal scratch']
  #allocation2 [shape = 'f32[8,8,32]{2,1,0:T(8,128)}', space=vmem, size = 0x8000, scoped, tag = 'scratch operand']
  #allocation3 [shape = 'f32[8,8,128]{2,1,0:T(8,128)}', space=vmem, size = 0x8000, scoped, tag = 'scratch operand']
  #allocation4 [shape = 'f32[1,1]{1,0:T(1,128)S(1)}', space=vmem, size = 0x200, scoped, tag = 'scoped memory for tpu_custom_call.1']
  %s0 = inlined_call_operand.hbm [shape: f32[8,8,8], index: 0, kind: input, shape index: {}]
  %s1 = inlined_call_operand.hbm [shape: f32[8,128], index: 1, kind: input, shape index: {}]
  %s2 = inlined_call_operand.hbm [shape: f32[3,32,128], index: 2, kind: input, shape index: {}]
  %s3 = inlined_call_operand.hbm [shape: f32[4,32,128], index: 3, kind: input, shape index: {}]
  %s4 = inlined_call_operand.vmem [shape: f32[4,1,128], index: 4, kind: input, shape index: {}]
  %s5 = inlined_call_operand.vmem [shape: f32[1,32], index: 5, kind: input, shape index: {}]
  %s6 = inlined_call_operand.<no memory space> [shape: f32[1,1], index: 6, kind: input, shape index: {}]
  %s7 = inlined_call_operand.vmem [shape: f32[8,1], index: 7, kind: output, shape index: {}]
  %s8 = sld [smem:[#allocation0]]
  $region54: #{tpu_custom_call.1} parent=0
    _
  %s10 = ssub.s32 1, %s8
  %s11 = scalar_select 0, %s10, %s8
  %v12 = vstv %s6
  %13 = vst [vmem:[#allocation4] sm:$0x1] %v12
  $region1: #{tpu_custom_call.1} parent=0
    #allocation5 [shape = 'u8[32768]{0}', space=vmem, size = 0x8000, scoped, tag = 'input window, operand 0, single buffered']
    #allocation6 [shape = 's32[1]{0}', space=sflag, size = 0x4, scoped, tag = 'scoped memory for tpu_custom_call.1']
    #allocation7 [shape = 'u8[4096]{0}', space=vmem, size = 0x1000, scoped, tag = 'input window, operand 1, single buffered']
    #allocation8 [shape = 's32[1]{0}', space=sflag, size = 0x4, scoped, tag = 'scoped memory for tpu_custom_call.1']
    #allocation9 [shape = 'u8[49152]{0}', space=vmem, size = 0xc000, scoped, tag = 'input window, operand 2, single buffered']
    #allocation10 [shape = 'u8[65536]{0}', space=vmem, size = 0x10000, scoped, tag = 'input window, operand 3, single buffered']
    #allocation11 [shape = 's32[1]{0}', space=sflag, size = 0x4, scoped, tag = 'scoped memory for tpu_custom_call.1']
    %14 = vsyncpa [#allocation6], 0
    %15 = vsyncpa [#allocation8], 0
    %16 = vsyncpa [#allocation11], 0
    // Predicated region
    $region2: #{tpu_custom_call.1} parent=1 // pred_check
      _
    $region3: #{tpu_custom_call.1} parent=1 // pred_check_branch
      %18 = sbr.rel (0) target = $region5
    $region4: #{tpu_custom_call.1} parent=1 // pred_region
      %s20 = ssub.s32 1024, 1024
      %21 = vsyncadd [#allocation6], %s20
      %s22 = sshll.u32 [#allocation5], 4
      %s23 = int_to_ptr.vmem [resolvable:$true] %s22
      %28 = dma.hbm_to_vmem [thread:$0]  %s0, 1024, %s23, [#allocation6], 128, 128, 8
    $region5: #{tpu_custom_call.1} parent=1 // pred_fallthru
      _
    // Predicated region
    $region6: #{tpu_custom_call.1} parent=1 // pred_check
      _
    $region7: #{tpu_custom_call.1} parent=1 // pred_check_branch
      %30 = sbr.rel (0) target = $region9
    $region8: #{tpu_custom_call.1} parent=1 // pred_region
      %s32 = ssub.s32 128, 128
      %33 = vsyncadd [#allocation8], %s32
      %s35 = sshll.u32 [#allocation7], 4
      %s36 = int_to_ptr.vmem [resolvable:$true] %s35
      %38 = dma.hbm_to_vmem [thread:$0]  %s1, 128, %s36, [#allocation8]
    $region9: #{tpu_custom_call.1} parent=1 // pred_fallthru
      _
    // Predicated region
    $region10: #{tpu_custom_call.1} parent=1 // pred_check
      _
    $region11: #{tpu_custom_call.1} parent=1 // pred_check_branch
      %40 = sbr.rel (0) target = $region13
    $region12: #{tpu_custom_call.1} parent=1 // pred_region
      %s42 = ssub.s32 1536, 1536
      %43 = vsyncadd [#allocation8], %s42
      %s44 = sshll.u32 [#allocation9], 4
      %s45 = int_to_ptr.vmem [resolvable:$true] %s44
      %50 = dma.hbm_to_vmem [thread:$0]  %s2, 1536, %s45, [#allocation8], 128, 128, 8
    $region13: #{tpu_custom_call.1} parent=1 // pred_fallthru
      _
    // Predicated region
    $region14: #{tpu_custom_call.1} parent=1 // pred_check
      _
    $region15: #{tpu_custom_call.1} parent=1 // pred_check_branch
      %52 = sbr.rel (0) target = $region17
    $region16: #{tpu_custom_call.1} parent=1 // pred_region
      %s54 = ssub.s32 2048, 2048
      %55 = vsyncadd [#allocation11], %s54
      %s56 = sshll.u32 [#allocation10], 4
      %s57 = int_to_ptr.vmem [resolvable:$true] %s56
      %62 = dma.hbm_to_vmem [thread:$0]  %s3, 2048, %s57, [#allocation11], 128, 128, 8
    $region17: #{tpu_custom_call.1} parent=1 // pred_fallthru
      _
    // Predicated region
    $region18: #{tpu_custom_call.1} parent=1 // pred_check
      _
    $region19: #{tpu_custom_call.1} parent=1 // pred_check_branch
      %64 = sbr.rel (0) target = $region21
    $region20: #{tpu_custom_call.1} parent=1 // pred_region
      _
    $region21: #{tpu_custom_call.1} parent=1 // pred_fallthru
      _
    // Predicated region
    $region22: #{tpu_custom_call.1} parent=1 // pred_check
      _
    $region23: #{tpu_custom_call.1} parent=1 // pred_check_branch
      %66 = sbr.rel (0) target = $region25
    $region24: #{tpu_custom_call.1} parent=1 // pred_region
      _
    $region25: #{tpu_custom_call.1} parent=1 // pred_fallthru
      _
    // Predicated region
    $region26: #{tpu_custom_call.1} parent=1 // pred_check
      _
    $region27: #{tpu_custom_call.1} parent=1 // pred_check_branch
      %68 = sbr.rel (0) target = $region29
    $region28: #{tpu_custom_call.1} parent=1 // pred_region
      _
    $region29: #{tpu_custom_call.1} parent=1 // pred_fallthru
      _
    // Predicated region
    $region30: #{tpu_custom_call.1} parent=1 // pred_check
      _
    $region31: #{tpu_custom_call.1} parent=1 // pred_check_branch
      %70 = sbr.rel (0) target = $region33
    $region32: #{tpu_custom_call.1} parent=1 // pred_region
      %71 = dma.done [#allocation6], 1024
    $region33: #{tpu_custom_call.1} parent=1 // pred_fallthru
      _
    // Predicated region
    $region34: #{tpu_custom_call.1} parent=1 // pred_check
      _
    $region35: #{tpu_custom_call.1} parent=1 // pred_check_branch
      %73 = sbr.rel (0) target = $region37
    $region36: #{tpu_custom_call.1} parent=1 // pred_region
      %74 = dma.done [#allocation8], 128
    $region37: #{tpu_custom_call.1} parent=1 // pred_fallthru
      _
    // Predicated region
    $region38: #{tpu_custom_call.1} parent=1 // pred_check
      _
    $region39: #{tpu_custom_call.1} parent=1 // pred_check_branch
      %76 = sbr.rel (0) target = $region41
    $region40: #{tpu_custom_call.1} parent=1 // pred_region
      %77 = dma.done [#allocation8], 1536
    $region41: #{tpu_custom_call.1} parent=1 // pred_fallthru
      _
    // Predicated region
    $region42: #{tpu_custom_call.1} parent=1 // pred_check
      _
    $region43: #{tpu_custom_call.1} parent=1 // pred_check_branch
      %79 = sbr.rel (0) target = $region45
    $region44: #{tpu_custom_call.1} parent=1 // pred_region
      %80 = dma.done [#allocation11], 2048
    $region45: #{tpu_custom_call.1} parent=1 // pred_fallthru
      _
    %v81 = vld [vmem:[#allocation7] sm:$0xff]
    %v82 = vld [vmem:[#allocation10] sm:$0xff]
    %v83 = vld [vmem:[#allocation10 + $0x8] sm:$0xff]
    %v84 = vld [vmem:[#allocation10 + $0x10] sm:$0xff]
    %v85 = vld [vmem:[#allocation10 + $0x18] sm:$0xff]
    %v86 = vld [vmem:[%s4] sm:$0x1]
    %v88 = vlaneseq
    %v89 = vshrl.u32 %v88, 7
    %v90 = vsub.s32 0, %v89
    %v91 = vrot.slane %v86, %v90
    %v93 = vld [vmem:[#allocation5] sm:$0xff]
    %vm94 = vcmask 64512
    %v96 = vsel %vm94, %v93, 0
    %98 = vmatprep.subr.mxu0 0.0
    %99 = vmatpush1.msra.mxu0 %v81
    %100 = vmatprep.subr.mxu0 0.0
    %101 = vmatpush1.msra.mxu0 0.0
    %102 = vmatprep.subr.mxu0 0.0
    %103 = vmatpush1.msra.mxu0 0.0
    %104 = vmatprep.subr.mxu0 0.0
    %105 = vmatpush1.msra.mxu0 0.0
    %106 = vmatprep.subr.mxu0 0.0
    %107 = vmatpush1.msra.mxu0 0.0
    %108 = vmatprep.subr.mxu0 0.0
    %109 = vmatpush1.msra.mxu0 0.0
    %110 = vmatprep.subr.mxu0 0.0
    %111 = vmatpush1.msra.mxu0 0.0
    %112 = vmatprep.subr.mxu0 0.0
    %113 = vmatpush1.msra.mxu0 0.0
    %114 = vmatprep.subr.mxu0 0.0
    %115 = vmatpush1.msra.mxu0 0.0
    %116 = vmatprep.subr.mxu0 0.0
    %117 = vmatpush1.msra.mxu0 0.0
    %118 = vmatprep.subr.mxu0 0.0
    %119 = vmatpush1.msra.mxu0 0.0
    %120 = vmatprep.subr.mxu0 0.0
    %121 = vmatpush1.msra.mxu0 0.0
    %122 = vmatprep.subr.mxu0 0.0
    %123 = vmatpush1.msra.mxu0 0.0
    %124 = vmatprep.subr.mxu0 0.0
    %125 = vmatpush1.msra.mxu0 0.0
    %126 = vmatprep.subr.mxu0 0.0
    %127 = vmatpush1.msra.mxu0 0.0
    %128 = vmatprep.subr.mxu0 0.0
    %129 = vmatpush1.msra.mxu0 0.0
    %130 = vmatprep.subr.mxu0 0.0
    %131 = vmatpush1.msra.mxu0 0.0
    %132 = vmatprep.subr.mxu0 0.0
    %133 = vmatpush1.msra.mxu0 0.0
    %134 = vmatprep.subr.mxu0 0.0
    %135 = vmatpush1.msra.mxu0 0.0
    %136 = vmatprep.subr.mxu0 0.0
    %137 = vmatpush1.msra.mxu0 0.0
    %138 = vmatprep.subr.mxu0 0.0
    %139 = vmatpush1.msra.mxu0 0.0
    %140 = vmatprep.subr.mxu0 0.0
    %141 = vmatpush1.msra.mxu0 0.0
    %142 = vmatprep.subr.mxu0 0.0
    %143 = vmatpush1.msra.mxu0 0.0
    %144 = vmatprep.subr.mxu0 0.0
    %145 = vmatpush1.msra.mxu0 0.0
    %146 = vmatprep.subr.mxu0 0.0
    %147 = vmatpush1.msra.mxu0 0.0
    %148 = vmatprep.subr.mxu0 0.0
    %149 = vmatpush1.msra.mxu0 0.0
    %150 = vmatprep.subr.mxu0 0.0
    %151 = vmatpush1.msra.mxu0 0.0
    %152 = vmatprep.subr.mxu0 0.0
    %153 = vmatpush1.msra.mxu0 0.0
    %154 = vmatprep.subr.mxu0 0.0
    %155 = vmatpush1.msra.mxu0 0.0
    %156 = vmatprep.subr.mxu0 0.0
    %157 = vmatpush1.msra.mxu0 0.0
    %158 = vmatprep.subr.mxu0 0.0
    %159 = vmatpush1.msra.mxu0 0.0
    %160 = vmatprep.subr.mxu0 0.0
    %161 = vmatpush1.msra.mxu0 0.0
    %162 = vmatprep.mubr.f32.mxu0 0.0
    %163 = vmatmul.mubr.f32.gmra.mrb[0].mxu0 %v96
    %v164 = vpop.f32.mrb[0].mxu0
    %v165 = vadd.f32 %v91, %v164
    %v166 = vpop.f32.mrb[0].mxu0
    %167 = vdwg.mxu0
    %168 = vst [vmem:[#allocation3] sm:$0xff] %v165
    %s169 = scalar_lea.vmem [#allocation5], 8
    %v170 = vld [vmem:[%s169] sm:$0xff]
    %v172 = vsel %vm94, %v170, 0
    %174 = vmatprep.subr.mxu0 0.0
    %175 = vmatpush1.msra.mxu0 %v81
    %176 = vmatprep.subr.mxu0 0.0
    %177 = vmatpush1.msra.mxu0 0.0
    %178 = vmatprep.subr.mxu0 0.0
    %179 = vmatpush1.msra.mxu0 0.0
    %180 = vmatprep.subr.mxu0 0.0
    %181 = vmatpush1.msra.mxu0 0.0
    %182 = vmatprep.subr.mxu0 0.0
    %183 = vmatpush1.msra.mxu0 0.0
    %184 = vmatprep.subr.mxu0 0.0
    %185 = vmatpush1.msra.mxu0 0.0
    %186 = vmatprep.subr.mxu0 0.0
    %187 = vmatpush1.msra.mxu0 0.0
    %188 = vmatprep.subr.mxu0 0.0
    %189 = vmatpush1.msra.mxu0 0.0
    %190 = vmatprep.subr.mxu0 0.0
    %191 = vmatpush1.msra.mxu0 0.0
    %192 = vmatprep.subr.mxu0 0.0
    %193 = vmatpush1.msra.mxu0 0.0
    %194 = vmatprep.subr.mxu0 0.0
    %195 = vmatpush1.msra.mxu0 0.0
    %196 = vmatprep.subr.mxu0 0.0
    %197 = vmatpush1.msra.mxu0 0.0
    %198 = vmatprep.subr.mxu0 0.0
    %199 = vmatpush1.msra.mxu0 0.0
    %200 = vmatprep.subr.mxu0 0.0
    %201 = vmatpush1.msra.mxu0 0.0
    %202 = vmatprep.subr.mxu0 0.0
    %203 = vmatpush1.msra.mxu0 0.0
    %204 = vmatprep.subr.mxu0 0.0
    %205 = vmatpush1.msra.mxu0 0.0
    %206 = vmatprep.subr.mxu0 0.0
    %207 = vmatpush1.msra.mxu0 0.0
    %208 = vmatprep.subr.mxu0 0.0
    %209 = vmatpush1.msra.mxu0 0.0
    %210 = vmatprep.subr.mxu0 0.0
    %211 = vmatpush1.msra.mxu0 0.0
    %212 = vmatprep.subr.mxu0 0.0
    %213 = vmatpush1.msra.mxu0 0.0
    %214 = vmatprep.subr.mxu0 0.0
    %215 = vmatpush1.msra.mxu0 0.0
    %216 = vmatprep.subr.mxu0 0.0
    %217 = vmatpush1.msra.mxu0 0.0
    %218 = vmatprep.subr.mxu0 0.0
    %219 = vmatpush1.msra.mxu0 0.0
    %220 = vmatprep.subr.mxu0 0.0
    %221 = vmatpush1.msra.mxu0 0.0
    %222 = vmatprep.subr.mxu0 0.0
    %223 = vmatpush1.msra.mxu0 0.0
    %224 = vmatprep.subr.mxu0 0.0
    %225 = vmatpush1.msra.mxu0 0.0
    %226 = vmatprep.subr.mxu0 0.0
    %227 = vmatpush1.msra.mxu0 0.0
    %228 = vmatprep.subr.mxu0 0.0
    %229 = vmatpush1.msra.mxu0 0.0
    %230 = vmatprep.subr.mxu0 0.0
    %231 = vmatpush1.msra.mxu0 0.0
    %232 = vmatprep.subr.mxu0 0.0
    %233 = vmatpush1.msra.mxu0 0.0
    %234 = vmatprep.subr.mxu0 0.0
    %235 = vmatpush1.msra.mxu0 0.0
    %236 = vmatprep.subr.mxu0 0.0
    %237 = vmatpush1.msra.mxu0 0.0
    %238 = vmatprep.mubr.f32.mxu0 0.0
    %239 = vmatmul.mubr.f32.gmra.mrb[0].mxu0 %v172
    %v240 = vpop.f32.mrb[0].mxu0
    %v241 = vadd.f32 %v91, %v240
    %v242 = vpop.f32.mrb[0].mxu0
    %243 = vdwg.mxu0
    %s244 = scalar_lea.vmem [#allocation3], 8
    %245 = vst [vmem:[%s244] sm:$0xff] %v241
    %s246 = scalar_lea.vmem [#allocation5], 16
    %v247 = vld [vmem:[%s246] sm:$0xff]
    %v249 = vsel %vm94, %v247, 0
    %251 = vmatprep.subr.mxu0 0.0
    %252 = vmatpush1.msra.mxu0 %v81
    %253 = vmatprep.subr.mxu0 0.0
    %254 = vmatpush1.msra.mxu0 0.0
    %255 = vmatprep.subr.mxu0 0.0
    %256 = vmatpush1.msra.mxu0 0.0
    %257 = vmatprep.subr.mxu0 0.0
    %258 = vmatpush1.msra.mxu0 0.0
    %259 = vmatprep.subr.mxu0 0.0
    %260 = vmatpush1.msra.mxu0 0.0
    %261 = vmatprep.subr.mxu0 0.0
    %262 = vmatpush1.msra.mxu0 0.0
    %263 = vmatprep.subr.mxu0 0.0
    %264 = vmatpush1.msra.mxu0 0.0
    %265 = vmatprep.subr.mxu0 0.0
    %266 = vmatpush1.msra.mxu0 0.0
    %267 = vmatprep.subr.mxu0 0.0
    %268 = vmatpush1.msra.mxu0 0.0
    %269 = vmatprep.subr.mxu0 0.0
    %270 = vmatpush1.msra.mxu0 0.0
    %271 = vmatprep.subr.mxu0 0.0
    %272 = vmatpush1.msra.mxu0 0.0
    %273 = vmatprep.subr.mxu0 0.0
    %274 = vmatpush1.msra.mxu0 0.0
    %275 = vmatprep.subr.mxu0 0.0
    %276 = vmatpush1.msra.mxu0 0.0
    %277 = vmatprep.subr.mxu0 0.0
    %278 = vmatpush1.msra.mxu0 0.0
    %279 = vmatprep.subr.mxu0 0.0
    %280 = vmatpush1.msra.mxu0 0.0
    %281 = vmatprep.subr.mxu0 0.0
    %282 = vmatpush1.msra.mxu0 0.0
    %283 = vmatprep.subr.mxu0 0.0
    %284 = vmatpush1.msra.mxu0 0.0
    %285 = vmatprep.subr.mxu0 0.0
    %286 = vmatpush1.msra.mxu0 0.0
    %287 = vmatprep.subr.mxu0 0.0
    %288 = vmatpush1.msra.mxu0 0.0
    %289 = vmatprep.subr.mxu0 0.0
    %290 = vmatpush1.msra.mxu0 0.0
    %291 = vmatprep.subr.mxu0 0.0
    %292 = vmatpush1.msra.mxu0 0.0
    %293 = vmatprep.subr.mxu0 0.0
    %294 = vmatpush1.msra.mxu0 0.0
    %295 = vmatprep.subr.mxu0 0.0
    %296 = vmatpush1.msra.mxu0 0.0
    %297 = vmatprep.subr.mxu0 0.0
    %298 = vmatpush1.msra.mxu0 0.0
    %299 = vmatprep.subr.mxu0 0.0
    %300 = vmatpush1.msra.mxu0 0.0
    %301 = vmatprep.subr.mxu0 0.0
    %302 = vmatpush1.msra.mxu0 0.0
    %303 = vmatprep.subr.mxu0 0.0
    %304 = vmatpush1.msra.mxu0 0.0
    %305 = vmatprep.subr.mxu0 0.0
    %306 = vmatpush1.msra.mxu0 0.0
    %307 = vmatprep.subr.mxu0 0.0
    %308 = vmatpush1.msra.mxu0 0.0
    %309 = vmatprep.subr.mxu0 0.0
    %310 = vmatpush1.msra.mxu0 0.0
    %311 = vmatprep.subr.mxu0 0.0
    %312 = vmatpush1.msra.mxu0 0.0
    %313 = vmatprep.subr.mxu0 0.0
    %314 = vmatpush1.msra.mxu0 0.0
    %315 = vmatprep.mubr.f32.mxu0 0.0
    %316 = vmatmul.mubr.f32.gmra.mrb[0].mxu0 %v249
    %v317 = vpop.f32.mrb[0].mxu0
    %v318 = vadd.f32 %v91, %v317
    %v319 = vpop.f32.mrb[0].mxu0
    %320 = vdwg.mxu0
    %s321 = scalar_lea.vmem [#allocation3], 16
    %322 = vst [vmem:[%s321] sm:$0xff] %v318
    %s323 = scalar_lea.vmem [#allocation5], 24
    %v324 = vld [vmem:[%s323] sm:$0xff]
    %v326 = vsel %vm94, %v324, 0
    %328 = vmatprep.subr.mxu0 0.0
    %329 = vmatpush1.msra.mxu0 %v81
    %330 = vmatprep.subr.mxu0 0.0
    %331 = vmatpush1.msra.mxu0 0.0
    %332 = vmatprep.subr.mxu0 0.0
    %333 = vmatpush1.msra.mxu0 0.0
    %334 = vmatprep.subr.mxu0 0.0
    %335 = vmatpush1.msra.mxu0 0.0
    %336 = vmatprep.subr.mxu0 0.0
    %337 = vmatpush1.msra.mxu0 0.0
    %338 = vmatprep.subr.mxu0 0.0
    %339 = vmatpush1.msra.mxu0 0.0
    %340 = vmatprep.subr.mxu0 0.0
    %341 = vmatpush1.msra.mxu0 0.0
    %342 = vmatprep.subr.mxu0 0.0
    %343 = vmatpush1.msra.mxu0 0.0
    %344 = vmatprep.subr.mxu0 0.0
    %345 = vmatpush1.msra.mxu0 0.0
    %346 = vmatprep.subr.mxu0 0.0
    %347 = vmatpush1.msra.mxu0 0.0
    %348 = vmatprep.subr.mxu0 0.0
    %349 = vmatpush1.msra.mxu0 0.0
    %350 = vmatprep.subr.mxu0 0.0
    %351 = vmatpush1.msra.mxu0 0.0
    %352 = vmatprep.subr.mxu0 0.0
    %353 = vmatpush1.msra.mxu0 0.0
    %354 = vmatprep.subr.mxu0 0.0
    %355 = vmatpush1.msra.mxu0 0.0
    %356 = vmatprep.subr.mxu0 0.0
    %357 = vmatpush1.msra.mxu0 0.0
    %358 = vmatprep.subr.mxu0 0.0
    %359 = vmatpush1.msra.mxu0 0.0
    %360 = vmatprep.subr.mxu0 0.0
    %361 = vmatpush1.msra.mxu0 0.0
    %362 = vmatprep.subr.mxu0 0.0
    %363 = vmatpush1.msra.mxu0 0.0
    %364 = vmatprep.subr.mxu0 0.0
    %365 = vmatpush1.msra.mxu0 0.0
    %366 = vmatprep.subr.mxu0 0.0
    %367 = vmatpush1.msra.mxu0 0.0
    %368 = vmatprep.subr.mxu0 0.0
    %369 = vmatpush1.msra.mxu0 0.0
    %370 = vmatprep.subr.mxu0 0.0
    %371 = vmatpush1.msra.mxu0 0.0
    %372 = vmatprep.subr.mxu0 0.0
    %373 = vmatpush1.msra.mxu0 0.0
    %374 = vmatprep.subr.mxu0 0.0
    %375 = vmatpush1.msra.mxu0 0.0
    %376 = vmatprep.subr.mxu0 0.0
    %377 = vmatpush1.msra.mxu0 0.0
    %378 = vmatprep.subr.mxu0 0.0
    %379 = vmatpush1.msra.mxu0 0.0
    %380 = vmatprep.subr.mxu0 0.0
    %381 = vmatpush1.msra.mxu0 0.0
    %382 = vmatprep.subr.mxu0 0.0
    %383 = vmatpush1.msra.mxu0 0.0
    %384 = vmatprep.subr.mxu0 0.0
    %385 = vmatpush1.msra.mxu0 0.0
    %386 = vmatprep.subr.mxu0 0.0
    %387 = vmatpush1.msra.mxu0 0.0
    %388 = vmatprep.subr.mxu0 0.0
    %389 = vmatpush1.msra.mxu0 0.0
    %390 = vmatprep.subr.mxu0 0.0
    %391 = vmatpush1.msra.mxu0 0.0
    %392 = vmatprep.mubr.f32.mxu0 0.0
    %393 = vmatmul.mubr.f32.gmra.mrb[0].mxu0 %v326
    %v394 = vpop.f32.mrb[0].mxu0
    %v395 = vadd.f32 %v91, %v394
    %v396 = vpop.f32.mrb[0].mxu0
    %397 = vdwg.mxu0
    %s398 = scalar_lea.vmem [#allocation3], 24
    %399 = vst [vmem:[%s398] sm:$0xff] %v395
    %s400 = scalar_lea.vmem [#allocation5], 32
    %v401 = vld [vmem:[%s400] sm:$0xff]
    %v403 = vsel %vm94, %v401, 0
    %405 = vmatprep.subr.mxu0 0.0
    %406 = vmatpush1.msra.mxu0 %v81
    %407 = vmatprep.subr.mxu0 0.0
    %408 = vmatpush1.msra.mxu0 0.0
    %409 = vmatprep.subr.mxu0 0.0
    %410 = vmatpush1.msra.mxu0 0.0
    %411 = vmatprep.subr.mxu0 0.0
    %412 = vmatpush1.msra.mxu0 0.0
    %413 = vmatprep.subr.mxu0 0.0
    %414 = vmatpush1.msra.mxu0 0.0
    %415 = vmatprep.subr.mxu0 0.0
    %416 = vmatpush1.msra.mxu0 0.0
    %417 = vmatprep.subr.mxu0 0.0
    %418 = vmatpush1.msra.mxu0 0.0
    %419 = vmatprep.subr.mxu0 0.0
    %420 = vmatpush1.msra.mxu0 0.0
    %421 = vmatprep.subr.mxu0 0.0
    %422 = vmatpush1.msra.mxu0 0.0
    %423 = vmatprep.subr.mxu0 0.0
    %424 = vmatpush1.msra.mxu0 0.0
    %425 = vmatprep.subr.mxu0 0.0
    %426 = vmatpush1.msra.mxu0 0.0
    %427 = vmatprep.subr.mxu0 0.0
    %428 = vmatpush1.msra.mxu0 0.0
    %429 = vmatprep.subr.mxu0 0.0
    %430 = vmatpush1.msra.mxu0 0.0
    %431 = vmatprep.subr.mxu0 0.0
    %432 = vmatpush1.msra.mxu0 0.0
    %433 = vmatprep.subr.mxu0 0.0
    %434 = vmatpush1.msra.mxu0 0.0
    %435 = vmatprep.subr.mxu0 0.0
    %436 = vmatpush1.msra.mxu0 0.0
    %437 = vmatprep.subr.mxu0 0.0
    %438 = vmatpush1.msra.mxu0 0.0
    %439 = vmatprep.subr.mxu0 0.0
    %440 = vmatpush1.msra.mxu0 0.0
    %441 = vmatprep.subr.mxu0 0.0
    %442 = vmatpush1.msra.mxu0 0.0
    %443 = vmatprep.subr.mxu0 0.0
    %444 = vmatpush1.msra.mxu0 0.0
    %445 = vmatprep.subr.mxu0 0.0
    %446 = vmatpush1.msra.mxu0 0.0
    %447 = vmatprep.subr.mxu0 0.0
    %448 = vmatpush1.msra.mxu0 0.0
    %449 = vmatprep.subr.mxu0 0.0
    %450 = vmatpush1.msra.mxu0 0.0
    %451 = vmatprep.subr.mxu0 0.0
    %452 = vmatpush1.msra.mxu0 0.0
    %453 = vmatprep.subr.mxu0 0.0
    %454 = vmatpush1.msra.mxu0 0.0
    %455 = vmatprep.subr.mxu0 0.0
    %456 = vmatpush1.msra.mxu0 0.0
    %457 = vmatprep.subr.mxu0 0.0
    %458 = vmatpush1.msra.mxu0 0.0
    %459 = vmatprep.subr.mxu0 0.0
    %460 = vmatpush1.msra.mxu0 0.0
    %461 = vmatprep.subr.mxu0 0.0
    %462 = vmatpush1.msra.mxu0 0.0
    %463 = vmatprep.subr.mxu0 0.0
    %464 = vmatpush1.msra.mxu0 0.0
    %465 = vmatprep.subr.mxu0 0.0
    %466 = vmatpush1.msra.mxu0 0.0
    %467 = vmatprep.subr.mxu0 0.0
    %468 = vmatpush1.msra.mxu0 0.0
    %469 = vmatprep.mubr.f32.mxu0 0.0
    %470 = vmatmul.mubr.f32.gmra.mrb[0].mxu0 %v403
    %v471 = vpop.f32.mrb[0].mxu0
    %v472 = vadd.f32 %v91, %v471
    %v473 = vpop.f32.mrb[0].mxu0
    %474 = vdwg.mxu0
    %s475 = scalar_lea.vmem [#allocation3], 32
    %476 = vst [vmem:[%s475] sm:$0xff] %v472
    %s477 = scalar_lea.vmem [#allocation5], 40
    %v478 = vld [vmem:[%s477] sm:$0xff]
    %v480 = vsel %vm94, %v478, 0
    %482 = vmatprep.subr.mxu0 0.0
    %483 = vmatpush1.msra.mxu0 %v81
    %484 = vmatprep.subr.mxu0 0.0
    %485 = vmatpush1.msra.mxu0 0.0
    %486 = vmatprep.subr.mxu0 0.0
    %487 = vmatpush1.msra.mxu0 0.0
    %488 = vmatprep.subr.mxu0 0.0
    %489 = vmatpush1.msra.mxu0 0.0
    %490 = vmatprep.subr.mxu0 0.0
    %491 = vmatpush1.msra.mxu0 0.0
    %492 = vmatprep.subr.mxu0 0.0
    %493 = vmatpush1.msra.mxu0 0.0
    %494 = vmatprep.subr.mxu0 0.0
    %495 = vmatpush1.msra.mxu0 0.0
    %496 = vmatprep.subr.mxu0 0.0
    %497 = vmatpush1.msra.mxu0 0.0
    %498 = vmatprep.subr.mxu0 0.0
    %499 = vmatpush1.msra.mxu0 0.0
    %500 = vmatprep.subr.mxu0 0.0
    %501 = vmatpush1.msra.mxu0 0.0
    %502 = vmatprep.subr.mxu0 0.0
    %503 = vmatpush1.msra.mxu0 0.0
    %504 = vmatprep.subr.mxu0 0.0
    %505 = vmatpush1.msra.mxu0 0.0
    %506 = vmatprep.subr.mxu0 0.0
    %507 = vmatpush1.msra.mxu0 0.0
    %508 = vmatprep.subr.mxu0 0.0
    %509 = vmatpush1.msra.mxu0 0.0
    %510 = vmatprep.subr.mxu0 0.0
    %511 = vmatpush1.msra.mxu0 0.0
    %512 = vmatprep.subr.mxu0 0.0
    %513 = vmatpush1.msra.mxu0 0.0
    %514 = vmatprep.subr.mxu0 0.0
    %515 = vmatpush1.msra.mxu0 0.0
    %516 = vmatprep.subr.mxu0 0.0
    %517 = vmatpush1.msra.mxu0 0.0
    %518 = vmatprep.subr.mxu0 0.0
    %519 = vmatpush1.msra.mxu0 0.0
    %520 = vmatprep.subr.mxu0 0.0
    %521 = vmatpush1.msra.mxu0 0.0
    %522 = vmatprep.subr.mxu0 0.0
    %523 = vmatpush1.msra.mxu0 0.0
    %524 = vmatprep.subr.mxu0 0.0
    %525 = vmatpush1.msra.mxu0 0.0
    %526 = vmatprep.subr.mxu0 0.0
    %527 = vmatpush1.msra.mxu0 0.0
    %528 = vmatprep.subr.mxu0 0.0
    %529 = vmatpush1.msra.mxu0 0.0
    %530 = vmatprep.subr.mxu0 0.0
    %531 = vmatpush1.msra.mxu0 0.0
    %532 = vmatprep.subr.mxu0 0.0
    %533 = vmatpush1.msra.mxu0 0.0
    %534 = vmatprep.subr.mxu0 0.0
    %535 = vmatpush1.msra.mxu0 0.0
    %536 = vmatprep.subr.mxu0 0.0
    %537 = vmatpush1.msra.mxu0 0.0
    %538 = vmatprep.subr.mxu0 0.0
    %539 = vmatpush1.msra.mxu0 0.0
    %540 = vmatprep.subr.mxu0 0.0
    %541 = vmatpush1.msra.mxu0 0.0
    %542 = vmatprep.subr.mxu0 0.0
    %543 = vmatpush1.msra.mxu0 0.0
    %544 = vmatprep.subr.mxu0 0.0
    %545 = vmatpush1.msra.mxu0 0.0
    %546 = vmatprep.mubr.f32.mxu0 0.0
    %547 = vmatmul.mubr.f32.gmra.mrb[0].mxu0 %v480
    %v548 = vpop.f32.mrb[0].mxu0
    %v549 = vadd.f32 %v91, %v548
    %v550 = vpop.f32.mrb[0].mxu0
    %551 = vdwg.mxu0
    %s552 = scalar_lea.vmem [#allocation3], 40
    %553 = vst [vmem:[%s552] sm:$0xff] %v549
    %s554 = scalar_lea.vmem [#allocation5], 48
    %v555 = vld [vmem:[%s554] sm:$0xff]
    %v557 = vsel %vm94, %v555, 0
    %559 = vmatprep.subr.mxu0 0.0
    %560 = vmatpush1.msra.mxu0 %v81
    %561 = vmatprep.subr.mxu0 0.0
    %562 = vmatpush1.msra.mxu0 0.0
    %563 = vmatprep.subr.mxu0 0.0
    %564 = vmatpush1.msra.mxu0 0.0
    %565 = vmatprep.subr.mxu0 0.0
    %566 = vmatpush1.msra.mxu0 0.0
    %567 = vmatprep.subr.mxu0 0.0
    %568 = vmatpush1.msra.mxu0 0.0
    %569 = vmatprep.subr.mxu0 0.0
    %570 = vmatpush1.msra.mxu0 0.0
    %571 = vmatprep.subr.mxu0 0.0
    %572 = vmatpush1.msra.mxu0 0.0
    %573 = vmatprep.subr.mxu0 0.0
    %574 = vmatpush1.msra.mxu0 0.0
    %575 = vmatprep.subr.mxu0 0.0
    %576 = vmatpush1.msra.mxu0 0.0
    %577 = vmatprep.subr.mxu0 0.0
    %578 = vmatpush1.msra.mxu0 0.0
    %579 = vmatprep.subr.mxu0 0.0
    %580 = vmatpush1.msra.mxu0 0.0
    %581 = vmatprep.subr.mxu0 0.0
    %582 = vmatpush1.msra.mxu0 0.0
    %583 = vmatprep.subr.mxu0 0.0
    %584 = vmatpush1.msra.mxu0 0.0
    %585 = vmatprep.subr.mxu0 0.0
    %586 = vmatpush1.msra.mxu0 0.0
    %587 = vmatprep.subr.mxu0 0.0
    %588 = vmatpush1.msra.mxu0 0.0
    %589 = vmatprep.subr.mxu0 0.0
    %590 = vmatpush1.msra.mxu0 0.0
    %591 = vmatprep.subr.mxu0 0.0
    %592 = vmatpush1.msra.mxu0 0.0
    %593 = vmatprep.subr.mxu0 0.0
    %594 = vmatpush1.msra.mxu0 0.0
    %595 = vmatprep.subr.mxu0 0.0
    %596 = vmatpush1.msra.mxu0 0.0
    %597 = vmatprep.subr.mxu0 0.0
    %598 = vmatpush1.msra.mxu0 0.0
    %599 = vmatprep.subr.mxu0 0.0
    %600 = vmatpush1.msra.mxu0 0.0
    %601 = vmatprep.subr.mxu0 0.0
    %602 = vmatpush1.msra.mxu0 0.0
    %603 = vmatprep.subr.mxu0 0.0
    %604 = vmatpush1.msra.mxu0 0.0
    %605 = vmatprep.subr.mxu0 0.0
    %606 = vmatpush1.msra.mxu0 0.0
    %607 = vmatprep.subr.mxu0 0.0
    %608 = vmatpush1.msra.mxu0 0.0
    %609 = vmatprep.subr.mxu0 0.0
    %610 = vmatpush1.msra.mxu0 0.0
    %611 = vmatprep.subr.mxu0 0.0
    %612 = vmatpush1.msra.mxu0 0.0
    %613 = vmatprep.subr.mxu0 0.0
    %614 = vmatpush1.msra.mxu0 0.0
    %615 = vmatprep.subr.mxu0 0.0
    %616 = vmatpush1.msra.mxu0 0.0
    %617 = vmatprep.subr.mxu0 0.0
    %618 = vmatpush1.msra.mxu0 0.0
    %619 = vmatprep.subr.mxu0 0.0
    %620 = vmatpush1.msra.mxu0 0.0
    %621 = vmatprep.subr.mxu0 0.0
    %622 = vmatpush1.msra.mxu0 0.0
    %623 = vmatprep.mubr.f32.mxu0 0.0
    %624 = vmatmul.mubr.f32.gmra.mrb[0].mxu0 %v557
    %v625 = vpop.f32.mrb[0].mxu0
    %v626 = vadd.f32 %v91, %v625
    %v627 = vpop.f32.mrb[0].mxu0
    %628 = vdwg.mxu0
    %s629 = scalar_lea.vmem [#allocation3], 48
    %630 = vst [vmem:[%s629] sm:$0xff] %v626
    %s631 = scalar_lea.vmem [#allocation5], 56
    %v632 = vld [vmem:[%s631] sm:$0xff]
    %v634 = vsel %vm94, %v632, 0
    %636 = vmatprep.subr.mxu0 0.0
    %637 = vmatpush1.msra.mxu0 %v81
    %638 = vmatprep.subr.mxu0 0.0
    %639 = vmatpush1.msra.mxu0 0.0
    %640 = vmatprep.subr.mxu0 0.0
    %641 = vmatpush1.msra.mxu0 0.0
    %642 = vmatprep.subr.mxu0 0.0
    %643 = vmatpush1.msra.mxu0 0.0
    %644 = vmatprep.subr.mxu0 0.0
    %645 = vmatpush1.msra.mxu0 0.0
    %646 = vmatprep.subr.mxu0 0.0
    %647 = vmatpush1.msra.mxu0 0.0
    %648 = vmatprep.subr.mxu0 0.0
    %649 = vmatpush1.msra.mxu0 0.0
    %650 = vmatprep.subr.mxu0 0.0
    %651 = vmatpush1.msra.mxu0 0.0
    %652 = vmatprep.subr.mxu0 0.0
    %653 = vmatpush1.msra.mxu0 0.0
    %654 = vmatprep.subr.mxu0 0.0
    %655 = vmatpush1.msra.mxu0 0.0
    %656 = vmatprep.subr.mxu0 0.0
    %657 = vmatpush1.msra.mxu0 0.0
    %658 = vmatprep.subr.mxu0 0.0
    %659 = vmatpush1.msra.mxu0 0.0
    %660 = vmatprep.subr.mxu0 0.0
    %661 = vmatpush1.msra.mxu0 0.0
    %662 = vmatprep.subr.mxu0 0.0
    %663 = vmatpush1.msra.mxu0 0.0
    %664 = vmatprep.subr.mxu0 0.0
    %665 = vmatpush1.msra.mxu0 0.0
    %666 = vmatprep.subr.mxu0 0.0
    %667 = vmatpush1.msra.mxu0 0.0
    %668 = vmatprep.subr.mxu0 0.0
    %669 = vmatpush1.msra.mxu0 0.0
    %670 = vmatprep.subr.mxu0 0.0
    %671 = vmatpush1.msra.mxu0 0.0
    %672 = vmatprep.subr.mxu0 0.0
    %673 = vmatpush1.msra.mxu0 0.0
    %674 = vmatprep.subr.mxu0 0.0
    %675 = vmatpush1.msra.mxu0 0.0
    %676 = vmatprep.subr.mxu0 0.0
    %677 = vmatpush1.msra.mxu0 0.0
    %678 = vmatprep.subr.mxu0 0.0
    %679 = vmatpush1.msra.mxu0 0.0
    %680 = vmatprep.subr.mxu0 0.0
    %681 = vmatpush1.msra.mxu0 0.0
    %682 = vmatprep.subr.mxu0 0.0
    %683 = vmatpush1.msra.mxu0 0.0
    %684 = vmatprep.subr.mxu0 0.0
    %685 = vmatpush1.msra.mxu0 0.0
    %686 = vmatprep.subr.mxu0 0.0
    %687 = vmatpush1.msra.mxu0 0.0
    %688 = vmatprep.subr.mxu0 0.0
    %689 = vmatpush1.msra.mxu0 0.0
    %690 = vmatprep.subr.mxu0 0.0
    %691 = vmatpush1.msra.mxu0 0.0
    %692 = vmatprep.subr.mxu0 0.0
    %693 = vmatpush1.msra.mxu0 0.0
    %694 = vmatprep.subr.mxu0 0.0
    %695 = vmatpush1.msra.mxu0 0.0
    %696 = vmatprep.subr.mxu0 0.0
    %697 = vmatpush1.msra.mxu0 0.0
    %698 = vmatprep.subr.mxu0 0.0
    %699 = vmatpush1.msra.mxu0 0.0
    %700 = vmatprep.mubr.f32.mxu0 0.0
    %701 = vmatmul.mubr.f32.gmra.mrb[0].mxu0 %v634
    %v702 = vpop.f32.mrb[0].mxu0
    %v703 = vadd.f32 %v91, %v702
    %v704 = vpop.f32.mrb[0].mxu0
    %705 = vdwg.mxu0
    %s706 = scalar_lea.vmem [#allocation3], 56
    %707 = vst [vmem:[%s706] sm:$0xff] %v703
    %v708 = vld [vmem:[#allocation3] sm:$0xff]
    %v709 = vmul.f32 %v708, 0.5
    %v710 = vtanh.pop %v709
    %v711 = vmul.f32 %v710, 0.5
    %v712 = vadd.f32 %v711, 0.5
    %v713 = vtanh.pop %v708
    %v714 = vmul.f32 %v712, 0.0
    %716 = vrot.lane.b32.xlu0 %v713, 32
    %v717 = vpop.permute.xlu0 %716
    %v719 = vmul.f32 %v712, %v717
    %721 = vrot.lane.b32.xlu0 %v719, 32
    %v722 = vpop.permute.xlu0 %721
    %v724 = vadd.f32 %v714, %v722
    %v725 = vtanh.pop %v724
    %727 = vrot.lane.b32.xlu0 %v725, 32
    %v728 = vpop.permute.xlu0 %727
    %v730 = vmul.f32 %v712, %v728
    %732 = vrot.lane.b32.xlu0 %v730, 64
    %v733 = vpop.permute.xlu0 %732
    %vm735 = vcmask 261120
    %736 = vst.msk [vmem:[#allocation2] sm:$0xff] %vm735, %v733
    %v737 = vld [vmem:[%s244] sm:$0xff]
    %v738 = vsel %vm735, %v733, 0
    %740 = vmatprep.subr.mxu0 0.0
    %741 = vmatpush1.msra.mxu0 %v82
    %742 = vmatprep.subr.mxu0 0.0
    %743 = vmatpush1.msra.mxu0 %v83
    %744 = vmatprep.subr.mxu0 0.0
    %745 = vmatpush1.msra.mxu0 %v84
    %746 = vmatprep.subr.mxu0 0.0
    %747 = vmatpush1.msra.mxu0 %v85
    %748 = vmatprep.subr.mxu0 0.0
    %749 = vmatpush1.msra.mxu0 0.0
    %750 = vmatprep.subr.mxu0 0.0
    %751 = vmatpush1.msra.mxu0 0.0
    %752 = vmatprep.subr.mxu0 0.0
    %753 = vmatpush1.msra.mxu0 0.0
    %754 = vmatprep.subr.mxu0 0.0
    %755 = vmatpush1.msra.mxu0 0.0
    %756 = vmatprep.subr.mxu0 0.0
    %757 = vmatpush1.msra.mxu0 0.0
    %758 = vmatprep.subr.mxu0 0.0
    %759 = vmatpush1.msra.mxu0 0.0
    %760 = vmatprep.subr.mxu0 0.0
    %761 = vmatpush1.msra.mxu0 0.0
    %762 = vmatprep.subr.mxu0 0.0
    %763 = vmatpush1.msra.mxu0 0.0
    %764 = vmatprep.subr.mxu0 0.0
    %765 = vmatpush1.msra.mxu0 0.0
    %766 = vmatprep.subr.mxu0 0.0
    %767 = vmatpush1.msra.mxu0 0.0
    %768 = vmatprep.subr.mxu0 0.0
    %769 = vmatpush1.msra.mxu0 0.0
    %770 = vmatprep.subr.mxu0 0.0
    %771 = vmatpush1.msra.mxu0 0.0
    %772 = vmatprep.subr.mxu0 0.0
    %773 = vmatpush1.msra.mxu0 0.0
    %774 = vmatprep.subr.mxu0 0.0
    %775 = vmatpush1.msra.mxu0 0.0
    %776 = vmatprep.subr.mxu0 0.0
    %777 = vmatpush1.msra.mxu0 0.0
    %778 = vmatprep.subr.mxu0 0.0
    %779 = vmatpush1.msra.mxu0 0.0
    %780 = vmatprep.subr.mxu0 0.0
    %781 = vmatpush1.msra.mxu0 0.0
    %782 = vmatprep.subr.mxu0 0.0
    %783 = vmatpush1.msra.mxu0 0.0
    %784 = vmatprep.subr.mxu0 0.0
    %785 = vmatpush1.msra.mxu0 0.0
    %786 = vmatprep.subr.mxu0 0.0
    %787 = vmatpush1.msra.mxu0 0.0
    %788 = vmatprep.subr.mxu0 0.0
    %789 = vmatpush1.msra.mxu0 0.0
    %790 = vmatprep.subr.mxu0 0.0
    %791 = vmatpush1.msra.mxu0 0.0
    %792 = vmatprep.subr.mxu0 0.0
    %793 = vmatpush1.msra.mxu0 0.0
    %794 = vmatprep.subr.mxu0 0.0
    %795 = vmatpush1.msra.mxu0 0.0
    %796 = vmatprep.subr.mxu0 0.0
    %797 = vmatpush1.msra.mxu0 0.0
    %798 = vmatprep.subr.mxu0 0.0
    %799 = vmatpush1.msra.mxu0 0.0
    %800 = vmatprep.subr.mxu0 0.0
    %801 = vmatpush1.msra.mxu0 0.0
    %802 = vmatprep.subr.mxu0 0.0
    %803 = vmatpush1.msra.mxu0 0.0
    %804 = vmatprep.mubr.f32.mxu0 0.0
    %805 = vmatmul.mubr.f32.gmra.mrb[0].mxu0 %v738
    %v806 = vpop.f32.mrb[0].mxu0
    %v807 = vadd.f32 0.0, %v806
    %v808 = vpop.f32.mrb[0].mxu0
    %809 = vdwg.mxu0
    %v810 = vadd.f32 %v737, %v807
    %v811 = vmul.f32 %v810, 0.5
    %v812 = vtanh.pop %v811
    %v813 = vmul.f32 %v812, 0.5
    %v814 = vadd.f32 %v813, 0.5
    %v815 = vtanh.pop %v810
    %v816 = vmul.f32 %v814, %v724
    %818 = vrot.lane.b32.xlu0 %v815, 32
    %v819 = vpop.permute.xlu0 %818
    %v821 = vmul.f32 %v814, %v819
    %823 = vrot.lane.b32.xlu0 %v821, 32
    %v824 = vpop.permute.xlu0 %823
    %v826 = vadd.f32 %v816, %v824
    %v827 = vtanh.pop %v826
    %829 = vrot.lane.b32.xlu0 %v827, 32
    %v830 = vpop.permute.xlu0 %829
    %v832 = vmul.f32 %v814, %v830
    %834 = vrot.lane.b32.xlu0 %v832, 64
    %v835 = vpop.permute.xlu0 %834
    %s837 = scalar_lea.vmem [#allocation2], 8
    %838 = vst.msk [vmem:[%s837] sm:$0xff] %vm735, %v835
    %v839 = vld [vmem:[%s321] sm:$0xff]
    %v840 = vsel %vm735, %v835, 0
    %842 = vmatprep.subr.mxu0 0.0
    %843 = vmatpush1.msra.mxu0 %v82
    %844 = vmatprep.subr.mxu0 0.0
    %845 = vmatpush1.msra.mxu0 %v83
    %846 = vmatprep.subr.mxu0 0.0
    %847 = vmatpush1.msra.mxu0 %v84
    %848 = vmatprep.subr.mxu0 0.0
    %849 = vmatpush1.msra.mxu0 %v85
    %850 = vmatprep.subr.mxu0 0.0
    %851 = vmatpush1.msra.mxu0 0.0
    %852 = vmatprep.subr.mxu0 0.0
    %853 = vmatpush1.msra.mxu0 0.0
    %854 = vmatprep.subr.mxu0 0.0
    %855 = vmatpush1.msra.mxu0 0.0
    %856 = vmatprep.subr.mxu0 0.0
    %857 = vmatpush1.msra.mxu0 0.0
    %858 = vmatprep.subr.mxu0 0.0
    %859 = vmatpush1.msra.mxu0 0.0
    %860 = vmatprep.subr.mxu0 0.0
    %861 = vmatpush1.msra.mxu0 0.0
    %862 = vmatprep.subr.mxu0 0.0
    %863 = vmatpush1.msra.mxu0 0.0
    %864 = vmatprep.subr.mxu0 0.0
    %865 = vmatpush1.msra.mxu0 0.0
    %866 = vmatprep.subr.mxu0 0.0
    %867 = vmatpush1.msra.mxu0 0.0
    %868 = vmatprep.subr.mxu0 0.0
    %869 = vmatpush1.msra.mxu0 0.0
    %870 = vmatprep.subr.mxu0 0.0
    %871 = vmatpush1.msra.mxu0 0.0
    %872 = vmatprep.subr.mxu0 0.0
    %873 = vmatpush1.msra.mxu0 0.0
    %874 = vmatprep.subr.mxu0 0.0
    %875 = vmatpush1.msra.mxu0 0.0
    %876 = vmatprep.subr.mxu0 0.0
    %877 = vmatpush1.msra.mxu0 0.0
    %878 = vmatprep.subr.mxu0 0.0
    %879 = vmatpush1.msra.mxu0 0.0
    %880 = vmatprep.subr.mxu0 0.0
    %881 = vmatpush1.msra.mxu0 0.0
    %882 = vmatprep.subr.mxu0 0.0
    %883 = vmatpush1.msra.mxu0 0.0
    %884 = vmatprep.subr.mxu0 0.0
    %885 = vmatpush1.msra.mxu0 0.0
    %886 = vmatprep.subr.mxu0 0.0
    %887 = vmatpush1.msra.mxu0 0.0
    %888 = vmatprep.subr.mxu0 0.0
    %889 = vmatpush1.msra.mxu0 0.0
    %890 = vmatprep.subr.mxu0 0.0
    %891 = vmatpush1.msra.mxu0 0.0
    %892 = vmatprep.subr.mxu0 0.0
    %893 = vmatpush1.msra.mxu0 0.0
    %894 = vmatprep.subr.mxu0 0.0
    %895 = vmatpush1.msra.mxu0 0.0
    %896 = vmatprep.subr.mxu0 0.0
    %897 = vmatpush1.msra.mxu0 0.0
    %898 = vmatprep.subr.mxu0 0.0
    %899 = vmatpush1.msra.mxu0 0.0
    %900 = vmatprep.subr.mxu0 0.0
    %901 = vmatpush1.msra.mxu0 0.0
    %902 = vmatprep.subr.mxu0 0.0
    %903 = vmatpush1.msra.mxu0 0.0
    %904 = vmatprep.subr.mxu0 0.0
    %905 = vmatpush1.msra.mxu0 0.0
    %906 = vmatprep.mubr.f32.mxu0 0.0
    %907 = vmatmul.mubr.f32.gmra.mrb[0].mxu0 %v840
    %v908 = vpop.f32.mrb[0].mxu0
    %v909 = vadd.f32 0.0, %v908
    %v910 = vpop.f32.mrb[0].mxu0
    %911 = vdwg.mxu0
    %v912 = vadd.f32 %v839, %v909
    %v913 = vmul.f32 %v912, 0.5
    %v914 = vtanh.pop %v913
    %v915 = vmul.f32 %v914, 0.5
    %v916 = vadd.f32 %v915, 0.5
    %v917 = vtanh.pop %v912
    %v918 = vmul.f32 %v916, %v826
    %920 = vrot.lane.b32.xlu0 %v917, 32
    %v921 = vpop.permute.xlu0 %920
    %v923 = vmul.f32 %v916, %v921
    %925 = vrot.lane.b32.xlu0 %v923, 32
    %v926 = vpop.permute.xlu0 %925
    %v928 = vadd.f32 %v918, %v926
    %v929 = vtanh.pop %v928
    %931 = vrot.lane.b32.xlu0 %v929, 32
    %v932 = vpop.permute.xlu0 %931
    %v934 = vmul.f32 %v916, %v932
    %936 = vrot.lane.b32.xlu0 %v934, 64
    %v937 = vpop.permute.xlu0 %936
    %s939 = scalar_lea.vmem [#allocation2], 16
    %940 = vst.msk [vmem:[%s939] sm:$0xff] %vm735, %v937
    %v941 = vld [vmem:[%s398] sm:$0xff]
    %v942 = vsel %vm735, %v937, 0
    %944 = vmatprep.subr.mxu0 0.0
    %945 = vmatpush1.msra.mxu0 %v82
    %946 = vmatprep.subr.mxu0 0.0
    %947 = vmatpush1.msra.mxu0 %v83
    %948 = vmatprep.subr.mxu0 0.0
    %949 = vmatpush1.msra.mxu0 %v84
    %950 = vmatprep.subr.mxu0 0.0
    %951 = vmatpush1.msra.mxu0 %v85
    %952 = vmatprep.subr.mxu0 0.0
    %953 = vmatpush1.msra.mxu0 0.0
    %954 = vmatprep.subr.mxu0 0.0
    %955 = vmatpush1.msra.mxu0 0.0
    %956 = vmatprep.subr.mxu0 0.0
    %957 = vmatpush1.msra.mxu0 0.0
    %958 = vmatprep.subr.mxu0 0.0
    %959 = vmatpush1.msra.mxu0 0.0
    %960 = vmatprep.subr.mxu0 0.0
    %961 = vmatpush1.msra.mxu0 0.0
    %962 = vmatprep.subr.mxu0 0.0
    %963 = vmatpush1.msra.mxu0 0.0
    %964 = vmatprep.subr.mxu0 0.0
    %965 = vmatpush1.msra.mxu0 0.0
    %966 = vmatprep.subr.mxu0 0.0
    %967 = vmatpush1.msra.mxu0 0.0
    %968 = vmatprep.subr.mxu0 0.0
    %969 = vmatpush1.msra.mxu0 0.0
    %970 = vmatprep.subr.mxu0 0.0
    %971 = vmatpush1.msra.mxu0 0.0
    %972 = vmatprep.subr.mxu0 0.0
    %973 = vmatpush1.msra.mxu0 0.0
    %974 = vmatprep.subr.mxu0 0.0
    %975 = vmatpush1.msra.mxu0 0.0
    %976 = vmatprep.subr.mxu0 0.0
    %977 = vmatpush1.msra.mxu0 0.0
    %978 = vmatprep.subr.mxu0 0.0
    %979 = vmatpush1.msra.mxu0 0.0
    %980 = vmatprep.subr.mxu0 0.0
    %981 = vmatpush1.msra.mxu0 0.0
    %982 = vmatprep.subr.mxu0 0.0
    %983 = vmatpush1.msra.mxu0 0.0
    %984 = vmatprep.subr.mxu0 0.0
    %985 = vmatpush1.msra.mxu0 0.0
    %986 = vmatprep.subr.mxu0 0.0
    %987 = vmatpush1.msra.mxu0 0.0
    %988 = vmatprep.subr.mxu0 0.0
    %989 = vmatpush1.msra.mxu0 0.0
    %990 = vmatprep.subr.mxu0 0.0
    %991 = vmatpush1.msra.mxu0 0.0
    %992 = vmatprep.subr.mxu0 0.0
    %993 = vmatpush1.msra.mxu0 0.0
    %994 = vmatprep.subr.mxu0 0.0
    %995 = vmatpush1.msra.mxu0 0.0
    %996 = vmatprep.subr.mxu0 0.0
    %997 = vmatpush1.msra.mxu0 0.0
    %998 = vmatprep.subr.mxu0 0.0
    %999 = vmatpush1.msra.mxu0 0.0
    %1000 = vmatprep.subr.mxu0 0.0
    %1001 = vmatpush1.msra.mxu0 0.0
    %1002 = vmatprep.subr.mxu0 0.0
    %1003 = vmatpush1.msra.mxu0 0.0
    %1004 = vmatprep.subr.mxu0 0.0
    %1005 = vmatpush1.msra.mxu0 0.0
    %1006 = vmatprep.subr.mxu0 0.0
    %1007 = vmatpush1.msra.mxu0 0.0
    %1008 = vmatprep.mubr.f32.mxu0 0.0
    %1009 = vmatmul.mubr.f32.gmra.mrb[0].mxu0 %v942
    %v1010 = vpop.f32.mrb[0].mxu0
    %v1011 = vadd.f32 0.0, %v1010
    %v1012 = vpop.f32.mrb[0].mxu0
    %1013 = vdwg.mxu0
    %v1014 = vadd.f32 %v941, %v1011
    %v1015 = vmul.f32 %v1014, 0.5
    %v1016 = vtanh.pop %v1015
    %v1017 = vmul.f32 %v1016, 0.5
    %v1018 = vadd.f32 %v1017, 0.5
    %v1019 = vtanh.pop %v1014
    %v1020 = vmul.f32 %v1018, %v928
    %1022 = vrot.lane.b32.xlu0 %v1019, 32
    %v1023 = vpop.permute.xlu0 %1022
    %v1025 = vmul.f32 %v1018, %v1023
    %1027 = vrot.lane.b32.xlu0 %v1025, 32
    %v1028 = vpop.permute.xlu0 %1027
    %v1030 = vadd.f32 %v1020, %v1028
    %v1031 = vtanh.pop %v1030
    %1033 = vrot.lane.b32.xlu0 %v1031, 32
    %v1034 = vpop.permute.xlu0 %1033
    %v1036 = vmul.f32 %v1018, %v1034
    %1038 = vrot.lane.b32.xlu0 %v1036, 64
    %v1039 = vpop.permute.xlu0 %1038
    %s1041 = scalar_lea.vmem [#allocation2], 24
    %1042 = vst.msk [vmem:[%s1041] sm:$0xff] %vm735, %v1039
    %v1043 = vld [vmem:[%s475] sm:$0xff]
    %v1044 = vsel %vm735, %v1039, 0
    %1046 = vmatprep.subr.mxu0 0.0
    %1047 = vmatpush1.msra.mxu0 %v82
    %1048 = vmatprep.subr.mxu0 0.0
    %1049 = vmatpush1.msra.mxu0 %v83
    %1050 = vmatprep.subr.mxu0 0.0
    %1051 = vmatpush1.msra.mxu0 %v84
    %1052 = vmatprep.subr.mxu0 0.0
    %1053 = vmatpush1.msra.mxu0 %v85
    %1054 = vmatprep.subr.mxu0 0.0
    %1055 = vmatpush1.msra.mxu0 0.0
    %1056 = vmatprep.subr.mxu0 0.0
    %1057 = vmatpush1.msra.mxu0 0.0
    %1058 = vmatprep.subr.mxu0 0.0
    %1059 = vmatpush1.msra.mxu0 0.0
    %1060 = vmatprep.subr.mxu0 0.0
    %1061 = vmatpush1.msra.mxu0 0.0
    %1062 = vmatprep.subr.mxu0 0.0
    %1063 = vmatpush1.msra.mxu0 0.0
    %1064 = vmatprep.subr.mxu0 0.0
    %1065 = vmatpush1.msra.mxu0 0.0
    %1066 = vmatprep.subr.mxu0 0.0
    %1067 = vmatpush1.msra.mxu0 0.0
    %1068 = vmatprep.subr.mxu0 0.0
    %1069 = vmatpush1.msra.mxu0 0.0
    %1070 = vmatprep.subr.mxu0 0.0
    %1071 = vmatpush1.msra.mxu0 0.0
    %1072 = vmatprep.subr.mxu0 0.0
    %1073 = vmatpush1.msra.mxu0 0.0
    %1074 = vmatprep.subr.mxu0 0.0
    %1075 = vmatpush1.msra.mxu0 0.0
    %1076 = vmatprep.subr.mxu0 0.0
    %1077 = vmatpush1.msra.mxu0 0.0
    %1078 = vmatprep.subr.mxu0 0.0
    %1079 = vmatpush1.msra.mxu0 0.0
    %1080 = vmatprep.subr.mxu0 0.0
    %1081 = vmatpush1.msra.mxu0 0.0
    %1082 = vmatprep.subr.mxu0 0.0
    %1083 = vmatpush1.msra.mxu0 0.0
    %1084 = vmatprep.subr.mxu0 0.0
    %1085 = vmatpush1.msra.mxu0 0.0
    %1086 = vmatprep.subr.mxu0 0.0
    %1087 = vmatpush1.msra.mxu0 0.0
    %1088 = vmatprep.subr.mxu0 0.0
    %1089 = vmatpush1.msra.mxu0 0.0
    %1090 = vmatprep.subr.mxu0 0.0
    %1091 = vmatpush1.msra.mxu0 0.0
    %1092 = vmatprep.subr.mxu0 0.0
    %1093 = vmatpush1.msra.mxu0 0.0
    %1094 = vmatprep.subr.mxu0 0.0
    %1095 = vmatpush1.msra.mxu0 0.0
    %1096 = vmatprep.subr.mxu0 0.0
    %1097 = vmatpush1.msra.mxu0 0.0
    %1098 = vmatprep.subr.mxu0 0.0
    %1099 = vmatpush1.msra.mxu0 0.0
    %1100 = vmatprep.subr.mxu0 0.0
    %1101 = vmatpush1.msra.mxu0 0.0
    %1102 = vmatprep.subr.mxu0 0.0
    %1103 = vmatpush1.msra.mxu0 0.0
    %1104 = vmatprep.subr.mxu0 0.0
    %1105 = vmatpush1.msra.mxu0 0.0
    %1106 = vmatprep.subr.mxu0 0.0
    %1107 = vmatpush1.msra.mxu0 0.0
    %1108 = vmatprep.subr.mxu0 0.0
    %1109 = vmatpush1.msra.mxu0 0.0
    %1110 = vmatprep.mubr.f32.mxu0 0.0
    %1111 = vmatmul.mubr.f32.gmra.mrb[0].mxu0 %v1044
    %v1112 = vpop.f32.mrb[0].mxu0
    %v1113 = vadd.f32 0.0, %v1112
    %v1114 = vpop.f32.mrb[0].mxu0
    %1115 = vdwg.mxu0
    %v1116 = vadd.f32 %v1043, %v1113
    %v1117 = vmul.f32 %v1116, 0.5
    %v1118 = vtanh.pop %v1117
    %v1119 = vmul.f32 %v1118, 0.5
    %v1120 = vadd.f32 %v1119, 0.5
    %v1121 = vtanh.pop %v1116
    %v1122 = vmul.f32 %v1120, %v1030
    %1124 = vrot.lane.b32.xlu0 %v1121, 32
    %v1125 = vpop.permute.xlu0 %1124
    %v1127 = vmul.f32 %v1120, %v1125
    %1129 = vrot.lane.b32.xlu0 %v1127, 32
    %v1130 = vpop.permute.xlu0 %1129
    %v1132 = vadd.f32 %v1122, %v1130
    %v1133 = vtanh.pop %v1132
    %1135 = vrot.lane.b32.xlu0 %v1133, 32
    %v1136 = vpop.permute.xlu0 %1135
    %v1138 = vmul.f32 %v1120, %v1136
    %1140 = vrot.lane.b32.xlu0 %v1138, 64
    %v1141 = vpop.permute.xlu0 %1140
    %s1143 = scalar_lea.vmem [#allocation2], 32
    %1144 = vst.msk [vmem:[%s1143] sm:$0xff] %vm735, %v1141
    %v1145 = vld [vmem:[%s552] sm:$0xff]
    %v1146 = vsel %vm735, %v1141, 0
    %1148 = vmatprep.subr.mxu0 0.0
    %1149 = vmatpush1.msra.mxu0 %v82
    %1150 = vmatprep.subr.mxu0 0.0
    %1151 = vmatpush1.msra.mxu0 %v83
    %1152 = vmatprep.subr.mxu0 0.0
    %1153 = vmatpush1.msra.mxu0 %v84
    %1154 = vmatprep.subr.mxu0 0.0
    %1155 = vmatpush1.msra.mxu0 %v85
    %1156 = vmatprep.subr.mxu0 0.0
    %1157 = vmatpush1.msra.mxu0 0.0
    %1158 = vmatprep.subr.mxu0 0.0
    %1159 = vmatpush1.msra.mxu0 0.0
    %1160 = vmatprep.subr.mxu0 0.0
    %1161 = vmatpush1.msra.mxu0 0.0
    %1162 = vmatprep.subr.mxu0 0.0
    %1163 = vmatpush1.msra.mxu0 0.0
    %1164 = vmatprep.subr.mxu0 0.0
    %1165 = vmatpush1.msra.mxu0 0.0
    %1166 = vmatprep.subr.mxu0 0.0
    %1167 = vmatpush1.msra.mxu0 0.0
    %1168 = vmatprep.subr.mxu0 0.0
    %1169 = vmatpush1.msra.mxu0 0.0
    %1170 = vmatprep.subr.mxu0 0.0
    %1171 = vmatpush1.msra.mxu0 0.0
    %1172 = vmatprep.subr.mxu0 0.0
    %1173 = vmatpush1.msra.mxu0 0.0
    %1174 = vmatprep.subr.mxu0 0.0
    %1175 = vmatpush1.msra.mxu0 0.0
    %1176 = vmatprep.subr.mxu0 0.0
    %1177 = vmatpush1.msra.mxu0 0.0
    %1178 = vmatprep.subr.mxu0 0.0
    %1179 = vmatpush1.msra.mxu0 0.0
    %1180 = vmatprep.subr.mxu0 0.0
    %1181 = vmatpush1.msra.mxu0 0.0
    %1182 = vmatprep.subr.mxu0 0.0
    %1183 = vmatpush1.msra.mxu0 0.0
    %1184 = vmatprep.subr.mxu0 0.0
    %1185 = vmatpush1.msra.mxu0 0.0
    %1186 = vmatprep.subr.mxu0 0.0
    %1187 = vmatpush1.msra.mxu0 0.0
    %1188 = vmatprep.subr.mxu0 0.0
    %1189 = vmatpush1.msra.mxu0 0.0
    %1190 = vmatprep.subr.mxu0 0.0
    %1191 = vmatpush1.msra.mxu0 0.0
    %1192 = vmatprep.subr.mxu0 0.0
    %1193 = vmatpush1.msra.mxu0 0.0
    %1194 = vmatprep.subr.mxu0 0.0
    %1195 = vmatpush1.msra.mxu0 0.0
    %1196 = vmatprep.subr.mxu0 0.0
    %1197 = vmatpush1.msra.mxu0 0.0
    %1198 = vmatprep.subr.mxu0 0.0
    %1199 = vmatpush1.msra.mxu0 0.0
    %1200 = vmatprep.subr.mxu0 0.0
    %1201 = vmatpush1.msra.mxu0 0.0
    %1202 = vmatprep.subr.mxu0 0.0
    %1203 = vmatpush1.msra.mxu0 0.0
    %1204 = vmatprep.subr.mxu0 0.0
    %1205 = vmatpush1.msra.mxu0 0.0
    %1206 = vmatprep.subr.mxu0 0.0
    %1207 = vmatpush1.msra.mxu0 0.0
    %1208 = vmatprep.subr.mxu0 0.0
    %1209 = vmatpush1.msra.mxu0 0.0
    %1210 = vmatprep.subr.mxu0 0.0
    %1211 = vmatpush1.msra.mxu0 0.0
    %1212 = vmatprep.mubr.f32.mxu0 0.0
    %1213 = vmatmul.mubr.f32.gmra.mrb[0].mxu0 %v1146
    %v1214 = vpop.f32.mrb[0].mxu0
    %v1215 = vadd.f32 0.0, %v1214
    %v1216 = vpop.f32.mrb[0].mxu0
    %1217 = vdwg.mxu0
    %v1218 = vadd.f32 %v1145, %v1215
    %v1219 = vmul.f32 %v1218, 0.5
    %v1220 = vtanh.pop %v1219
    %v1221 = vmul.f32 %v1220, 0.5
    %v1222 = vadd.f32 %v1221, 0.5
    %v1223 = vtanh.pop %v1218
    %v1224 = vmul.f32 %v1222, %v1132
    %1226 = vrot.lane.b32.xlu0 %v1223, 32
    %v1227 = vpop.permute.xlu0 %1226
    %v1229 = vmul.f32 %v1222, %v1227
    %1231 = vrot.lane.b32.xlu0 %v1229, 32
    %v1232 = vpop.permute.xlu0 %1231
    %v1234 = vadd.f32 %v1224, %v1232
    %v1235 = vtanh.pop %v1234
    %1237 = vrot.lane.b32.xlu0 %v1235, 32
    %v1238 = vpop.permute.xlu0 %1237
    %v1240 = vmul.f32 %v1222, %v1238
    %1242 = vrot.lane.b32.xlu0 %v1240, 64
    %v1243 = vpop.permute.xlu0 %1242
    %s1245 = scalar_lea.vmem [#allocation2], 40
    %1246 = vst.msk [vmem:[%s1245] sm:$0xff] %vm735, %v1243
    %v1247 = vld [vmem:[%s629] sm:$0xff]
    %v1248 = vsel %vm735, %v1243, 0
    %1250 = vmatprep.subr.mxu0 0.0
    %1251 = vmatpush1.msra.mxu0 %v82
    %1252 = vmatprep.subr.mxu0 0.0
    %1253 = vmatpush1.msra.mxu0 %v83
    %1254 = vmatprep.subr.mxu0 0.0
    %1255 = vmatpush1.msra.mxu0 %v84
    %1256 = vmatprep.subr.mxu0 0.0
    %1257 = vmatpush1.msra.mxu0 %v85
    %1258 = vmatprep.subr.mxu0 0.0
    %1259 = vmatpush1.msra.mxu0 0.0
    %1260 = vmatprep.subr.mxu0 0.0
    %1261 = vmatpush1.msra.mxu0 0.0
    %1262 = vmatprep.subr.mxu0 0.0
    %1263 = vmatpush1.msra.mxu0 0.0
    %1264 = vmatprep.subr.mxu0 0.0
    %1265 = vmatpush1.msra.mxu0 0.0
    %1266 = vmatprep.subr.mxu0 0.0
    %1267 = vmatpush1.msra.mxu0 0.0
    %1268 = vmatprep.subr.mxu0 0.0
    %1269 = vmatpush1.msra.mxu0 0.0
    %1270 = vmatprep.subr.mxu0 0.0
    %1271 = vmatpush1.msra.mxu0 0.0
    %1272 = vmatprep.subr.mxu0 0.0
    %1273 = vmatpush1.msra.mxu0 0.0
    %1274 = vmatprep.subr.mxu0 0.0
    %1275 = vmatpush1.msra.mxu0 0.0
    %1276 = vmatprep.subr.mxu0 0.0
    %1277 = vmatpush1.msra.mxu0 0.0
    %1278 = vmatprep.subr.mxu0 0.0
    %1279 = vmatpush1.msra.mxu0 0.0
    %1280 = vmatprep.subr.mxu0 0.0
    %1281 = vmatpush1.msra.mxu0 0.0
    %1282 = vmatprep.subr.mxu0 0.0
    %1283 = vmatpush1.msra.mxu0 0.0
    %1284 = vmatprep.subr.mxu0 0.0
    %1285 = vmatpush1.msra.mxu0 0.0
    %1286 = vmatprep.subr.mxu0 0.0
    %1287 = vmatpush1.msra.mxu0 0.0
    %1288 = vmatprep.subr.mxu0 0.0
    %1289 = vmatpush1.msra.mxu0 0.0
    %1290 = vmatprep.subr.mxu0 0.0
    %1291 = vmatpush1.msra.mxu0 0.0
    %1292 = vmatprep.subr.mxu0 0.0
    %1293 = vmatpush1.msra.mxu0 0.0
    %1294 = vmatprep.subr.mxu0 0.0
    %1295 = vmatpush1.msra.mxu0 0.0
    %1296 = vmatprep.subr.mxu0 0.0
    %1297 = vmatpush1.msra.mxu0 0.0
    %1298 = vmatprep.subr.mxu0 0.0
    %1299 = vmatpush1.msra.mxu0 0.0
    %1300 = vmatprep.subr.mxu0 0.0
    %1301 = vmatpush1.msra.mxu0 0.0
    %1302 = vmatprep.subr.mxu0 0.0
    %1303 = vmatpush1.msra.mxu0 0.0
    %1304 = vmatprep.subr.mxu0 0.0
    %1305 = vmatpush1.msra.mxu0 0.0
    %1306 = vmatprep.subr.mxu0 0.0
    %1307 = vmatpush1.msra.mxu0 0.0
    %1308 = vmatprep.subr.mxu0 0.0
    %1309 = vmatpush1.msra.mxu0 0.0
    %1310 = vmatprep.subr.mxu0 0.0
    %1311 = vmatpush1.msra.mxu0 0.0
    %1312 = vmatprep.subr.mxu0 0.0
    %1313 = vmatpush1.msra.mxu0 0.0
    %1314 = vmatprep.mubr.f32.mxu0 0.0
    %1315 = vmatmul.mubr.f32.gmra.mrb[0].mxu0 %v1248
    %v1316 = vpop.f32.mrb[0].mxu0
    %v1317 = vadd.f32 0.0, %v1316
    %v1318 = vpop.f32.mrb[0].mxu0
    %1319 = vdwg.mxu0
    %v1320 = vadd.f32 %v1247, %v1317
    %v1321 = vmul.f32 %v1320, 0.5
    %v1322 = vtanh.pop %v1321
    %v1323 = vmul.f32 %v1322, 0.5
    %v1324 = vadd.f32 %v1323, 0.5
    %v1325 = vtanh.pop %v1320
    %v1326 = vmul.f32 %v1324, %v1234
    %1328 = vrot.lane.b32.xlu0 %v1325, 32
    %v1329 = vpop.permute.xlu0 %1328
    %v1331 = vmul.f32 %v1324, %v1329
    %1333 = vrot.lane.b32.xlu0 %v1331, 32
    %v1334 = vpop.permute.xlu0 %1333
    %v1336 = vadd.f32 %v1326, %v1334
    %v1337 = vtanh.pop %v1336
    %1339 = vrot.lane.b32.xlu0 %v1337, 32
    %v1340 = vpop.permute.xlu0 %1339
    %v1342 = vmul.f32 %v1324, %v1340
    %1344 = vrot.lane.b32.xlu0 %v1342, 64
    %v1345 = vpop.permute.xlu0 %1344
    %s1347 = scalar_lea.vmem [#allocation2], 48
    %1348 = vst.msk [vmem:[%s1347] sm:$0xff] %vm735, %v1345
    %v1349 = vld [vmem:[%s706] sm:$0xff]
    %v1350 = vsel %vm735, %v1345, 0
    %1352 = vmatprep.subr.mxu0 0.0
    %1353 = vmatpush1.msra.mxu0 %v82
    %1354 = vmatprep.subr.mxu0 0.0
    %1355 = vmatpush1.msra.mxu0 %v83
    %1356 = vmatprep.subr.mxu0 0.0
    %1357 = vmatpush1.msra.mxu0 %v84
    %1358 = vmatprep.subr.mxu0 0.0
    %1359 = vmatpush1.msra.mxu0 %v85
    %1360 = vmatprep.subr.mxu0 0.0
    %1361 = vmatpush1.msra.mxu0 0.0
    %1362 = vmatprep.subr.mxu0 0.0
    %1363 = vmatpush1.msra.mxu0 0.0
    %1364 = vmatprep.subr.mxu0 0.0
    %1365 = vmatpush1.msra.mxu0 0.0
    %1366 = vmatprep.subr.mxu0 0.0
    %1367 = vmatpush1.msra.mxu0 0.0
    %1368 = vmatprep.subr.mxu0 0.0
    %1369 = vmatpush1.msra.mxu0 0.0
    %1370 = vmatprep.subr.mxu0 0.0
    %1371 = vmatpush1.msra.mxu0 0.0
    %1372 = vmatprep.subr.mxu0 0.0
    %1373 = vmatpush1.msra.mxu0 0.0
    %1374 = vmatprep.subr.mxu0 0.0
    %1375 = vmatpush1.msra.mxu0 0.0
    %1376 = vmatprep.subr.mxu0 0.0
    %1377 = vmatpush1.msra.mxu0 0.0
    %1378 = vmatprep.subr.mxu0 0.0
    %1379 = vmatpush1.msra.mxu0 0.0
    %1380 = vmatprep.subr.mxu0 0.0
    %1381 = vmatpush1.msra.mxu0 0.0
    %1382 = vmatprep.subr.mxu0 0.0
    %1383 = vmatpush1.msra.mxu0 0.0
    %1384 = vmatprep.subr.mxu0 0.0
    %1385 = vmatpush1.msra.mxu0 0.0
    %1386 = vmatprep.subr.mxu0 0.0
    %1387 = vmatpush1.msra.mxu0 0.0
    %1388 = vmatprep.subr.mxu0 0.0
    %1389 = vmatpush1.msra.mxu0 0.0
    %1390 = vmatprep.subr.mxu0 0.0
    %1391 = vmatpush1.msra.mxu0 0.0
    %1392 = vmatprep.subr.mxu0 0.0
    %1393 = vmatpush1.msra.mxu0 0.0
    %1394 = vmatprep.subr.mxu0 0.0
    %1395 = vmatpush1.msra.mxu0 0.0
    %1396 = vmatprep.subr.mxu0 0.0
    %1397 = vmatpush1.msra.mxu0 0.0
    %1398 = vmatprep.subr.mxu0 0.0
    %1399 = vmatpush1.msra.mxu0 0.0
    %1400 = vmatprep.subr.mxu0 0.0
    %1401 = vmatpush1.msra.mxu0 0.0
    %1402 = vmatprep.subr.mxu0 0.0
    %1403 = vmatpush1.msra.mxu0 0.0
    %1404 = vmatprep.subr.mxu0 0.0
    %1405 = vmatpush1.msra.mxu0 0.0
    %1406 = vmatprep.subr.mxu0 0.0
    %1407 = vmatpush1.msra.mxu0 0.0
    %1408 = vmatprep.subr.mxu0 0.0
    %1409 = vmatpush1.msra.mxu0 0.0
    %1410 = vmatprep.subr.mxu0 0.0
    %1411 = vmatpush1.msra.mxu0 0.0
    %1412 = vmatprep.subr.mxu0 0.0
    %1413 = vmatpush1.msra.mxu0 0.0
    %1414 = vmatprep.subr.mxu0 0.0
    %1415 = vmatpush1.msra.mxu0 0.0
    %1416 = vmatprep.mubr.f32.mxu0 0.0
    %1417 = vmatmul.mubr.f32.gmra.mrb[0].mxu0 %v1350
    %v1418 = vpop.f32.mrb[0].mxu0
    %v1419 = vadd.f32 0.0, %v1418
    %v1420 = vpop.f32.mrb[0].mxu0
    %1421 = vdwg.mxu0
    %v1422 = vadd.f32 %v1349, %v1419
    %v1423 = vmul.f32 %v1422, 0.5
    %v1424 = vtanh.pop %v1423
    %v1425 = vmul.f32 %v1424, 0.5
    %v1426 = vadd.f32 %v1425, 0.5
    %v1427 = vtanh.pop %v1422
    %v1428 = vmul.f32 %v1426, %v1336
    %1430 = vrot.lane.b32.xlu0 %v1427, 32
    %v1431 = vpop.permute.xlu0 %1430
    %v1433 = vmul.f32 %v1426, %v1431
    %1435 = vrot.lane.b32.xlu0 %v1433, 32
    %v1436 = vpop.permute.xlu0 %1435
    %v1438 = vadd.f32 %v1428, %v1436
    %v1439 = vtanh.pop %v1438
    %1441 = vrot.lane.b32.xlu0 %v1439, 32
    %v1442 = vpop.permute.xlu0 %1441
    %v1444 = vmul.f32 %v1426, %v1442
    %1446 = vrot.lane.b32.xlu0 %v1444, 64
    %v1447 = vpop.permute.xlu0 %1446
    %s1449 = scalar_lea.vmem [#allocation2], 56
    %1450 = vst.msk [vmem:[%s1449] sm:$0xff] %vm735, %v1447
    %v1451 = vld [vmem:[#allocation9] sm:$0xff]
    %v1452 = vld [vmem:[#allocation9 + $0x8] sm:$0xff]
    %v1453 = vld [vmem:[#allocation9 + $0x10] sm:$0xff]
    %v1454 = vld [vmem:[#allocation9 + $0x18] sm:$0xff]
    %s1455 = scalar_lea.vmem [#allocation10], 32
    %v1456 = vld [vmem:[%s1455] sm:$0xff]
    %v1457 = vld [vmem:[%s1455 + $0x8] sm:$0xff]
    %v1458 = vld [vmem:[%s1455 + $0x10] sm:$0xff]
    %v1459 = vld [vmem:[%s1455 + $0x18] sm:$0xff]
    %s1460 = scalar_lea.vmem %s4, 1
    %v1461 = vld [vmem:[%s1460] sm:$0x1]
    %v1463 = vlaneseq
    %v1464 = vshrl.u32 %v1463, 7
    %v1465 = vsub.s32 0, %v1464
    %v1466 = vrot.slane %v1461, %v1465
    %v1468 = vld [vmem:[#allocation2] sm:$0xff]
    %v1470 = vsel %vm735, %v1468, 0
    %1472 = vmatprep.subr.mxu0 0.0
    %1473 = vmatpush1.msra.mxu0 %v1451
    %1474 = vmatprep.subr.mxu0 0.0
    %1475 = vmatpush1.msra.mxu0 %v1452
    %1476 = vmatprep.subr.mxu0 0.0
    %1477 = vmatpush1.msra.mxu0 %v1453
    %1478 = vmatprep.subr.mxu0 0.0
    %1479 = vmatpush1.msra.mxu0 %v1454
    %1480 = vmatprep.subr.mxu0 0.0
    %1481 = vmatpush1.msra.mxu0 0.0
    %1482 = vmatprep.subr.mxu0 0.0
    %1483 = vmatpush1.msra.mxu0 0.0
    %1484 = vmatprep.subr.mxu0 0.0
    %1485 = vmatpush1.msra.mxu0 0.0
    %1486 = vmatprep.subr.mxu0 0.0
    %1487 = vmatpush1.msra.mxu0 0.0
    %1488 = vmatprep.subr.mxu0 0.0
    %1489 = vmatpush1.msra.mxu0 0.0
    %1490 = vmatprep.subr.mxu0 0.0
    %1491 = vmatpush1.msra.mxu0 0.0
    %1492 = vmatprep.subr.mxu0 0.0
    %1493 = vmatpush1.msra.mxu0 0.0
    %1494 = vmatprep.subr.mxu0 0.0
    %1495 = vmatpush1.msra.mxu0 0.0
    %1496 = vmatprep.subr.mxu0 0.0
    %1497 = vmatpush1.msra.mxu0 0.0
    %1498 = vmatprep.subr.mxu0 0.0
    %1499 = vmatpush1.msra.mxu0 0.0
    %1500 = vmatprep.subr.mxu0 0.0
    %1501 = vmatpush1.msra.mxu0 0.0
    %1502 = vmatprep.subr.mxu0 0.0
    %1503 = vmatpush1.msra.mxu0 0.0
    %1504 = vmatprep.subr.mxu0 0.0
    %1505 = vmatpush1.msra.mxu0 0.0
    %1506 = vmatprep.subr.mxu0 0.0
    %1507 = vmatpush1.msra.mxu0 0.0
    %1508 = vmatprep.subr.mxu0 0.0
    %1509 = vmatpush1.msra.mxu0 0.0
    %1510 = vmatprep.subr.mxu0 0.0
    %1511 = vmatpush1.msra.mxu0 0.0
    %1512 = vmatprep.subr.mxu0 0.0
    %1513 = vmatpush1.msra.mxu0 0.0
    %1514 = vmatprep.subr.mxu0 0.0
    %1515 = vmatpush1.msra.mxu0 0.0
    %1516 = vmatprep.subr.mxu0 0.0
    %1517 = vmatpush1.msra.mxu0 0.0
    %1518 = vmatprep.subr.mxu0 0.0
    %1519 = vmatpush1.msra.mxu0 0.0
    %1520 = vmatprep.subr.mxu0 0.0
    %1521 = vmatpush1.msra.mxu0 0.0
    %1522 = vmatprep.subr.mxu0 0.0
    %1523 = vmatpush1.msra.mxu0 0.0
    %1524 = vmatprep.subr.mxu0 0.0
    %1525 = vmatpush1.msra.mxu0 0.0
    %1526 = vmatprep.subr.mxu0 0.0
    %1527 = vmatpush1.msra.mxu0 0.0
    %1528 = vmatprep.subr.mxu0 0.0
    %1529 = vmatpush1.msra.mxu0 0.0
    %1530 = vmatprep.subr.mxu0 0.0
    %1531 = vmatpush1.msra.mxu0 0.0
    %1532 = vmatprep.subr.mxu0 0.0
    %1533 = vmatpush1.msra.mxu0 0.0
    %1534 = vmatprep.subr.mxu0 0.0
    %1535 = vmatpush1.msra.mxu0 0.0
    %1536 = vmatprep.mubr.f32.mxu0 0.0
    %1537 = vmatmul.mubr.f32.gmra.mrb[0].mxu0 %v1470
    %v1538 = vpop.f32.mrb[0].mxu0
    %v1539 = vadd.f32 %v1466, %v1538
    %v1540 = vpop.f32.mrb[0].mxu0
    %1541 = vdwg.mxu0
    %1542 = vst [vmem:[#allocation3] sm:$0xff] %v1539
    %v1543 = vld [vmem:[%s837] sm:$0xff]
    %v1545 = vsel %vm735, %v1543, 0
    %1547 = vmatprep.subr.mxu0 0.0
    %1548 = vmatpush1.msra.mxu0 %v1451
    %1549 = vmatprep.subr.mxu0 0.0
    %1550 = vmatpush1.msra.mxu0 %v1452
    %1551 = vmatprep.subr.mxu0 0.0
    %1552 = vmatpush1.msra.mxu0 %v1453
    %1553 = vmatprep.subr.mxu0 0.0
    %1554 = vmatpush1.msra.mxu0 %v1454
    %1555 = vmatprep.subr.mxu0 0.0
    %1556 = vmatpush1.msra.mxu0 0.0
    %1557 = vmatprep.subr.mxu0 0.0
    %1558 = vmatpush1.msra.mxu0 0.0
    %1559 = vmatprep.subr.mxu0 0.0
    %1560 = vmatpush1.msra.mxu0 0.0
    %1561 = vmatprep.subr.mxu0 0.0
    %1562 = vmatpush1.msra.mxu0 0.0
    %1563 = vmatprep.subr.mxu0 0.0
    %1564 = vmatpush1.msra.mxu0 0.0
    %1565 = vmatprep.subr.mxu0 0.0
    %1566 = vmatpush1.msra.mxu0 0.0
    %1567 = vmatprep.subr.mxu0 0.0
    %1568 = vmatpush1.msra.mxu0 0.0
    %1569 = vmatprep.subr.mxu0 0.0
    %1570 = vmatpush1.msra.mxu0 0.0
    %1571 = vmatprep.subr.mxu0 0.0
    %1572 = vmatpush1.msra.mxu0 0.0
    %1573 = vmatprep.subr.mxu0 0.0
    %1574 = vmatpush1.msra.mxu0 0.0
    %1575 = vmatprep.subr.mxu0 0.0
    %1576 = vmatpush1.msra.mxu0 0.0
    %1577 = vmatprep.subr.mxu0 0.0
    %1578 = vmatpush1.msra.mxu0 0.0
    %1579 = vmatprep.subr.mxu0 0.0
    %1580 = vmatpush1.msra.mxu0 0.0
    %1581 = vmatprep.subr.mxu0 0.0
    %1582 = vmatpush1.msra.mxu0 0.0
    %1583 = vmatprep.subr.mxu0 0.0
    %1584 = vmatpush1.msra.mxu0 0.0
    %1585 = vmatprep.subr.mxu0 0.0
    %1586 = vmatpush1.msra.mxu0 0.0
    %1587 = vmatprep.subr.mxu0 0.0
    %1588 = vmatpush1.msra.mxu0 0.0
    %1589 = vmatprep.subr.mxu0 0.0
    %1590 = vmatpush1.msra.mxu0 0.0
    %1591 = vmatprep.subr.mxu0 0.0
    %1592 = vmatpush1.msra.mxu0 0.0
    %1593 = vmatprep.subr.mxu0 0.0
    %1594 = vmatpush1.msra.mxu0 0.0
    %1595 = vmatprep.subr.mxu0 0.0
    %1596 = vmatpush1.msra.mxu0 0.0
    %1597 = vmatprep.subr.mxu0 0.0
    %1598 = vmatpush1.msra.mxu0 0.0
    %1599 = vmatprep.subr.mxu0 0.0
    %1600 = vmatpush1.msra.mxu0 0.0
    %1601 = vmatprep.subr.mxu0 0.0
    %1602 = vmatpush1.msra.mxu0 0.0
    %1603 = vmatprep.subr.mxu0 0.0
    %1604 = vmatpush1.msra.mxu0 0.0
    %1605 = vmatprep.subr.mxu0 0.0
    %1606 = vmatpush1.msra.mxu0 0.0
    %1607 = vmatprep.subr.mxu0 0.0
    %1608 = vmatpush1.msra.mxu0 0.0
    %1609 = vmatprep.subr.mxu0 0.0
    %1610 = vmatpush1.msra.mxu0 0.0
    %1611 = vmatprep.mubr.f32.mxu0 0.0
    %1612 = vmatmul.mubr.f32.gmra.mrb[0].mxu0 %v1545
    %v1613 = vpop.f32.mrb[0].mxu0
    %v1614 = vadd.f32 %v1466, %v1613
    %v1615 = vpop.f32.mrb[0].mxu0
    %1616 = vdwg.mxu0
    %1617 = vst [vmem:[%s244] sm:$0xff] %v1614
    %v1618 = vld [vmem:[%s939] sm:$0xff]
    %v1620 = vsel %vm735, %v1618, 0
    %1622 = vmatprep.subr.mxu0 0.0
    %1623 = vmatpush1.msra.mxu0 %v1451
    %1624 = vmatprep.subr.mxu0 0.0
    %1625 = vmatpush1.msra.mxu0 %v1452
    %1626 = vmatprep.subr.mxu0 0.0
    %1627 = vmatpush1.msra.mxu0 %v1453
    %1628 = vmatprep.subr.mxu0 0.0
    %1629 = vmatpush1.msra.mxu0 %v1454
    %1630 = vmatprep.subr.mxu0 0.0
    %1631 = vmatpush1.msra.mxu0 0.0
    %1632 = vmatprep.subr.mxu0 0.0
    %1633 = vmatpush1.msra.mxu0 0.0
    %1634 = vmatprep.subr.mxu0 0.0
    %1635 = vmatpush1.msra.mxu0 0.0
    %1636 = vmatprep.subr.mxu0 0.0
    %1637 = vmatpush1.msra.mxu0 0.0
    %1638 = vmatprep.subr.mxu0 0.0
    %1639 = vmatpush1.msra.mxu0 0.0
    %1640 = vmatprep.subr.mxu0 0.0
    %1641 = vmatpush1.msra.mxu0 0.0
    %1642 = vmatprep.subr.mxu0 0.0
    %1643 = vmatpush1.msra.mxu0 0.0
    %1644 = vmatprep.subr.mxu0 0.0
    %1645 = vmatpush1.msra.mxu0 0.0
    %1646 = vmatprep.subr.mxu0 0.0
    %1647 = vmatpush1.msra.mxu0 0.0
    %1648 = vmatprep.subr.mxu0 0.0
    %1649 = vmatpush1.msra.mxu0 0.0
    %1650 = vmatprep.subr.mxu0 0.0
    %1651 = vmatpush1.msra.mxu0 0.0
    %1652 = vmatprep.subr.mxu0 0.0
    %1653 = vmatpush1.msra.mxu0 0.0
    %1654 = vmatprep.subr.mxu0 0.0
    %1655 = vmatpush1.msra.mxu0 0.0
    %1656 = vmatprep.subr.mxu0 0.0
    %1657 = vmatpush1.msra.mxu0 0.0
    %1658 = vmatprep.subr.mxu0 0.0
    %1659 = vmatpush1.msra.mxu0 0.0
    %1660 = vmatprep.subr.mxu0 0.0
    %1661 = vmatpush1.msra.mxu0 0.0
    %1662 = vmatprep.subr.mxu0 0.0
    %1663 = vmatpush1.msra.mxu0 0.0
    %1664 = vmatprep.subr.mxu0 0.0
    %1665 = vmatpush1.msra.mxu0 0.0
    %1666 = vmatprep.subr.mxu0 0.0
    %1667 = vmatpush1.msra.mxu0 0.0
    %1668 = vmatprep.subr.mxu0 0.0
    %1669 = vmatpush1.msra.mxu0 0.0
    %1670 = vmatprep.subr.mxu0 0.0
    %1671 = vmatpush1.msra.mxu0 0.0
    %1672 = vmatprep.subr.mxu0 0.0
    %1673 = vmatpush1.msra.mxu0 0.0
    %1674 = vmatprep.subr.mxu0 0.0
    %1675 = vmatpush1.msra.mxu0 0.0
    %1676 = vmatprep.subr.mxu0 0.0
    %1677 = vmatpush1.msra.mxu0 0.0
    %1678 = vmatprep.subr.mxu0 0.0
    %1679 = vmatpush1.msra.mxu0 0.0
    %1680 = vmatprep.subr.mxu0 0.0
    %1681 = vmatpush1.msra.mxu0 0.0
    %1682 = vmatprep.subr.mxu0 0.0
    %1683 = vmatpush1.msra.mxu0 0.0
    %1684 = vmatprep.subr.mxu0 0.0
    %1685 = vmatpush1.msra.mxu0 0.0
    %1686 = vmatprep.mubr.f32.mxu0 0.0
    %1687 = vmatmul.mubr.f32.gmra.mrb[0].mxu0 %v1620
    %v1688 = vpop.f32.mrb[0].mxu0
    %v1689 = vadd.f32 %v1466, %v1688
    %v1690 = vpop.f32.mrb[0].mxu0
    %1691 = vdwg.mxu0
    %1692 = vst [vmem:[%s321] sm:$0xff] %v1689
    %v1693 = vld [vmem:[%s1041] sm:$0xff]
    %v1695 = vsel %vm735, %v1693, 0
    %1697 = vmatprep.subr.mxu0 0.0
    %1698 = vmatpush1.msra.mxu0 %v1451
    %1699 = vmatprep.subr.mxu0 0.0
    %1700 = vmatpush1.msra.mxu0 %v1452
    %1701 = vmatprep.subr.mxu0 0.0
    %1702 = vmatpush1.msra.mxu0 %v1453
    %1703 = vmatprep.subr.mxu0 0.0
    %1704 = vmatpush1.msra.mxu0 %v1454
    %1705 = vmatprep.subr.mxu0 0.0
    %1706 = vmatpush1.msra.mxu0 0.0
    %1707 = vmatprep.subr.mxu0 0.0
    %1708 = vmatpush1.msra.mxu0 0.0
    %1709 = vmatprep.subr.mxu0 0.0
    %1710 = vmatpush1.msra.mxu0 0.0
    %1711 = vmatprep.subr.mxu0 0.0
    %1712 = vmatpush1.msra.mxu0 0.0
    %1713 = vmatprep.subr.mxu0 0.0
    %1714 = vmatpush1.msra.mxu0 0.0
    %1715 = vmatprep.subr.mxu0 0.0
    %1716 = vmatpush1.msra.mxu0 0.0
    %1717 = vmatprep.subr.mxu0 0.0
    %1718 = vmatpush1.msra.mxu0 0.0
    %1719 = vmatprep.subr.mxu0 0.0
    %1720 = vmatpush1.msra.mxu0 0.0
    %1721 = vmatprep.subr.mxu0 0.0
    %1722 = vmatpush1.msra.mxu0 0.0
    %1723 = vmatprep.subr.mxu0 0.0
    %1724 = vmatpush1.msra.mxu0 0.0
    %1725 = vmatprep.subr.mxu0 0.0
    %1726 = vmatpush1.msra.mxu0 0.0
    %1727 = vmatprep.subr.mxu0 0.0
    %1728 = vmatpush1.msra.mxu0 0.0
    %1729 = vmatprep.subr.mxu0 0.0
    %1730 = vmatpush1.msra.mxu0 0.0
    %1731 = vmatprep.subr.mxu0 0.0
    %1732 = vmatpush1.msra.mxu0 0.0
    %1733 = vmatprep.subr.mxu0 0.0
    %1734 = vmatpush1.msra.mxu0 0.0
    %1735 = vmatprep.subr.mxu0 0.0
    %1736 = vmatpush1.msra.mxu0 0.0
    %1737 = vmatprep.subr.mxu0 0.0
    %1738 = vmatpush1.msra.mxu0 0.0
    %1739 = vmatprep.subr.mxu0 0.0
    %1740 = vmatpush1.msra.mxu0 0.0
    %1741 = vmatprep.subr.mxu0 0.0
    %1742 = vmatpush1.msra.mxu0 0.0
    %1743 = vmatprep.subr.mxu0 0.0
    %1744 = vmatpush1.msra.mxu0 0.0
    %1745 = vmatprep.subr.mxu0 0.0
    %1746 = vmatpush1.msra.mxu0 0.0
    %1747 = vmatprep.subr.mxu0 0.0
    %1748 = vmatpush1.msra.mxu0 0.0
    %1749 = vmatprep.subr.mxu0 0.0
    %1750 = vmatpush1.msra.mxu0 0.0
    %1751 = vmatprep.subr.mxu0 0.0
    %1752 = vmatpush1.msra.mxu0 0.0
    %1753 = vmatprep.subr.mxu0 0.0
    %1754 = vmatpush1.msra.mxu0 0.0
    %1755 = vmatprep.subr.mxu0 0.0
    %1756 = vmatpush1.msra.mxu0 0.0
    %1757 = vmatprep.subr.mxu0 0.0
    %1758 = vmatpush1.msra.mxu0 0.0
    %1759 = vmatprep.subr.mxu0 0.0
    %1760 = vmatpush1.msra.mxu0 0.0
    %1761 = vmatprep.mubr.f32.mxu0 0.0
    %1762 = vmatmul.mubr.f32.gmra.mrb[0].mxu0 %v1695
    %v1763 = vpop.f32.mrb[0].mxu0
    %v1764 = vadd.f32 %v1466, %v1763
    %v1765 = vpop.f32.mrb[0].mxu0
    %1766 = vdwg.mxu0
    %1767 = vst [vmem:[%s398] sm:$0xff] %v1764
    %v1768 = vld [vmem:[%s1143] sm:$0xff]
    %v1770 = vsel %vm735, %v1768, 0
    %1772 = vmatprep.subr.mxu0 0.0
    %1773 = vmatpush1.msra.mxu0 %v1451
    %1774 = vmatprep.subr.mxu0 0.0
    %1775 = vmatpush1.msra.mxu0 %v1452
    %1776 = vmatprep.subr.mxu0 0.0
    %1777 = vmatpush1.msra.mxu0 %v1453
    %1778 = vmatprep.subr.mxu0 0.0
    %1779 = vmatpush1.msra.mxu0 %v1454
    %1780 = vmatprep.subr.mxu0 0.0
    %1781 = vmatpush1.msra.mxu0 0.0
    %1782 = vmatprep.subr.mxu0 0.0
    %1783 = vmatpush1.msra.mxu0 0.0
    %1784 = vmatprep.subr.mxu0 0.0
    %1785 = vmatpush1.msra.mxu0 0.0
    %1786 = vmatprep.subr.mxu0 0.0
    %1787 = vmatpush1.msra.mxu0 0.0
    %1788 = vmatprep.subr.mxu0 0.0
    %1789 = vmatpush1.msra.mxu0 0.0
    %1790 = vmatprep.subr.mxu0 0.0
    %1791 = vmatpush1.msra.mxu0 0.0
    %1792 = vmatprep.subr.mxu0 0.0
    %1793 = vmatpush1.msra.mxu0 0.0
    %1794 = vmatprep.subr.mxu0 0.0
    %1795 = vmatpush1.msra.mxu0 0.0
    %1796 = vmatprep.subr.mxu0 0.0
    %1797 = vmatpush1.msra.mxu0 0.0
    %1798 = vmatprep.subr.mxu0 0.0
    %1799 = vmatpush1.msra.mxu0 0.0
    %1800 = vmatprep.subr.mxu0 0.0
    %1801 = vmatpush1.msra.mxu0 0.0
    %1802 = vmatprep.subr.mxu0 0.0
    %1803 = vmatpush1.msra.mxu0 0.0
    %1804 = vmatprep.subr.mxu0 0.0
    %1805 = vmatpush1.msra.mxu0 0.0
    %1806 = vmatprep.subr.mxu0 0.0
    %1807 = vmatpush1.msra.mxu0 0.0
    %1808 = vmatprep.subr.mxu0 0.0
    %1809 = vmatpush1.msra.mxu0 0.0
    %1810 = vmatprep.subr.mxu0 0.0
    %1811 = vmatpush1.msra.mxu0 0.0
    %1812 = vmatprep.subr.mxu0 0.0
    %1813 = vmatpush1.msra.mxu0 0.0
    %1814 = vmatprep.subr.mxu0 0.0
    %1815 = vmatpush1.msra.mxu0 0.0
    %1816 = vmatprep.subr.mxu0 0.0
    %1817 = vmatpush1.msra.mxu0 0.0
    %1818 = vmatprep.subr.mxu0 0.0
    %1819 = vmatpush1.msra.mxu0 0.0
    %1820 = vmatprep.subr.mxu0 0.0
    %1821 = vmatpush1.msra.mxu0 0.0
    %1822 = vmatprep.subr.mxu0 0.0
    %1823 = vmatpush1.msra.mxu0 0.0
    %1824 = vmatprep.subr.mxu0 0.0
    %1825 = vmatpush1.msra.mxu0 0.0
    %1826 = vmatprep.subr.mxu0 0.0
    %1827 = vmatpush1.msra.mxu0 0.0
    %1828 = vmatprep.subr.mxu0 0.0
    %1829 = vmatpush1.msra.mxu0 0.0
    %1830 = vmatprep.subr.mxu0 0.0
    %1831 = vmatpush1.msra.mxu0 0.0
    %1832 = vmatprep.subr.mxu0 0.0
    %1833 = vmatpush1.msra.mxu0 0.0
    %1834 = vmatprep.subr.mxu0 0.0
    %1835 = vmatpush1.msra.mxu0 0.0
    %1836 = vmatprep.mubr.f32.mxu0 0.0
    %1837 = vmatmul.mubr.f32.gmra.mrb[0].mxu0 %v1770
    %v1838 = vpop.f32.mrb[0].mxu0
    %v1839 = vadd.f32 %v1466, %v1838
    %v1840 = vpop.f32.mrb[0].mxu0
    %1841 = vdwg.mxu0
    %1842 = vst [vmem:[%s475] sm:$0xff] %v1839
    %v1843 = vld [vmem:[%s1245] sm:$0xff]
    %v1845 = vsel %vm735, %v1843, 0
    %1847 = vmatprep.subr.mxu0 0.0
    %1848 = vmatpush1.msra.mxu0 %v1451
    %1849 = vmatprep.subr.mxu0 0.0
    %1850 = vmatpush1.msra.mxu0 %v1452
    %1851 = vmatprep.subr.mxu0 0.0
    %1852 = vmatpush1.msra.mxu0 %v1453
    %1853 = vmatprep.subr.mxu0 0.0
    %1854 = vmatpush1.msra.mxu0 %v1454
    %1855 = vmatprep.subr.mxu0 0.0
    %1856 = vmatpush1.msra.mxu0 0.0
    %1857 = vmatprep.subr.mxu0 0.0
    %1858 = vmatpush1.msra.mxu0 0.0
    %1859 = vmatprep.subr.mxu0 0.0
    %1860 = vmatpush1.msra.mxu0 0.0
    %1861 = vmatprep.subr.mxu0 0.0
    %1862 = vmatpush1.msra.mxu0 0.0
    %1863 = vmatprep.subr.mxu0 0.0
    %1864 = vmatpush1.msra.mxu0 0.0
    %1865 = vmatprep.subr.mxu0 0.0
    %1866 = vmatpush1.msra.mxu0 0.0
    %1867 = vmatprep.subr.mxu0 0.0
    %1868 = vmatpush1.msra.mxu0 0.0
    %1869 = vmatprep.subr.mxu0 0.0
    %1870 = vmatpush1.msra.mxu0 0.0
    %1871 = vmatprep.subr.mxu0 0.0
    %1872 = vmatpush1.msra.mxu0 0.0
    %1873 = vmatprep.subr.mxu0 0.0
    %1874 = vmatpush1.msra.mxu0 0.0
    %1875 = vmatprep.subr.mxu0 0.0
    %1876 = vmatpush1.msra.mxu0 0.0
    %1877 = vmatprep.subr.mxu0 0.0
    %1878 = vmatpush1.msra.mxu0 0.0
    %1879 = vmatprep.subr.mxu0 0.0
    %1880 = vmatpush1.msra.mxu0 0.0
    %1881 = vmatprep.subr.mxu0 0.0
    %1882 = vmatpush1.msra.mxu0 0.0
    %1883 = vmatprep.subr.mxu0 0.0
    %1884 = vmatpush1.msra.mxu0 0.0
    %1885 = vmatprep.subr.mxu0 0.0
    %1886 = vmatpush1.msra.mxu0 0.0
    %1887 = vmatprep.subr.mxu0 0.0
    %1888 = vmatpush1.msra.mxu0 0.0
    %1889 = vmatprep.subr.mxu0 0.0
    %1890 = vmatpush1.msra.mxu0 0.0
    %1891 = vmatprep.subr.mxu0 0.0
    %1892 = vmatpush1.msra.mxu0 0.0
    %1893 = vmatprep.subr.mxu0 0.0
    %1894 = vmatpush1.msra.mxu0 0.0
    %1895 = vmatprep.subr.mxu0 0.0
    %1896 = vmatpush1.msra.mxu0 0.0
    %1897 = vmatprep.subr.mxu0 0.0
    %1898 = vmatpush1.msra.mxu0 0.0
    %1899 = vmatprep.subr.mxu0 0.0
    %1900 = vmatpush1.msra.mxu0 0.0
    %1901 = vmatprep.subr.mxu0 0.0
    %1902 = vmatpush1.msra.mxu0 0.0
    %1903 = vmatprep.subr.mxu0 0.0
    %1904 = vmatpush1.msra.mxu0 0.0
    %1905 = vmatprep.subr.mxu0 0.0
    %1906 = vmatpush1.msra.mxu0 0.0
    %1907 = vmatprep.subr.mxu0 0.0
    %1908 = vmatpush1.msra.mxu0 0.0
    %1909 = vmatprep.subr.mxu0 0.0
    %1910 = vmatpush1.msra.mxu0 0.0
    %1911 = vmatprep.mubr.f32.mxu0 0.0
    %1912 = vmatmul.mubr.f32.gmra.mrb[0].mxu0 %v1845
    %v1913 = vpop.f32.mrb[0].mxu0
    %v1914 = vadd.f32 %v1466, %v1913
    %v1915 = vpop.f32.mrb[0].mxu0
    %1916 = vdwg.mxu0
    %1917 = vst [vmem:[%s552] sm:$0xff] %v1914
    %v1918 = vld [vmem:[%s1347] sm:$0xff]
    %v1920 = vsel %vm735, %v1918, 0
    %1922 = vmatprep.subr.mxu0 0.0
    %1923 = vmatpush1.msra.mxu0 %v1451
    %1924 = vmatprep.subr.mxu0 0.0
    %1925 = vmatpush1.msra.mxu0 %v1452
    %1926 = vmatprep.subr.mxu0 0.0
    %1927 = vmatpush1.msra.mxu0 %v1453
    %1928 = vmatprep.subr.mxu0 0.0
    %1929 = vmatpush1.msra.mxu0 %v1454
    %1930 = vmatprep.subr.mxu0 0.0
    %1931 = vmatpush1.msra.mxu0 0.0
    %1932 = vmatprep.subr.mxu0 0.0
    %1933 = vmatpush1.msra.mxu0 0.0
    %1934 = vmatprep.subr.mxu0 0.0
    %1935 = vmatpush1.msra.mxu0 0.0
    %1936 = vmatprep.subr.mxu0 0.0
    %1937 = vmatpush1.msra.mxu0 0.0
    %1938 = vmatprep.subr.mxu0 0.0
    %1939 = vmatpush1.msra.mxu0 0.0
    %1940 = vmatprep.subr.mxu0 0.0
    %1941 = vmatpush1.msra.mxu0 0.0
    %1942 = vmatprep.subr.mxu0 0.0
    %1943 = vmatpush1.msra.mxu0 0.0
    %1944 = vmatprep.subr.mxu0 0.0
    %1945 = vmatpush1.msra.mxu0 0.0
    %1946 = vmatprep.subr.mxu0 0.0
    %1947 = vmatpush1.msra.mxu0 0.0
    %1948 = vmatprep.subr.mxu0 0.0
    %1949 = vmatpush1.msra.mxu0 0.0
    %1950 = vmatprep.subr.mxu0 0.0
    %1951 = vmatpush1.msra.mxu0 0.0
    %1952 = vmatprep.subr.mxu0 0.0
    %1953 = vmatpush1.msra.mxu0 0.0
    %1954 = vmatprep.subr.mxu0 0.0
    %1955 = vmatpush1.msra.mxu0 0.0
    %1956 = vmatprep.subr.mxu0 0.0
    %1957 = vmatpush1.msra.mxu0 0.0
    %1958 = vmatprep.subr.mxu0 0.0
    %1959 = vmatpush1.msra.mxu0 0.0
    %1960 = vmatprep.subr.mxu0 0.0
    %1961 = vmatpush1.msra.mxu0 0.0
    %1962 = vmatprep.subr.mxu0 0.0
    %1963 = vmatpush1.msra.mxu0 0.0
    %1964 = vmatprep.subr.mxu0 0.0
    %1965 = vmatpush1.msra.mxu0 0.0
    %1966 = vmatprep.subr.mxu0 0.0
    %1967 = vmatpush1.msra.mxu0 0.0
    %1968 = vmatprep.subr.mxu0 0.0
    %1969 = vmatpush1.msra.mxu0 0.0
    %1970 = vmatprep.subr.mxu0 0.0
    %1971 = vmatpush1.msra.mxu0 0.0
    %1972 = vmatprep.subr.mxu0 0.0
    %1973 = vmatpush1.msra.mxu0 0.0
    %1974 = vmatprep.subr.mxu0 0.0
    %1975 = vmatpush1.msra.mxu0 0.0
    %1976 = vmatprep.subr.mxu0 0.0
    %1977 = vmatpush1.msra.mxu0 0.0
    %1978 = vmatprep.subr.mxu0 0.0
    %1979 = vmatpush1.msra.mxu0 0.0
    %1980 = vmatprep.subr.mxu0 0.0
    %1981 = vmatpush1.msra.mxu0 0.0
    %1982 = vmatprep.subr.mxu0 0.0
    %1983 = vmatpush1.msra.mxu0 0.0
    %1984 = vmatprep.subr.mxu0 0.0
    %1985 = vmatpush1.msra.mxu0 0.0
    %1986 = vmatprep.mubr.f32.mxu0 0.0
    %1987 = vmatmul.mubr.f32.gmra.mrb[0].mxu0 %v1920
    %v1988 = vpop.f32.mrb[0].mxu0
    %v1989 = vadd.f32 %v1466, %v1988
    %v1990 = vpop.f32.mrb[0].mxu0
    %1991 = vdwg.mxu0
    %1992 = vst [vmem:[%s629] sm:$0xff] %v1989
    %v1993 = vld [vmem:[%s1449] sm:$0xff]
    %v1995 = vsel %vm735, %v1993, 0
    %1997 = vmatprep.subr.mxu0 0.0
    %1998 = vmatpush1.msra.mxu0 %v1451
    %1999 = vmatprep.subr.mxu0 0.0
    %2000 = vmatpush1.msra.mxu0 %v1452
    %2001 = vmatprep.subr.mxu0 0.0
    %2002 = vmatpush1.msra.mxu0 %v1453
    %2003 = vmatprep.subr.mxu0 0.0
    %2004 = vmatpush1.msra.mxu0 %v1454
    %2005 = vmatprep.subr.mxu0 0.0
    %2006 = vmatpush1.msra.mxu0 0.0
    %2007 = vmatprep.subr.mxu0 0.0
    %2008 = vmatpush1.msra.mxu0 0.0
    %2009 = vmatprep.subr.mxu0 0.0
    %2010 = vmatpush1.msra.mxu0 0.0
    %2011 = vmatprep.subr.mxu0 0.0
    %2012 = vmatpush1.msra.mxu0 0.0
    %2013 = vmatprep.subr.mxu0 0.0
    %2014 = vmatpush1.msra.mxu0 0.0
    %2015 = vmatprep.subr.mxu0 0.0
    %2016 = vmatpush1.msra.mxu0 0.0
    %2017 = vmatprep.subr.mxu0 0.0
    %2018 = vmatpush1.msra.mxu0 0.0
    %2019 = vmatprep.subr.mxu0 0.0
    %2020 = vmatpush1.msra.mxu0 0.0
    %2021 = vmatprep.subr.mxu0 0.0
    %2022 = vmatpush1.msra.mxu0 0.0
    %2023 = vmatprep.subr.mxu0 0.0
    %2024 = vmatpush1.msra.mxu0 0.0
    %2025 = vmatprep.subr.mxu0 0.0
    %2026 = vmatpush1.msra.mxu0 0.0
    %2027 = vmatprep.subr.mxu0 0.0
    %2028 = vmatpush1.msra.mxu0 0.0
    %2029 = vmatprep.subr.mxu0 0.0
    %2030 = vmatpush1.msra.mxu0 0.0
    %2031 = vmatprep.subr.mxu0 0.0
    %2032 = vmatpush1.msra.mxu0 0.0
    %2033 = vmatprep.subr.mxu0 0.0
    %2034 = vmatpush1.msra.mxu0 0.0
    %2035 = vmatprep.subr.mxu0 0.0
    %2036 = vmatpush1.msra.mxu0 0.0
    %2037 = vmatprep.subr.mxu0 0.0
    %2038 = vmatpush1.msra.mxu0 0.0
    %2039 = vmatprep.subr.mxu0 0.0
    %2040 = vmatpush1.msra.mxu0 0.0
    %2041 = vmatprep.subr.mxu0 0.0
    %2042 = vmatpush1.msra.mxu0 0.0
    %2043 = vmatprep.subr.mxu0 0.0
    %2044 = vmatpush1.msra.mxu0 0.0
    %2045 = vmatprep.subr.mxu0 0.0
    %2046 = vmatpush1.msra.mxu0 0.0
    %2047 = vmatprep.subr.mxu0 0.0
    %2048 = vmatpush1.msra.mxu0 0.0
    %2049 = vmatprep.subr.mxu0 0.0
    %2050 = vmatpush1.msra.mxu0 0.0
    %2051 = vmatprep.subr.mxu0 0.0
    %2052 = vmatpush1.msra.mxu0 0.0
    %2053 = vmatprep.subr.mxu0 0.0
    %2054 = vmatpush1.msra.mxu0 0.0
    %2055 = vmatprep.subr.mxu0 0.0
    %2056 = vmatpush1.msra.mxu0 0.0
    %2057 = vmatprep.subr.mxu0 0.0
    %2058 = vmatpush1.msra.mxu0 0.0
    %2059 = vmatprep.subr.mxu0 0.0
    %2060 = vmatpush1.msra.mxu0 0.0
    %2061 = vmatprep.mubr.f32.mxu0 0.0
    %2062 = vmatmul.mubr.f32.gmra.mrb[0].mxu0 %v1995
    %v2063 = vpop.f32.mrb[0].mxu0
    %v2064 = vadd.f32 %v1466, %v2063
    %v2065 = vpop.f32.mrb[0].mxu0
    %2066 = vdwg.mxu0
    %2067 = vst [vmem:[%s706] sm:$0xff] %v2064
    %v2068 = vld [vmem:[#allocation3] sm:$0xff]
    %v2069 = vmul.f32 %v2068, 0.5
    %v2070 = vtanh.pop %v2069
    %v2071 = vmul.f32 %v2070, 0.5
    %v2072 = vadd.f32 %v2071, 0.5
    %v2073 = vtanh.pop %v2068
    %v2074 = vmul.f32 %v2072, 0.0
    %2076 = vrot.lane.b32.xlu0 %v2073, 32
    %v2077 = vpop.permute.xlu0 %2076
    %v2079 = vmul.f32 %v2072, %v2077
    %2081 = vrot.lane.b32.xlu0 %v2079, 32
    %v2082 = vpop.permute.xlu0 %2081
    %v2084 = vadd.f32 %v2074, %v2082
    %v2085 = vtanh.pop %v2084
    %2087 = vrot.lane.b32.xlu0 %v2085, 32
    %v2088 = vpop.permute.xlu0 %2087
    %v2090 = vmul.f32 %v2072, %v2088
    %2092 = vrot.lane.b32.xlu0 %v2090, 64
    %v2093 = vpop.permute.xlu0 %2092
    %2095 = vst.msk [vmem:[#allocation2] sm:$0xff] %vm735, %v2093
    %v2096 = vld [vmem:[%s244] sm:$0xff]
    %v2097 = vsel %vm735, %v2093, 0
    %2099 = vmatprep.subr.mxu0 0.0
    %2100 = vmatpush1.msra.mxu0 %v1456
    %2101 = vmatprep.subr.mxu0 0.0
    %2102 = vmatpush1.msra.mxu0 %v1457
    %2103 = vmatprep.subr.mxu0 0.0
    %2104 = vmatpush1.msra.mxu0 %v1458
    %2105 = vmatprep.subr.mxu0 0.0
    %2106 = vmatpush1.msra.mxu0 %v1459
    %2107 = vmatprep.subr.mxu0 0.0
    %2108 = vmatpush1.msra.mxu0 0.0
    %2109 = vmatprep.subr.mxu0 0.0
    %2110 = vmatpush1.msra.mxu0 0.0
    %2111 = vmatprep.subr.mxu0 0.0
    %2112 = vmatpush1.msra.mxu0 0.0
    %2113 = vmatprep.subr.mxu0 0.0
    %2114 = vmatpush1.msra.mxu0 0.0
    %2115 = vmatprep.subr.mxu0 0.0
    %2116 = vmatpush1.msra.mxu0 0.0
    %2117 = vmatprep.subr.mxu0 0.0
    %2118 = vmatpush1.msra.mxu0 0.0
    %2119 = vmatprep.subr.mxu0 0.0
    %2120 = vmatpush1.msra.mxu0 0.0
    %2121 = vmatprep.subr.mxu0 0.0
    %2122 = vmatpush1.msra.mxu0 0.0
    %2123 = vmatprep.subr.mxu0 0.0
    %2124 = vmatpush1.msra.mxu0 0.0
    %2125 = vmatprep.subr.mxu0 0.0
    %2126 = vmatpush1.msra.mxu0 0.0
    %2127 = vmatprep.subr.mxu0 0.0
    %2128 = vmatpush1.msra.mxu0 0.0
    %2129 = vmatprep.subr.mxu0 0.0
    %2130 = vmatpush1.msra.mxu0 0.0
    %2131 = vmatprep.subr.mxu0 0.0
    %2132 = vmatpush1.msra.mxu0 0.0
    %2133 = vmatprep.subr.mxu0 0.0
    %2134 = vmatpush1.msra.mxu0 0.0
    %2135 = vmatprep.subr.mxu0 0.0
    %2136 = vmatpush1.msra.mxu0 0.0
    %2137 = vmatprep.subr.mxu0 0.0
    %2138 = vmatpush1.msra.mxu0 0.0
    %2139 = vmatprep.subr.mxu0 0.0
    %2140 = vmatpush1.msra.mxu0 0.0
    %2141 = vmatprep.subr.mxu0 0.0
    %2142 = vmatpush1.msra.mxu0 0.0
    %2143 = vmatprep.subr.mxu0 0.0
    %2144 = vmatpush1.msra.mxu0 0.0
    %2145 = vmatprep.subr.mxu0 0.0
    %2146 = vmatpush1.msra.mxu0 0.0
    %2147 = vmatprep.subr.mxu0 0.0
    %2148 = vmatpush1.msra.mxu0 0.0
    %2149 = vmatprep.subr.mxu0 0.0
    %2150 = vmatpush1.msra.mxu0 0.0
    %2151 = vmatprep.subr.mxu0 0.0
    %2152 = vmatpush1.msra.mxu0 0.0
    %2153 = vmatprep.subr.mxu0 0.0
    %2154 = vmatpush1.msra.mxu0 0.0
    %2155 = vmatprep.subr.mxu0 0.0
    %2156 = vmatpush1.msra.mxu0 0.0
    %2157 = vmatprep.subr.mxu0 0.0
    %2158 = vmatpush1.msra.mxu0 0.0
    %2159 = vmatprep.subr.mxu0 0.0
    %2160 = vmatpush1.msra.mxu0 0.0
    %2161 = vmatprep.subr.mxu0 0.0
    %2162 = vmatpush1.msra.mxu0 0.0
    %2163 = vmatprep.mubr.f32.mxu0 0.0
    %2164 = vmatmul.mubr.f32.gmra.mrb[0].mxu0 %v2097
    %v2165 = vpop.f32.mrb[0].mxu0
    %v2166 = vadd.f32 0.0, %v2165
    %v2167 = vpop.f32.mrb[0].mxu0
    %2168 = vdwg.mxu0
    %v2169 = vadd.f32 %v2096, %v2166
    %v2170 = vmul.f32 %v2169, 0.5
    %v2171 = vtanh.pop %v2170
    %v2172 = vmul.f32 %v2171, 0.5
    %v2173 = vadd.f32 %v2172, 0.5
    %v2174 = vtanh.pop %v2169
    %v2175 = vmul.f32 %v2173, %v2084
    %2177 = vrot.lane.b32.xlu0 %v2174, 32
    %v2178 = vpop.permute.xlu0 %2177
    %v2180 = vmul.f32 %v2173, %v2178
    %2182 = vrot.lane.b32.xlu0 %v2180, 32
    %v2183 = vpop.permute.xlu0 %2182
    %v2185 = vadd.f32 %v2175, %v2183
    %v2186 = vtanh.pop %v2185
    %2188 = vrot.lane.b32.xlu0 %v2186, 32
    %v2189 = vpop.permute.xlu0 %2188
    %v2191 = vmul.f32 %v2173, %v2189
    %2193 = vrot.lane.b32.xlu0 %v2191, 64
    %v2194 = vpop.permute.xlu0 %2193
    %2196 = vst.msk [vmem:[%s837] sm:$0xff] %vm735, %v2194
    %v2197 = vld [vmem:[%s321] sm:$0xff]
    %v2198 = vsel %vm735, %v2194, 0
    %2200 = vmatprep.subr.mxu0 0.0
    %2201 = vmatpush1.msra.mxu0 %v1456
    %2202 = vmatprep.subr.mxu0 0.0
    %2203 = vmatpush1.msra.mxu0 %v1457
    %2204 = vmatprep.subr.mxu0 0.0
    %2205 = vmatpush1.msra.mxu0 %v1458
    %2206 = vmatprep.subr.mxu0 0.0
    %2207 = vmatpush1.msra.mxu0 %v1459
    %2208 = vmatprep.subr.mxu0 0.0
    %2209 = vmatpush1.msra.mxu0 0.0
    %2210 = vmatprep.subr.mxu0 0.0
    %2211 = vmatpush1.msra.mxu0 0.0
    %2212 = vmatprep.subr.mxu0 0.0
    %2213 = vmatpush1.msra.mxu0 0.0
    %2214 = vmatprep.subr.mxu0 0.0
    %2215 = vmatpush1.msra.mxu0 0.0
    %2216 = vmatprep.subr.mxu0 0.0
    %2217 = vmatpush1.msra.mxu0 0.0
    %2218 = vmatprep.subr.mxu0 0.0
    %2219 = vmatpush1.msra.mxu0 0.0
    %2220 = vmatprep.subr.mxu0 0.0
    %2221 = vmatpush1.msra.mxu0 0.0
    %2222 = vmatprep.subr.mxu0 0.0
    %2223 = vmatpush1.msra.mxu0 0.0
    %2224 = vmatprep.subr.mxu0 0.0
    %2225 = vmatpush1.msra.mxu0 0.0
    %2226 = vmatprep.subr.mxu0 0.0
    %2227 = vmatpush1.msra.mxu0 0.0
    %2228 = vmatprep.subr.mxu0 0.0
    %2229 = vmatpush1.msra.mxu0 0.0
    %2230 = vmatprep.subr.mxu0 0.0
    %2231 = vmatpush1.msra.mxu0 0.0
    %2232 = vmatprep.subr.mxu0 0.0
    %2233 = vmatpush1.msra.mxu0 0.0
    %2234 = vmatprep.subr.mxu0 0.0
    %2235 = vmatpush1.msra.mxu0 0.0
    %2236 = vmatprep.subr.mxu0 0.0
    %2237 = vmatpush1.msra.mxu0 0.0
    %2238 = vmatprep.subr.mxu0 0.0
    %2239 = vmatpush1.msra.mxu0 0.0
    %2240 = vmatprep.subr.mxu0 0.0
    %2241 = vmatpush1.msra.mxu0 0.0
    %2242 = vmatprep.subr.mxu0 0.0
    %2243 = vmatpush1.msra.mxu0 0.0
    %2244 = vmatprep.subr.mxu0 0.0
    %2245 = vmatpush1.msra.mxu0 0.0
    %2246 = vmatprep.subr.mxu0 0.0
    %2247 = vmatpush1.msra.mxu0 0.0
    %2248 = vmatprep.subr.mxu0 0.0
    %2249 = vmatpush1.msra.mxu0 0.0
    %2250 = vmatprep.subr.mxu0 0.0
    %2251 = vmatpush1.msra.mxu0 0.0
    %2252 = vmatprep.subr.mxu0 0.0
    %2253 = vmatpush1.msra.mxu0 0.0
    %2254 = vmatprep.subr.mxu0 0.0
    %2255 = vmatpush1.msra.mxu0 0.0
    %2256 = vmatprep.subr.mxu0 0.0
    %2257 = vmatpush1.msra.mxu0 0.0
    %2258 = vmatprep.subr.mxu0 0.0
    %2259 = vmatpush1.msra.mxu0 0.0
    %2260 = vmatprep.subr.mxu0 0.0
    %2261 = vmatpush1.msra.mxu0 0.0
    %2262 = vmatprep.subr.mxu0 0.0
    %2263 = vmatpush1.msra.mxu0 0.0
    %2264 = vmatprep.mubr.f32.mxu0 0.0
    %2265 = vmatmul.mubr.f32.gmra.mrb[0].mxu0 %v2198
    %v2266 = vpop.f32.mrb[0].mxu0
    %v2267 = vadd.f32 0.0, %v2266
    %v2268 = vpop.f32.mrb[0].mxu0
    %2269 = vdwg.mxu0
    %v2270 = vadd.f32 %v2197, %v2267
    %v2271 = vmul.f32 %v2270, 0.5
    %v2272 = vtanh.pop %v2271
    %v2273 = vmul.f32 %v2272, 0.5
    %v2274 = vadd.f32 %v2273, 0.5
    %v2275 = vtanh.pop %v2270
    %v2276 = vmul.f32 %v2274, %v2185
    %2278 = vrot.lane.b32.xlu0 %v2275, 32
    %v2279 = vpop.permute.xlu0 %2278
    %v2281 = vmul.f32 %v2274, %v2279
    %2283 = vrot.lane.b32.xlu0 %v2281, 32
    %v2284 = vpop.permute.xlu0 %2283
    %v2286 = vadd.f32 %v2276, %v2284
    %v2287 = vtanh.pop %v2286
    %2289 = vrot.lane.b32.xlu0 %v2287, 32
    %v2290 = vpop.permute.xlu0 %2289
    %v2292 = vmul.f32 %v2274, %v2290
    %2294 = vrot.lane.b32.xlu0 %v2292, 64
    %v2295 = vpop.permute.xlu0 %2294
    %2297 = vst.msk [vmem:[%s939] sm:$0xff] %vm735, %v2295
    %v2298 = vld [vmem:[%s398] sm:$0xff]
    %v2299 = vsel %vm735, %v2295, 0
    %2301 = vmatprep.subr.mxu0 0.0
    %2302 = vmatpush1.msra.mxu0 %v1456
    %2303 = vmatprep.subr.mxu0 0.0
    %2304 = vmatpush1.msra.mxu0 %v1457
    %2305 = vmatprep.subr.mxu0 0.0
    %2306 = vmatpush1.msra.mxu0 %v1458
    %2307 = vmatprep.subr.mxu0 0.0
    %2308 = vmatpush1.msra.mxu0 %v1459
    %2309 = vmatprep.subr.mxu0 0.0
    %2310 = vmatpush1.msra.mxu0 0.0
    %2311 = vmatprep.subr.mxu0 0.0
    %2312 = vmatpush1.msra.mxu0 0.0
    %2313 = vmatprep.subr.mxu0 0.0
    %2314 = vmatpush1.msra.mxu0 0.0
    %2315 = vmatprep.subr.mxu0 0.0
    %2316 = vmatpush1.msra.mxu0 0.0
    %2317 = vmatprep.subr.mxu0 0.0
    %2318 = vmatpush1.msra.mxu0 0.0
    %2319 = vmatprep.subr.mxu0 0.0
    %2320 = vmatpush1.msra.mxu0 0.0
    %2321 = vmatprep.subr.mxu0 0.0
    %2322 = vmatpush1.msra.mxu0 0.0
    %2323 = vmatprep.subr.mxu0 0.0
    %2324 = vmatpush1.msra.mxu0 0.0
    %2325 = vmatprep.subr.mxu0 0.0
    %2326 = vmatpush1.msra.mxu0 0.0
    %2327 = vmatprep.subr.mxu0 0.0
    %2328 = vmatpush1.msra.mxu0 0.0
    %2329 = vmatprep.subr.mxu0 0.0
    %2330 = vmatpush1.msra.mxu0 0.0
    %2331 = vmatprep.subr.mxu0 0.0
    %2332 = vmatpush1.msra.mxu0 0.0
    %2333 = vmatprep.subr.mxu0 0.0
    %2334 = vmatpush1.msra.mxu0 0.0
    %2335 = vmatprep.subr.mxu0 0.0
    %2336 = vmatpush1.msra.mxu0 0.0
    %2337 = vmatprep.subr.mxu0 0.0
    %2338 = vmatpush1.msra.mxu0 0.0
    %2339 = vmatprep.subr.mxu0 0.0
    %2340 = vmatpush1.msra.mxu0 0.0
    %2341 = vmatprep.subr.mxu0 0.0
    %2342 = vmatpush1.msra.mxu0 0.0
    %2343 = vmatprep.subr.mxu0 0.0
    %2344 = vmatpush1.msra.mxu0 0.0
    %2345 = vmatprep.subr.mxu0 0.0
    %2346 = vmatpush1.msra.mxu0 0.0
    %2347 = vmatprep.subr.mxu0 0.0
    %2348 = vmatpush1.msra.mxu0 0.0
    %2349 = vmatprep.subr.mxu0 0.0
    %2350 = vmatpush1.msra.mxu0 0.0
    %2351 = vmatprep.subr.mxu0 0.0
    %2352 = vmatpush1.msra.mxu0 0.0
    %2353 = vmatprep.subr.mxu0 0.0
    %2354 = vmatpush1.msra.mxu0 0.0
    %2355 = vmatprep.subr.mxu0 0.0
    %2356 = vmatpush1.msra.mxu0 0.0
    %2357 = vmatprep.subr.mxu0 0.0
    %2358 = vmatpush1.msra.mxu0 0.0
    %2359 = vmatprep.subr.mxu0 0.0
    %2360 = vmatpush1.msra.mxu0 0.0
    %2361 = vmatprep.subr.mxu0 0.0
    %2362 = vmatpush1.msra.mxu0 0.0
    %2363 = vmatprep.subr.mxu0 0.0
    %2364 = vmatpush1.msra.mxu0 0.0
    %2365 = vmatprep.mubr.f32.mxu0 0.0
    %2366 = vmatmul.mubr.f32.gmra.mrb[0].mxu0 %v2299
    %v2367 = vpop.f32.mrb[0].mxu0
    %v2368 = vadd.f32 0.0, %v2367
    %v2369 = vpop.f32.mrb[0].mxu0
    %2370 = vdwg.mxu0
    %v2371 = vadd.f32 %v2298, %v2368
    %v2372 = vmul.f32 %v2371, 0.5
    %v2373 = vtanh.pop %v2372
    %v2374 = vmul.f32 %v2373, 0.5
    %v2375 = vadd.f32 %v2374, 0.5
    %v2376 = vtanh.pop %v2371
    %v2377 = vmul.f32 %v2375, %v2286
    %2379 = vrot.lane.b32.xlu0 %v2376, 32
    %v2380 = vpop.permute.xlu0 %2379
    %v2382 = vmul.f32 %v2375, %v2380
    %2384 = vrot.lane.b32.xlu0 %v2382, 32
    %v2385 = vpop.permute.xlu0 %2384
    %v2387 = vadd.f32 %v2377, %v2385
    %v2388 = vtanh.pop %v2387
    %2390 = vrot.lane.b32.xlu0 %v2388, 32
    %v2391 = vpop.permute.xlu0 %2390
    %v2393 = vmul.f32 %v2375, %v2391
    %2395 = vrot.lane.b32.xlu0 %v2393, 64
    %v2396 = vpop.permute.xlu0 %2395
    %2398 = vst.msk [vmem:[%s1041] sm:$0xff] %vm735, %v2396
    %v2399 = vld [vmem:[%s475] sm:$0xff]
    %v2400 = vsel %vm735, %v2396, 0
    %2402 = vmatprep.subr.mxu0 0.0
    %2403 = vmatpush1.msra.mxu0 %v1456
    %2404 = vmatprep.subr.mxu0 0.0
    %2405 = vmatpush1.msra.mxu0 %v1457
    %2406 = vmatprep.subr.mxu0 0.0
    %2407 = vmatpush1.msra.mxu0 %v1458
    %2408 = vmatprep.subr.mxu0 0.0
    %2409 = vmatpush1.msra.mxu0 %v1459
    %2410 = vmatprep.subr.mxu0 0.0
    %2411 = vmatpush1.msra.mxu0 0.0
    %2412 = vmatprep.subr.mxu0 0.0
    %2413 = vmatpush1.msra.mxu0 0.0
    %2414 = vmatprep.subr.mxu0 0.0
    %2415 = vmatpush1.msra.mxu0 0.0
    %2416 = vmatprep.subr.mxu0 0.0
    %2417 = vmatpush1.msra.mxu0 0.0
    %2418 = vmatprep.subr.mxu0 0.0
    %2419 = vmatpush1.msra.mxu0 0.0
    %2420 = vmatprep.subr.mxu0 0.0
    %2421 = vmatpush1.msra.mxu0 0.0
    %2422 = vmatprep.subr.mxu0 0.0
    %2423 = vmatpush1.msra.mxu0 0.0
    %2424 = vmatprep.subr.mxu0 0.0
    %2425 = vmatpush1.msra.mxu0 0.0
    %2426 = vmatprep.subr.mxu0 0.0
    %2427 = vmatpush1.msra.mxu0 0.0
    %2428 = vmatprep.subr.mxu0 0.0
    %2429 = vmatpush1.msra.mxu0 0.0
    %2430 = vmatprep.subr.mxu0 0.0
    %2431 = vmatpush1.msra.mxu0 0.0
    %2432 = vmatprep.subr.mxu0 0.0
    %2433 = vmatpush1.msra.mxu0 0.0
    %2434 = vmatprep.subr.mxu0 0.0
    %2435 = vmatpush1.msra.mxu0 0.0
    %2436 = vmatprep.subr.mxu0 0.0
    %2437 = vmatpush1.msra.mxu0 0.0
    %2438 = vmatprep.subr.mxu0 0.0
    %2439 = vmatpush1.msra.mxu0 0.0
    %2440 = vmatprep.subr.mxu0 0.0
    %2441 = vmatpush1.msra.mxu0 0.0
    %2442 = vmatprep.subr.mxu0 0.0
    %2443 = vmatpush1.msra.mxu0 0.0
    %2444 = vmatprep.subr.mxu0 0.0
    %2445 = vmatpush1.msra.mxu0 0.0
    %2446 = vmatprep.subr.mxu0 0.0
    %2447 = vmatpush1.msra.mxu0 0.0
    %2448 = vmatprep.subr.mxu0 0.0
    %2449 = vmatpush1.msra.mxu0 0.0
    %2450 = vmatprep.subr.mxu0 0.0
    %2451 = vmatpush1.msra.mxu0 0.0
    %2452 = vmatprep.subr.mxu0 0.0
    %2453 = vmatpush1.msra.mxu0 0.0
    %2454 = vmatprep.subr.mxu0 0.0
    %2455 = vmatpush1.msra.mxu0 0.0
    %2456 = vmatprep.subr.mxu0 0.0
    %2457 = vmatpush1.msra.mxu0 0.0
    %2458 = vmatprep.subr.mxu0 0.0
    %2459 = vmatpush1.msra.mxu0 0.0
    %2460 = vmatprep.subr.mxu0 0.0
    %2461 = vmatpush1.msra.mxu0 0.0
    %2462 = vmatprep.subr.mxu0 0.0
    %2463 = vmatpush1.msra.mxu0 0.0
    %2464 = vmatprep.subr.mxu0 0.0
    %2465 = vmatpush1.msra.mxu0 0.0
    %2466 = vmatprep.mubr.f32.mxu0 0.0
    %2467 = vmatmul.mubr.f32.gmra.mrb[0].mxu0 %v2400
    %v2468 = vpop.f32.mrb[0].mxu0
    %v2469 = vadd.f32 0.0, %v2468
    %v2470 = vpop.f32.mrb[0].mxu0
    %2471 = vdwg.mxu0
    %v2472 = vadd.f32 %v2399, %v2469
    %v2473 = vmul.f32 %v2472, 0.5
    %v2474 = vtanh.pop %v2473
    %v2475 = vmul.f32 %v2474, 0.5
    %v2476 = vadd.f32 %v2475, 0.5
    %v2477 = vtanh.pop %v2472
    %v2478 = vmul.f32 %v2476, %v2387
    %2480 = vrot.lane.b32.xlu0 %v2477, 32
    %v2481 = vpop.permute.xlu0 %2480
    %v2483 = vmul.f32 %v2476, %v2481
    %2485 = vrot.lane.b32.xlu0 %v2483, 32
    %v2486 = vpop.permute.xlu0 %2485
    %v2488 = vadd.f32 %v2478, %v2486
    %v2489 = vtanh.pop %v2488
    %2491 = vrot.lane.b32.xlu0 %v2489, 32
    %v2492 = vpop.permute.xlu0 %2491
    %v2494 = vmul.f32 %v2476, %v2492
    %2496 = vrot.lane.b32.xlu0 %v2494, 64
    %v2497 = vpop.permute.xlu0 %2496
    %2499 = vst.msk [vmem:[%s1143] sm:$0xff] %vm735, %v2497
    %v2500 = vld [vmem:[%s552] sm:$0xff]
    %v2501 = vsel %vm735, %v2497, 0
    %2503 = vmatprep.subr.mxu0 0.0
    %2504 = vmatpush1.msra.mxu0 %v1456
    %2505 = vmatprep.subr.mxu0 0.0
    %2506 = vmatpush1.msra.mxu0 %v1457
    %2507 = vmatprep.subr.mxu0 0.0
    %2508 = vmatpush1.msra.mxu0 %v1458
    %2509 = vmatprep.subr.mxu0 0.0
    %2510 = vmatpush1.msra.mxu0 %v1459
    %2511 = vmatprep.subr.mxu0 0.0
    %2512 = vmatpush1.msra.mxu0 0.0
    %2513 = vmatprep.subr.mxu0 0.0
    %2514 = vmatpush1.msra.mxu0 0.0
    %2515 = vmatprep.subr.mxu0 0.0
    %2516 = vmatpush1.msra.mxu0 0.0
    %2517 = vmatprep.subr.mxu0 0.0
    %2518 = vmatpush1.msra.mxu0 0.0
    %2519 = vmatprep.subr.mxu0 0.0
    %2520 = vmatpush1.msra.mxu0 0.0
    %2521 = vmatprep.subr.mxu0 0.0
    %2522 = vmatpush1.msra.mxu0 0.0
    %2523 = vmatprep.subr.mxu0 0.0
    %2524 = vmatpush1.msra.mxu0 0.0
    %2525 = vmatprep.subr.mxu0 0.0
    %2526 = vmatpush1.msra.mxu0 0.0
    %2527 = vmatprep.subr.mxu0 0.0
    %2528 = vmatpush1.msra.mxu0 0.0
    %2529 = vmatprep.subr.mxu0 0.0
    %2530 = vmatpush1.msra.mxu0 0.0
    %2531 = vmatprep.subr.mxu0 0.0
    %2532 = vmatpush1.msra.mxu0 0.0
    %2533 = vmatprep.subr.mxu0 0.0
    %2534 = vmatpush1.msra.mxu0 0.0
    %2535 = vmatprep.subr.mxu0 0.0
    %2536 = vmatpush1.msra.mxu0 0.0
    %2537 = vmatprep.subr.mxu0 0.0
    %2538 = vmatpush1.msra.mxu0 0.0
    %2539 = vmatprep.subr.mxu0 0.0
    %2540 = vmatpush1.msra.mxu0 0.0
    %2541 = vmatprep.subr.mxu0 0.0
    %2542 = vmatpush1.msra.mxu0 0.0
    %2543 = vmatprep.subr.mxu0 0.0
    %2544 = vmatpush1.msra.mxu0 0.0
    %2545 = vmatprep.subr.mxu0 0.0
    %2546 = vmatpush1.msra.mxu0 0.0
    %2547 = vmatprep.subr.mxu0 0.0
    %2548 = vmatpush1.msra.mxu0 0.0
    %2549 = vmatprep.subr.mxu0 0.0
    %2550 = vmatpush1.msra.mxu0 0.0
    %2551 = vmatprep.subr.mxu0 0.0
    %2552 = vmatpush1.msra.mxu0 0.0
    %2553 = vmatprep.subr.mxu0 0.0
    %2554 = vmatpush1.msra.mxu0 0.0
    %2555 = vmatprep.subr.mxu0 0.0
    %2556 = vmatpush1.msra.mxu0 0.0
    %2557 = vmatprep.subr.mxu0 0.0
    %2558 = vmatpush1.msra.mxu0 0.0
    %2559 = vmatprep.subr.mxu0 0.0
    %2560 = vmatpush1.msra.mxu0 0.0
    %2561 = vmatprep.subr.mxu0 0.0
    %2562 = vmatpush1.msra.mxu0 0.0
    %2563 = vmatprep.subr.mxu0 0.0
    %2564 = vmatpush1.msra.mxu0 0.0
    %2565 = vmatprep.subr.mxu0 0.0
    %2566 = vmatpush1.msra.mxu0 0.0
    %2567 = vmatprep.mubr.f32.mxu0 0.0
    %2568 = vmatmul.mubr.f32.gmra.mrb[0].mxu0 %v2501
    %v2569 = vpop.f32.mrb[0].mxu0
    %v2570 = vadd.f32 0.0, %v2569
    %v2571 = vpop.f32.mrb[0].mxu0
    %2572 = vdwg.mxu0
    %v2573 = vadd.f32 %v2500, %v2570
    %v2574 = vmul.f32 %v2573, 0.5
    %v2575 = vtanh.pop %v2574
    %v2576 = vmul.f32 %v2575, 0.5
    %v2577 = vadd.f32 %v2576, 0.5
    %v2578 = vtanh.pop %v2573
    %v2579 = vmul.f32 %v2577, %v2488
    %2581 = vrot.lane.b32.xlu0 %v2578, 32
    %v2582 = vpop.permute.xlu0 %2581
    %v2584 = vmul.f32 %v2577, %v2582
    %2586 = vrot.lane.b32.xlu0 %v2584, 32
    %v2587 = vpop.permute.xlu0 %2586
    %v2589 = vadd.f32 %v2579, %v2587
    %v2590 = vtanh.pop %v2589
    %2592 = vrot.lane.b32.xlu0 %v2590, 32
    %v2593 = vpop.permute.xlu0 %2592
    %v2595 = vmul.f32 %v2577, %v2593
    %2597 = vrot.lane.b32.xlu0 %v2595, 64
    %v2598 = vpop.permute.xlu0 %2597
    %2600 = vst.msk [vmem:[%s1245] sm:$0xff] %vm735, %v2598
    %v2601 = vld [vmem:[%s629] sm:$0xff]
    %v2602 = vsel %vm735, %v2598, 0
    %2604 = vmatprep.subr.mxu0 0.0
    %2605 = vmatpush1.msra.mxu0 %v1456
    %2606 = vmatprep.subr.mxu0 0.0
    %2607 = vmatpush1.msra.mxu0 %v1457
    %2608 = vmatprep.subr.mxu0 0.0
    %2609 = vmatpush1.msra.mxu0 %v1458
    %2610 = vmatprep.subr.mxu0 0.0
    %2611 = vmatpush1.msra.mxu0 %v1459
    %2612 = vmatprep.subr.mxu0 0.0
    %2613 = vmatpush1.msra.mxu0 0.0
    %2614 = vmatprep.subr.mxu0 0.0
    %2615 = vmatpush1.msra.mxu0 0.0
    %2616 = vmatprep.subr.mxu0 0.0
    %2617 = vmatpush1.msra.mxu0 0.0
    %2618 = vmatprep.subr.mxu0 0.0
    %2619 = vmatpush1.msra.mxu0 0.0
    %2620 = vmatprep.subr.mxu0 0.0
    %2621 = vmatpush1.msra.mxu0 0.0
    %2622 = vmatprep.subr.mxu0 0.0
    %2623 = vmatpush1.msra.mxu0 0.0
    %2624 = vmatprep.subr.mxu0 0.0
    %2625 = vmatpush1.msra.mxu0 0.0
    %2626 = vmatprep.subr.mxu0 0.0
    %2627 = vmatpush1.msra.mxu0 0.0
    %2628 = vmatprep.subr.mxu0 0.0
    %2629 = vmatpush1.msra.mxu0 0.0
    %2630 = vmatprep.subr.mxu0 0.0
    %2631 = vmatpush1.msra.mxu0 0.0
    %2632 = vmatprep.subr.mxu0 0.0
    %2633 = vmatpush1.msra.mxu0 0.0
    %2634 = vmatprep.subr.mxu0 0.0
    %2635 = vmatpush1.msra.mxu0 0.0
    %2636 = vmatprep.subr.mxu0 0.0
    %2637 = vmatpush1.msra.mxu0 0.0
    %2638 = vmatprep.subr.mxu0 0.0
    %2639 = vmatpush1.msra.mxu0 0.0
    %2640 = vmatprep.subr.mxu0 0.0
    %2641 = vmatpush1.msra.mxu0 0.0
    %2642 = vmatprep.subr.mxu0 0.0
    %2643 = vmatpush1.msra.mxu0 0.0
    %2644 = vmatprep.subr.mxu0 0.0
    %2645 = vmatpush1.msra.mxu0 0.0
    %2646 = vmatprep.subr.mxu0 0.0
    %2647 = vmatpush1.msra.mxu0 0.0
    %2648 = vmatprep.subr.mxu0 0.0
    %2649 = vmatpush1.msra.mxu0 0.0
    %2650 = vmatprep.subr.mxu0 0.0
    %2651 = vmatpush1.msra.mxu0 0.0
    %2652 = vmatprep.subr.mxu0 0.0
    %2653 = vmatpush1.msra.mxu0 0.0
    %2654 = vmatprep.subr.mxu0 0.0
    %2655 = vmatpush1.msra.mxu0 0.0
    %2656 = vmatprep.subr.mxu0 0.0
    %2657 = vmatpush1.msra.mxu0 0.0
    %2658 = vmatprep.subr.mxu0 0.0
    %2659 = vmatpush1.msra.mxu0 0.0
    %2660 = vmatprep.subr.mxu0 0.0
    %2661 = vmatpush1.msra.mxu0 0.0
    %2662 = vmatprep.subr.mxu0 0.0
    %2663 = vmatpush1.msra.mxu0 0.0
    %2664 = vmatprep.subr.mxu0 0.0
    %2665 = vmatpush1.msra.mxu0 0.0
    %2666 = vmatprep.subr.mxu0 0.0
    %2667 = vmatpush1.msra.mxu0 0.0
    %2668 = vmatprep.mubr.f32.mxu0 0.0
    %2669 = vmatmul.mubr.f32.gmra.mrb[0].mxu0 %v2602
    %v2670 = vpop.f32.mrb[0].mxu0
    %v2671 = vadd.f32 0.0, %v2670
    %v2672 = vpop.f32.mrb[0].mxu0
    %2673 = vdwg.mxu0
    %v2674 = vadd.f32 %v2601, %v2671
    %v2675 = vmul.f32 %v2674, 0.5
    %v2676 = vtanh.pop %v2675
    %v2677 = vmul.f32 %v2676, 0.5
    %v2678 = vadd.f32 %v2677, 0.5
    %v2679 = vtanh.pop %v2674
    %v2680 = vmul.f32 %v2678, %v2589
    %2682 = vrot.lane.b32.xlu0 %v2679, 32
    %v2683 = vpop.permute.xlu0 %2682
    %v2685 = vmul.f32 %v2678, %v2683
    %2687 = vrot.lane.b32.xlu0 %v2685, 32
    %v2688 = vpop.permute.xlu0 %2687
    %v2690 = vadd.f32 %v2680, %v2688
    %v2691 = vtanh.pop %v2690
    %2693 = vrot.lane.b32.xlu0 %v2691, 32
    %v2694 = vpop.permute.xlu0 %2693
    %v2696 = vmul.f32 %v2678, %v2694
    %2698 = vrot.lane.b32.xlu0 %v2696, 64
    %v2699 = vpop.permute.xlu0 %2698
    %2701 = vst.msk [vmem:[%s1347] sm:$0xff] %vm735, %v2699
    %v2702 = vld [vmem:[%s706] sm:$0xff]
    %v2703 = vsel %vm735, %v2699, 0
    %2705 = vmatprep.subr.mxu0 0.0
    %2706 = vmatpush1.msra.mxu0 %v1456
    %2707 = vmatprep.subr.mxu0 0.0
    %2708 = vmatpush1.msra.mxu0 %v1457
    %2709 = vmatprep.subr.mxu0 0.0
    %2710 = vmatpush1.msra.mxu0 %v1458
    %2711 = vmatprep.subr.mxu0 0.0
    %2712 = vmatpush1.msra.mxu0 %v1459
    %2713 = vmatprep.subr.mxu0 0.0
    %2714 = vmatpush1.msra.mxu0 0.0
    %2715 = vmatprep.subr.mxu0 0.0
    %2716 = vmatpush1.msra.mxu0 0.0
    %2717 = vmatprep.subr.mxu0 0.0
    %2718 = vmatpush1.msra.mxu0 0.0
    %2719 = vmatprep.subr.mxu0 0.0
    %2720 = vmatpush1.msra.mxu0 0.0
    %2721 = vmatprep.subr.mxu0 0.0
    %2722 = vmatpush1.msra.mxu0 0.0
    %2723 = vmatprep.subr.mxu0 0.0
    %2724 = vmatpush1.msra.mxu0 0.0
    %2725 = vmatprep.subr.mxu0 0.0
    %2726 = vmatpush1.msra.mxu0 0.0
    %2727 = vmatprep.subr.mxu0 0.0
    %2728 = vmatpush1.msra.mxu0 0.0
    %2729 = vmatprep.subr.mxu0 0.0
    %2730 = vmatpush1.msra.mxu0 0.0
    %2731 = vmatprep.subr.mxu0 0.0
    %2732 = vmatpush1.msra.mxu0 0.0
    %2733 = vmatprep.subr.mxu0 0.0
    %2734 = vmatpush1.msra.mxu0 0.0
    %2735 = vmatprep.subr.mxu0 0.0
    %2736 = vmatpush1.msra.mxu0 0.0
    %2737 = vmatprep.subr.mxu0 0.0
    %2738 = vmatpush1.msra.mxu0 0.0
    %2739 = vmatprep.subr.mxu0 0.0
    %2740 = vmatpush1.msra.mxu0 0.0
    %2741 = vmatprep.subr.mxu0 0.0
    %2742 = vmatpush1.msra.mxu0 0.0
    %2743 = vmatprep.subr.mxu0 0.0
    %2744 = vmatpush1.msra.mxu0 0.0
    %2745 = vmatprep.subr.mxu0 0.0
    %2746 = vmatpush1.msra.mxu0 0.0
    %2747 = vmatprep.subr.mxu0 0.0
    %2748 = vmatpush1.msra.mxu0 0.0
    %2749 = vmatprep.subr.mxu0 0.0
    %2750 = vmatpush1.msra.mxu0 0.0
    %2751 = vmatprep.subr.mxu0 0.0
    %2752 = vmatpush1.msra.mxu0 0.0
    %2753 = vmatprep.subr.mxu0 0.0
    %2754 = vmatpush1.msra.mxu0 0.0
    %2755 = vmatprep.subr.mxu0 0.0
    %2756 = vmatpush1.msra.mxu0 0.0
    %2757 = vmatprep.subr.mxu0 0.0
    %2758 = vmatpush1.msra.mxu0 0.0
    %2759 = vmatprep.subr.mxu0 0.0
    %2760 = vmatpush1.msra.mxu0 0.0
    %2761 = vmatprep.subr.mxu0 0.0
    %2762 = vmatpush1.msra.mxu0 0.0
    %2763 = vmatprep.subr.mxu0 0.0
    %2764 = vmatpush1.msra.mxu0 0.0
    %2765 = vmatprep.subr.mxu0 0.0
    %2766 = vmatpush1.msra.mxu0 0.0
    %2767 = vmatprep.subr.mxu0 0.0
    %2768 = vmatpush1.msra.mxu0 0.0
    %2769 = vmatprep.mubr.f32.mxu0 0.0
    %2770 = vmatmul.mubr.f32.gmra.mrb[0].mxu0 %v2703
    %v2771 = vpop.f32.mrb[0].mxu0
    %v2772 = vadd.f32 0.0, %v2771
    %v2773 = vpop.f32.mrb[0].mxu0
    %2774 = vdwg.mxu0
    %v2775 = vadd.f32 %v2702, %v2772
    %v2776 = vmul.f32 %v2775, 0.5
    %v2777 = vtanh.pop %v2776
    %v2778 = vmul.f32 %v2777, 0.5
    %v2779 = vadd.f32 %v2778, 0.5
    %v2780 = vtanh.pop %v2775
    %v2781 = vmul.f32 %v2779, %v2690
    %2783 = vrot.lane.b32.xlu0 %v2780, 32
    %v2784 = vpop.permute.xlu0 %2783
    %v2786 = vmul.f32 %v2779, %v2784
    %2788 = vrot.lane.b32.xlu0 %v2786, 32
    %v2789 = vpop.permute.xlu0 %2788
    %v2791 = vadd.f32 %v2781, %v2789
    %v2792 = vtanh.pop %v2791
    %2794 = vrot.lane.b32.xlu0 %v2792, 32
    %v2795 = vpop.permute.xlu0 %2794
    %v2797 = vmul.f32 %v2779, %v2795
    %2799 = vrot.lane.b32.xlu0 %v2797, 64
    %v2800 = vpop.permute.xlu0 %2799
    %2802 = vst.msk [vmem:[%s1449] sm:$0xff] %vm735, %v2800
    %s2803 = scalar_lea.vmem [#allocation9], 32
    %v2804 = vld [vmem:[%s2803] sm:$0xff]
    %v2805 = vld [vmem:[%s2803 + $0x8] sm:$0xff]
    %v2806 = vld [vmem:[%s2803 + $0x10] sm:$0xff]
    %v2807 = vld [vmem:[%s2803 + $0x18] sm:$0xff]
    %s2808 = scalar_lea.vmem [#allocation10], 64
    %v2809 = vld [vmem:[%s2808] sm:$0xff]
    %v2810 = vld [vmem:[%s2808 + $0x8] sm:$0xff]
    %v2811 = vld [vmem:[%s2808 + $0x10] sm:$0xff]
    %v2812 = vld [vmem:[%s2808 + $0x18] sm:$0xff]
    %s2813 = scalar_lea.vmem %s4, 2
    %v2814 = vld [vmem:[%s2813] sm:$0x1]
    %v2816 = vlaneseq
    %v2817 = vshrl.u32 %v2816, 7
    %v2818 = vsub.s32 0, %v2817
    %v2819 = vrot.slane %v2814, %v2818
    %v2821 = vld [vmem:[#allocation2] sm:$0xff]
    %v2823 = vsel %vm735, %v2821, 0
    %2825 = vmatprep.subr.mxu0 0.0
    %2826 = vmatpush1.msra.mxu0 %v2804
    %2827 = vmatprep.subr.mxu0 0.0
    %2828 = vmatpush1.msra.mxu0 %v2805
    %2829 = vmatprep.subr.mxu0 0.0
    %2830 = vmatpush1.msra.mxu0 %v2806
    %2831 = vmatprep.subr.mxu0 0.0
    %2832 = vmatpush1.msra.mxu0 %v2807
    %2833 = vmatprep.subr.mxu0 0.0
    %2834 = vmatpush1.msra.mxu0 0.0
    %2835 = vmatprep.subr.mxu0 0.0
    %2836 = vmatpush1.msra.mxu0 0.0
    %2837 = vmatprep.subr.mxu0 0.0
    %2838 = vmatpush1.msra.mxu0 0.0
    %2839 = vmatprep.subr.mxu0 0.0
    %2840 = vmatpush1.msra.mxu0 0.0
    %2841 = vmatprep.subr.mxu0 0.0
    %2842 = vmatpush1.msra.mxu0 0.0
    %2843 = vmatprep.subr.mxu0 0.0
    %2844 = vmatpush1.msra.mxu0 0.0
    %2845 = vmatprep.subr.mxu0 0.0
    %2846 = vmatpush1.msra.mxu0 0.0
    %2847 = vmatprep.subr.mxu0 0.0
    %2848 = vmatpush1.msra.mxu0 0.0
    %2849 = vmatprep.subr.mxu0 0.0
    %2850 = vmatpush1.msra.mxu0 0.0
    %2851 = vmatprep.subr.mxu0 0.0
    %2852 = vmatpush1.msra.mxu0 0.0
    %2853 = vmatprep.subr.mxu0 0.0
    %2854 = vmatpush1.msra.mxu0 0.0
    %2855 = vmatprep.subr.mxu0 0.0
    %2856 = vmatpush1.msra.mxu0 0.0
    %2857 = vmatprep.subr.mxu0 0.0
    %2858 = vmatpush1.msra.mxu0 0.0
    %2859 = vmatprep.subr.mxu0 0.0
    %2860 = vmatpush1.msra.mxu0 0.0
    %2861 = vmatprep.subr.mxu0 0.0
    %2862 = vmatpush1.msra.mxu0 0.0
    %2863 = vmatprep.subr.mxu0 0.0
    %2864 = vmatpush1.msra.mxu0 0.0
    %2865 = vmatprep.subr.mxu0 0.0
    %2866 = vmatpush1.msra.mxu0 0.0
    %2867 = vmatprep.subr.mxu0 0.0
    %2868 = vmatpush1.msra.mxu0 0.0
    %2869 = vmatprep.subr.mxu0 0.0
    %2870 = vmatpush1.msra.mxu0 0.0
    %2871 = vmatprep.subr.mxu0 0.0
    %2872 = vmatpush1.msra.mxu0 0.0
    %2873 = vmatprep.subr.mxu0 0.0
    %2874 = vmatpush1.msra.mxu0 0.0
    %2875 = vmatprep.subr.mxu0 0.0
    %2876 = vmatpush1.msra.mxu0 0.0
    %2877 = vmatprep.subr.mxu0 0.0
    %2878 = vmatpush1.msra.mxu0 0.0
    %2879 = vmatprep.subr.mxu0 0.0
    %2880 = vmatpush1.msra.mxu0 0.0
    %2881 = vmatprep.subr.mxu0 0.0
    %2882 = vmatpush1.msra.mxu0 0.0
    %2883 = vmatprep.subr.mxu0 0.0
    %2884 = vmatpush1.msra.mxu0 0.0
    %2885 = vmatprep.subr.mxu0 0.0
    %2886 = vmatpush1.msra.mxu0 0.0
    %2887 = vmatprep.subr.mxu0 0.0
    %2888 = vmatpush1.msra.mxu0 0.0
    %2889 = vmatprep.mubr.f32.mxu0 0.0
    %2890 = vmatmul.mubr.f32.gmra.mrb[0].mxu0 %v2823
    %v2891 = vpop.f32.mrb[0].mxu0
    %v2892 = vadd.f32 %v2819, %v2891
    %v2893 = vpop.f32.mrb[0].mxu0
    %2894 = vdwg.mxu0
    %2895 = vst [vmem:[#allocation3] sm:$0xff] %v2892
    %v2896 = vld [vmem:[%s837] sm:$0xff]
    %v2898 = vsel %vm735, %v2896, 0
    %2900 = vmatprep.subr.mxu0 0.0
    %2901 = vmatpush1.msra.mxu0 %v2804
    %2902 = vmatprep.subr.mxu0 0.0
    %2903 = vmatpush1.msra.mxu0 %v2805
    %2904 = vmatprep.subr.mxu0 0.0
    %2905 = vmatpush1.msra.mxu0 %v2806
    %2906 = vmatprep.subr.mxu0 0.0
    %2907 = vmatpush1.msra.mxu0 %v2807
    %2908 = vmatprep.subr.mxu0 0.0
    %2909 = vmatpush1.msra.mxu0 0.0
    %2910 = vmatprep.subr.mxu0 0.0
    %2911 = vmatpush1.msra.mxu0 0.0
    %2912 = vmatprep.subr.mxu0 0.0
    %2913 = vmatpush1.msra.mxu0 0.0
    %2914 = vmatprep.subr.mxu0 0.0
    %2915 = vmatpush1.msra.mxu0 0.0
    %2916 = vmatprep.subr.mxu0 0.0
    %2917 = vmatpush1.msra.mxu0 0.0
    %2918 = vmatprep.subr.mxu0 0.0
    %2919 = vmatpush1.msra.mxu0 0.0
    %2920 = vmatprep.subr.mxu0 0.0
    %2921 = vmatpush1.msra.mxu0 0.0
    %2922 = vmatprep.subr.mxu0 0.0
    %2923 = vmatpush1.msra.mxu0 0.0
    %2924 = vmatprep.subr.mxu0 0.0
    %2925 = vmatpush1.msra.mxu0 0.0
    %2926 = vmatprep.subr.mxu0 0.0
    %2927 = vmatpush1.msra.mxu0 0.0
    %2928 = vmatprep.subr.mxu0 0.0
    %2929 = vmatpush1.msra.mxu0 0.0
    %2930 = vmatprep.subr.mxu0 0.0
    %2931 = vmatpush1.msra.mxu0 0.0
    %2932 = vmatprep.subr.mxu0 0.0
    %2933 = vmatpush1.msra.mxu0 0.0
    %2934 = vmatprep.subr.mxu0 0.0
    %2935 = vmatpush1.msra.mxu0 0.0
    %2936 = vmatprep.subr.mxu0 0.0
    %2937 = vmatpush1.msra.mxu0 0.0
    %2938 = vmatprep.subr.mxu0 0.0
    %2939 = vmatpush1.msra.mxu0 0.0
    %2940 = vmatprep.subr.mxu0 0.0
    %2941 = vmatpush1.msra.mxu0 0.0
    %2942 = vmatprep.subr.mxu0 0.0
    %2943 = vmatpush1.msra.mxu0 0.0
    %2944 = vmatprep.subr.mxu0 0.0
    %2945 = vmatpush1.msra.mxu0 0.0
    %2946 = vmatprep.subr.mxu0 0.0
    %2947 = vmatpush1.msra.mxu0 0.0
    %2948 = vmatprep.subr.mxu0 0.0
    %2949 = vmatpush1.msra.mxu0 0.0
    %2950 = vmatprep.subr.mxu0 0.0
    %2951 = vmatpush1.msra.mxu0 0.0
    %2952 = vmatprep.subr.mxu0 0.0
    %2953 = vmatpush1.msra.mxu0 0.0
    %2954 = vmatprep.subr.mxu0 0.0
    %2955 = vmatpush1.msra.mxu0 0.0
    %2956 = vmatprep.subr.mxu0 0.0
    %2957 = vmatpush1.msra.mxu0 0.0
    %2958 = vmatprep.subr.mxu0 0.0
    %2959 = vmatpush1.msra.mxu0 0.0
    %2960 = vmatprep.subr.mxu0 0.0
    %2961 = vmatpush1.msra.mxu0 0.0
    %2962 = vmatprep.subr.mxu0 0.0
    %2963 = vmatpush1.msra.mxu0 0.0
    %2964 = vmatprep.mubr.f32.mxu0 0.0
    %2965 = vmatmul.mubr.f32.gmra.mrb[0].mxu0 %v2898
    %v2966 = vpop.f32.mrb[0].mxu0
    %v2967 = vadd.f32 %v2819, %v2966
    %v2968 = vpop.f32.mrb[0].mxu0
    %2969 = vdwg.mxu0
    %2970 = vst [vmem:[%s244] sm:$0xff] %v2967
    %v2971 = vld [vmem:[%s939] sm:$0xff]
    %v2973 = vsel %vm735, %v2971, 0
    %2975 = vmatprep.subr.mxu0 0.0
    %2976 = vmatpush1.msra.mxu0 %v2804
    %2977 = vmatprep.subr.mxu0 0.0
    %2978 = vmatpush1.msra.mxu0 %v2805
    %2979 = vmatprep.subr.mxu0 0.0
    %2980 = vmatpush1.msra.mxu0 %v2806
    %2981 = vmatprep.subr.mxu0 0.0
    %2982 = vmatpush1.msra.mxu0 %v2807
    %2983 = vmatprep.subr.mxu0 0.0
    %2984 = vmatpush1.msra.mxu0 0.0
    %2985 = vmatprep.subr.mxu0 0.0
    %2986 = vmatpush1.msra.mxu0 0.0
    %2987 = vmatprep.subr.mxu0 0.0
    %2988 = vmatpush1.msra.mxu0 0.0
    %2989 = vmatprep.subr.mxu0 0.0
    %2990 = vmatpush1.msra.mxu0 0.0
    %2991 = vmatprep.subr.mxu0 0.0
    %2992 = vmatpush1.msra.mxu0 0.0
    %2993 = vmatprep.subr.mxu0 0.0
    %2994 = vmatpush1.msra.mxu0 0.0
    %2995 = vmatprep.subr.mxu0 0.0
    %2996 = vmatpush1.msra.mxu0 0.0
    %2997 = vmatprep.subr.mxu0 0.0
    %2998 = vmatpush1.msra.mxu0 0.0
    %2999 = vmatprep.subr.mxu0 0.0
    %3000 = vmatpush1.msra.mxu0 0.0
    %3001 = vmatprep.subr.mxu0 0.0
    %3002 = vmatpush1.msra.mxu0 0.0
    %3003 = vmatprep.subr.mxu0 0.0
    %3004 = vmatpush1.msra.mxu0 0.0
    %3005 = vmatprep.subr.mxu0 0.0
    %3006 = vmatpush1.msra.mxu0 0.0
    %3007 = vmatprep.subr.mxu0 0.0
    %3008 = vmatpush1.msra.mxu0 0.0
    %3009 = vmatprep.subr.mxu0 0.0
    %3010 = vmatpush1.msra.mxu0 0.0
    %3011 = vmatprep.subr.mxu0 0.0
    %3012 = vmatpush1.msra.mxu0 0.0
    %3013 = vmatprep.subr.mxu0 0.0
    %3014 = vmatpush1.msra.mxu0 0.0
    %3015 = vmatprep.subr.mxu0 0.0
    %3016 = vmatpush1.msra.mxu0 0.0
    %3017 = vmatprep.subr.mxu0 0.0
    %3018 = vmatpush1.msra.mxu0 0.0
    %3019 = vmatprep.subr.mxu0 0.0
    %3020 = vmatpush1.msra.mxu0 0.0
    %3021 = vmatprep.subr.mxu0 0.0
    %3022 = vmatpush1.msra.mxu0 0.0
    %3023 = vmatprep.subr.mxu0 0.0
    %3024 = vmatpush1.msra.mxu0 0.0
    %3025 = vmatprep.subr.mxu0 0.0
    %3026 = vmatpush1.msra.mxu0 0.0
    %3027 = vmatprep.subr.mxu0 0.0
    %3028 = vmatpush1.msra.mxu0 0.0
    %3029 = vmatprep.subr.mxu0 0.0
    %3030 = vmatpush1.msra.mxu0 0.0
    %3031 = vmatprep.subr.mxu0 0.0
    %3032 = vmatpush1.msra.mxu0 0.0
    %3033 = vmatprep.subr.mxu0 0.0
    %3034 = vmatpush1.msra.mxu0 0.0
    %3035 = vmatprep.subr.mxu0 0.0
    %3036 = vmatpush1.msra.mxu0 0.0
    %3037 = vmatprep.subr.mxu0 0.0
    %3038 = vmatpush1.msra.mxu0 0.0
    %3039 = vmatprep.mubr.f32.mxu0 0.0
    %3040 = vmatmul.mubr.f32.gmra.mrb[0].mxu0 %v2973
    %v3041 = vpop.f32.mrb[0].mxu0
    %v3042 = vadd.f32 %v2819, %v3041
    %v3043 = vpop.f32.mrb[0].mxu0
    %3044 = vdwg.mxu0
    %3045 = vst [vmem:[%s321] sm:$0xff] %v3042
    %v3046 = vld [vmem:[%s1041] sm:$0xff]
    %v3048 = vsel %vm735, %v3046, 0
    %3050 = vmatprep.subr.mxu0 0.0
    %3051 = vmatpush1.msra.mxu0 %v2804
    %3052 = vmatprep.subr.mxu0 0.0
    %3053 = vmatpush1.msra.mxu0 %v2805
    %3054 = vmatprep.subr.mxu0 0.0
    %3055 = vmatpush1.msra.mxu0 %v2806
    %3056 = vmatprep.subr.mxu0 0.0
    %3057 = vmatpush1.msra.mxu0 %v2807
    %3058 = vmatprep.subr.mxu0 0.0
    %3059 = vmatpush1.msra.mxu0 0.0
    %3060 = vmatprep.subr.mxu0 0.0
    %3061 = vmatpush1.msra.mxu0 0.0
    %3062 = vmatprep.subr.mxu0 0.0
    %3063 = vmatpush1.msra.mxu0 0.0
    %3064 = vmatprep.subr.mxu0 0.0
    %3065 = vmatpush1.msra.mxu0 0.0
    %3066 = vmatprep.subr.mxu0 0.0
    %3067 = vmatpush1.msra.mxu0 0.0
    %3068 = vmatprep.subr.mxu0 0.0
    %3069 = vmatpush1.msra.mxu0 0.0
    %3070 = vmatprep.subr.mxu0 0.0
    %3071 = vmatpush1.msra.mxu0 0.0
    %3072 = vmatprep.subr.mxu0 0.0
    %3073 = vmatpush1.msra.mxu0 0.0
    %3074 = vmatprep.subr.mxu0 0.0
    %3075 = vmatpush1.msra.mxu0 0.0
    %3076 = vmatprep.subr.mxu0 0.0
    %3077 = vmatpush1.msra.mxu0 0.0
    %3078 = vmatprep.subr.mxu0 0.0
    %3079 = vmatpush1.msra.mxu0 0.0
    %3080 = vmatprep.subr.mxu0 0.0
    %3081 = vmatpush1.msra.mxu0 0.0
    %3082 = vmatprep.subr.mxu0 0.0
    %3083 = vmatpush1.msra.mxu0 0.0
    %3084 = vmatprep.subr.mxu0 0.0
    %3085 = vmatpush1.msra.mxu0 0.0
    %3086 = vmatprep.subr.mxu0 0.0
    %3087 = vmatpush1.msra.mxu0 0.0
    %3088 = vmatprep.subr.mxu0 0.0
    %3089 = vmatpush1.msra.mxu0 0.0
    %3090 = vmatprep.subr.mxu0 0.0
    %3091 = vmatpush1.msra.mxu0 0.0
    %3092 = vmatprep.subr.mxu0 0.0
    %3093 = vmatpush1.msra.mxu0 0.0
    %3094 = vmatprep.subr.mxu0 0.0
    %3095 = vmatpush1.msra.mxu0 0.0
    %3096 = vmatprep.subr.mxu0 0.0
    %3097 = vmatpush1.msra.mxu0 0.0
    %3098 = vmatprep.subr.mxu0 0.0
    %3099 = vmatpush1.msra.mxu0 0.0
    %3100 = vmatprep.subr.mxu0 0.0
    %3101 = vmatpush1.msra.mxu0 0.0
    %3102 = vmatprep.subr.mxu0 0.0
    %3103 = vmatpush1.msra.mxu0 0.0
    %3104 = vmatprep.subr.mxu0 0.0
    %3105 = vmatpush1.msra.mxu0 0.0
    %3106 = vmatprep.subr.mxu0 0.0
    %3107 = vmatpush1.msra.mxu0 0.0
    %3108 = vmatprep.subr.mxu0 0.0
    %3109 = vmatpush1.msra.mxu0 0.0
    %3110 = vmatprep.subr.mxu0 0.0
    %3111 = vmatpush1.msra.mxu0 0.0
    %3112 = vmatprep.subr.mxu0 0.0
    %3113 = vmatpush1.msra.mxu0 0.0
    %3114 = vmatprep.mubr.f32.mxu0 0.0
    %3115 = vmatmul.mubr.f32.gmra.mrb[0].mxu0 %v3048
    %v3116 = vpop.f32.mrb[0].mxu0
    %v3117 = vadd.f32 %v2819, %v3116
    %v3118 = vpop.f32.mrb[0].mxu0
    %3119 = vdwg.mxu0
    %3120 = vst [vmem:[%s398] sm:$0xff] %v3117
    %v3121 = vld [vmem:[%s1143] sm:$0xff]
    %v3123 = vsel %vm735, %v3121, 0
    %3125 = vmatprep.subr.mxu0 0.0
    %3126 = vmatpush1.msra.mxu0 %v2804
    %3127 = vmatprep.subr.mxu0 0.0
    %3128 = vmatpush1.msra.mxu0 %v2805
    %3129 = vmatprep.subr.mxu0 0.0
    %3130 = vmatpush1.msra.mxu0 %v2806
    %3131 = vmatprep.subr.mxu0 0.0
    %3132 = vmatpush1.msra.mxu0 %v2807
    %3133 = vmatprep.subr.mxu0 0.0
    %3134 = vmatpush1.msra.mxu0 0.0
    %3135 = vmatprep.subr.mxu0 0.0
    %3136 = vmatpush1.msra.mxu0 0.0
    %3137 = vmatprep.subr.mxu0 0.0
    %3138 = vmatpush1.msra.mxu0 0.0
    %3139 = vmatprep.subr.mxu0 0.0
    %3140 = vmatpush1.msra.mxu0 0.0
    %3141 = vmatprep.subr.mxu0 0.0
    %3142 = vmatpush1.msra.mxu0 0.0
    %3143 = vmatprep.subr.mxu0 0.0
    %3144 = vmatpush1.msra.mxu0 0.0
    %3145 = vmatprep.subr.mxu0 0.0
    %3146 = vmatpush1.msra.mxu0 0.0
    %3147 = vmatprep.subr.mxu0 0.0
    %3148 = vmatpush1.msra.mxu0 0.0
    %3149 = vmatprep.subr.mxu0 0.0
    %3150 = vmatpush1.msra.mxu0 0.0
    %3151 = vmatprep.subr.mxu0 0.0
    %3152 = vmatpush1.msra.mxu0 0.0
    %3153 = vmatprep.subr.mxu0 0.0
    %3154 = vmatpush1.msra.mxu0 0.0
    %3155 = vmatprep.subr.mxu0 0.0
    %3156 = vmatpush1.msra.mxu0 0.0
    %3157 = vmatprep.subr.mxu0 0.0
    %3158 = vmatpush1.msra.mxu0 0.0
    %3159 = vmatprep.subr.mxu0 0.0
    %3160 = vmatpush1.msra.mxu0 0.0
    %3161 = vmatprep.subr.mxu0 0.0
    %3162 = vmatpush1.msra.mxu0 0.0
    %3163 = vmatprep.subr.mxu0 0.0
    %3164 = vmatpush1.msra.mxu0 0.0
    %3165 = vmatprep.subr.mxu0 0.0
    %3166 = vmatpush1.msra.mxu0 0.0
    %3167 = vmatprep.subr.mxu0 0.0
    %3168 = vmatpush1.msra.mxu0 0.0
    %3169 = vmatprep.subr.mxu0 0.0
    %3170 = vmatpush1.msra.mxu0 0.0
    %3171 = vmatprep.subr.mxu0 0.0
    %3172 = vmatpush1.msra.mxu0 0.0
    %3173 = vmatprep.subr.mxu0 0.0
    %3174 = vmatpush1.msra.mxu0 0.0
    %3175 = vmatprep.subr.mxu0 0.0
    %3176 = vmatpush1.msra.mxu0 0.0
    %3177 = vmatprep.subr.mxu0 0.0
    %3178 = vmatpush1.msra.mxu0 0.0
    %3179 = vmatprep.subr.mxu0 0.0
    %3180 = vmatpush1.msra.mxu0 0.0
    %3181 = vmatprep.subr.mxu0 0.0
    %3182 = vmatpush1.msra.mxu0 0.0
    %3183 = vmatprep.subr.mxu0 0.0
    %3184 = vmatpush1.msra.mxu0 0.0
    %3185 = vmatprep.subr.mxu0 0.0
    %3186 = vmatpush1.msra.mxu0 0.0
    %3187 = vmatprep.subr.mxu0 0.0
    %3188 = vmatpush1.msra.mxu0 0.0
    %3189 = vmatprep.mubr.f32.mxu0 0.0
    %3190 = vmatmul.mubr.f32.gmra.mrb[0].mxu0 %v3123
    %v3191 = vpop.f32.mrb[0].mxu0
    %v3192 = vadd.f32 %v2819, %v3191
    %v3193 = vpop.f32.mrb[0].mxu0
    %3194 = vdwg.mxu0
    %3195 = vst [vmem:[%s475] sm:$0xff] %v3192
    %v3196 = vld [vmem:[%s1245] sm:$0xff]
    %v3198 = vsel %vm735, %v3196, 0
    %3200 = vmatprep.subr.mxu0 0.0
    %3201 = vmatpush1.msra.mxu0 %v2804
    %3202 = vmatprep.subr.mxu0 0.0
    %3203 = vmatpush1.msra.mxu0 %v2805
    %3204 = vmatprep.subr.mxu0 0.0
    %3205 = vmatpush1.msra.mxu0 %v2806
    %3206 = vmatprep.subr.mxu0 0.0
    %3207 = vmatpush1.msra.mxu0 %v2807
    %3208 = vmatprep.subr.mxu0 0.0
    %3209 = vmatpush1.msra.mxu0 0.0
    %3210 = vmatprep.subr.mxu0 0.0
    %3211 = vmatpush1.msra.mxu0 0.0
    %3212 = vmatprep.subr.mxu0 0.0
    %3213 = vmatpush1.msra.mxu0 0.0
    %3214 = vmatprep.subr.mxu0 0.0
    %3215 = vmatpush1.msra.mxu0 0.0
    %3216 = vmatprep.subr.mxu0 0.0
    %3217 = vmatpush1.msra.mxu0 0.0
    %3218 = vmatprep.subr.mxu0 0.0
    %3219 = vmatpush1.msra.mxu0 0.0
    %3220 = vmatprep.subr.mxu0 0.0
    %3221 = vmatpush1.msra.mxu0 0.0
    %3222 = vmatprep.subr.mxu0 0.0
    %3223 = vmatpush1.msra.mxu0 0.0
    %3224 = vmatprep.subr.mxu0 0.0
    %3225 = vmatpush1.msra.mxu0 0.0
    %3226 = vmatprep.subr.mxu0 0.0
    %3227 = vmatpush1.msra.mxu0 0.0
    %3228 = vmatprep.subr.mxu0 0.0
    %3229 = vmatpush1.msra.mxu0 0.0
    %3230 = vmatprep.subr.mxu0 0.0
    %3231 = vmatpush1.msra.mxu0 0.0
    %3232 = vmatprep.subr.mxu0 0.0
    %3233 = vmatpush1.msra.mxu0 0.0
    %3234 = vmatprep.subr.mxu0 0.0
    %3235 = vmatpush1.msra.mxu0 0.0
    %3236 = vmatprep.subr.mxu0 0.0
    %3237 = vmatpush1.msra.mxu0 0.0
    %3238 = vmatprep.subr.mxu0 0.0
    %3239 = vmatpush1.msra.mxu0 0.0
    %3240 = vmatprep.subr.mxu0 0.0
    %3241 = vmatpush1.msra.mxu0 0.0
    %3242 = vmatprep.subr.mxu0 0.0
    %3243 = vmatpush1.msra.mxu0 0.0
    %3244 = vmatprep.subr.mxu0 0.0
    %3245 = vmatpush1.msra.mxu0 0.0
    %3246 = vmatprep.subr.mxu0 0.0
    %3247 = vmatpush1.msra.mxu0 0.0
    %3248 = vmatprep.subr.mxu0 0.0
    %3249 = vmatpush1.msra.mxu0 0.0
    %3250 = vmatprep.subr.mxu0 0.0
    %3251 = vmatpush1.msra.mxu0 0.0
    %3252 = vmatprep.subr.mxu0 0.0
    %3253 = vmatpush1.msra.mxu0 0.0
    %3254 = vmatprep.subr.mxu0 0.0
    %3255 = vmatpush1.msra.mxu0 0.0
    %3256 = vmatprep.subr.mxu0 0.0
    %3257 = vmatpush1.msra.mxu0 0.0
    %3258 = vmatprep.subr.mxu0 0.0
    %3259 = vmatpush1.msra.mxu0 0.0
    %3260 = vmatprep.subr.mxu0 0.0
    %3261 = vmatpush1.msra.mxu0 0.0
    %3262 = vmatprep.subr.mxu0 0.0
    %3263 = vmatpush1.msra.mxu0 0.0
    %3264 = vmatprep.mubr.f32.mxu0 0.0
    %3265 = vmatmul.mubr.f32.gmra.mrb[0].mxu0 %v3198
    %v3266 = vpop.f32.mrb[0].mxu0
    %v3267 = vadd.f32 %v2819, %v3266
    %v3268 = vpop.f32.mrb[0].mxu0
    %3269 = vdwg.mxu0
    %3270 = vst [vmem:[%s552] sm:$0xff] %v3267
    %v3271 = vld [vmem:[%s1347] sm:$0xff]
    %v3273 = vsel %vm735, %v3271, 0
    %3275 = vmatprep.subr.mxu0 0.0
    %3276 = vmatpush1.msra.mxu0 %v2804
    %3277 = vmatprep.subr.mxu0 0.0
    %3278 = vmatpush1.msra.mxu0 %v2805
    %3279 = vmatprep.subr.mxu0 0.0
    %3280 = vmatpush1.msra.mxu0 %v2806
    %3281 = vmatprep.subr.mxu0 0.0
    %3282 = vmatpush1.msra.mxu0 %v2807
    %3283 = vmatprep.subr.mxu0 0.0
    %3284 = vmatpush1.msra.mxu0 0.0
    %3285 = vmatprep.subr.mxu0 0.0
    %3286 = vmatpush1.msra.mxu0 0.0
    %3287 = vmatprep.subr.mxu0 0.0
    %3288 = vmatpush1.msra.mxu0 0.0
    %3289 = vmatprep.subr.mxu0 0.0
    %3290 = vmatpush1.msra.mxu0 0.0
    %3291 = vmatprep.subr.mxu0 0.0
    %3292 = vmatpush1.msra.mxu0 0.0
    %3293 = vmatprep.subr.mxu0 0.0
    %3294 = vmatpush1.msra.mxu0 0.0
    %3295 = vmatprep.subr.mxu0 0.0
    %3296 = vmatpush1.msra.mxu0 0.0
    %3297 = vmatprep.subr.mxu0 0.0
    %3298 = vmatpush1.msra.mxu0 0.0
    %3299 = vmatprep.subr.mxu0 0.0
    %3300 = vmatpush1.msra.mxu0 0.0
    %3301 = vmatprep.subr.mxu0 0.0
    %3302 = vmatpush1.msra.mxu0 0.0
    %3303 = vmatprep.subr.mxu0 0.0
    %3304 = vmatpush1.msra.mxu0 0.0
    %3305 = vmatprep.subr.mxu0 0.0
    %3306 = vmatpush1.msra.mxu0 0.0
    %3307 = vmatprep.subr.mxu0 0.0
    %3308 = vmatpush1.msra.mxu0 0.0
    %3309 = vmatprep.subr.mxu0 0.0
    %3310 = vmatpush1.msra.mxu0 0.0
    %3311 = vmatprep.subr.mxu0 0.0
    %3312 = vmatpush1.msra.mxu0 0.0
    %3313 = vmatprep.subr.mxu0 0.0
    %3314 = vmatpush1.msra.mxu0 0.0
    %3315 = vmatprep.subr.mxu0 0.0
    %3316 = vmatpush1.msra.mxu0 0.0
    %3317 = vmatprep.subr.mxu0 0.0
    %3318 = vmatpush1.msra.mxu0 0.0
    %3319 = vmatprep.subr.mxu0 0.0
    %3320 = vmatpush1.msra.mxu0 0.0
    %3321 = vmatprep.subr.mxu0 0.0
    %3322 = vmatpush1.msra.mxu0 0.0
    %3323 = vmatprep.subr.mxu0 0.0
    %3324 = vmatpush1.msra.mxu0 0.0
    %3325 = vmatprep.subr.mxu0 0.0
    %3326 = vmatpush1.msra.mxu0 0.0
    %3327 = vmatprep.subr.mxu0 0.0
    %3328 = vmatpush1.msra.mxu0 0.0
    %3329 = vmatprep.subr.mxu0 0.0
    %3330 = vmatpush1.msra.mxu0 0.0
    %3331 = vmatprep.subr.mxu0 0.0
    %3332 = vmatpush1.msra.mxu0 0.0
    %3333 = vmatprep.subr.mxu0 0.0
    %3334 = vmatpush1.msra.mxu0 0.0
    %3335 = vmatprep.subr.mxu0 0.0
    %3336 = vmatpush1.msra.mxu0 0.0
    %3337 = vmatprep.subr.mxu0 0.0
    %3338 = vmatpush1.msra.mxu0 0.0
    %3339 = vmatprep.mubr.f32.mxu0 0.0
    %3340 = vmatmul.mubr.f32.gmra.mrb[0].mxu0 %v3273
    %v3341 = vpop.f32.mrb[0].mxu0
    %v3342 = vadd.f32 %v2819, %v3341
    %v3343 = vpop.f32.mrb[0].mxu0
    %3344 = vdwg.mxu0
    %3345 = vst [vmem:[%s629] sm:$0xff] %v3342
    %v3346 = vld [vmem:[%s1449] sm:$0xff]
    %v3348 = vsel %vm735, %v3346, 0
    %3350 = vmatprep.subr.mxu0 0.0
    %3351 = vmatpush1.msra.mxu0 %v2804
    %3352 = vmatprep.subr.mxu0 0.0
    %3353 = vmatpush1.msra.mxu0 %v2805
    %3354 = vmatprep.subr.mxu0 0.0
    %3355 = vmatpush1.msra.mxu0 %v2806
    %3356 = vmatprep.subr.mxu0 0.0
    %3357 = vmatpush1.msra.mxu0 %v2807
    %3358 = vmatprep.subr.mxu0 0.0
    %3359 = vmatpush1.msra.mxu0 0.0
    %3360 = vmatprep.subr.mxu0 0.0
    %3361 = vmatpush1.msra.mxu0 0.0
    %3362 = vmatprep.subr.mxu0 0.0
    %3363 = vmatpush1.msra.mxu0 0.0
    %3364 = vmatprep.subr.mxu0 0.0
    %3365 = vmatpush1.msra.mxu0 0.0
    %3366 = vmatprep.subr.mxu0 0.0
    %3367 = vmatpush1.msra.mxu0 0.0
    %3368 = vmatprep.subr.mxu0 0.0
    %3369 = vmatpush1.msra.mxu0 0.0
    %3370 = vmatprep.subr.mxu0 0.0
    %3371 = vmatpush1.msra.mxu0 0.0
    %3372 = vmatprep.subr.mxu0 0.0
    %3373 = vmatpush1.msra.mxu0 0.0
    %3374 = vmatprep.subr.mxu0 0.0
    %3375 = vmatpush1.msra.mxu0 0.0
    %3376 = vmatprep.subr.mxu0 0.0
    %3377 = vmatpush1.msra.mxu0 0.0
    %3378 = vmatprep.subr.mxu0 0.0
    %3379 = vmatpush1.msra.mxu0 0.0
    %3380 = vmatprep.subr.mxu0 0.0
    %3381 = vmatpush1.msra.mxu0 0.0
    %3382 = vmatprep.subr.mxu0 0.0
    %3383 = vmatpush1.msra.mxu0 0.0
    %3384 = vmatprep.subr.mxu0 0.0
    %3385 = vmatpush1.msra.mxu0 0.0
    %3386 = vmatprep.subr.mxu0 0.0
    %3387 = vmatpush1.msra.mxu0 0.0
    %3388 = vmatprep.subr.mxu0 0.0
    %3389 = vmatpush1.msra.mxu0 0.0
    %3390 = vmatprep.subr.mxu0 0.0
    %3391 = vmatpush1.msra.mxu0 0.0
    %3392 = vmatprep.subr.mxu0 0.0
    %3393 = vmatpush1.msra.mxu0 0.0
    %3394 = vmatprep.subr.mxu0 0.0
    %3395 = vmatpush1.msra.mxu0 0.0
    %3396 = vmatprep.subr.mxu0 0.0
    %3397 = vmatpush1.msra.mxu0 0.0
    %3398 = vmatprep.subr.mxu0 0.0
    %3399 = vmatpush1.msra.mxu0 0.0
    %3400 = vmatprep.subr.mxu0 0.0
    %3401 = vmatpush1.msra.mxu0 0.0
    %3402 = vmatprep.subr.mxu0 0.0
    %3403 = vmatpush1.msra.mxu0 0.0
    %3404 = vmatprep.subr.mxu0 0.0
    %3405 = vmatpush1.msra.mxu0 0.0
    %3406 = vmatprep.subr.mxu0 0.0
    %3407 = vmatpush1.msra.mxu0 0.0
    %3408 = vmatprep.subr.mxu0 0.0
    %3409 = vmatpush1.msra.mxu0 0.0
    %3410 = vmatprep.subr.mxu0 0.0
    %3411 = vmatpush1.msra.mxu0 0.0
    %3412 = vmatprep.subr.mxu0 0.0
    %3413 = vmatpush1.msra.mxu0 0.0
    %3414 = vmatprep.mubr.f32.mxu0 0.0
    %3415 = vmatmul.mubr.f32.gmra.mrb[0].mxu0 %v3348
    %v3416 = vpop.f32.mrb[0].mxu0
    %v3417 = vadd.f32 %v2819, %v3416
    %v3418 = vpop.f32.mrb[0].mxu0
    %3419 = vdwg.mxu0
    %3420 = vst [vmem:[%s706] sm:$0xff] %v3417
    %v3421 = vld [vmem:[#allocation3] sm:$0xff]
    %v3422 = vmul.f32 %v3421, 0.5
    %v3423 = vtanh.pop %v3422
    %v3424 = vmul.f32 %v3423, 0.5
    %v3425 = vadd.f32 %v3424, 0.5
    %v3426 = vtanh.pop %v3421
    %v3427 = vmul.f32 %v3425, 0.0
    %3429 = vrot.lane.b32.xlu0 %v3426, 32
    %v3430 = vpop.permute.xlu0 %3429
    %v3432 = vmul.f32 %v3425, %v3430
    %3434 = vrot.lane.b32.xlu0 %v3432, 32
    %v3435 = vpop.permute.xlu0 %3434
    %v3437 = vadd.f32 %v3427, %v3435
    %v3438 = vtanh.pop %v3437
    %3440 = vrot.lane.b32.xlu0 %v3438, 32
    %v3441 = vpop.permute.xlu0 %3440
    %v3443 = vmul.f32 %v3425, %v3441
    %3445 = vrot.lane.b32.xlu0 %v3443, 64
    %v3446 = vpop.permute.xlu0 %3445
    %3448 = vst.msk [vmem:[#allocation2] sm:$0xff] %vm735, %v3446
    %v3449 = vld [vmem:[%s244] sm:$0xff]
    %v3450 = vsel %vm735, %v3446, 0
    %3452 = vmatprep.subr.mxu0 0.0
    %3453 = vmatpush1.msra.mxu0 %v2809
    %3454 = vmatprep.subr.mxu0 0.0
    %3455 = vmatpush1.msra.mxu0 %v2810
    %3456 = vmatprep.subr.mxu0 0.0
    %3457 = vmatpush1.msra.mxu0 %v2811
    %3458 = vmatprep.subr.mxu0 0.0
    %3459 = vmatpush1.msra.mxu0 %v2812
    %3460 = vmatprep.subr.mxu0 0.0
    %3461 = vmatpush1.msra.mxu0 0.0
    %3462 = vmatprep.subr.mxu0 0.0
    %3463 = vmatpush1.msra.mxu0 0.0
    %3464 = vmatprep.subr.mxu0 0.0
    %3465 = vmatpush1.msra.mxu0 0.0
    %3466 = vmatprep.subr.mxu0 0.0
    %3467 = vmatpush1.msra.mxu0 0.0
    %3468 = vmatprep.subr.mxu0 0.0
    %3469 = vmatpush1.msra.mxu0 0.0
    %3470 = vmatprep.subr.mxu0 0.0
    %3471 = vmatpush1.msra.mxu0 0.0
    %3472 = vmatprep.subr.mxu0 0.0
    %3473 = vmatpush1.msra.mxu0 0.0
    %3474 = vmatprep.subr.mxu0 0.0
    %3475 = vmatpush1.msra.mxu0 0.0
    %3476 = vmatprep.subr.mxu0 0.0
    %3477 = vmatpush1.msra.mxu0 0.0
    %3478 = vmatprep.subr.mxu0 0.0
    %3479 = vmatpush1.msra.mxu0 0.0
    %3480 = vmatprep.subr.mxu0 0.0
    %3481 = vmatpush1.msra.mxu0 0.0
    %3482 = vmatprep.subr.mxu0 0.0
    %3483 = vmatpush1.msra.mxu0 0.0
    %3484 = vmatprep.subr.mxu0 0.0
    %3485 = vmatpush1.msra.mxu0 0.0
    %3486 = vmatprep.subr.mxu0 0.0
    %3487 = vmatpush1.msra.mxu0 0.0
    %3488 = vmatprep.subr.mxu0 0.0
    %3489 = vmatpush1.msra.mxu0 0.0
    %3490 = vmatprep.subr.mxu0 0.0
    %3491 = vmatpush1.msra.mxu0 0.0
    %3492 = vmatprep.subr.mxu0 0.0
    %3493 = vmatpush1.msra.mxu0 0.0
    %3494 = vmatprep.subr.mxu0 0.0
    %3495 = vmatpush1.msra.mxu0 0.0
    %3496 = vmatprep.subr.mxu0 0.0
    %3497 = vmatpush1.msra.mxu0 0.0
    %3498 = vmatprep.subr.mxu0 0.0
    %3499 = vmatpush1.msra.mxu0 0.0
    %3500 = vmatprep.subr.mxu0 0.0
    %3501 = vmatpush1.msra.mxu0 0.0
    %3502 = vmatprep.subr.mxu0 0.0
    %3503 = vmatpush1.msra.mxu0 0.0
    %3504 = vmatprep.subr.mxu0 0.0
    %3505 = vmatpush1.msra.mxu0 0.0
    %3506 = vmatprep.subr.mxu0 0.0
    %3507 = vmatpush1.msra.mxu0 0.0
    %3508 = vmatprep.subr.mxu0 0.0
    %3509 = vmatpush1.msra.mxu0 0.0
    %3510 = vmatprep.subr.mxu0 0.0
    %3511 = vmatpush1.msra.mxu0 0.0
    %3512 = vmatprep.subr.mxu0 0.0
    %3513 = vmatpush1.msra.mxu0 0.0
    %3514 = vmatprep.subr.mxu0 0.0
    %3515 = vmatpush1.msra.mxu0 0.0
    %3516 = vmatprep.mubr.f32.mxu0 0.0
    %3517 = vmatmul.mubr.f32.gmra.mrb[0].mxu0 %v3450
    %v3518 = vpop.f32.mrb[0].mxu0
    %v3519 = vadd.f32 0.0, %v3518
    %v3520 = vpop.f32.mrb[0].mxu0
    %3521 = vdwg.mxu0
    %v3522 = vadd.f32 %v3449, %v3519
    %v3523 = vmul.f32 %v3522, 0.5
    %v3524 = vtanh.pop %v3523
    %v3525 = vmul.f32 %v3524, 0.5
    %v3526 = vadd.f32 %v3525, 0.5
    %v3527 = vtanh.pop %v3522
    %v3528 = vmul.f32 %v3526, %v3437
    %3530 = vrot.lane.b32.xlu0 %v3527, 32
    %v3531 = vpop.permute.xlu0 %3530
    %v3533 = vmul.f32 %v3526, %v3531
    %3535 = vrot.lane.b32.xlu0 %v3533, 32
    %v3536 = vpop.permute.xlu0 %3535
    %v3538 = vadd.f32 %v3528, %v3536
    %v3539 = vtanh.pop %v3538
    %3541 = vrot.lane.b32.xlu0 %v3539, 32
    %v3542 = vpop.permute.xlu0 %3541
    %v3544 = vmul.f32 %v3526, %v3542
    %3546 = vrot.lane.b32.xlu0 %v3544, 64
    %v3547 = vpop.permute.xlu0 %3546
    %3549 = vst.msk [vmem:[%s837] sm:$0xff] %vm735, %v3547
    %v3550 = vld [vmem:[%s321] sm:$0xff]
    %v3551 = vsel %vm735, %v3547, 0
    %3553 = vmatprep.subr.mxu0 0.0
    %3554 = vmatpush1.msra.mxu0 %v2809
    %3555 = vmatprep.subr.mxu0 0.0
    %3556 = vmatpush1.msra.mxu0 %v2810
    %3557 = vmatprep.subr.mxu0 0.0
    %3558 = vmatpush1.msra.mxu0 %v2811
    %3559 = vmatprep.subr.mxu0 0.0
    %3560 = vmatpush1.msra.mxu0 %v2812
    %3561 = vmatprep.subr.mxu0 0.0
    %3562 = vmatpush1.msra.mxu0 0.0
    %3563 = vmatprep.subr.mxu0 0.0
    %3564 = vmatpush1.msra.mxu0 0.0
    %3565 = vmatprep.subr.mxu0 0.0
    %3566 = vmatpush1.msra.mxu0 0.0
    %3567 = vmatprep.subr.mxu0 0.0
    %3568 = vmatpush1.msra.mxu0 0.0
    %3569 = vmatprep.subr.mxu0 0.0
    %3570 = vmatpush1.msra.mxu0 0.0
    %3571 = vmatprep.subr.mxu0 0.0
    %3572 = vmatpush1.msra.mxu0 0.0
    %3573 = vmatprep.subr.mxu0 0.0
    %3574 = vmatpush1.msra.mxu0 0.0
    %3575 = vmatprep.subr.mxu0 0.0
    %3576 = vmatpush1.msra.mxu0 0.0
    %3577 = vmatprep.subr.mxu0 0.0
    %3578 = vmatpush1.msra.mxu0 0.0
    %3579 = vmatprep.subr.mxu0 0.0
    %3580 = vmatpush1.msra.mxu0 0.0
    %3581 = vmatprep.subr.mxu0 0.0
    %3582 = vmatpush1.msra.mxu0 0.0
    %3583 = vmatprep.subr.mxu0 0.0
    %3584 = vmatpush1.msra.mxu0 0.0
    %3585 = vmatprep.subr.mxu0 0.0
    %3586 = vmatpush1.msra.mxu0 0.0
    %3587 = vmatprep.subr.mxu0 0.0
    %3588 = vmatpush1.msra.mxu0 0.0
    %3589 = vmatprep.subr.mxu0 0.0
    %3590 = vmatpush1.msra.mxu0 0.0
    %3591 = vmatprep.subr.mxu0 0.0
    %3592 = vmatpush1.msra.mxu0 0.0
    %3593 = vmatprep.subr.mxu0 0.0
    %3594 = vmatpush1.msra.mxu0 0.0
    %3595 = vmatprep.subr.mxu0 0.0
    %3596 = vmatpush1.msra.mxu0 0.0
    %3597 = vmatprep.subr.mxu0 0.0
    %3598 = vmatpush1.msra.mxu0 0.0
    %3599 = vmatprep.subr.mxu0 0.0
    %3600 = vmatpush1.msra.mxu0 0.0
    %3601 = vmatprep.subr.mxu0 0.0
    %3602 = vmatpush1.msra.mxu0 0.0
    %3603 = vmatprep.subr.mxu0 0.0
    %3604 = vmatpush1.msra.mxu0 0.0
    %3605 = vmatprep.subr.mxu0 0.0
    %3606 = vmatpush1.msra.mxu0 0.0
    %3607 = vmatprep.subr.mxu0 0.0
    %3608 = vmatpush1.msra.mxu0 0.0
    %3609 = vmatprep.subr.mxu0 0.0
    %3610 = vmatpush1.msra.mxu0 0.0
    %3611 = vmatprep.subr.mxu0 0.0
    %3612 = vmatpush1.msra.mxu0 0.0
    %3613 = vmatprep.subr.mxu0 0.0
    %3614 = vmatpush1.msra.mxu0 0.0
    %3615 = vmatprep.subr.mxu0 0.0
    %3616 = vmatpush1.msra.mxu0 0.0
    %3617 = vmatprep.mubr.f32.mxu0 0.0
    %3618 = vmatmul.mubr.f32.gmra.mrb[0].mxu0 %v3551
    %v3619 = vpop.f32.mrb[0].mxu0
    %v3620 = vadd.f32 0.0, %v3619
    %v3621 = vpop.f32.mrb[0].mxu0
    %3622 = vdwg.mxu0
    %v3623 = vadd.f32 %v3550, %v3620
    %v3624 = vmul.f32 %v3623, 0.5
    %v3625 = vtanh.pop %v3624
    %v3626 = vmul.f32 %v3625, 0.5
    %v3627 = vadd.f32 %v3626, 0.5
    %v3628 = vtanh.pop %v3623
    %v3629 = vmul.f32 %v3627, %v3538
    %3631 = vrot.lane.b32.xlu0 %v3628, 32
    %v3632 = vpop.permute.xlu0 %3631
    %v3634 = vmul.f32 %v3627, %v3632
    %3636 = vrot.lane.b32.xlu0 %v3634, 32
    %v3637 = vpop.permute.xlu0 %3636
    %v3639 = vadd.f32 %v3629, %v3637
    %v3640 = vtanh.pop %v3639
    %3642 = vrot.lane.b32.xlu0 %v3640, 32
    %v3643 = vpop.permute.xlu0 %3642
    %v3645 = vmul.f32 %v3627, %v3643
    %3647 = vrot.lane.b32.xlu0 %v3645, 64
    %v3648 = vpop.permute.xlu0 %3647
    %3650 = vst.msk [vmem:[%s939] sm:$0xff] %vm735, %v3648
    %v3651 = vld [vmem:[%s398] sm:$0xff]
    %v3652 = vsel %vm735, %v3648, 0
    %3654 = vmatprep.subr.mxu0 0.0
    %3655 = vmatpush1.msra.mxu0 %v2809
    %3656 = vmatprep.subr.mxu0 0.0
    %3657 = vmatpush1.msra.mxu0 %v2810
    %3658 = vmatprep.subr.mxu0 0.0
    %3659 = vmatpush1.msra.mxu0 %v2811
    %3660 = vmatprep.subr.mxu0 0.0
    %3661 = vmatpush1.msra.mxu0 %v2812
    %3662 = vmatprep.subr.mxu0 0.0
    %3663 = vmatpush1.msra.mxu0 0.0
    %3664 = vmatprep.subr.mxu0 0.0
    %3665 = vmatpush1.msra.mxu0 0.0
    %3666 = vmatprep.subr.mxu0 0.0
    %3667 = vmatpush1.msra.mxu0 0.0
    %3668 = vmatprep.subr.mxu0 0.0
    %3669 = vmatpush1.msra.mxu0 0.0
    %3670 = vmatprep.subr.mxu0 0.0
    %3671 = vmatpush1.msra.mxu0 0.0
    %3672 = vmatprep.subr.mxu0 0.0
    %3673 = vmatpush1.msra.mxu0 0.0
    %3674 = vmatprep.subr.mxu0 0.0
    %3675 = vmatpush1.msra.mxu0 0.0
    %3676 = vmatprep.subr.mxu0 0.0
    %3677 = vmatpush1.msra.mxu0 0.0
    %3678 = vmatprep.subr.mxu0 0.0
    %3679 = vmatpush1.msra.mxu0 0.0
    %3680 = vmatprep.subr.mxu0 0.0
    %3681 = vmatpush1.msra.mxu0 0.0
    %3682 = vmatprep.subr.mxu0 0.0
    %3683 = vmatpush1.msra.mxu0 0.0
    %3684 = vmatprep.subr.mxu0 0.0
    %3685 = vmatpush1.msra.mxu0 0.0
    %3686 = vmatprep.subr.mxu0 0.0
    %3687 = vmatpush1.msra.mxu0 0.0
    %3688 = vmatprep.subr.mxu0 0.0
    %3689 = vmatpush1.msra.mxu0 0.0
    %3690 = vmatprep.subr.mxu0 0.0
    %3691 = vmatpush1.msra.mxu0 0.0
    %3692 = vmatprep.subr.mxu0 0.0
    %3693 = vmatpush1.msra.mxu0 0.0
    %3694 = vmatprep.subr.mxu0 0.0
    %3695 = vmatpush1.msra.mxu0 0.0
    %3696 = vmatprep.subr.mxu0 0.0
    %3697 = vmatpush1.msra.mxu0 0.0
    %3698 = vmatprep.subr.mxu0 0.0
    %3699 = vmatpush1.msra.mxu0 0.0
    %3700 = vmatprep.subr.mxu0 0.0
    %3701 = vmatpush1.msra.mxu0 0.0
    %3702 = vmatprep.subr.mxu0 0.0
    %3703 = vmatpush1.msra.mxu0 0.0
    %3704 = vmatprep.subr.mxu0 0.0
    %3705 = vmatpush1.msra.mxu0 0.0
    %3706 = vmatprep.subr.mxu0 0.0
    %3707 = vmatpush1.msra.mxu0 0.0
    %3708 = vmatprep.subr.mxu0 0.0
    %3709 = vmatpush1.msra.mxu0 0.0
    %3710 = vmatprep.subr.mxu0 0.0
    %3711 = vmatpush1.msra.mxu0 0.0
    %3712 = vmatprep.subr.mxu0 0.0
    %3713 = vmatpush1.msra.mxu0 0.0
    %3714 = vmatprep.subr.mxu0 0.0
    %3715 = vmatpush1.msra.mxu0 0.0
    %3716 = vmatprep.subr.mxu0 0.0
    %3717 = vmatpush1.msra.mxu0 0.0
    %3718 = vmatprep.mubr.f32.mxu0 0.0
    %3719 = vmatmul.mubr.f32.gmra.mrb[0].mxu0 %v3652
    %v3720 = vpop.f32.mrb[0].mxu0
    %v3721 = vadd.f32 0.0, %v3720
    %v3722 = vpop.f32.mrb[0].mxu0
    %3723 = vdwg.mxu0
    %v3724 = vadd.f32 %v3651, %v3721
    %v3725 = vmul.f32 %v3724, 0.5
    %v3726 = vtanh.pop %v3725
    %v3727 = vmul.f32 %v3726, 0.5
    %v3728 = vadd.f32 %v3727, 0.5
    %v3729 = vtanh.pop %v3724
    %v3730 = vmul.f32 %v3728, %v3639
    %3732 = vrot.lane.b32.xlu0 %v3729, 32
    %v3733 = vpop.permute.xlu0 %3732
    %v3735 = vmul.f32 %v3728, %v3733
    %3737 = vrot.lane.b32.xlu0 %v3735, 32
    %v3738 = vpop.permute.xlu0 %3737
    %v3740 = vadd.f32 %v3730, %v3738
    %v3741 = vtanh.pop %v3740
    %3743 = vrot.lane.b32.xlu0 %v3741, 32
    %v3744 = vpop.permute.xlu0 %3743
    %v3746 = vmul.f32 %v3728, %v3744
    %3748 = vrot.lane.b32.xlu0 %v3746, 64
    %v3749 = vpop.permute.xlu0 %3748
    %3751 = vst.msk [vmem:[%s1041] sm:$0xff] %vm735, %v3749
    %v3752 = vld [vmem:[%s475] sm:$0xff]
    %v3753 = vsel %vm735, %v3749, 0
    %3755 = vmatprep.subr.mxu0 0.0
    %3756 = vmatpush1.msra.mxu0 %v2809
    %3757 = vmatprep.subr.mxu0 0.0
    %3758 = vmatpush1.msra.mxu0 %v2810
    %3759 = vmatprep.subr.mxu0 0.0
    %3760 = vmatpush1.msra.mxu0 %v2811
    %3761 = vmatprep.subr.mxu0 0.0
    %3762 = vmatpush1.msra.mxu0 %v2812
    %3763 = vmatprep.subr.mxu0 0.0
    %3764 = vmatpush1.msra.mxu0 0.0
    %3765 = vmatprep.subr.mxu0 0.0
    %3766 = vmatpush1.msra.mxu0 0.0
    %3767 = vmatprep.subr.mxu0 0.0
    %3768 = vmatpush1.msra.mxu0 0.0
    %3769 = vmatprep.subr.mxu0 0.0
    %3770 = vmatpush1.msra.mxu0 0.0
    %3771 = vmatprep.subr.mxu0 0.0
    %3772 = vmatpush1.msra.mxu0 0.0
    %3773 = vmatprep.subr.mxu0 0.0
    %3774 = vmatpush1.msra.mxu0 0.0
    %3775 = vmatprep.subr.mxu0 0.0
    %3776 = vmatpush1.msra.mxu0 0.0
    %3777 = vmatprep.subr.mxu0 0.0
    %3778 = vmatpush1.msra.mxu0 0.0
    %3779 = vmatprep.subr.mxu0 0.0
    %3780 = vmatpush1.msra.mxu0 0.0
    %3781 = vmatprep.subr.mxu0 0.0
    %3782 = vmatpush1.msra.mxu0 0.0
    %3783 = vmatprep.subr.mxu0 0.0
    %3784 = vmatpush1.msra.mxu0 0.0
    %3785 = vmatprep.subr.mxu0 0.0
    %3786 = vmatpush1.msra.mxu0 0.0
    %3787 = vmatprep.subr.mxu0 0.0
    %3788 = vmatpush1.msra.mxu0 0.0
    %3789 = vmatprep.subr.mxu0 0.0
    %3790 = vmatpush1.msra.mxu0 0.0
    %3791 = vmatprep.subr.mxu0 0.0
    %3792 = vmatpush1.msra.mxu0 0.0
    %3793 = vmatprep.subr.mxu0 0.0
    %3794 = vmatpush1.msra.mxu0 0.0
    %3795 = vmatprep.subr.mxu0 0.0
    %3796 = vmatpush1.msra.mxu0 0.0
    %3797 = vmatprep.subr.mxu0 0.0
    %3798 = vmatpush1.msra.mxu0 0.0
    %3799 = vmatprep.subr.mxu0 0.0
    %3800 = vmatpush1.msra.mxu0 0.0
    %3801 = vmatprep.subr.mxu0 0.0
    %3802 = vmatpush1.msra.mxu0 0.0
    %3803 = vmatprep.subr.mxu0 0.0
    %3804 = vmatpush1.msra.mxu0 0.0
    %3805 = vmatprep.subr.mxu0 0.0
    %3806 = vmatpush1.msra.mxu0 0.0
    %3807 = vmatprep.subr.mxu0 0.0
    %3808 = vmatpush1.msra.mxu0 0.0
    %3809 = vmatprep.subr.mxu0 0.0
    %3810 = vmatpush1.msra.mxu0 0.0
    %3811 = vmatprep.subr.mxu0 0.0
    %3812 = vmatpush1.msra.mxu0 0.0
    %3813 = vmatprep.subr.mxu0 0.0
    %3814 = vmatpush1.msra.mxu0 0.0
    %3815 = vmatprep.subr.mxu0 0.0
    %3816 = vmatpush1.msra.mxu0 0.0
    %3817 = vmatprep.subr.mxu0 0.0
    %3818 = vmatpush1.msra.mxu0 0.0
    %3819 = vmatprep.mubr.f32.mxu0 0.0
    %3820 = vmatmul.mubr.f32.gmra.mrb[0].mxu0 %v3753
    %v3821 = vpop.f32.mrb[0].mxu0
    %v3822 = vadd.f32 0.0, %v3821
    %v3823 = vpop.f32.mrb[0].mxu0
    %3824 = vdwg.mxu0
    %v3825 = vadd.f32 %v3752, %v3822
    %v3826 = vmul.f32 %v3825, 0.5
    %v3827 = vtanh.pop %v3826
    %v3828 = vmul.f32 %v3827, 0.5
    %v3829 = vadd.f32 %v3828, 0.5
    %v3830 = vtanh.pop %v3825
    %v3831 = vmul.f32 %v3829, %v3740
    %3833 = vrot.lane.b32.xlu0 %v3830, 32
    %v3834 = vpop.permute.xlu0 %3833
    %v3836 = vmul.f32 %v3829, %v3834
    %3838 = vrot.lane.b32.xlu0 %v3836, 32
    %v3839 = vpop.permute.xlu0 %3838
    %v3841 = vadd.f32 %v3831, %v3839
    %v3842 = vtanh.pop %v3841
    %3844 = vrot.lane.b32.xlu0 %v3842, 32
    %v3845 = vpop.permute.xlu0 %3844
    %v3847 = vmul.f32 %v3829, %v3845
    %3849 = vrot.lane.b32.xlu0 %v3847, 64
    %v3850 = vpop.permute.xlu0 %3849
    %3852 = vst.msk [vmem:[%s1143] sm:$0xff] %vm735, %v3850
    %v3853 = vld [vmem:[%s552] sm:$0xff]
    %v3854 = vsel %vm735, %v3850, 0
    %3856 = vmatprep.subr.mxu0 0.0
    %3857 = vmatpush1.msra.mxu0 %v2809
    %3858 = vmatprep.subr.mxu0 0.0
    %3859 = vmatpush1.msra.mxu0 %v2810
    %3860 = vmatprep.subr.mxu0 0.0
    %3861 = vmatpush1.msra.mxu0 %v2811
    %3862 = vmatprep.subr.mxu0 0.0
    %3863 = vmatpush1.msra.mxu0 %v2812
    %3864 = vmatprep.subr.mxu0 0.0
    %3865 = vmatpush1.msra.mxu0 0.0
    %3866 = vmatprep.subr.mxu0 0.0
    %3867 = vmatpush1.msra.mxu0 0.0
    %3868 = vmatprep.subr.mxu0 0.0
    %3869 = vmatpush1.msra.mxu0 0.0
    %3870 = vmatprep.subr.mxu0 0.0
    %3871 = vmatpush1.msra.mxu0 0.0
    %3872 = vmatprep.subr.mxu0 0.0
    %3873 = vmatpush1.msra.mxu0 0.0
    %3874 = vmatprep.subr.mxu0 0.0
    %3875 = vmatpush1.msra.mxu0 0.0
    %3876 = vmatprep.subr.mxu0 0.0
    %3877 = vmatpush1.msra.mxu0 0.0
    %3878 = vmatprep.subr.mxu0 0.0
    %3879 = vmatpush1.msra.mxu0 0.0
    %3880 = vmatprep.subr.mxu0 0.0
    %3881 = vmatpush1.msra.mxu0 0.0
    %3882 = vmatprep.subr.mxu0 0.0
    %3883 = vmatpush1.msra.mxu0 0.0
    %3884 = vmatprep.subr.mxu0 0.0
    %3885 = vmatpush1.msra.mxu0 0.0
    %3886 = vmatprep.subr.mxu0 0.0
    %3887 = vmatpush1.msra.mxu0 0.0
    %3888 = vmatprep.subr.mxu0 0.0
    %3889 = vmatpush1.msra.mxu0 0.0
    %3890 = vmatprep.subr.mxu0 0.0
    %3891 = vmatpush1.msra.mxu0 0.0
    %3892 = vmatprep.subr.mxu0 0.0
    %3893 = vmatpush1.msra.mxu0 0.0
    %3894 = vmatprep.subr.mxu0 0.0
    %3895 = vmatpush1.msra.mxu0 0.0
    %3896 = vmatprep.subr.mxu0 0.0
    %3897 = vmatpush1.msra.mxu0 0.0
    %3898 = vmatprep.subr.mxu0 0.0
    %3899 = vmatpush1.msra.mxu0 0.0
    %3900 = vmatprep.subr.mxu0 0.0
    %3901 = vmatpush1.msra.mxu0 0.0
    %3902 = vmatprep.subr.mxu0 0.0
    %3903 = vmatpush1.msra.mxu0 0.0
    %3904 = vmatprep.subr.mxu0 0.0
    %3905 = vmatpush1.msra.mxu0 0.0
    %3906 = vmatprep.subr.mxu0 0.0
    %3907 = vmatpush1.msra.mxu0 0.0
    %3908 = vmatprep.subr.mxu0 0.0
    %3909 = vmatpush1.msra.mxu0 0.0
    %3910 = vmatprep.subr.mxu0 0.0
    %3911 = vmatpush1.msra.mxu0 0.0
    %3912 = vmatprep.subr.mxu0 0.0
    %3913 = vmatpush1.msra.mxu0 0.0
    %3914 = vmatprep.subr.mxu0 0.0
    %3915 = vmatpush1.msra.mxu0 0.0
    %3916 = vmatprep.subr.mxu0 0.0
    %3917 = vmatpush1.msra.mxu0 0.0
    %3918 = vmatprep.subr.mxu0 0.0
    %3919 = vmatpush1.msra.mxu0 0.0
    %3920 = vmatprep.mubr.f32.mxu0 0.0
    %3921 = vmatmul.mubr.f32.gmra.mrb[0].mxu0 %v3854
    %v3922 = vpop.f32.mrb[0].mxu0
    %v3923 = vadd.f32 0.0, %v3922
    %v3924 = vpop.f32.mrb[0].mxu0
    %3925 = vdwg.mxu0
    %v3926 = vadd.f32 %v3853, %v3923
    %v3927 = vmul.f32 %v3926, 0.5
    %v3928 = vtanh.pop %v3927
    %v3929 = vmul.f32 %v3928, 0.5
    %v3930 = vadd.f32 %v3929, 0.5
    %v3931 = vtanh.pop %v3926
    %v3932 = vmul.f32 %v3930, %v3841
    %3934 = vrot.lane.b32.xlu0 %v3931, 32
    %v3935 = vpop.permute.xlu0 %3934
    %v3937 = vmul.f32 %v3930, %v3935
    %3939 = vrot.lane.b32.xlu0 %v3937, 32
    %v3940 = vpop.permute.xlu0 %3939
    %v3942 = vadd.f32 %v3932, %v3940
    %v3943 = vtanh.pop %v3942
    %3945 = vrot.lane.b32.xlu0 %v3943, 32
    %v3946 = vpop.permute.xlu0 %3945
    %v3948 = vmul.f32 %v3930, %v3946
    %3950 = vrot.lane.b32.xlu0 %v3948, 64
    %v3951 = vpop.permute.xlu0 %3950
    %3953 = vst.msk [vmem:[%s1245] sm:$0xff] %vm735, %v3951
    %v3954 = vld [vmem:[%s629] sm:$0xff]
    %v3955 = vsel %vm735, %v3951, 0
    %3957 = vmatprep.subr.mxu0 0.0
    %3958 = vmatpush1.msra.mxu0 %v2809
    %3959 = vmatprep.subr.mxu0 0.0
    %3960 = vmatpush1.msra.mxu0 %v2810
    %3961 = vmatprep.subr.mxu0 0.0
    %3962 = vmatpush1.msra.mxu0 %v2811
    %3963 = vmatprep.subr.mxu0 0.0
    %3964 = vmatpush1.msra.mxu0 %v2812
    %3965 = vmatprep.subr.mxu0 0.0
    %3966 = vmatpush1.msra.mxu0 0.0
    %3967 = vmatprep.subr.mxu0 0.0
    %3968 = vmatpush1.msra.mxu0 0.0
    %3969 = vmatprep.subr.mxu0 0.0
    %3970 = vmatpush1.msra.mxu0 0.0
    %3971 = vmatprep.subr.mxu0 0.0
    %3972 = vmatpush1.msra.mxu0 0.0
    %3973 = vmatprep.subr.mxu0 0.0
    %3974 = vmatpush1.msra.mxu0 0.0
    %3975 = vmatprep.subr.mxu0 0.0
    %3976 = vmatpush1.msra.mxu0 0.0
    %3977 = vmatprep.subr.mxu0 0.0
    %3978 = vmatpush1.msra.mxu0 0.0
    %3979 = vmatprep.subr.mxu0 0.0
    %3980 = vmatpush1.msra.mxu0 0.0
    %3981 = vmatprep.subr.mxu0 0.0
    %3982 = vmatpush1.msra.mxu0 0.0
    %3983 = vmatprep.subr.mxu0 0.0
    %3984 = vmatpush1.msra.mxu0 0.0
    %3985 = vmatprep.subr.mxu0 0.0
    %3986 = vmatpush1.msra.mxu0 0.0
    %3987 = vmatprep.subr.mxu0 0.0
    %3988 = vmatpush1.msra.mxu0 0.0
    %3989 = vmatprep.subr.mxu0 0.0
    %3990 = vmatpush1.msra.mxu0 0.0
    %3991 = vmatprep.subr.mxu0 0.0
    %3992 = vmatpush1.msra.mxu0 0.0
    %3993 = vmatprep.subr.mxu0 0.0
    %3994 = vmatpush1.msra.mxu0 0.0
    %3995 = vmatprep.subr.mxu0 0.0
    %3996 = vmatpush1.msra.mxu0 0.0
    %3997 = vmatprep.subr.mxu0 0.0
    %3998 = vmatpush1.msra.mxu0 0.0
    %3999 = vmatprep.subr.mxu0 0.0
    %4000 = vmatpush1.msra.mxu0 0.0
    %4001 = vmatprep.subr.mxu0 0.0
    %4002 = vmatpush1.msra.mxu0 0.0
    %4003 = vmatprep.subr.mxu0 0.0
    %4004 = vmatpush1.msra.mxu0 0.0
    %4005 = vmatprep.subr.mxu0 0.0
    %4006 = vmatpush1.msra.mxu0 0.0
    %4007 = vmatprep.subr.mxu0 0.0
    %4008 = vmatpush1.msra.mxu0 0.0
    %4009 = vmatprep.subr.mxu0 0.0
    %4010 = vmatpush1.msra.mxu0 0.0
    %4011 = vmatprep.subr.mxu0 0.0
    %4012 = vmatpush1.msra.mxu0 0.0
    %4013 = vmatprep.subr.mxu0 0.0
    %4014 = vmatpush1.msra.mxu0 0.0
    %4015 = vmatprep.subr.mxu0 0.0
    %4016 = vmatpush1.msra.mxu0 0.0
    %4017 = vmatprep.subr.mxu0 0.0
    %4018 = vmatpush1.msra.mxu0 0.0
    %4019 = vmatprep.subr.mxu0 0.0
    %4020 = vmatpush1.msra.mxu0 0.0
    %4021 = vmatprep.mubr.f32.mxu0 0.0
    %4022 = vmatmul.mubr.f32.gmra.mrb[0].mxu0 %v3955
    %v4023 = vpop.f32.mrb[0].mxu0
    %v4024 = vadd.f32 0.0, %v4023
    %v4025 = vpop.f32.mrb[0].mxu0
    %4026 = vdwg.mxu0
    %v4027 = vadd.f32 %v3954, %v4024
    %v4028 = vmul.f32 %v4027, 0.5
    %v4029 = vtanh.pop %v4028
    %v4030 = vmul.f32 %v4029, 0.5
    %v4031 = vadd.f32 %v4030, 0.5
    %v4032 = vtanh.pop %v4027
    %v4033 = vmul.f32 %v4031, %v3942
    %4035 = vrot.lane.b32.xlu0 %v4032, 32
    %v4036 = vpop.permute.xlu0 %4035
    %v4038 = vmul.f32 %v4031, %v4036
    %4040 = vrot.lane.b32.xlu0 %v4038, 32
    %v4041 = vpop.permute.xlu0 %4040
    %v4043 = vadd.f32 %v4033, %v4041
    %v4044 = vtanh.pop %v4043
    %4046 = vrot.lane.b32.xlu0 %v4044, 32
    %v4047 = vpop.permute.xlu0 %4046
    %v4049 = vmul.f32 %v4031, %v4047
    %4051 = vrot.lane.b32.xlu0 %v4049, 64
    %v4052 = vpop.permute.xlu0 %4051
    %4054 = vst.msk [vmem:[%s1347] sm:$0xff] %vm735, %v4052
    %v4055 = vld [vmem:[%s706] sm:$0xff]
    %v4056 = vsel %vm735, %v4052, 0
    %4058 = vmatprep.subr.mxu0 0.0
    %4059 = vmatpush1.msra.mxu0 %v2809
    %4060 = vmatprep.subr.mxu0 0.0
    %4061 = vmatpush1.msra.mxu0 %v2810
    %4062 = vmatprep.subr.mxu0 0.0
    %4063 = vmatpush1.msra.mxu0 %v2811
    %4064 = vmatprep.subr.mxu0 0.0
    %4065 = vmatpush1.msra.mxu0 %v2812
    %4066 = vmatprep.subr.mxu0 0.0
    %4067 = vmatpush1.msra.mxu0 0.0
    %4068 = vmatprep.subr.mxu0 0.0
    %4069 = vmatpush1.msra.mxu0 0.0
    %4070 = vmatprep.subr.mxu0 0.0
    %4071 = vmatpush1.msra.mxu0 0.0
    %4072 = vmatprep.subr.mxu0 0.0
    %4073 = vmatpush1.msra.mxu0 0.0
    %4074 = vmatprep.subr.mxu0 0.0
    %4075 = vmatpush1.msra.mxu0 0.0
    %4076 = vmatprep.subr.mxu0 0.0
    %4077 = vmatpush1.msra.mxu0 0.0
    %4078 = vmatprep.subr.mxu0 0.0
    %4079 = vmatpush1.msra.mxu0 0.0
    %4080 = vmatprep.subr.mxu0 0.0
    %4081 = vmatpush1.msra.mxu0 0.0
    %4082 = vmatprep.subr.mxu0 0.0
    %4083 = vmatpush1.msra.mxu0 0.0
    %4084 = vmatprep.subr.mxu0 0.0
    %4085 = vmatpush1.msra.mxu0 0.0
    %4086 = vmatprep.subr.mxu0 0.0
    %4087 = vmatpush1.msra.mxu0 0.0
    %4088 = vmatprep.subr.mxu0 0.0
    %4089 = vmatpush1.msra.mxu0 0.0
    %4090 = vmatprep.subr.mxu0 0.0
    %4091 = vmatpush1.msra.mxu0 0.0
    %4092 = vmatprep.subr.mxu0 0.0
    %4093 = vmatpush1.msra.mxu0 0.0
    %4094 = vmatprep.subr.mxu0 0.0
    %4095 = vmatpush1.msra.mxu0 0.0
    %4096 = vmatprep.subr.mxu0 0.0
    %4097 = vmatpush1.msra.mxu0 0.0
    %4098 = vmatprep.subr.mxu0 0.0
    %4099 = vmatpush1.msra.mxu0 0.0
    %4100 = vmatprep.subr.mxu0 0.0
    %4101 = vmatpush1.msra.mxu0 0.0
    %4102 = vmatprep.subr.mxu0 0.0
    %4103 = vmatpush1.msra.mxu0 0.0
    %4104 = vmatprep.subr.mxu0 0.0
    %4105 = vmatpush1.msra.mxu0 0.0
    %4106 = vmatprep.subr.mxu0 0.0
    %4107 = vmatpush1.msra.mxu0 0.0
    %4108 = vmatprep.subr.mxu0 0.0
    %4109 = vmatpush1.msra.mxu0 0.0
    %4110 = vmatprep.subr.mxu0 0.0
    %4111 = vmatpush1.msra.mxu0 0.0
    %4112 = vmatprep.subr.mxu0 0.0
    %4113 = vmatpush1.msra.mxu0 0.0
    %4114 = vmatprep.subr.mxu0 0.0
    %4115 = vmatpush1.msra.mxu0 0.0
    %4116 = vmatprep.subr.mxu0 0.0
    %4117 = vmatpush1.msra.mxu0 0.0
    %4118 = vmatprep.subr.mxu0 0.0
    %4119 = vmatpush1.msra.mxu0 0.0
    %4120 = vmatprep.subr.mxu0 0.0
    %4121 = vmatpush1.msra.mxu0 0.0
    %4122 = vmatprep.mubr.f32.mxu0 0.0
    %4123 = vmatmul.mubr.f32.gmra.mrb[0].mxu0 %v4056
    %v4124 = vpop.f32.mrb[0].mxu0
    %v4125 = vadd.f32 0.0, %v4124
    %v4126 = vpop.f32.mrb[0].mxu0
    %4127 = vdwg.mxu0
    %v4128 = vadd.f32 %v4055, %v4125
    %v4129 = vmul.f32 %v4128, 0.5
    %v4130 = vtanh.pop %v4129
    %v4131 = vmul.f32 %v4130, 0.5
    %v4132 = vadd.f32 %v4131, 0.5
    %v4133 = vtanh.pop %v4128
    %v4134 = vmul.f32 %v4132, %v4043
    %4136 = vrot.lane.b32.xlu0 %v4133, 32
    %v4137 = vpop.permute.xlu0 %4136
    %v4139 = vmul.f32 %v4132, %v4137
    %4141 = vrot.lane.b32.xlu0 %v4139, 32
    %v4142 = vpop.permute.xlu0 %4141
    %v4144 = vadd.f32 %v4134, %v4142
    %v4145 = vtanh.pop %v4144
    %4147 = vrot.lane.b32.xlu0 %v4145, 32
    %v4148 = vpop.permute.xlu0 %4147
    %v4150 = vmul.f32 %v4132, %v4148
    %4152 = vrot.lane.b32.xlu0 %v4150, 64
    %v4153 = vpop.permute.xlu0 %4152
    %4155 = vst.msk [vmem:[%s1449] sm:$0xff] %vm735, %v4153
    %s4156 = scalar_lea.vmem [#allocation9], 64
    %v4157 = vld [vmem:[%s4156] sm:$0xff]
    %v4158 = vld [vmem:[%s4156 + $0x8] sm:$0xff]
    %v4159 = vld [vmem:[%s4156 + $0x10] sm:$0xff]
    %v4160 = vld [vmem:[%s4156 + $0x18] sm:$0xff]
    %s4161 = scalar_lea.vmem [#allocation10], 96
    %v4162 = vld [vmem:[%s4161] sm:$0xff]
    %v4163 = vld [vmem:[%s4161 + $0x8] sm:$0xff]
    %v4164 = vld [vmem:[%s4161 + $0x10] sm:$0xff]
    %v4165 = vld [vmem:[%s4161 + $0x18] sm:$0xff]
    %s4166 = scalar_lea.vmem %s4, 3
    %v4167 = vld [vmem:[%s4166] sm:$0x1]
    %v4169 = vlaneseq
    %v4170 = vshrl.u32 %v4169, 7
    %v4171 = vsub.s32 0, %v4170
    %v4172 = vrot.slane %v4167, %v4171
    %v4174 = vld [vmem:[#allocation2] sm:$0xff]
    %v4176 = vsel %vm735, %v4174, 0
    %4178 = vmatprep.subr.mxu0 0.0
    %4179 = vmatpush1.msra.mxu0 %v4157
    %4180 = vmatprep.subr.mxu0 0.0
    %4181 = vmatpush1.msra.mxu0 %v4158
    %4182 = vmatprep.subr.mxu0 0.0
    %4183 = vmatpush1.msra.mxu0 %v4159
    %4184 = vmatprep.subr.mxu0 0.0
    %4185 = vmatpush1.msra.mxu0 %v4160
    %4186 = vmatprep.subr.mxu0 0.0
    %4187 = vmatpush1.msra.mxu0 0.0
    %4188 = vmatprep.subr.mxu0 0.0
    %4189 = vmatpush1.msra.mxu0 0.0
    %4190 = vmatprep.subr.mxu0 0.0
    %4191 = vmatpush1.msra.mxu0 0.0
    %4192 = vmatprep.subr.mxu0 0.0
    %4193 = vmatpush1.msra.mxu0 0.0
    %4194 = vmatprep.subr.mxu0 0.0
    %4195 = vmatpush1.msra.mxu0 0.0
    %4196 = vmatprep.subr.mxu0 0.0
    %4197 = vmatpush1.msra.mxu0 0.0
    %4198 = vmatprep.subr.mxu0 0.0
    %4199 = vmatpush1.msra.mxu0 0.0
    %4200 = vmatprep.subr.mxu0 0.0
    %4201 = vmatpush1.msra.mxu0 0.0
    %4202 = vmatprep.subr.mxu0 0.0
    %4203 = vmatpush1.msra.mxu0 0.0
    %4204 = vmatprep.subr.mxu0 0.0
    %4205 = vmatpush1.msra.mxu0 0.0
    %4206 = vmatprep.subr.mxu0 0.0
    %4207 = vmatpush1.msra.mxu0 0.0
    %4208 = vmatprep.subr.mxu0 0.0
    %4209 = vmatpush1.msra.mxu0 0.0
    %4210 = vmatprep.subr.mxu0 0.0
    %4211 = vmatpush1.msra.mxu0 0.0
    %4212 = vmatprep.subr.mxu0 0.0
    %4213 = vmatpush1.msra.mxu0 0.0
    %4214 = vmatprep.subr.mxu0 0.0
    %4215 = vmatpush1.msra.mxu0 0.0
    %4216 = vmatprep.subr.mxu0 0.0
    %4217 = vmatpush1.msra.mxu0 0.0
    %4218 = vmatprep.subr.mxu0 0.0
    %4219 = vmatpush1.msra.mxu0 0.0
    %4220 = vmatprep.subr.mxu0 0.0
    %4221 = vmatpush1.msra.mxu0 0.0
    %4222 = vmatprep.subr.mxu0 0.0
    %4223 = vmatpush1.msra.mxu0 0.0
    %4224 = vmatprep.subr.mxu0 0.0
    %4225 = vmatpush1.msra.mxu0 0.0
    %4226 = vmatprep.subr.mxu0 0.0
    %4227 = vmatpush1.msra.mxu0 0.0
    %4228 = vmatprep.subr.mxu0 0.0
    %4229 = vmatpush1.msra.mxu0 0.0
    %4230 = vmatprep.subr.mxu0 0.0
    %4231 = vmatpush1.msra.mxu0 0.0
    %4232 = vmatprep.subr.mxu0 0.0
    %4233 = vmatpush1.msra.mxu0 0.0
    %4234 = vmatprep.subr.mxu0 0.0
    %4235 = vmatpush1.msra.mxu0 0.0
    %4236 = vmatprep.subr.mxu0 0.0
    %4237 = vmatpush1.msra.mxu0 0.0
    %4238 = vmatprep.subr.mxu0 0.0
    %4239 = vmatpush1.msra.mxu0 0.0
    %4240 = vmatprep.subr.mxu0 0.0
    %4241 = vmatpush1.msra.mxu0 0.0
    %4242 = vmatprep.mubr.f32.mxu0 0.0
    %4243 = vmatmul.mubr.f32.gmra.mrb[0].mxu0 %v4176
    %v4244 = vpop.f32.mrb[0].mxu0
    %v4245 = vadd.f32 %v4172, %v4244
    %v4246 = vpop.f32.mrb[0].mxu0
    %4247 = vdwg.mxu0
    %4248 = vst [vmem:[#allocation3] sm:$0xff] %v4245
    %v4249 = vld [vmem:[%s837] sm:$0xff]
    %v4251 = vsel %vm735, %v4249, 0
    %4253 = vmatprep.subr.mxu0 0.0
    %4254 = vmatpush1.msra.mxu0 %v4157
    %4255 = vmatprep.subr.mxu0 0.0
    %4256 = vmatpush1.msra.mxu0 %v4158
    %4257 = vmatprep.subr.mxu0 0.0
    %4258 = vmatpush1.msra.mxu0 %v4159
    %4259 = vmatprep.subr.mxu0 0.0
    %4260 = vmatpush1.msra.mxu0 %v4160
    %4261 = vmatprep.subr.mxu0 0.0
    %4262 = vmatpush1.msra.mxu0 0.0
    %4263 = vmatprep.subr.mxu0 0.0
    %4264 = vmatpush1.msra.mxu0 0.0
    %4265 = vmatprep.subr.mxu0 0.0
    %4266 = vmatpush1.msra.mxu0 0.0
    %4267 = vmatprep.subr.mxu0 0.0
    %4268 = vmatpush1.msra.mxu0 0.0
    %4269 = vmatprep.subr.mxu0 0.0
    %4270 = vmatpush1.msra.mxu0 0.0
    %4271 = vmatprep.subr.mxu0 0.0
    %4272 = vmatpush1.msra.mxu0 0.0
    %4273 = vmatprep.subr.mxu0 0.0
    %4274 = vmatpush1.msra.mxu0 0.0
    %4275 = vmatprep.subr.mxu0 0.0
    %4276 = vmatpush1.msra.mxu0 0.0
    %4277 = vmatprep.subr.mxu0 0.0
    %4278 = vmatpush1.msra.mxu0 0.0
    %4279 = vmatprep.subr.mxu0 0.0
    %4280 = vmatpush1.msra.mxu0 0.0
    %4281 = vmatprep.subr.mxu0 0.0
    %4282 = vmatpush1.msra.mxu0 0.0
    %4283 = vmatprep.subr.mxu0 0.0
    %4284 = vmatpush1.msra.mxu0 0.0
    %4285 = vmatprep.subr.mxu0 0.0
    %4286 = vmatpush1.msra.mxu0 0.0
    %4287 = vmatprep.subr.mxu0 0.0
    %4288 = vmatpush1.msra.mxu0 0.0
    %4289 = vmatprep.subr.mxu0 0.0
    %4290 = vmatpush1.msra.mxu0 0.0
    %4291 = vmatprep.subr.mxu0 0.0
    %4292 = vmatpush1.msra.mxu0 0.0
    %4293 = vmatprep.subr.mxu0 0.0
    %4294 = vmatpush1.msra.mxu0 0.0
    %4295 = vmatprep.subr.mxu0 0.0
    %4296 = vmatpush1.msra.mxu0 0.0
    %4297 = vmatprep.subr.mxu0 0.0
    %4298 = vmatpush1.msra.mxu0 0.0
    %4299 = vmatprep.subr.mxu0 0.0
    %4300 = vmatpush1.msra.mxu0 0.0
    %4301 = vmatprep.subr.mxu0 0.0
    %4302 = vmatpush1.msra.mxu0 0.0
    %4303 = vmatprep.subr.mxu0 0.0
    %4304 = vmatpush1.msra.mxu0 0.0
    %4305 = vmatprep.subr.mxu0 0.0
    %4306 = vmatpush1.msra.mxu0 0.0
    %4307 = vmatprep.subr.mxu0 0.0
    %4308 = vmatpush1.msra.mxu0 0.0
    %4309 = vmatprep.subr.mxu0 0.0
    %4310 = vmatpush1.msra.mxu0 0.0
    %4311 = vmatprep.subr.mxu0 0.0
    %4312 = vmatpush1.msra.mxu0 0.0
    %4313 = vmatprep.subr.mxu0 0.0
    %4314 = vmatpush1.msra.mxu0 0.0
    %4315 = vmatprep.subr.mxu0 0.0
    %4316 = vmatpush1.msra.mxu0 0.0
    %4317 = vmatprep.mubr.f32.mxu0 0.0
    %4318 = vmatmul.mubr.f32.gmra.mrb[0].mxu0 %v4251
    %v4319 = vpop.f32.mrb[0].mxu0
    %v4320 = vadd.f32 %v4172, %v4319
    %v4321 = vpop.f32.mrb[0].mxu0
    %4322 = vdwg.mxu0
    %4323 = vst [vmem:[%s244] sm:$0xff] %v4320
    %v4324 = vld [vmem:[%s939] sm:$0xff]
    %v4326 = vsel %vm735, %v4324, 0
    %4328 = vmatprep.subr.mxu0 0.0
    %4329 = vmatpush1.msra.mxu0 %v4157
    %4330 = vmatprep.subr.mxu0 0.0
    %4331 = vmatpush1.msra.mxu0 %v4158
    %4332 = vmatprep.subr.mxu0 0.0
    %4333 = vmatpush1.msra.mxu0 %v4159
    %4334 = vmatprep.subr.mxu0 0.0
    %4335 = vmatpush1.msra.mxu0 %v4160
    %4336 = vmatprep.subr.mxu0 0.0
    %4337 = vmatpush1.msra.mxu0 0.0
    %4338 = vmatprep.subr.mxu0 0.0
    %4339 = vmatpush1.msra.mxu0 0.0
    %4340 = vmatprep.subr.mxu0 0.0
    %4341 = vmatpush1.msra.mxu0 0.0
    %4342 = vmatprep.subr.mxu0 0.0
    %4343 = vmatpush1.msra.mxu0 0.0
    %4344 = vmatprep.subr.mxu0 0.0
    %4345 = vmatpush1.msra.mxu0 0.0
    %4346 = vmatprep.subr.mxu0 0.0
    %4347 = vmatpush1.msra.mxu0 0.0
    %4348 = vmatprep.subr.mxu0 0.0
    %4349 = vmatpush1.msra.mxu0 0.0
    %4350 = vmatprep.subr.mxu0 0.0
    %4351 = vmatpush1.msra.mxu0 0.0
    %4352 = vmatprep.subr.mxu0 0.0
    %4353 = vmatpush1.msra.mxu0 0.0
    %4354 = vmatprep.subr.mxu0 0.0
    %4355 = vmatpush1.msra.mxu0 0.0
    %4356 = vmatprep.subr.mxu0 0.0
    %4357 = vmatpush1.msra.mxu0 0.0
    %4358 = vmatprep.subr.mxu0 0.0
    %4359 = vmatpush1.msra.mxu0 0.0
    %4360 = vmatprep.subr.mxu0 0.0
    %4361 = vmatpush1.msra.mxu0 0.0
    %4362 = vmatprep.subr.mxu0 0.0
    %4363 = vmatpush1.msra.mxu0 0.0
    %4364 = vmatprep.subr.mxu0 0.0
    %4365 = vmatpush1.msra.mxu0 0.0
    %4366 = vmatprep.subr.mxu0 0.0
    %4367 = vmatpush1.msra.mxu0 0.0
    %4368 = vmatprep.subr.mxu0 0.0
    %4369 = vmatpush1.msra.mxu0 0.0
    %4370 = vmatprep.subr.mxu0 0.0
    %4371 = vmatpush1.msra.mxu0 0.0
    %4372 = vmatprep.subr.mxu0 0.0
    %4373 = vmatpush1.msra.mxu0 0.0
    %4374 = vmatprep.subr.mxu0 0.0
    %4375 = vmatpush1.msra.mxu0 0.0
    %4376 = vmatprep.subr.mxu0 0.0
    %4377 = vmatpush1.msra.mxu0 0.0
    %4378 = vmatprep.subr.mxu0 0.0
    %4379 = vmatpush1.msra.mxu0 0.0
    %4380 = vmatprep.subr.mxu0 0.0
    %4381 = vmatpush1.msra.mxu0 0.0
    %4382 = vmatprep.subr.mxu0 0.0
    %4383 = vmatpush1.msra.mxu0 0.0
    %4384 = vmatprep.subr.mxu0 0.0
    %4385 = vmatpush1.msra.mxu0 0.0
    %4386 = vmatprep.subr.mxu0 0.0
    %4387 = vmatpush1.msra.mxu0 0.0
    %4388 = vmatprep.subr.mxu0 0.0
    %4389 = vmatpush1.msra.mxu0 0.0
    %4390 = vmatprep.subr.mxu0 0.0
    %4391 = vmatpush1.msra.mxu0 0.0
    %4392 = vmatprep.mubr.f32.mxu0 0.0
    %4393 = vmatmul.mubr.f32.gmra.mrb[0].mxu0 %v4326
    %v4394 = vpop.f32.mrb[0].mxu0
    %v4395 = vadd.f32 %v4172, %v4394
    %v4396 = vpop.f32.mrb[0].mxu0
    %4397 = vdwg.mxu0
    %4398 = vst [vmem:[%s321] sm:$0xff] %v4395
    %v4399 = vld [vmem:[%s1041] sm:$0xff]
    %v4401 = vsel %vm735, %v4399, 0
    %4403 = vmatprep.subr.mxu0 0.0
    %4404 = vmatpush1.msra.mxu0 %v4157
    %4405 = vmatprep.subr.mxu0 0.0
    %4406 = vmatpush1.msra.mxu0 %v4158
    %4407 = vmatprep.subr.mxu0 0.0
    %4408 = vmatpush1.msra.mxu0 %v4159
    %4409 = vmatprep.subr.mxu0 0.0
    %4410 = vmatpush1.msra.mxu0 %v4160
    %4411 = vmatprep.subr.mxu0 0.0
    %4412 = vmatpush1.msra.mxu0 0.0
    %4413 = vmatprep.subr.mxu0 0.0
    %4414 = vmatpush1.msra.mxu0 0.0
    %4415 = vmatprep.subr.mxu0 0.0
    %4416 = vmatpush1.msra.mxu0 0.0
    %4417 = vmatprep.subr.mxu0 0.0
    %4418 = vmatpush1.msra.mxu0 0.0
    %4419 = vmatprep.subr.mxu0 0.0
    %4420 = vmatpush1.msra.mxu0 0.0
    %4421 = vmatprep.subr.mxu0 0.0
    %4422 = vmatpush1.msra.mxu0 0.0
    %4423 = vmatprep.subr.mxu0 0.0
    %4424 = vmatpush1.msra.mxu0 0.0
    %4425 = vmatprep.subr.mxu0 0.0
    %4426 = vmatpush1.msra.mxu0 0.0
    %4427 = vmatprep.subr.mxu0 0.0
    %4428 = vmatpush1.msra.mxu0 0.0
    %4429 = vmatprep.subr.mxu0 0.0
    %4430 = vmatpush1.msra.mxu0 0.0
    %4431 = vmatprep.subr.mxu0 0.0
    %4432 = vmatpush1.msra.mxu0 0.0
    %4433 = vmatprep.subr.mxu0 0.0
    %4434 = vmatpush1.msra.mxu0 0.0
    %4435 = vmatprep.subr.mxu0 0.0
    %4436 = vmatpush1.msra.mxu0 0.0
    %4437 = vmatprep.subr.mxu0 0.0
    %4438 = vmatpush1.msra.mxu0 0.0
    %4439 = vmatprep.subr.mxu0 0.0
    %4440 = vmatpush1.msra.mxu0 0.0
    %4441 = vmatprep.subr.mxu0 0.0
    %4442 = vmatpush1.msra.mxu0 0.0
    %4443 = vmatprep.subr.mxu0 0.0
    %4444 = vmatpush1.msra.mxu0 0.0
    %4445 = vmatprep.subr.mxu0 0.0
    %4446 = vmatpush1.msra.mxu0 0.0
    %4447 = vmatprep.subr.mxu0 0.0
    %4448 = vmatpush1.msra.mxu0 0.0
    %4449 = vmatprep.subr.mxu0 0.0
    %4450 = vmatpush1.msra.mxu0 0.0
    %4451 = vmatprep.subr.mxu0 0.0
    %4452 = vmatpush1.msra.mxu0 0.0
    %4453 = vmatprep.subr.mxu0 0.0
    %4454 = vmatpush1.msra.mxu0 0.0
    %4455 = vmatprep.subr.mxu0 0.0
    %4456 = vmatpush1.msra.mxu0 0.0
    %4457 = vmatprep.subr.mxu0 0.0
    %4458 = vmatpush1.msra.mxu0 0.0
    %4459 = vmatprep.subr.mxu0 0.0
    %4460 = vmatpush1.msra.mxu0 0.0
    %4461 = vmatprep.subr.mxu0 0.0
    %4462 = vmatpush1.msra.mxu0 0.0
    %4463 = vmatprep.subr.mxu0 0.0
    %4464 = vmatpush1.msra.mxu0 0.0
    %4465 = vmatprep.subr.mxu0 0.0
    %4466 = vmatpush1.msra.mxu0 0.0
    %4467 = vmatprep.mubr.f32.mxu0 0.0
    %4468 = vmatmul.mubr.f32.gmra.mrb[0].mxu0 %v4401
    %v4469 = vpop.f32.mrb[0].mxu0
    %v4470 = vadd.f32 %v4172, %v4469
    %v4471 = vpop.f32.mrb[0].mxu0
    %4472 = vdwg.mxu0
    %4473 = vst [vmem:[%s398] sm:$0xff] %v4470
    %v4474 = vld [vmem:[%s1143] sm:$0xff]
    %v4476 = vsel %vm735, %v4474, 0
    %4478 = vmatprep.subr.mxu0 0.0
    %4479 = vmatpush1.msra.mxu0 %v4157
    %4480 = vmatprep.subr.mxu0 0.0
    %4481 = vmatpush1.msra.mxu0 %v4158
    %4482 = vmatprep.subr.mxu0 0.0
    %4483 = vmatpush1.msra.mxu0 %v4159
    %4484 = vmatprep.subr.mxu0 0.0
    %4485 = vmatpush1.msra.mxu0 %v4160
    %4486 = vmatprep.subr.mxu0 0.0
    %4487 = vmatpush1.msra.mxu0 0.0
    %4488 = vmatprep.subr.mxu0 0.0
    %4489 = vmatpush1.msra.mxu0 0.0
    %4490 = vmatprep.subr.mxu0 0.0
    %4491 = vmatpush1.msra.mxu0 0.0
    %4492 = vmatprep.subr.mxu0 0.0
    %4493 = vmatpush1.msra.mxu0 0.0
    %4494 = vmatprep.subr.mxu0 0.0
    %4495 = vmatpush1.msra.mxu0 0.0
    %4496 = vmatprep.subr.mxu0 0.0
    %4497 = vmatpush1.msra.mxu0 0.0
    %4498 = vmatprep.subr.mxu0 0.0
    %4499 = vmatpush1.msra.mxu0 0.0
    %4500 = vmatprep.subr.mxu0 0.0
    %4501 = vmatpush1.msra.mxu0 0.0
    %4502 = vmatprep.subr.mxu0 0.0
    %4503 = vmatpush1.msra.mxu0 0.0
    %4504 = vmatprep.subr.mxu0 0.0
    %4505 = vmatpush1.msra.mxu0 0.0
    %4506 = vmatprep.subr.mxu0 0.0
    %4507 = vmatpush1.msra.mxu0 0.0
    %4508 = vmatprep.subr.mxu0 0.0
    %4509 = vmatpush1.msra.mxu0 0.0
    %4510 = vmatprep.subr.mxu0 0.0
    %4511 = vmatpush1.msra.mxu0 0.0
    %4512 = vmatprep.subr.mxu0 0.0
    %4513 = vmatpush1.msra.mxu0 0.0
    %4514 = vmatprep.subr.mxu0 0.0
    %4515 = vmatpush1.msra.mxu0 0.0
    %4516 = vmatprep.subr.mxu0 0.0
    %4517 = vmatpush1.msra.mxu0 0.0
    %4518 = vmatprep.subr.mxu0 0.0
    %4519 = vmatpush1.msra.mxu0 0.0
    %4520 = vmatprep.subr.mxu0 0.0
    %4521 = vmatpush1.msra.mxu0 0.0
    %4522 = vmatprep.subr.mxu0 0.0
    %4523 = vmatpush1.msra.mxu0 0.0
    %4524 = vmatprep.subr.mxu0 0.0
    %4525 = vmatpush1.msra.mxu0 0.0
    %4526 = vmatprep.subr.mxu0 0.0
    %4527 = vmatpush1.msra.mxu0 0.0
    %4528 = vmatprep.subr.mxu0 0.0
    %4529 = vmatpush1.msra.mxu0 0.0
    %4530 = vmatprep.subr.mxu0 0.0
    %4531 = vmatpush1.msra.mxu0 0.0
    %4532 = vmatprep.subr.mxu0 0.0
    %4533 = vmatpush1.msra.mxu0 0.0
    %4534 = vmatprep.subr.mxu0 0.0
    %4535 = vmatpush1.msra.mxu0 0.0
    %4536 = vmatprep.subr.mxu0 0.0
    %4537 = vmatpush1.msra.mxu0 0.0
    %4538 = vmatprep.subr.mxu0 0.0
    %4539 = vmatpush1.msra.mxu0 0.0
    %4540 = vmatprep.subr.mxu0 0.0
    %4541 = vmatpush1.msra.mxu0 0.0
    %4542 = vmatprep.mubr.f32.mxu0 0.0
    %4543 = vmatmul.mubr.f32.gmra.mrb[0].mxu0 %v4476
    %v4544 = vpop.f32.mrb[0].mxu0
    %v4545 = vadd.f32 %v4172, %v4544
    %v4546 = vpop.f32.mrb[0].mxu0
    %4547 = vdwg.mxu0
    %4548 = vst [vmem:[%s475] sm:$0xff] %v4545
    %v4549 = vld [vmem:[%s1245] sm:$0xff]
    %v4551 = vsel %vm735, %v4549, 0
    %4553 = vmatprep.subr.mxu0 0.0
    %4554 = vmatpush1.msra.mxu0 %v4157
    %4555 = vmatprep.subr.mxu0 0.0
    %4556 = vmatpush1.msra.mxu0 %v4158
    %4557 = vmatprep.subr.mxu0 0.0
    %4558 = vmatpush1.msra.mxu0 %v4159
    %4559 = vmatprep.subr.mxu0 0.0
    %4560 = vmatpush1.msra.mxu0 %v4160
    %4561 = vmatprep.subr.mxu0 0.0
    %4562 = vmatpush1.msra.mxu0 0.0
    %4563 = vmatprep.subr.mxu0 0.0
    %4564 = vmatpush1.msra.mxu0 0.0
    %4565 = vmatprep.subr.mxu0 0.0
    %4566 = vmatpush1.msra.mxu0 0.0
    %4567 = vmatprep.subr.mxu0 0.0
    %4568 = vmatpush1.msra.mxu0 0.0
    %4569 = vmatprep.subr.mxu0 0.0
    %4570 = vmatpush1.msra.mxu0 0.0
    %4571 = vmatprep.subr.mxu0 0.0
    %4572 = vmatpush1.msra.mxu0 0.0
    %4573 = vmatprep.subr.mxu0 0.0
    %4574 = vmatpush1.msra.mxu0 0.0
    %4575 = vmatprep.subr.mxu0 0.0
    %4576 = vmatpush1.msra.mxu0 0.0
    %4577 = vmatprep.subr.mxu0 0.0
    %4578 = vmatpush1.msra.mxu0 0.0
    %4579 = vmatprep.subr.mxu0 0.0
    %4580 = vmatpush1.msra.mxu0 0.0
    %4581 = vmatprep.subr.mxu0 0.0
    %4582 = vmatpush1.msra.mxu0 0.0
    %4583 = vmatprep.subr.mxu0 0.0
    %4584 = vmatpush1.msra.mxu0 0.0
    %4585 = vmatprep.subr.mxu0 0.0
    %4586 = vmatpush1.msra.mxu0 0.0
    %4587 = vmatprep.subr.mxu0 0.0
    %4588 = vmatpush1.msra.mxu0 0.0
    %4589 = vmatprep.subr.mxu0 0.0
    %4590 = vmatpush1.msra.mxu0 0.0
    %4591 = vmatprep.subr.mxu0 0.0
    %4592 = vmatpush1.msra.mxu0 0.0
    %4593 = vmatprep.subr.mxu0 0.0
    %4594 = vmatpush1.msra.mxu0 0.0
    %4595 = vmatprep.subr.mxu0 0.0
    %4596 = vmatpush1.msra.mxu0 0.0
    %4597 = vmatprep.subr.mxu0 0.0
    %4598 = vmatpush1.msra.mxu0 0.0
    %4599 = vmatprep.subr.mxu0 0.0
    %4600 = vmatpush1.msra.mxu0 0.0
    %4601 = vmatprep.subr.mxu0 0.0
    %4602 = vmatpush1.msra.mxu0 0.0
    %4603 = vmatprep.subr.mxu0 0.0
    %4604 = vmatpush1.msra.mxu0 0.0
    %4605 = vmatprep.subr.mxu0 0.0
    %4606 = vmatpush1.msra.mxu0 0.0
    %4607 = vmatprep.subr.mxu0 0.0
    %4608 = vmatpush1.msra.mxu0 0.0
    %4609 = vmatprep.subr.mxu0 0.0
    %4610 = vmatpush1.msra.mxu0 0.0
    %4611 = vmatprep.subr.mxu0 0.0
    %4612 = vmatpush1.msra.mxu0 0.0
    %4613 = vmatprep.subr.mxu0 0.0
    %4614 = vmatpush1.msra.mxu0 0.0
    %4615 = vmatprep.subr.mxu0 0.0
    %4616 = vmatpush1.msra.mxu0 0.0
    %4617 = vmatprep.mubr.f32.mxu0 0.0
    %4618 = vmatmul.mubr.f32.gmra.mrb[0].mxu0 %v4551
    %v4619 = vpop.f32.mrb[0].mxu0
    %v4620 = vadd.f32 %v4172, %v4619
    %v4621 = vpop.f32.mrb[0].mxu0
    %4622 = vdwg.mxu0
    %4623 = vst [vmem:[%s552] sm:$0xff] %v4620
    %v4624 = vld [vmem:[%s1347] sm:$0xff]
    %v4626 = vsel %vm735, %v4624, 0
    %4628 = vmatprep.subr.mxu0 0.0
    %4629 = vmatpush1.msra.mxu0 %v4157
    %4630 = vmatprep.subr.mxu0 0.0
    %4631 = vmatpush1.msra.mxu0 %v4158
    %4632 = vmatprep.subr.mxu0 0.0
    %4633 = vmatpush1.msra.mxu0 %v4159
    %4634 = vmatprep.subr.mxu0 0.0
    %4635 = vmatpush1.msra.mxu0 %v4160
    %4636 = vmatprep.subr.mxu0 0.0
    %4637 = vmatpush1.msra.mxu0 0.0
    %4638 = vmatprep.subr.mxu0 0.0
    %4639 = vmatpush1.msra.mxu0 0.0
    %4640 = vmatprep.subr.mxu0 0.0
    %4641 = vmatpush1.msra.mxu0 0.0
    %4642 = vmatprep.subr.mxu0 0.0
    %4643 = vmatpush1.msra.mxu0 0.0
    %4644 = vmatprep.subr.mxu0 0.0
    %4645 = vmatpush1.msra.mxu0 0.0
    %4646 = vmatprep.subr.mxu0 0.0
    %4647 = vmatpush1.msra.mxu0 0.0
    %4648 = vmatprep.subr.mxu0 0.0
    %4649 = vmatpush1.msra.mxu0 0.0
    %4650 = vmatprep.subr.mxu0 0.0
    %4651 = vmatpush1.msra.mxu0 0.0
    %4652 = vmatprep.subr.mxu0 0.0
    %4653 = vmatpush1.msra.mxu0 0.0
    %4654 = vmatprep.subr.mxu0 0.0
    %4655 = vmatpush1.msra.mxu0 0.0
    %4656 = vmatprep.subr.mxu0 0.0
    %4657 = vmatpush1.msra.mxu0 0.0
    %4658 = vmatprep.subr.mxu0 0.0
    %4659 = vmatpush1.msra.mxu0 0.0
    %4660 = vmatprep.subr.mxu0 0.0
    %4661 = vmatpush1.msra.mxu0 0.0
    %4662 = vmatprep.subr.mxu0 0.0
    %4663 = vmatpush1.msra.mxu0 0.0
    %4664 = vmatprep.subr.mxu0 0.0
    %4665 = vmatpush1.msra.mxu0 0.0
    %4666 = vmatprep.subr.mxu0 0.0
    %4667 = vmatpush1.msra.mxu0 0.0
    %4668 = vmatprep.subr.mxu0 0.0
    %4669 = vmatpush1.msra.mxu0 0.0
    %4670 = vmatprep.subr.mxu0 0.0
    %4671 = vmatpush1.msra.mxu0 0.0
    %4672 = vmatprep.subr.mxu0 0.0
    %4673 = vmatpush1.msra.mxu0 0.0
    %4674 = vmatprep.subr.mxu0 0.0
    %4675 = vmatpush1.msra.mxu0 0.0
    %4676 = vmatprep.subr.mxu0 0.0
    %4677 = vmatpush1.msra.mxu0 0.0
    %4678 = vmatprep.subr.mxu0 0.0
    %4679 = vmatpush1.msra.mxu0 0.0
    %4680 = vmatprep.subr.mxu0 0.0
    %4681 = vmatpush1.msra.mxu0 0.0
    %4682 = vmatprep.subr.mxu0 0.0
    %4683 = vmatpush1.msra.mxu0 0.0
    %4684 = vmatprep.subr.mxu0 0.0
    %4685 = vmatpush1.msra.mxu0 0.0
    %4686 = vmatprep.subr.mxu0 0.0
    %4687 = vmatpush1.msra.mxu0 0.0
    %4688 = vmatprep.subr.mxu0 0.0
    %4689 = vmatpush1.msra.mxu0 0.0
    %4690 = vmatprep.subr.mxu0 0.0
    %4691 = vmatpush1.msra.mxu0 0.0
    %4692 = vmatprep.mubr.f32.mxu0 0.0
    %4693 = vmatmul.mubr.f32.gmra.mrb[0].mxu0 %v4626
    %v4694 = vpop.f32.mrb[0].mxu0
    %v4695 = vadd.f32 %v4172, %v4694
    %v4696 = vpop.f32.mrb[0].mxu0
    %4697 = vdwg.mxu0
    %4698 = vst [vmem:[%s629] sm:$0xff] %v4695
    %v4699 = vld [vmem:[%s1449] sm:$0xff]
    %v4701 = vsel %vm735, %v4699, 0
    %4703 = vmatprep.subr.mxu0 0.0
    %4704 = vmatpush1.msra.mxu0 %v4157
    %4705 = vmatprep.subr.mxu0 0.0
    %4706 = vmatpush1.msra.mxu0 %v4158
    %4707 = vmatprep.subr.mxu0 0.0
    %4708 = vmatpush1.msra.mxu0 %v4159
    %4709 = vmatprep.subr.mxu0 0.0
    %4710 = vmatpush1.msra.mxu0 %v4160
    %4711 = vmatprep.subr.mxu0 0.0
    %4712 = vmatpush1.msra.mxu0 0.0
    %4713 = vmatprep.subr.mxu0 0.0
    %4714 = vmatpush1.msra.mxu0 0.0
    %4715 = vmatprep.subr.mxu0 0.0
    %4716 = vmatpush1.msra.mxu0 0.0
    %4717 = vmatprep.subr.mxu0 0.0
    %4718 = vmatpush1.msra.mxu0 0.0
    %4719 = vmatprep.subr.mxu0 0.0
    %4720 = vmatpush1.msra.mxu0 0.0
    %4721 = vmatprep.subr.mxu0 0.0
    %4722 = vmatpush1.msra.mxu0 0.0
    %4723 = vmatprep.subr.mxu0 0.0
    %4724 = vmatpush1.msra.mxu0 0.0
    %4725 = vmatprep.subr.mxu0 0.0
    %4726 = vmatpush1.msra.mxu0 0.0
    %4727 = vmatprep.subr.mxu0 0.0
    %4728 = vmatpush1.msra.mxu0 0.0
    %4729 = vmatprep.subr.mxu0 0.0
    %4730 = vmatpush1.msra.mxu0 0.0
    %4731 = vmatprep.subr.mxu0 0.0
    %4732 = vmatpush1.msra.mxu0 0.0
    %4733 = vmatprep.subr.mxu0 0.0
    %4734 = vmatpush1.msra.mxu0 0.0
    %4735 = vmatprep.subr.mxu0 0.0
    %4736 = vmatpush1.msra.mxu0 0.0
    %4737 = vmatprep.subr.mxu0 0.0
    %4738 = vmatpush1.msra.mxu0 0.0
    %4739 = vmatprep.subr.mxu0 0.0
    %4740 = vmatpush1.msra.mxu0 0.0
    %4741 = vmatprep.subr.mxu0 0.0
    %4742 = vmatpush1.msra.mxu0 0.0
    %4743 = vmatprep.subr.mxu0 0.0
    %4744 = vmatpush1.msra.mxu0 0.0
    %4745 = vmatprep.subr.mxu0 0.0
    %4746 = vmatpush1.msra.mxu0 0.0
    %4747 = vmatprep.subr.mxu0 0.0
    %4748 = vmatpush1.msra.mxu0 0.0
    %4749 = vmatprep.subr.mxu0 0.0
    %4750 = vmatpush1.msra.mxu0 0.0
    %4751 = vmatprep.subr.mxu0 0.0
    %4752 = vmatpush1.msra.mxu0 0.0
    %4753 = vmatprep.subr.mxu0 0.0
    %4754 = vmatpush1.msra.mxu0 0.0
    %4755 = vmatprep.subr.mxu0 0.0
    %4756 = vmatpush1.msra.mxu0 0.0
    %4757 = vmatprep.subr.mxu0 0.0
    %4758 = vmatpush1.msra.mxu0 0.0
    %4759 = vmatprep.subr.mxu0 0.0
    %4760 = vmatpush1.msra.mxu0 0.0
    %4761 = vmatprep.subr.mxu0 0.0
    %4762 = vmatpush1.msra.mxu0 0.0
    %4763 = vmatprep.subr.mxu0 0.0
    %4764 = vmatpush1.msra.mxu0 0.0
    %4765 = vmatprep.subr.mxu0 0.0
    %4766 = vmatpush1.msra.mxu0 0.0
    %4767 = vmatprep.mubr.f32.mxu0 0.0
    %4768 = vmatmul.mubr.f32.gmra.mrb[0].mxu0 %v4701
    %v4769 = vpop.f32.mrb[0].mxu0
    %v4770 = vadd.f32 %v4172, %v4769
    %v4771 = vpop.f32.mrb[0].mxu0
    %4772 = vdwg.mxu0
    %4773 = vst [vmem:[%s706] sm:$0xff] %v4770
    %v4774 = vld [vmem:[#allocation3] sm:$0xff]
    %v4775 = vmul.f32 %v4774, 0.5
    %v4776 = vtanh.pop %v4775
    %v4777 = vmul.f32 %v4776, 0.5
    %v4778 = vadd.f32 %v4777, 0.5
    %v4779 = vtanh.pop %v4774
    %v4780 = vmul.f32 %v4778, 0.0
    %4782 = vrot.lane.b32.xlu0 %v4779, 32
    %v4783 = vpop.permute.xlu0 %4782
    %v4785 = vmul.f32 %v4778, %v4783
    %4787 = vrot.lane.b32.xlu0 %v4785, 32
    %v4788 = vpop.permute.xlu0 %4787
    %v4790 = vadd.f32 %v4780, %v4788
    %v4791 = vtanh.pop %v4790
    %4793 = vrot.lane.b32.xlu0 %v4791, 32
    %v4794 = vpop.permute.xlu0 %4793
    %v4796 = vmul.f32 %v4778, %v4794
    %v4797 = vld [vmem:[%s244] sm:$0xff]
    %4799 = vrot.lane.b32.xlu0 %v4796, 64
    %v4800 = vpop.permute.xlu0 %4799
    %v4801 = vsel %vm735, %v4800, 0
    %4803 = vmatprep.subr.mxu0 0.0
    %4804 = vmatpush1.msra.mxu0 %v4162
    %4805 = vmatprep.subr.mxu0 0.0
    %4806 = vmatpush1.msra.mxu0 %v4163
    %4807 = vmatprep.subr.mxu0 0.0
    %4808 = vmatpush1.msra.mxu0 %v4164
    %4809 = vmatprep.subr.mxu0 0.0
    %4810 = vmatpush1.msra.mxu0 %v4165
    %4811 = vmatprep.subr.mxu0 0.0
    %4812 = vmatpush1.msra.mxu0 0.0
    %4813 = vmatprep.subr.mxu0 0.0
    %4814 = vmatpush1.msra.mxu0 0.0
    %4815 = vmatprep.subr.mxu0 0.0
    %4816 = vmatpush1.msra.mxu0 0.0
    %4817 = vmatprep.subr.mxu0 0.0
    %4818 = vmatpush1.msra.mxu0 0.0
    %4819 = vmatprep.subr.mxu0 0.0
    %4820 = vmatpush1.msra.mxu0 0.0
    %4821 = vmatprep.subr.mxu0 0.0
    %4822 = vmatpush1.msra.mxu0 0.0
    %4823 = vmatprep.subr.mxu0 0.0
    %4824 = vmatpush1.msra.mxu0 0.0
    %4825 = vmatprep.subr.mxu0 0.0
    %4826 = vmatpush1.msra.mxu0 0.0
    %4827 = vmatprep.subr.mxu0 0.0
    %4828 = vmatpush1.msra.mxu0 0.0
    %4829 = vmatprep.subr.mxu0 0.0
    %4830 = vmatpush1.msra.mxu0 0.0
    %4831 = vmatprep.subr.mxu0 0.0
    %4832 = vmatpush1.msra.mxu0 0.0
    %4833 = vmatprep.subr.mxu0 0.0
    %4834 = vmatpush1.msra.mxu0 0.0
    %4835 = vmatprep.subr.mxu0 0.0
    %4836 = vmatpush1.msra.mxu0 0.0
    %4837 = vmatprep.subr.mxu0 0.0
    %4838 = vmatpush1.msra.mxu0 0.0
    %4839 = vmatprep.subr.mxu0 0.0
    %4840 = vmatpush1.msra.mxu0 0.0
    %4841 = vmatprep.subr.mxu0 0.0
    %4842 = vmatpush1.msra.mxu0 0.0
    %4843 = vmatprep.subr.mxu0 0.0
    %4844 = vmatpush1.msra.mxu0 0.0
    %4845 = vmatprep.subr.mxu0 0.0
    %4846 = vmatpush1.msra.mxu0 0.0
    %4847 = vmatprep.subr.mxu0 0.0
    %4848 = vmatpush1.msra.mxu0 0.0
    %4849 = vmatprep.subr.mxu0 0.0
    %4850 = vmatpush1.msra.mxu0 0.0
    %4851 = vmatprep.subr.mxu0 0.0
    %4852 = vmatpush1.msra.mxu0 0.0
    %4853 = vmatprep.subr.mxu0 0.0
    %4854 = vmatpush1.msra.mxu0 0.0
    %4855 = vmatprep.subr.mxu0 0.0
    %4856 = vmatpush1.msra.mxu0 0.0
    %4857 = vmatprep.subr.mxu0 0.0
    %4858 = vmatpush1.msra.mxu0 0.0
    %4859 = vmatprep.subr.mxu0 0.0
    %4860 = vmatpush1.msra.mxu0 0.0
    %4861 = vmatprep.subr.mxu0 0.0
    %4862 = vmatpush1.msra.mxu0 0.0
    %4863 = vmatprep.subr.mxu0 0.0
    %4864 = vmatpush1.msra.mxu0 0.0
    %4865 = vmatprep.subr.mxu0 0.0
    %4866 = vmatpush1.msra.mxu0 0.0
    %4867 = vmatprep.mubr.f32.mxu0 0.0
    %4868 = vmatmul.mubr.f32.gmra.mrb[0].mxu0 %v4801
    %v4869 = vpop.f32.mrb[0].mxu0
    %v4870 = vadd.f32 0.0, %v4869
    %v4871 = vpop.f32.mrb[0].mxu0
    %4872 = vdwg.mxu0
    %v4873 = vadd.f32 %v4797, %v4870
    %v4874 = vmul.f32 %v4873, 0.5
    %v4875 = vtanh.pop %v4874
    %v4876 = vmul.f32 %v4875, 0.5
    %v4877 = vadd.f32 %v4876, 0.5
    %v4878 = vtanh.pop %v4873
    %v4879 = vmul.f32 %v4877, %v4790
    %4881 = vrot.lane.b32.xlu0 %v4878, 32
    %v4882 = vpop.permute.xlu0 %4881
    %v4884 = vmul.f32 %v4877, %v4882
    %4886 = vrot.lane.b32.xlu0 %v4884, 32
    %v4887 = vpop.permute.xlu0 %4886
    %v4889 = vadd.f32 %v4879, %v4887
    %v4890 = vtanh.pop %v4889
    %4892 = vrot.lane.b32.xlu0 %v4890, 32
    %v4893 = vpop.permute.xlu0 %4892
    %v4895 = vmul.f32 %v4877, %v4893
    %v4896 = vadd.f32 %v4796, %v4895
    %v4897 = vld [vmem:[%s321] sm:$0xff]
    %4899 = vrot.lane.b32.xlu0 %v4895, 64
    %v4900 = vpop.permute.xlu0 %4899
    %v4901 = vsel %vm735, %v4900, 0
    %4903 = vmatprep.subr.mxu0 0.0
    %4904 = vmatpush1.msra.mxu0 %v4162
    %4905 = vmatprep.subr.mxu0 0.0
    %4906 = vmatpush1.msra.mxu0 %v4163
    %4907 = vmatprep.subr.mxu0 0.0
    %4908 = vmatpush1.msra.mxu0 %v4164
    %4909 = vmatprep.subr.mxu0 0.0
    %4910 = vmatpush1.msra.mxu0 %v4165
    %4911 = vmatprep.subr.mxu0 0.0
    %4912 = vmatpush1.msra.mxu0 0.0
    %4913 = vmatprep.subr.mxu0 0.0
    %4914 = vmatpush1.msra.mxu0 0.0
    %4915 = vmatprep.subr.mxu0 0.0
    %4916 = vmatpush1.msra.mxu0 0.0
    %4917 = vmatprep.subr.mxu0 0.0
    %4918 = vmatpush1.msra.mxu0 0.0
    %4919 = vmatprep.subr.mxu0 0.0
    %4920 = vmatpush1.msra.mxu0 0.0
    %4921 = vmatprep.subr.mxu0 0.0
    %4922 = vmatpush1.msra.mxu0 0.0
    %4923 = vmatprep.subr.mxu0 0.0
    %4924 = vmatpush1.msra.mxu0 0.0
    %4925 = vmatprep.subr.mxu0 0.0
    %4926 = vmatpush1.msra.mxu0 0.0
    %4927 = vmatprep.subr.mxu0 0.0
    %4928 = vmatpush1.msra.mxu0 0.0
    %4929 = vmatprep.subr.mxu0 0.0
    %4930 = vmatpush1.msra.mxu0 0.0
    %4931 = vmatprep.subr.mxu0 0.0
    %4932 = vmatpush1.msra.mxu0 0.0
    %4933 = vmatprep.subr.mxu0 0.0
    %4934 = vmatpush1.msra.mxu0 0.0
    %4935 = vmatprep.subr.mxu0 0.0
    %4936 = vmatpush1.msra.mxu0 0.0
    %4937 = vmatprep.subr.mxu0 0.0
    %4938 = vmatpush1.msra.mxu0 0.0
    %4939 = vmatprep.subr.mxu0 0.0
    %4940 = vmatpush1.msra.mxu0 0.0
    %4941 = vmatprep.subr.mxu0 0.0
    %4942 = vmatpush1.msra.mxu0 0.0
    %4943 = vmatprep.subr.mxu0 0.0
    %4944 = vmatpush1.msra.mxu0 0.0
    %4945 = vmatprep.subr.mxu0 0.0
    %4946 = vmatpush1.msra.mxu0 0.0
    %4947 = vmatprep.subr.mxu0 0.0
    %4948 = vmatpush1.msra.mxu0 0.0
    %4949 = vmatprep.subr.mxu0 0.0
    %4950 = vmatpush1.msra.mxu0 0.0
    %4951 = vmatprep.subr.mxu0 0.0
    %4952 = vmatpush1.msra.mxu0 0.0
    %4953 = vmatprep.subr.mxu0 0.0
    %4954 = vmatpush1.msra.mxu0 0.0
    %4955 = vmatprep.subr.mxu0 0.0
    %4956 = vmatpush1.msra.mxu0 0.0
    %4957 = vmatprep.subr.mxu0 0.0
    %4958 = vmatpush1.msra.mxu0 0.0
    %4959 = vmatprep.subr.mxu0 0.0
    %4960 = vmatpush1.msra.mxu0 0.0
    %4961 = vmatprep.subr.mxu0 0.0
    %4962 = vmatpush1.msra.mxu0 0.0
    %4963 = vmatprep.subr.mxu0 0.0
    %4964 = vmatpush1.msra.mxu0 0.0
    %4965 = vmatprep.subr.mxu0 0.0
    %4966 = vmatpush1.msra.mxu0 0.0
    %4967 = vmatprep.mubr.f32.mxu0 0.0
    %4968 = vmatmul.mubr.f32.gmra.mrb[0].mxu0 %v4901
    %v4969 = vpop.f32.mrb[0].mxu0
    %v4970 = vadd.f32 0.0, %v4969
    %v4971 = vpop.f32.mrb[0].mxu0
    %4972 = vdwg.mxu0
    %v4973 = vadd.f32 %v4897, %v4970
    %v4974 = vmul.f32 %v4973, 0.5
    %v4975 = vtanh.pop %v4974
    %v4976 = vmul.f32 %v4975, 0.5
    %v4977 = vadd.f32 %v4976, 0.5
    %v4978 = vtanh.pop %v4973
    %v4979 = vmul.f32 %v4977, %v4889
    %4981 = vrot.lane.b32.xlu0 %v4978, 32
    %v4982 = vpop.permute.xlu0 %4981
    %v4984 = vmul.f32 %v4977, %v4982
    %4986 = vrot.lane.b32.xlu0 %v4984, 32
    %v4987 = vpop.permute.xlu0 %4986
    %v4989 = vadd.f32 %v4979, %v4987
    %v4990 = vtanh.pop %v4989
    %4992 = vrot.lane.b32.xlu0 %v4990, 32
    %v4993 = vpop.permute.xlu0 %4992
    %v4995 = vmul.f32 %v4977, %v4993
    %v4996 = vadd.f32 %v4896, %v4995
    %v4997 = vld [vmem:[%s398] sm:$0xff]
    %4999 = vrot.lane.b32.xlu0 %v4995, 64
    %v5000 = vpop.permute.xlu0 %4999
    %v5001 = vsel %vm735, %v5000, 0
    %5003 = vmatprep.subr.mxu0 0.0
    %5004 = vmatpush1.msra.mxu0 %v4162
    %5005 = vmatprep.subr.mxu0 0.0
    %5006 = vmatpush1.msra.mxu0 %v4163
    %5007 = vmatprep.subr.mxu0 0.0
    %5008 = vmatpush1.msra.mxu0 %v4164
    %5009 = vmatprep.subr.mxu0 0.0
    %5010 = vmatpush1.msra.mxu0 %v4165
    %5011 = vmatprep.subr.mxu0 0.0
    %5012 = vmatpush1.msra.mxu0 0.0
    %5013 = vmatprep.subr.mxu0 0.0
    %5014 = vmatpush1.msra.mxu0 0.0
    %5015 = vmatprep.subr.mxu0 0.0
    %5016 = vmatpush1.msra.mxu0 0.0
    %5017 = vmatprep.subr.mxu0 0.0
    %5018 = vmatpush1.msra.mxu0 0.0
    %5019 = vmatprep.subr.mxu0 0.0
    %5020 = vmatpush1.msra.mxu0 0.0
    %5021 = vmatprep.subr.mxu0 0.0
    %5022 = vmatpush1.msra.mxu0 0.0
    %5023 = vmatprep.subr.mxu0 0.0
    %5024 = vmatpush1.msra.mxu0 0.0
    %5025 = vmatprep.subr.mxu0 0.0
    %5026 = vmatpush1.msra.mxu0 0.0
    %5027 = vmatprep.subr.mxu0 0.0
    %5028 = vmatpush1.msra.mxu0 0.0
    %5029 = vmatprep.subr.mxu0 0.0
    %5030 = vmatpush1.msra.mxu0 0.0
    %5031 = vmatprep.subr.mxu0 0.0
    %5032 = vmatpush1.msra.mxu0 0.0
    %5033 = vmatprep.subr.mxu0 0.0
    %5034 = vmatpush1.msra.mxu0 0.0
    %5035 = vmatprep.subr.mxu0 0.0
    %5036 = vmatpush1.msra.mxu0 0.0
    %5037 = vmatprep.subr.mxu0 0.0
    %5038 = vmatpush1.msra.mxu0 0.0
    %5039 = vmatprep.subr.mxu0 0.0
    %5040 = vmatpush1.msra.mxu0 0.0
    %5041 = vmatprep.subr.mxu0 0.0
    %5042 = vmatpush1.msra.mxu0 0.0
    %5043 = vmatprep.subr.mxu0 0.0
    %5044 = vmatpush1.msra.mxu0 0.0
    %5045 = vmatprep.subr.mxu0 0.0
    %5046 = vmatpush1.msra.mxu0 0.0
    %5047 = vmatprep.subr.mxu0 0.0
    %5048 = vmatpush1.msra.mxu0 0.0
    %5049 = vmatprep.subr.mxu0 0.0
    %5050 = vmatpush1.msra.mxu0 0.0
    %5051 = vmatprep.subr.mxu0 0.0
    %5052 = vmatpush1.msra.mxu0 0.0
    %5053 = vmatprep.subr.mxu0 0.0
    %5054 = vmatpush1.msra.mxu0 0.0
    %5055 = vmatprep.subr.mxu0 0.0
    %5056 = vmatpush1.msra.mxu0 0.0
    %5057 = vmatprep.subr.mxu0 0.0
    %5058 = vmatpush1.msra.mxu0 0.0
    %5059 = vmatprep.subr.mxu0 0.0
    %5060 = vmatpush1.msra.mxu0 0.0
    %5061 = vmatprep.subr.mxu0 0.0
    %5062 = vmatpush1.msra.mxu0 0.0
    %5063 = vmatprep.subr.mxu0 0.0
    %5064 = vmatpush1.msra.mxu0 0.0
    %5065 = vmatprep.subr.mxu0 0.0
    %5066 = vmatpush1.msra.mxu0 0.0
    %5067 = vmatprep.mubr.f32.mxu0 0.0
    %5068 = vmatmul.mubr.f32.gmra.mrb[0].mxu0 %v5001
    %v5069 = vpop.f32.mrb[0].mxu0
    %v5070 = vadd.f32 0.0, %v5069
    %v5071 = vpop.f32.mrb[0].mxu0
    %5072 = vdwg.mxu0
    %v5073 = vadd.f32 %v4997, %v5070
    %v5074 = vmul.f32 %v5073, 0.5
    %v5075 = vtanh.pop %v5074
    %v5076 = vmul.f32 %v5075, 0.5
    %v5077 = vadd.f32 %v5076, 0.5
    %v5078 = vtanh.pop %v5073
    %v5079 = vmul.f32 %v5077, %v4989
    %5081 = vrot.lane.b32.xlu0 %v5078, 32
    %v5082 = vpop.permute.xlu0 %5081
    %v5084 = vmul.f32 %v5077, %v5082
    %5086 = vrot.lane.b32.xlu0 %v5084, 32
    %v5087 = vpop.permute.xlu0 %5086
    %v5089 = vadd.f32 %v5079, %v5087
    %v5090 = vtanh.pop %v5089
    %5092 = vrot.lane.b32.xlu0 %v5090, 32
    %v5093 = vpop.permute.xlu0 %5092
    %v5095 = vmul.f32 %v5077, %v5093
    %v5096 = vadd.f32 %v4996, %v5095
    %v5097 = vld [vmem:[%s475] sm:$0xff]
    %5099 = vrot.lane.b32.xlu0 %v5095, 64
    %v5100 = vpop.permute.xlu0 %5099
    %v5101 = vsel %vm735, %v5100, 0
    %5103 = vmatprep.subr.mxu0 0.0
    %5104 = vmatpush1.msra.mxu0 %v4162
    %5105 = vmatprep.subr.mxu0 0.0
    %5106 = vmatpush1.msra.mxu0 %v4163
    %5107 = vmatprep.subr.mxu0 0.0
    %5108 = vmatpush1.msra.mxu0 %v4164
    %5109 = vmatprep.subr.mxu0 0.0
    %5110 = vmatpush1.msra.mxu0 %v4165
    %5111 = vmatprep.subr.mxu0 0.0
    %5112 = vmatpush1.msra.mxu0 0.0
    %5113 = vmatprep.subr.mxu0 0.0
    %5114 = vmatpush1.msra.mxu0 0.0
    %5115 = vmatprep.subr.mxu0 0.0
    %5116 = vmatpush1.msra.mxu0 0.0
    %5117 = vmatprep.subr.mxu0 0.0
    %5118 = vmatpush1.msra.mxu0 0.0
    %5119 = vmatprep.subr.mxu0 0.0
    %5120 = vmatpush1.msra.mxu0 0.0
    %5121 = vmatprep.subr.mxu0 0.0
    %5122 = vmatpush1.msra.mxu0 0.0
    %5123 = vmatprep.subr.mxu0 0.0
    %5124 = vmatpush1.msra.mxu0 0.0
    %5125 = vmatprep.subr.mxu0 0.0
    %5126 = vmatpush1.msra.mxu0 0.0
    %5127 = vmatprep.subr.mxu0 0.0
    %5128 = vmatpush1.msra.mxu0 0.0
    %5129 = vmatprep.subr.mxu0 0.0
    %5130 = vmatpush1.msra.mxu0 0.0
    %5131 = vmatprep.subr.mxu0 0.0
    %5132 = vmatpush1.msra.mxu0 0.0
    %5133 = vmatprep.subr.mxu0 0.0
    %5134 = vmatpush1.msra.mxu0 0.0
    %5135 = vmatprep.subr.mxu0 0.0
    %5136 = vmatpush1.msra.mxu0 0.0
    %5137 = vmatprep.subr.mxu0 0.0
    %5138 = vmatpush1.msra.mxu0 0.0
    %5139 = vmatprep.subr.mxu0 0.0
    %5140 = vmatpush1.msra.mxu0 0.0
    %5141 = vmatprep.subr.mxu0 0.0
    %5142 = vmatpush1.msra.mxu0 0.0
    %5143 = vmatprep.subr.mxu0 0.0
    %5144 = vmatpush1.msra.mxu0 0.0
    %5145 = vmatprep.subr.mxu0 0.0
    %5146 = vmatpush1.msra.mxu0 0.0
    %5147 = vmatprep.subr.mxu0 0.0
    %5148 = vmatpush1.msra.mxu0 0.0
    %5149 = vmatprep.subr.mxu0 0.0
    %5150 = vmatpush1.msra.mxu0 0.0
    %5151 = vmatprep.subr.mxu0 0.0
    %5152 = vmatpush1.msra.mxu0 0.0
    %5153 = vmatprep.subr.mxu0 0.0
    %5154 = vmatpush1.msra.mxu0 0.0
    %5155 = vmatprep.subr.mxu0 0.0
    %5156 = vmatpush1.msra.mxu0 0.0
    %5157 = vmatprep.subr.mxu0 0.0
    %5158 = vmatpush1.msra.mxu0 0.0
    %5159 = vmatprep.subr.mxu0 0.0
    %5160 = vmatpush1.msra.mxu0 0.0
    %5161 = vmatprep.subr.mxu0 0.0
    %5162 = vmatpush1.msra.mxu0 0.0
    %5163 = vmatprep.subr.mxu0 0.0
    %5164 = vmatpush1.msra.mxu0 0.0
    %5165 = vmatprep.subr.mxu0 0.0
    %5166 = vmatpush1.msra.mxu0 0.0
    %5167 = vmatprep.mubr.f32.mxu0 0.0
    %5168 = vmatmul.mubr.f32.gmra.mrb[0].mxu0 %v5101
    %v5169 = vpop.f32.mrb[0].mxu0
    %v5170 = vadd.f32 0.0, %v5169
    %v5171 = vpop.f32.mrb[0].mxu0
    %5172 = vdwg.mxu0
    %v5173 = vadd.f32 %v5097, %v5170
    %v5174 = vmul.f32 %v5173, 0.5
    %v5175 = vtanh.pop %v5174
    %v5176 = vmul.f32 %v5175, 0.5
    %v5177 = vadd.f32 %v5176, 0.5
    %v5178 = vtanh.pop %v5173
    %v5179 = vmul.f32 %v5177, %v5089
    %5181 = vrot.lane.b32.xlu0 %v5178, 32
    %v5182 = vpop.permute.xlu0 %5181
    %v5184 = vmul.f32 %v5177, %v5182
    %5186 = vrot.lane.b32.xlu0 %v5184, 32
    %v5187 = vpop.permute.xlu0 %5186
    %v5189 = vadd.f32 %v5179, %v5187
    %v5190 = vtanh.pop %v5189
    %5192 = vrot.lane.b32.xlu0 %v5190, 32
    %v5193 = vpop.permute.xlu0 %5192
    %v5195 = vmul.f32 %v5177, %v5193
    %v5196 = vadd.f32 %v5096, %v5195
    %v5197 = vld [vmem:[%s552] sm:$0xff]
    %5199 = vrot.lane.b32.xlu0 %v5195, 64
    %v5200 = vpop.permute.xlu0 %5199
    %v5201 = vsel %vm735, %v5200, 0
    %5203 = vmatprep.subr.mxu0 0.0
    %5204 = vmatpush1.msra.mxu0 %v4162
    %5205 = vmatprep.subr.mxu0 0.0
    %5206 = vmatpush1.msra.mxu0 %v4163
    %5207 = vmatprep.subr.mxu0 0.0
    %5208 = vmatpush1.msra.mxu0 %v4164
    %5209 = vmatprep.subr.mxu0 0.0
    %5210 = vmatpush1.msra.mxu0 %v4165
    %5211 = vmatprep.subr.mxu0 0.0
    %5212 = vmatpush1.msra.mxu0 0.0
    %5213 = vmatprep.subr.mxu0 0.0
    %5214 = vmatpush1.msra.mxu0 0.0
    %5215 = vmatprep.subr.mxu0 0.0
    %5216 = vmatpush1.msra.mxu0 0.0
    %5217 = vmatprep.subr.mxu0 0.0
    %5218 = vmatpush1.msra.mxu0 0.0
    %5219 = vmatprep.subr.mxu0 0.0
    %5220 = vmatpush1.msra.mxu0 0.0
    %5221 = vmatprep.subr.mxu0 0.0
    %5222 = vmatpush1.msra.mxu0 0.0
    %5223 = vmatprep.subr.mxu0 0.0
    %5224 = vmatpush1.msra.mxu0 0.0
    %5225 = vmatprep.subr.mxu0 0.0
    %5226 = vmatpush1.msra.mxu0 0.0
    %5227 = vmatprep.subr.mxu0 0.0
    %5228 = vmatpush1.msra.mxu0 0.0
    %5229 = vmatprep.subr.mxu0 0.0
    %5230 = vmatpush1.msra.mxu0 0.0
    %5231 = vmatprep.subr.mxu0 0.0
    %5232 = vmatpush1.msra.mxu0 0.0
    %5233 = vmatprep.subr.mxu0 0.0
    %5234 = vmatpush1.msra.mxu0 0.0
    %5235 = vmatprep.subr.mxu0 0.0
    %5236 = vmatpush1.msra.mxu0 0.0
    %5237 = vmatprep.subr.mxu0 0.0
    %5238 = vmatpush1.msra.mxu0 0.0
    %5239 = vmatprep.subr.mxu0 0.0
    %5240 = vmatpush1.msra.mxu0 0.0
    %5241 = vmatprep.subr.mxu0 0.0
    %5242 = vmatpush1.msra.mxu0 0.0
    %5243 = vmatprep.subr.mxu0 0.0
    %5244 = vmatpush1.msra.mxu0 0.0
    %5245 = vmatprep.subr.mxu0 0.0
    %5246 = vmatpush1.msra.mxu0 0.0
    %5247 = vmatprep.subr.mxu0 0.0
    %5248 = vmatpush1.msra.mxu0 0.0
    %5249 = vmatprep.subr.mxu0 0.0
    %5250 = vmatpush1.msra.mxu0 0.0
    %5251 = vmatprep.subr.mxu0 0.0
    %5252 = vmatpush1.msra.mxu0 0.0
    %5253 = vmatprep.subr.mxu0 0.0
    %5254 = vmatpush1.msra.mxu0 0.0
    %5255 = vmatprep.subr.mxu0 0.0
    %5256 = vmatpush1.msra.mxu0 0.0
    %5257 = vmatprep.subr.mxu0 0.0
    %5258 = vmatpush1.msra.mxu0 0.0
    %5259 = vmatprep.subr.mxu0 0.0
    %5260 = vmatpush1.msra.mxu0 0.0
    %5261 = vmatprep.subr.mxu0 0.0
    %5262 = vmatpush1.msra.mxu0 0.0
    %5263 = vmatprep.subr.mxu0 0.0
    %5264 = vmatpush1.msra.mxu0 0.0
    %5265 = vmatprep.subr.mxu0 0.0
    %5266 = vmatpush1.msra.mxu0 0.0
    %5267 = vmatprep.mubr.f32.mxu0 0.0
    %5268 = vmatmul.mubr.f32.gmra.mrb[0].mxu0 %v5201
    %v5269 = vpop.f32.mrb[0].mxu0
    %v5270 = vadd.f32 0.0, %v5269
    %v5271 = vpop.f32.mrb[0].mxu0
    %5272 = vdwg.mxu0
    %v5273 = vadd.f32 %v5197, %v5270
    %v5274 = vmul.f32 %v5273, 0.5
    %v5275 = vtanh.pop %v5274
    %v5276 = vmul.f32 %v5275, 0.5
    %v5277 = vadd.f32 %v5276, 0.5
    %v5278 = vtanh.pop %v5273
    %v5279 = vmul.f32 %v5277, %v5189
    %5281 = vrot.lane.b32.xlu0 %v5278, 32
    %v5282 = vpop.permute.xlu0 %5281
    %v5284 = vmul.f32 %v5277, %v5282
    %5286 = vrot.lane.b32.xlu0 %v5284, 32
    %v5287 = vpop.permute.xlu0 %5286
    %v5289 = vadd.f32 %v5279, %v5287
    %v5290 = vtanh.pop %v5289
    %5292 = vrot.lane.b32.xlu0 %v5290, 32
    %v5293 = vpop.permute.xlu0 %5292
    %v5295 = vmul.f32 %v5277, %v5293
    %v5296 = vadd.f32 %v5196, %v5295
    %v5297 = vld [vmem:[%s629] sm:$0xff]
    %5299 = vrot.lane.b32.xlu0 %v5295, 64
    %v5300 = vpop.permute.xlu0 %5299
    %v5301 = vsel %vm735, %v5300, 0
    %5303 = vmatprep.subr.mxu0 0.0
    %5304 = vmatpush1.msra.mxu0 %v4162
    %5305 = vmatprep.subr.mxu0 0.0
    %5306 = vmatpush1.msra.mxu0 %v4163
    %5307 = vmatprep.subr.mxu0 0.0
    %5308 = vmatpush1.msra.mxu0 %v4164
    %5309 = vmatprep.subr.mxu0 0.0
    %5310 = vmatpush1.msra.mxu0 %v4165
    %5311 = vmatprep.subr.mxu0 0.0
    %5312 = vmatpush1.msra.mxu0 0.0
    %5313 = vmatprep.subr.mxu0 0.0
    %5314 = vmatpush1.msra.mxu0 0.0
    %5315 = vmatprep.subr.mxu0 0.0
    %5316 = vmatpush1.msra.mxu0 0.0
    %5317 = vmatprep.subr.mxu0 0.0
    %5318 = vmatpush1.msra.mxu0 0.0
    %5319 = vmatprep.subr.mxu0 0.0
    %5320 = vmatpush1.msra.mxu0 0.0
    %5321 = vmatprep.subr.mxu0 0.0
    %5322 = vmatpush1.msra.mxu0 0.0
    %5323 = vmatprep.subr.mxu0 0.0
    %5324 = vmatpush1.msra.mxu0 0.0
    %5325 = vmatprep.subr.mxu0 0.0
    %5326 = vmatpush1.msra.mxu0 0.0
    %5327 = vmatprep.subr.mxu0 0.0
    %5328 = vmatpush1.msra.mxu0 0.0
    %5329 = vmatprep.subr.mxu0 0.0
    %5330 = vmatpush1.msra.mxu0 0.0
    %5331 = vmatprep.subr.mxu0 0.0
    %5332 = vmatpush1.msra.mxu0 0.0
    %5333 = vmatprep.subr.mxu0 0.0
    %5334 = vmatpush1.msra.mxu0 0.0
    %5335 = vmatprep.subr.mxu0 0.0
    %5336 = vmatpush1.msra.mxu0 0.0
    %5337 = vmatprep.subr.mxu0 0.0
    %5338 = vmatpush1.msra.mxu0 0.0
    %5339 = vmatprep.subr.mxu0 0.0
    %5340 = vmatpush1.msra.mxu0 0.0
    %5341 = vmatprep.subr.mxu0 0.0
    %5342 = vmatpush1.msra.mxu0 0.0
    %5343 = vmatprep.subr.mxu0 0.0
    %5344 = vmatpush1.msra.mxu0 0.0
    %5345 = vmatprep.subr.mxu0 0.0
    %5346 = vmatpush1.msra.mxu0 0.0
    %5347 = vmatprep.subr.mxu0 0.0
    %5348 = vmatpush1.msra.mxu0 0.0
    %5349 = vmatprep.subr.mxu0 0.0
    %5350 = vmatpush1.msra.mxu0 0.0
    %5351 = vmatprep.subr.mxu0 0.0
    %5352 = vmatpush1.msra.mxu0 0.0
    %5353 = vmatprep.subr.mxu0 0.0
    %5354 = vmatpush1.msra.mxu0 0.0
    %5355 = vmatprep.subr.mxu0 0.0
    %5356 = vmatpush1.msra.mxu0 0.0
    %5357 = vmatprep.subr.mxu0 0.0
    %5358 = vmatpush1.msra.mxu0 0.0
    %5359 = vmatprep.subr.mxu0 0.0
    %5360 = vmatpush1.msra.mxu0 0.0
    %5361 = vmatprep.subr.mxu0 0.0
    %5362 = vmatpush1.msra.mxu0 0.0
    %5363 = vmatprep.subr.mxu0 0.0
    %5364 = vmatpush1.msra.mxu0 0.0
    %5365 = vmatprep.subr.mxu0 0.0
    %5366 = vmatpush1.msra.mxu0 0.0
    %5367 = vmatprep.mubr.f32.mxu0 0.0
    %5368 = vmatmul.mubr.f32.gmra.mrb[0].mxu0 %v5301
    %v5369 = vpop.f32.mrb[0].mxu0
    %v5370 = vadd.f32 0.0, %v5369
    %v5371 = vpop.f32.mrb[0].mxu0
    %5372 = vdwg.mxu0
    %v5373 = vadd.f32 %v5297, %v5370
    %v5374 = vmul.f32 %v5373, 0.5
    %v5375 = vtanh.pop %v5374
    %v5376 = vmul.f32 %v5375, 0.5
    %v5377 = vadd.f32 %v5376, 0.5
    %v5378 = vtanh.pop %v5373
    %v5379 = vmul.f32 %v5377, %v5289
    %5381 = vrot.lane.b32.xlu0 %v5378, 32
    %v5382 = vpop.permute.xlu0 %5381
    %v5384 = vmul.f32 %v5377, %v5382
    %5386 = vrot.lane.b32.xlu0 %v5384, 32
    %v5387 = vpop.permute.xlu0 %5386
    %v5389 = vadd.f32 %v5379, %v5387
    %v5390 = vtanh.pop %v5389
    %5392 = vrot.lane.b32.xlu0 %v5390, 32
    %v5393 = vpop.permute.xlu0 %5392
    %v5395 = vmul.f32 %v5377, %v5393
    %v5396 = vadd.f32 %v5296, %v5395
    %v5397 = vld [vmem:[%s706] sm:$0xff]
    %5399 = vrot.lane.b32.xlu0 %v5395, 64
    %v5400 = vpop.permute.xlu0 %5399
    %v5401 = vsel %vm735, %v5400, 0
    %5403 = vmatprep.subr.mxu0 0.0
    %5404 = vmatpush1.msra.mxu0 %v4162
    %5405 = vmatprep.subr.mxu0 0.0
    %5406 = vmatpush1.msra.mxu0 %v4163
    %5407 = vmatprep.subr.mxu0 0.0
    %5408 = vmatpush1.msra.mxu0 %v4164
    %5409 = vmatprep.subr.mxu0 0.0
    %5410 = vmatpush1.msra.mxu0 %v4165
    %5411 = vmatprep.subr.mxu0 0.0
    %5412 = vmatpush1.msra.mxu0 0.0
    %5413 = vmatprep.subr.mxu0 0.0
    %5414 = vmatpush1.msra.mxu0 0.0
    %5415 = vmatprep.subr.mxu0 0.0
    %5416 = vmatpush1.msra.mxu0 0.0
    %5417 = vmatprep.subr.mxu0 0.0
    %5418 = vmatpush1.msra.mxu0 0.0
    %5419 = vmatprep.subr.mxu0 0.0
    %5420 = vmatpush1.msra.mxu0 0.0
    %5421 = vmatprep.subr.mxu0 0.0
    %5422 = vmatpush1.msra.mxu0 0.0
    %5423 = vmatprep.subr.mxu0 0.0
    %5424 = vmatpush1.msra.mxu0 0.0
    %5425 = vmatprep.subr.mxu0 0.0
    %5426 = vmatpush1.msra.mxu0 0.0
    %5427 = vmatprep.subr.mxu0 0.0
    %5428 = vmatpush1.msra.mxu0 0.0
    %5429 = vmatprep.subr.mxu0 0.0
    %5430 = vmatpush1.msra.mxu0 0.0
    %5431 = vmatprep.subr.mxu0 0.0
    %5432 = vmatpush1.msra.mxu0 0.0
    %5433 = vmatprep.subr.mxu0 0.0
    %5434 = vmatpush1.msra.mxu0 0.0
    %5435 = vmatprep.subr.mxu0 0.0
    %5436 = vmatpush1.msra.mxu0 0.0
    %5437 = vmatprep.subr.mxu0 0.0
    %5438 = vmatpush1.msra.mxu0 0.0
    %5439 = vmatprep.subr.mxu0 0.0
    %5440 = vmatpush1.msra.mxu0 0.0
    %5441 = vmatprep.subr.mxu0 0.0
    %5442 = vmatpush1.msra.mxu0 0.0
    %5443 = vmatprep.subr.mxu0 0.0
    %5444 = vmatpush1.msra.mxu0 0.0
    %5445 = vmatprep.subr.mxu0 0.0
    %5446 = vmatpush1.msra.mxu0 0.0
    %5447 = vmatprep.subr.mxu0 0.0
    %5448 = vmatpush1.msra.mxu0 0.0
    %5449 = vmatprep.subr.mxu0 0.0
    %5450 = vmatpush1.msra.mxu0 0.0
    %5451 = vmatprep.subr.mxu0 0.0
    %5452 = vmatpush1.msra.mxu0 0.0
    %5453 = vmatprep.subr.mxu0 0.0
    %5454 = vmatpush1.msra.mxu0 0.0
    %5455 = vmatprep.subr.mxu0 0.0
    %5456 = vmatpush1.msra.mxu0 0.0
    %5457 = vmatprep.subr.mxu0 0.0
    %5458 = vmatpush1.msra.mxu0 0.0
    %5459 = vmatprep.subr.mxu0 0.0
    %5460 = vmatpush1.msra.mxu0 0.0
    %5461 = vmatprep.subr.mxu0 0.0
    %5462 = vmatpush1.msra.mxu0 0.0
    %5463 = vmatprep.subr.mxu0 0.0
    %5464 = vmatpush1.msra.mxu0 0.0
    %5465 = vmatprep.subr.mxu0 0.0
    %5466 = vmatpush1.msra.mxu0 0.0
    %5467 = vmatprep.mubr.f32.mxu0 0.0
    %5468 = vmatmul.mubr.f32.gmra.mrb[0].mxu0 %v5401
    %v5469 = vpop.f32.mrb[0].mxu0
    %v5470 = vadd.f32 0.0, %v5469
    %v5471 = vpop.f32.mrb[0].mxu0
    %5472 = vdwg.mxu0
    %v5473 = vadd.f32 %v5397, %v5470
    %v5474 = vmul.f32 %v5473, 0.5
    %v5475 = vtanh.pop %v5474
    %v5476 = vmul.f32 %v5475, 0.5
    %v5477 = vadd.f32 %v5476, 0.5
    %v5478 = vtanh.pop %v5473
    %v5479 = vmul.f32 %v5477, %v5389
    %5481 = vrot.lane.b32.xlu0 %v5478, 32
    %v5482 = vpop.permute.xlu0 %5481
    %v5484 = vmul.f32 %v5477, %v5482
    %5486 = vrot.lane.b32.xlu0 %v5484, 32
    %v5487 = vpop.permute.xlu0 %5486
    %v5489 = vadd.f32 %v5479, %v5487
    %v5490 = vtanh.pop %v5489
    %5492 = vrot.lane.b32.xlu0 %v5490, 32
    %v5493 = vpop.permute.xlu0 %5492
    %v5495 = vmul.f32 %v5477, %v5493
    %v5496 = vadd.f32 %v5396, %v5495
    %v5497 = vld [vmem:[%s5] sm:$0x1]
    %v5499 = vlaneseq
    %v5500 = vshrl.u32 %v5499, 7
    %v5501 = vsub.s32 0, %v5500
    %v5502 = vrot.slane %v5497, %v5501
    %5503 = vrot.lane.b32.xlu0 %v5502, 64
    %v5504 = vpop.permute.xlu0 %5503
    %v5506 = vmul.f32 %v5496, %v5504
    %5508 = vrot.lane.b32.xlu0 %v5506, 64
    %v5509 = vpop.permute.xlu0 %5508
    %v5511 = vsel %vm735, %v5509, 0.0
    %5512 = vadd.xlane.f32.xlu0 %v5511
    %v5513 = vpop.xlane.xlu0 %5512
    %v5514 = vld [vmem:[#allocation4] sm:$0x1]
    %v5516 = vlaneseq
    %v5517 = vshrl.u32 %v5516, 7
    %v5518 = vsub.s32 0, %v5517
    %v5519 = vrot.slane %v5514, %v5518
    %v5521 = vadd.f32 %v5513, %v5519
    %vm5522 = vcmask 7168
    %5523 = vst.msk [vmem:[%s7] sm:$0xff] %vm5522, %v5521
    // Predicated region
    $region46: #{tpu_custom_call.1} parent=1 // pred_check
      _
    $region47: #{tpu_custom_call.1} parent=1 // pred_check_branch
      %5525 = sbr.rel (0) target = $region49
    $region48: #{tpu_custom_call.1} parent=1 // pred_region
      _
    $region49: #{tpu_custom_call.1} parent=1 // pred_fallthru
      _
    // Predicated region
    $region50: #{tpu_custom_call.1} parent=1 // pred_check
      _
    $region51: #{tpu_custom_call.1} parent=1 // pred_check_branch
      %5527 = sbr.rel (0) target = $region53
    $region52: #{tpu_custom_call.1} parent=1 // pred_region
      _
    $region53: #{tpu_custom_call.1} parent=1 // pred_fallthru
      _
    %5528 = vsyncpa [#allocation6], 1
    %5529 = vsyncpa [#allocation8], 1
    %5530 = vsyncpa [#allocation11], 1

</llo_original>
